<compile_context>
chip_gen: v7x
topology: tpu7x:2x2x1
jax: 0.10.0
libtpu: 0.0.40
codegen_flags: <defaults>
</compile_context>

<pallas_src>
import math
import functools

import jax
import jax.numpy as jnp
from jax.experimental import pallas as pl
from jax.experimental.pallas import tpu as pltpu


@functools.lru_cache(maxsize=1)
def _vmem_limit_bytes():
    """Generation-aware scoped-VMEM budget: ~3/4 of physical VMEM, capped at 100 MiB.

    v7x (64 MiB physical) -> 48 MiB; v5e/v6e (128 MiB) -> 96 MiB.
    """
    cap = 128 * 1024 * 1024
    try:
        info = pltpu.get_tpu_info()
        cap = int(getattr(info, "vmem_capacity_bytes", cap))
    except Exception:
        pass
    return int(min((cap * 3) // 4, 100 * 1024 * 1024))


def _pick_tile(dim, candidates):
    """Largest candidate that evenly divides `dim` (falls back to the full dim)."""
    for c in candidates:
        if c <= dim and dim % c == 0:
            return c
    return dim


def _pick_tile_n(s, candidates=(16, 8, 4, 2, 1)):
    """Prefer the largest tile whose grid is even and >= 2 steps (v7x megacore balance)."""
    for c in candidates:
        if c <= s and s % c == 0 and (s // c) >= 2 and (s // c) % 2 == 0:
            return c
    for c in candidates:
        if c <= s and s % c == 0:
            return c
    return s


# ----------------------------- in-kernel helpers -----------------------------

def _layernorm(x, g, b, eps=1e-5):
    mu = jnp.mean(x, axis=-1, keepdims=True)
    var = jnp.mean((x - mu) ** 2, axis=-1, keepdims=True)
    return (x - mu) * jax.lax.rsqrt(var + eps) * g + b


def _erf(x):
    # Abramowitz & Stegun 7.1.26 (|err| <= 1.5e-7).  Exact reciprocal here — an approximate
    # EUP reciprocal would break that bound (review correctness note).
    a1, a2, a3, a4, a5 = 0.254829592, -0.284496736, 1.421413741, -1.453152027, 1.061405429
    pc = 0.3275911
    ax = jnp.abs(x)
    t = 1.0 / (1.0 + pc * ax)
    poly = ((((a5 * t + a4) * t + a3) * t + a2) * t + a1) * t
    y = 1.0 - poly * jnp.exp(-ax * ax)
    return jnp.where(x >= 0, y, -y)


def _gelu_exact(x):
    # matches torch.nn.functional.gelu (approximate='none') to ~fp32 precision
    return 0.5 * x * (1.0 + _erf(x * (1.0 / math.sqrt(2.0))))


# ----------------------------- Pallas kernels -----------------------------

def _encoder_stack_kernel(x_ref, mask_ref,
                          wqkv_ref, bqkv_ref, wo_ref, bo_ref, ln1g_ref, ln1b_ref,
                          w1_ref, b1_ref, w2_ref, b2_ref, ln2g_ref, ln2b_ref,
                          o_ref, resid_ref, *, num_heads):
    """All post-norm TransformerEncoderLayers for one tile of the attention-batch axis.

    Grid = (S // tile_n, num_layers), layer axis innermost.  The residual stream lives in
    the f32 VMEM scratch `resid_ref` across layer steps; the bf16 output block is written
    only at the last layer.  One layer's weights are streamed per grid step (double
    buffered behind the compute), keeping VMEM bounded for any depth / generation.
    """
    l = pl.program_id(1)
    n_layers = pl.num_programs(1)

    @pl.when(l == 0)
    def _():
        resid_ref[...] = x_ref[...].astype(jnp.float32)

    nt, L, E = resid_ref.shape
    H = num_heads
    Dh = E // H
    M = nt * L

    x2 = resid_ref[...].reshape(M, E)           # (M, E) f32 residual stream
    xb = x2.astype(jnp.bfloat16)

    # ---- fused QKV: ONE (M, E) @ (E, 3E) bf16 MXU pass, f32 accumulation ----
    qkv = jnp.dot(xb, wqkv_ref[0], preferred_element_type=jnp.float32) + bqkv_ref[0]
    scale = 1.0 / math.sqrt(Dh)
    q3 = (qkv[:, 0 * E:1 * E] * scale).reshape(nt, L, E)   # fold 1/sqrt(Dh) into q
    k3 = qkv[:, 1 * E:2 * E].reshape(nt, L, E)
    v3 = qkv[:, 2 * E:3 * E].reshape(nt, L, E)

    # ---- batch ALL heads onto one leading axis: (H*nt, L, Dh); slice/concat in f32
    #      (best-supported relayouts), cast to bf16 once for the MXU ----
    def _heads(t):
        return jnp.concatenate([t[:, :, h * Dh:(h + 1) * Dh] for h in range(H)],
                               axis=0).astype(jnp.bfloat16)
    qh, kh, vh = _heads(q3), _heads(k3), _heads(v3)

    s = jnp.einsum('bqd,bkd->bqk', qh, kh,
                   preferred_element_type=jnp.float32)         # (H*nt, L, L) f32
    # Additive float mask broadcast over all heads/batch.  NOTE: with the causal mask the
    # diagonal is unmasked so softmax is NaN-free; an all--inf row would silently NaN.
    s = s + mask_ref[...][None, :, :]
    s = s - jnp.max(s, axis=-1, keepdims=True)
    p = jnp.exp(s)
    p = p * pl.reciprocal(jnp.sum(p, axis=-1, keepdims=True), approx=True)
    o = jnp.einsum('bqk,bkd->bqd', p.astype(jnp.bfloat16), vh,
                   preferred_element_type=jnp.float32)         # (H*nt, L, Dh)

    # ---- re-join heads on the lane axis with a register-level concat (no VMEM scratch,
    #      no masked partial stores), then ONE E-deep out-projection matmul ----
    attn_in = jnp.concatenate([o[h * nt:(h + 1) * nt] for h in range(H)], axis=-1)
    attn_in = attn_in.reshape(M, E).astype(jnp.bfloat16)
    attn = jnp.dot(attn_in, wo_ref[0], preferred_element_type=jnp.float32) + bo_ref[0]

    # residual + LayerNorm1 (norm_first=False -> post-norm), f32
    h1 = _layernorm(x2 + attn, ln1g_ref[0], ln1b_ref[0])

    # ---- feed forward: linear2(gelu(linear1(x))), bf16 MXU / f32 accumulate ----
    ff = jnp.dot(h1.astype(jnp.bfloat16), w1_ref[0],
                 preferred_element_type=jnp.float32) + b1_ref[0]
    ff = _gelu_exact(ff)
    ff = jnp.dot(ff.astype(jnp.bfloat16), w2_ref[0],
                 preferred_element_type=jnp.float32) + b2_ref[0]

    out = _layernorm(h1 + ff, ln2g_ref[0], ln2b_ref[0])
    resid_ref[...] = out.reshape(nt, L, E)

    @pl.when(l == n_layers - 1)
    def _():
        o_ref[...] = resid_ref[...].astype(o_ref.dtype)


def _lm_head_kernel(x_ref, g_ref, b_ref, w_ref, o_ref, y_ref):
    """Fused final-LayerNorm + tied-decoder tile.

    Grid = (rows, vocab) with vocab innermost: the LayerNorm for a row tile is computed
    once (first vocab tile) into a bf16 VMEM scratch and reused for every vocab tile, so
    the normalized activations never round-trip through HBM.
    """
    @pl.when(pl.program_id(1) == 0)
    def _():
        y = _layernorm(x_ref[...].astype(jnp.float32), g_ref[...], b_ref[...])
        y_ref[...] = y.astype(jnp.bfloat16)
    o_ref[...] = jnp.dot(y_ref[...], w_ref[...], preferred_element_type=jnp.float32)


# ----------------------------- wrappers -----------------------------

def encoder_stack(x, mask, layers, num_heads):
    """All encoder layers fused into one pallas_call; returns bf16 activations."""
    S, L, E = x.shape
    assert E % num_heads == 0
    n_layers = layers['wqkv'].shape[0]
    # TODO(synk): for large L the (H*tile_n, L, L) score block should be flash-tiled over L;
    # the module's S==B quirk keeps realistic L small so a whole-L block is used here.
    # (If bundle dumps show vld/vst spill pressure, lower tile_n: it halves live f32 state.)
    tile_n = _pick_tile_n(S)

    w_names = ('wqkv', 'bqkv', 'wo', 'bo', 'ln1_g', 'ln1_b',
               'w1', 'b1', 'w2', 'b2', 'ln2_g', 'ln2_b')
    w_args = [layers[n] for n in w_names]
    # one layer's weights per grid step, streamed + double-buffered behind the compute
    w_specs = [pl.BlockSpec((1,) + w.shape[1:], lambda i, l: (l, 0, 0)) for w in w_args]

    return pl.pallas_call(
        functools.partial(_encoder_stack_kernel, num_heads=num_heads),
        out_shape=jax.ShapeDtypeStruct((S, L, E), jnp.bfloat16),
        grid=(S // tile_n, n_layers),
        in_specs=[pl.BlockSpec((tile_n, L, E), lambda i, l: (i, 0, 0)),
                  pl.BlockSpec((L, L), lambda i, l: (0, 0))] + w_specs,
        out_specs=pl.BlockSpec((tile_n, L, E), lambda i, l: (i, 0, 0)),
        scratch_shapes=[pltpu.VMEM((tile_n, L, E), jnp.float32)],   # residual stream
        compiler_params=pltpu.CompilerParams(
            dimension_semantics=("parallel", "arbitrary"),   # batch axis shards across TCs
            vmem_limit_bytes=_vmem_limit_bytes()),
    )(x, mask, *w_args)


def lm_head(x, g, b, wdec_t):
    """Final LayerNorm fused with the tied decoder projection, tiled over (rows, vocab)."""
    S, B, E = x.shape
    M = S * B
    V = wdec_t.shape[1]
    x2 = x.reshape(M, E)

    vmem = _vmem_limit_bytes()
    # Bigger row tiles cut re-reads of the (E, V) tied decoder weight; allow larger tiles
    # under v5e/v6e's roomier VMEM, keep <=512 under v7x's tighter budget.
    tm_cands = ((1024, 512, 256, 128, 64, 32, 16, 8) if vmem >= 80 * 1024 * 1024
                else (512, 256, 128, 64, 32, 16, 8))
    tm = _pick_tile(M, tm_cands)
    tv = _pick_tile(V, (512, 256, 128))   # lane-dense vocab tiles (multiple of 256-wide MXU)
    # TODO(synk): vocab sizes not divisible by 128 fall back to a single whole-V tile;
    # pad the tied decoder weight to a multiple of 128 for realistic vocabularies.

    logits = pl.pallas_call(
        _lm_head_kernel,
        out_shape=jax.ShapeDtypeStruct((M, V), jnp.float32),
        grid=(M // tm, V // tv),
        in_specs=[pl.BlockSpec((tm, E), lambda i, j: (i, 0)),
                  pl.BlockSpec((1, E), lambda i, j: (0, 0)),
                  pl.BlockSpec((1, E), lambda i, j: (0, 0)),
                  pl.BlockSpec((E, tv), lambda i, j: (0, j))],
        out_specs=pl.BlockSpec((tm, tv), lambda i, j: (i, j)),
        scratch_shapes=[pltpu.VMEM((tm, E), jnp.bfloat16)],    # LayerNorm'ed row tile
        compiler_params=pltpu.CompilerParams(
            dimension_semantics=("parallel", "arbitrary"),
            vmem_limit_bytes=vmem),
    )(x2, g, b, wdec_t)
    return logits.reshape(S, B, V)


def make_positional_encoding(max_len, d_model):
    position = jnp.arange(max_len, dtype=jnp.float32)[:, None]
    div_term = jnp.exp(jnp.arange(0, d_model, 2, dtype=jnp.float32)
                       * (-math.log(10000.0) / d_model))
    pe = jnp.zeros((max_len, 1, d_model), jnp.float32)
    pe = pe.at[:, 0, 0::2].set(jnp.sin(position * div_term))
    pe = pe.at[:, 0, 1::2].set(jnp.cos(position * div_term))
    return pe


def init_gpt_params(key, *, vocab_size, embedding_dim, ff_dim, num_layers, max_len):
    """GPT-2 style init (normal std=0.02 for weights/biases; LayerNorms at (1, 0)).

    Encoder-layer weights are stacked over layers, stored pre-transposed (in, out) and
    cast to bf16 once at init; the QKV projection is packed into one (E, 3E) weight and
    one (1, 3E) bias so the kernel runs a single fused QKV matmul.
    """
    E, F, V, NL = embedding_dim, ff_dim, vocab_size, num_layers

    def normal(k, shape):
        return 0.02 * jax.random.normal(k, shape, jnp.float32)

    keys = jax.random.split(key, NL + 1)
    emb = normal(keys[0], (V, E))
    params = {
        'embedding': emb,                                  # f32, used for the token gather
        'wdec_t': emb.T.astype(jnp.bfloat16),              # tied decoder weight, (E, V) bf16
        'pe': make_positional_encoding(max_len, E),
        'ln_f_g': jnp.ones((1, E), jnp.float32),
        'ln_f_b': jnp.zeros((1, E), jnp.float32),
    }

    per_layer = []
    for li in range(NL):
        ks = jax.random.split(keys[li + 1], 8)
        wqkv = normal(ks[0], (3 * E, E))                   # torch in_proj_weight layout
        bqkv = normal(ks[1], (3 * E,))
        wo = normal(ks[2], (E, E)); bo = normal(ks[3], (E,))
        w1 = normal(ks[4], (F, E)); b1 = normal(ks[5], (F,))
        w2 = normal(ks[6], (E, F)); b2 = normal(ks[7], (E,))
        per_layer.append(dict(
            wqkv=wqkv.T.astype(jnp.bfloat16),              # (E, 3E): fused QKV weight
            bqkv=bqkv.reshape(1, 3 * E),
            wo=wo.T.astype(jnp.bfloat16), bo=bo.reshape(1, E),
            ln1_g=jnp.ones((1, E), jnp.float32), ln1_b=jnp.zeros((1, E), jnp.float32),
            w1=w1.T.astype(jnp.bfloat16), b1=b1.reshape(1, F),
            w2=w2.T.astype(jnp.bfloat16), b2=b2.reshape(1, E),
            ln2_g=jnp.ones((1, E), jnp.float32), ln2_b=jnp.zeros((1, E), jnp.float32),
        ))
    params['layers'] = {k: jnp.stack([lyr[k] for lyr in per_layer], axis=0)
                        for k in per_layer[0]}
    return params


@functools.partial(jax.jit, static_argnames=("num_heads",))
def gpt_forward(src, src_mask, params, num_heads):
    """src: [S, B] int tokens; src_mask: [S, S] additive float mask -> logits [S, B, V]."""
    S, B = src.shape
    # the original module's batch_first quirk: attention runs along the B axis with an
    # [S, S] mask, so it only makes sense when S == B (we reproduce this faithfully).
    assert S == B, "original module requires S == B (batch_first quirk with [S,S] mask)"
    E = params['embedding'].shape[1]
    # embedding gather + sqrt(E) scale + sinusoidal positional encoding (glue, plain JAX)
    x = jnp.take(params['embedding'], src, axis=0) * math.sqrt(E)   # (S, B, E) f32
    x = x + params['pe'][:S]
    # TODO(synk): nn.Dropout layers are identity here (inference/eval semantics).
    x = encoder_stack(x, src_mask, params['layers'], num_heads)     # (S, B, E) bf16
    return lm_head(x, params['ln_f_g'], params['ln_f_b'], params['wdec_t'])


# ----------------------------- demo -----------------------------

if __name__ == "__main__":
    # small shapes consistent with the module; S == B is required by the original
    # module's batch_first quirk. E is a multiple of 128 for lane-dense kernel blocks.
    S = B = 16
    VOCAB, EMB, HEADS, FF, LAYERS = 512, 128, 4, 256, 2

    key = jax.random.PRNGKey(0)
    k_tok, k_par = jax.random.split(key)

    params = init_gpt_params(k_par, vocab_size=VOCAB, embedding_dim=EMB,
                             ff_dim=FF, num_layers=LAYERS, max_len=64)

    src = jax.random.randint(k_tok, (S, B), 0, VOCAB, dtype=jnp.int32)
    # causal additive mask, a la Transformer.generate_square_subsequent_mask
    idx = jnp.arange(S)
    src_mask = jnp.where(idx[None, :] <= idx[:, None], 0.0, -jnp.inf).astype(jnp.float32)

    out = gpt_forward(src, src_mask, params, num_heads=HEADS)
    out = jax.block_until_ready(out)
    assert out.shape == (S, B, VOCAB) and out.dtype == jnp.float32
    print("KERNEL_OK")
</pallas_src>

<mosaic_0001>
module attributes {stable_mosaic.version = 11 : i64} {
  func.func @_lm_head_kernel(%arg0: i32, %arg1: i32, %arg2: memref<256x128xbf16, #tpu.memory_space<vmem>>, %arg3: memref<1x128xf32, #tpu.memory_space<vmem>>, %arg4: memref<1x128xf32, #tpu.memory_space<vmem>>, %arg5: memref<128x512xbf16, #tpu.memory_space<vmem>>, %arg6: memref<256x512xf32, #tpu.memory_space<vmem>>, %arg7: memref<256x128xbf16, #tpu.memory_space<vmem>>) attributes {dimension_semantics = [#tpu.dimension_semantics<parallel>, #tpu.dimension_semantics<arbitrary>], iteration_bounds = array<i64: 1, 1>, scalar_prefetch = 0 : i64, scratch_operands = 1 : i64, tpu.core_type = #tpu.core_type<tc>, window_params = [{transform_indices = @transform_0, window_bounds = array<i64: 256, 128>}, {pipeline_mode = #tpu.pipeline_mode<synchronous>, transform_indices = @transform_1, window_bounds = array<i64: 1, 128>}, {pipeline_mode = #tpu.pipeline_mode<synchronous>, transform_indices = @transform_2, window_bounds = array<i64: 1, 128>}, {transform_indices = @transform_3, window_bounds = array<i64: 128, 512>}, {transform_indices = @transform_4, window_bounds = array<i64: 256, 512>}]} {
    %c0_i32 = arith.constant 0 : i32
    %0 = arith.cmpi eq, %arg1, %c0_i32 : i32
    %1 = arith.extui %0 : i1 to i32
    %c0_i32_0 = arith.constant 0 : i32
    %2 = arith.cmpi ne, %1, %c0_i32_0 : i32
    scf.if %2 {
      %c0_6 = arith.constant 0 : index
      %c0_7 = arith.constant 0 : index
      %7 = vector.load %arg2[%c0_6, %c0_7] : memref<256x128xbf16, #tpu.memory_space<vmem>>, vector<256x128xbf16>
      %8 = arith.extf %7 : vector<256x128xbf16> to vector<256x128xf32>
      %c0_8 = arith.constant 0 : index
      %c0_9 = arith.constant 0 : index
      %9 = vector.load %arg3[%c0_8, %c0_9] : memref<1x128xf32, #tpu.memory_space<vmem>>, vector<1x128xf32>
      %c0_10 = arith.constant 0 : index
      %c0_11 = arith.constant 0 : index
      %10 = vector.load %arg4[%c0_10, %c0_11] : memref<1x128xf32, #tpu.memory_space<vmem>>, vector<1x128xf32>
      %cst_12 = arith.constant dense<0.000000e+00> : vector<256xf32>
      %11 = vector.multi_reduction <add>, %8, %cst_12 [1] : vector<256x128xf32> to vector<256xf32>
      %12 = vector.shape_cast %11 : vector<256xf32> to vector<256x1xf32>
      %cst_13 = arith.constant 1.280000e+02 : f32
      %13 = vector.broadcast %cst_13 : f32 to vector<256x1xf32>
      %14 = arith.divf %12, %13 : vector<256x1xf32>
      %15 = vector.broadcast %14 : vector<256x1xf32> to vector<256x128xf32>
      %16 = arith.subf %8, %15 : vector<256x128xf32>
      %17 = arith.mulf %16, %16 : vector<256x128xf32>
      %cst_14 = arith.constant dense<0.000000e+00> : vector<256xf32>
      %18 = vector.multi_reduction <add>, %17, %cst_14 [1] : vector<256x128xf32> to vector<256xf32>
      %19 = vector.shape_cast %18 : vector<256xf32> to vector<256x1xf32>
      %cst_15 = arith.constant 1.280000e+02 : f32
      %20 = vector.broadcast %cst_15 : f32 to vector<256x1xf32>
      %21 = arith.divf %19, %20 : vector<256x1xf32>
      %22 = vector.broadcast %14 : vector<256x1xf32> to vector<256x128xf32>
      %23 = arith.subf %8, %22 : vector<256x128xf32>
      %cst_16 = arith.constant 9.99999974E-6 : f32
      %24 = vector.broadcast %cst_16 : f32 to vector<256x1xf32>
      %25 = arith.addf %21, %24 : vector<256x1xf32>
      %26 = math.rsqrt %25 : vector<256x1xf32>
      %27 = vector.broadcast %26 : vector<256x1xf32> to vector<256x128xf32>
      %28 = arith.mulf %23, %27 : vector<256x128xf32>
      %29 = vector.broadcast %9 : vector<1x128xf32> to vector<256x128xf32>
      %30 = arith.mulf %28, %29 : vector<256x128xf32>
      %31 = vector.broadcast %10 : vector<1x128xf32> to vector<256x128xf32>
      %32 = arith.addf %30, %31 : vector<256x128xf32>
      %33 = arith.truncf %32 : vector<256x128xf32> to vector<256x128xbf16>
      %c0_17 = arith.constant 0 : index
      %c0_18 = arith.constant 0 : index
      %34 = vector.load %arg7[%c0_17, %c0_18] : memref<256x128xbf16, #tpu.memory_space<vmem>>, vector<256x128xbf16>
      tpu.vector_store %arg7[%c0_17, %c0_18], %33 {strides = array<i32>} : memref<256x128xbf16, #tpu.memory_space<vmem>>, vector<256x128xbf16>,
    } else {
    }
    %c0 = arith.constant 0 : index
    %c0_1 = arith.constant 0 : index
    %3 = vector.load %arg7[%c0, %c0_1] : memref<256x128xbf16, #tpu.memory_space<vmem>>, vector<256x128xbf16>
    %c0_2 = arith.constant 0 : index
    %c0_3 = arith.constant 0 : index
    %4 = vector.load %arg5[%c0_2, %c0_3] : memref<128x512xbf16, #tpu.memory_space<vmem>>, vector<128x512xbf16>
    %cst = arith.constant dense<0.000000e+00> : vector<256x512xf32>
    %5 = tpu.matmul %3, %4, %cst {dimension_numbers = #tpu.dot_dimension_numbers<[1], [0], [0], [1], [0, 0, 1, 1], [], []>} : vector<256x128xbf16>, vector<128x512xbf16>, vector<256x512xf32> -> vector<256x512xf32>
    %c0_4 = arith.constant 0 : index
    %c0_5 = arith.constant 0 : index
    %6 = vector.load %arg6[%c0_4, %c0_5] : memref<256x512xf32, #tpu.memory_space<vmem>>, vector<256x512xf32>
    tpu.vector_store %arg6[%c0_4, %c0_5], %5 {strides = array<i32>} : memref<256x512xf32, #tpu.memory_space<vmem>>, vector<256x512xf32>,
    return
  }
  func.func @transform_0(%arg0: i32, %arg1: i32) -> (i32, i32) {
    %c0_i32 = arith.constant 0 : i32
    %c0_i32_0 = arith.constant 0 : i32
    return %arg0, %c0_i32 : i32, i32
  }
  func.func @transform_1(%arg0: i32, %arg1: i32) -> (i32, i32) {
    %c0_i32 = arith.constant 0 : i32
    %c0_i32_0 = arith.constant 0 : i32
    %c0_i32_1 = arith.constant 0 : i32
    return %c0_i32, %c0_i32_0 : i32, i32
  }
  func.func @transform_2(%arg0: i32, %arg1: i32) -> (i32, i32) {
    %c0_i32 = arith.constant 0 : i32
    %c0_i32_0 = arith.constant 0 : i32
    %c0_i32_1 = arith.constant 0 : i32
    return %c0_i32, %c0_i32_0 : i32, i32
  }
  func.func @transform_3(%arg0: i32, %arg1: i32) -> (i32, i32) {
    %c0_i32 = arith.constant 0 : i32
    %c0_i32_0 = arith.constant 0 : i32
    return %c0_i32, %arg1 : i32, i32
  }
  func.func @transform_4(%arg0: i32, %arg1: i32) -> (i32, i32) {
    %c0_i32 = arith.constant 0 : i32
    return %arg0, %arg1 : i32, i32
  }
}

module attributes {stable_mosaic.version = 11 : i64} {
  func.func @_encoder_stack_kernel(%arg0: i32, %arg1: i32, %arg2: memref<8x16x128xf32, #tpu.memory_space<vmem>>, %arg3: memref<16x16xf32, #tpu.memory_space<vmem>>, %arg4: memref<1x128x384xbf16, #tpu.memory_space<vmem>>, %arg5: memref<1x1x384xf32, #tpu.memory_space<vmem>>, %arg6: memref<1x128x128xbf16, #tpu.memory_space<vmem>>, %arg7: memref<1x1x128xf32, #tpu.memory_space<vmem>>, %arg8: memref<1x1x128xf32, #tpu.memory_space<vmem>>, %arg9: memref<1x1x128xf32, #tpu.memory_space<vmem>>, %arg10: memref<1x128x256xbf16, #tpu.memory_space<vmem>>, %arg11: memref<1x1x256xf32, #tpu.memory_space<vmem>>, %arg12: memref<1x256x128xbf16, #tpu.memory_space<vmem>>, %arg13: memref<1x1x128xf32, #tpu.memory_space<vmem>>, %arg14: memref<1x1x128xf32, #tpu.memory_space<vmem>>, %arg15: memref<1x1x128xf32, #tpu.memory_space<vmem>>, %arg16: memref<8x16x128xbf16, #tpu.memory_space<vmem>>, %arg17: memref<8x16x128xf32, #tpu.memory_space<vmem>>) attributes {dimension_semantics = [#tpu.dimension_semantics<parallel>, #tpu.dimension_semantics<arbitrary>], iteration_bounds = array<i64: 2, 2>, scalar_prefetch = 0 : i64, scratch_operands = 1 : i64, tpu.core_type = #tpu.core_type<tc>, window_params = [{transform_indices = @transform_0, window_bounds = array<i64: 8, 16, 128>}, {pipeline_mode = #tpu.pipeline_mode<synchronous>, transform_indices = @transform_1, window_bounds = array<i64: 16, 16>}, {transform_indices = @transform_2, window_bounds = array<i64: 1, 128, 384>}, {transform_indices = @transform_3, window_bounds = array<i64: 1, 1, 384>}, {transform_indices = @transform_4, window_bounds = array<i64: 1, 128, 128>}, {transform_indices = @transform_5, window_bounds = array<i64: 1, 1, 128>}, {transform_indices = @transform_6, window_bounds = array<i64: 1, 1, 128>}, {transform_indices = @transform_7, window_bounds = array<i64: 1, 1, 128>}, {transform_indices = @transform_8, window_bounds = array<i64: 1, 128, 256>}, {transform_indices = @transform_9, window_bounds = array<i64: 1, 1, 256>}, {transform_indices = @transform_10, window_bounds = array<i64: 1, 256, 128>}, {transform_indices = @transform_11, window_bounds = array<i64: 1, 1, 128>}, {transform_indices = @transform_12, window_bounds = array<i64: 1, 1, 128>}, {transform_indices = @transform_13, window_bounds = array<i64: 1, 1, 128>}, {transform_indices = @transform_14, window_bounds = array<i64: 8, 16, 128>}]} {
    %c0_i32 = arith.constant 0 : i32
    %0 = arith.cmpi eq, %arg1, %c0_i32 : i32
    %1 = arith.extui %0 : i1 to i32
    %c0_i32_0 = arith.constant 0 : i32
    %2 = arith.cmpi ne, %1, %c0_i32_0 : i32
    scf.if %2 {
      %c0_78 = arith.constant 0 : index
      %c0_79 = arith.constant 0 : index
      %c0_80 = arith.constant 0 : index
      %185 = vector.load %arg2[%c0_78, %c0_79, %c0_80] : memref<8x16x128xf32, #tpu.memory_space<vmem>>, vector<8x16x128xf32>
      %c0_81 = arith.constant 0 : index
      %c0_82 = arith.constant 0 : index
      %c0_83 = arith.constant 0 : index
      %186 = vector.load %arg17[%c0_81, %c0_82, %c0_83] : memref<8x16x128xf32, #tpu.memory_space<vmem>>, vector<8x16x128xf32>
      tpu.vector_store %arg17[%c0_81, %c0_82, %c0_83], %185 {strides = array<i32>} : memref<8x16x128xf32, #tpu.memory_space<vmem>>, vector<8x16x128xf32>,
    } else {
    }
    %c0 = arith.constant 0 : index
    %c0_1 = arith.constant 0 : index
    %c0_2 = arith.constant 0 : index
    %3 = vector.load %arg17[%c0, %c0_1, %c0_2] : memref<8x16x128xf32, #tpu.memory_space<vmem>>, vector<8x16x128xf32>
    %4 = vector.shape_cast %3 : vector<8x16x128xf32> to vector<128x128xf32>
    %5 = arith.truncf %4 : vector<128x128xf32> to vector<128x128xbf16>
    %c0_3 = arith.constant 0 : index
    %c0_4 = arith.constant 0 : index
    %c0_5 = arith.constant 0 : index
    %6 = vector.load %arg4[%c0_3, %c0_4, %c0_5] : memref<1x128x384xbf16, #tpu.memory_space<vmem>>, vector<1x128x384xbf16>
    %7 = vector.shape_cast %6 : vector<1x128x384xbf16> to vector<128x384xbf16>
    %cst = arith.constant dense<0.000000e+00> : vector<128x384xf32>
    %8 = tpu.matmul %5, %7, %cst {dimension_numbers = #tpu.dot_dimension_numbers<[1], [0], [0], [1], [0, 0, 1, 1], [], []>} : vector<128x128xbf16>, vector<128x384xbf16>, vector<128x384xf32> -> vector<128x384xf32>
    %c0_6 = arith.constant 0 : index
    %c0_7 = arith.constant 0 : index
    %c0_8 = arith.constant 0 : index
    %9 = vector.load %arg5[%c0_6, %c0_7, %c0_8] : memref<1x1x384xf32, #tpu.memory_space<vmem>>, vector<1x1x384xf32>
    %10 = vector.shape_cast %9 : vector<1x1x384xf32> to vector<1x384xf32>
    %11 = vector.broadcast %10 : vector<1x384xf32> to vector<128x384xf32>
    %12 = arith.addf %8, %11 : vector<128x384xf32>
    %13 = vector.extract_strided_slice %12 {offsets = [0, 0], sizes = [128, 128], strides = [1, 1]} : vector<128x384xf32> to vector<128x128xf32>
    %cst_9 = arith.constant 0.176776692 : f32
    %14 = vector.broadcast %cst_9 : f32 to vector<128x128xf32>
    %15 = arith.mulf %13, %14 : vector<128x128xf32>
    %16 = vector.shape_cast %15 : vector<128x128xf32> to vector<8x16x128xf32>
    %17 = vector.extract_strided_slice %12 {offsets = [0, 128], sizes = [128, 128], strides = [1, 1]} : vector<128x384xf32> to vector<128x128xf32>
    %18 = vector.shape_cast %17 : vector<128x128xf32> to vector<8x16x128xf32>
    %19 = vector.extract_strided_slice %12 {offsets = [0, 256], sizes = [128, 128], strides = [1, 1]} : vector<128x384xf32> to vector<128x128xf32>
    %20 = vector.shape_cast %19 : vector<128x128xf32> to vector<8x16x128xf32>
    %21 = vector.extract_strided_slice %16 {offsets = [0, 0, 0], sizes = [8, 16, 32], strides = [1, 1, 1]} : vector<8x16x128xf32> to vector<8x16x32xf32>
    %22 = vector.extract_strided_slice %16 {offsets = [0, 0, 32], sizes = [8, 16, 32], strides = [1, 1, 1]} : vector<8x16x128xf32> to vector<8x16x32xf32>
    %23 = vector.extract_strided_slice %16 {offsets = [0, 0, 64], sizes = [8, 16, 32], strides = [1, 1, 1]} : vector<8x16x128xf32> to vector<8x16x32xf32>
    %24 = vector.extract_strided_slice %16 {offsets = [0, 0, 96], sizes = [8, 16, 32], strides = [1, 1, 1]} : vector<8x16x128xf32> to vector<8x16x32xf32>
    %25 = tpu.concatenate %21, %22, %23, %24 in 0 : vector<8x16x32xf32>, vector<8x16x32xf32>, vector<8x16x32xf32>, vector<8x16x32xf32> -> vector<32x16x32xf32>
    %26 = arith.truncf %25 : vector<32x16x32xf32> to vector<32x16x32xbf16>
    %27 = vector.extract_strided_slice %18 {offsets = [0, 0, 0], sizes = [8, 16, 32], strides = [1, 1, 1]} : vector<8x16x128xf32> to vector<8x16x32xf32>
    %28 = vector.extract_strided_slice %18 {offsets = [0, 0, 32], sizes = [8, 16, 32], strides = [1, 1, 1]} : vector<8x16x128xf32> to vector<8x16x32xf32>
    %29 = vector.extract_strided_slice %18 {offsets = [0, 0, 64], sizes = [8, 16, 32], strides = [1, 1, 1]} : vector<8x16x128xf32> to vector<8x16x32xf32>
    %30 = vector.extract_strided_slice %18 {offsets = [0, 0, 96], sizes = [8, 16, 32], strides = [1, 1, 1]} : vector<8x16x128xf32> to vector<8x16x32xf32>
    %31 = tpu.concatenate %27, %28, %29, %30 in 0 : vector<8x16x32xf32>, vector<8x16x32xf32>, vector<8x16x32xf32>, vector<8x16x32xf32> -> vector<32x16x32xf32>
    %32 = arith.truncf %31 : vector<32x16x32xf32> to vector<32x16x32xbf16>
    %33 = vector.extract_strided_slice %20 {offsets = [0, 0, 0], sizes = [8, 16, 32], strides = [1, 1, 1]} : vector<8x16x128xf32> to vector<8x16x32xf32>
    %34 = vector.extract_strided_slice %20 {offsets = [0, 0, 32], sizes = [8, 16, 32], strides = [1, 1, 1]} : vector<8x16x128xf32> to vector<8x16x32xf32>
    %35 = vector.extract_strided_slice %20 {offsets = [0, 0, 64], sizes = [8, 16, 32], strides = [1, 1, 1]} : vector<8x16x128xf32> to vector<8x16x32xf32>
    %36 = vector.extract_strided_slice %20 {offsets = [0, 0, 96], sizes = [8, 16, 32], strides = [1, 1, 1]} : vector<8x16x128xf32> to vector<8x16x32xf32>
    %37 = tpu.concatenate %33, %34, %35, %36 in 0 : vector<8x16x32xf32>, vector<8x16x32xf32>, vector<8x16x32xf32>, vector<8x16x32xf32> -> vector<32x16x32xf32>
    %38 = arith.truncf %37 : vector<32x16x32xf32> to vector<32x16x32xbf16>
    "tpu.trace_start"() <{level = 10 : i32, message = "bqd,bkd->bqk"}> : () -> ()
    %cst_10 = arith.constant dense<0.000000e+00> : vector<32x16x16xf32>
    %39 = tpu.matmul %26, %32, %cst_10 {dimension_numbers = #tpu.dot_dimension_numbers<[2], [2], [1], [1], [0, 0, 0, 1, 1, 1], [0], [0]>} : vector<32x16x32xbf16>, vector<32x16x32xbf16>, vector<32x16x16xf32> -> vector<32x16x16xf32>
    "tpu.trace_stop"() : () -> ()
    %c0_11 = arith.constant 0 : index
    %c0_12 = arith.constant 0 : index
    %40 = vector.load %arg3[%c0_11, %c0_12] : memref<16x16xf32, #tpu.memory_space<vmem>>, vector<16x16xf32>
    %41 = vector.shape_cast %40 : vector<16x16xf32> to vector<1x16x16xf32>
    %42 = vector.broadcast %41 : vector<1x16x16xf32> to vector<32x16x16xf32>
    %43 = arith.addf %39, %42 : vector<32x16x16xf32>
    %cst_13 = arith.constant dense<0xFF800000> : vector<32x16xf32>
    %44 = vector.multi_reduction <maximumf>, %43, %cst_13 [2] : vector<32x16x16xf32> to vector<32x16xf32>
    %45 = vector.shape_cast %44 : vector<32x16xf32> to vector<32x16x1xf32>
    %46 = vector.broadcast %45 : vector<32x16x1xf32> to vector<32x16x16xf32>
    %47 = arith.subf %43, %46 : vector<32x16x16xf32>
    %48 = math.exp %47 : vector<32x16x16xf32>
    %cst_14 = arith.constant dense<0.000000e+00> : vector<32x16xf32>
    %49 = vector.multi_reduction <add>, %48, %cst_14 [2] : vector<32x16x16xf32> to vector<32x16xf32>
    %50 = vector.shape_cast %49 : vector<32x16xf32> to vector<32x16x1xf32>
    %51 = tpu.reciprocal %50 {approx = true} : vector<32x16x1xf32> -> vector<32x16x1xf32>
    %52 = vector.broadcast %51 : vector<32x16x1xf32> to vector<32x16x16xf32>
    %53 = arith.mulf %48, %52 : vector<32x16x16xf32>
    %54 = arith.truncf %53 : vector<32x16x16xf32> to vector<32x16x16xbf16>
    "tpu.trace_start"() <{level = 10 : i32, message = "bqk,bkd->bqd"}> : () -> ()
    %cst_15 = arith.constant dense<0.000000e+00> : vector<32x16x32xf32>
    %55 = tpu.matmul %54, %38, %cst_15 {dimension_numbers = #tpu.dot_dimension_numbers<[2], [1], [1], [2], [0, 0, 0, 1, 1, 2], [0], [0]>} : vector<32x16x16xbf16>, vector<32x16x32xbf16>, vector<32x16x32xf32> -> vector<32x16x32xf32>
    "tpu.trace_stop"() : () -> ()
    %56 = vector.extract_strided_slice %55 {offsets = [0, 0, 0], sizes = [8, 16, 32], strides = [1, 1, 1]} : vector<32x16x32xf32> to vector<8x16x32xf32>
    %57 = vector.extract_strided_slice %55 {offsets = [8, 0, 0], sizes = [8, 16, 32], strides = [1, 1, 1]} : vector<32x16x32xf32> to vector<8x16x32xf32>
    %58 = vector.extract_strided_slice %55 {offsets = [16, 0, 0], sizes = [8, 16, 32], strides = [1, 1, 1]} : vector<32x16x32xf32> to vector<8x16x32xf32>
    %59 = vector.extract_strided_slice %55 {offsets = [24, 0, 0], sizes = [8, 16, 32], strides = [1, 1, 1]} : vector<32x16x32xf32> to vector<8x16x32xf32>
    %60 = tpu.concatenate %56, %57, %58, %59 in 2 : vector<8x16x32xf32>, vector<8x16x32xf32>, vector<8x16x32xf32>, vector<8x16x32xf32> -> vector<8x16x128xf32>
    %61 = vector.shape_cast %60 : vector<8x16x128xf32> to vector<128x128xf32>
    %62 = arith.truncf %61 : vector<128x128xf32> to vector<128x128xbf16>
    %c0_16 = arith.constant 0 : index
    %c0_17 = arith.constant 0 : index
    %c0_18 = arith.constant 0 : index
    %63 = vector.load %arg6[%c0_16, %c0_17, %c0_18] : memref<1x128x128xbf16, #tpu.memory_space<vmem>>, vector<1x128x128xbf16>
    %64 = vector.shape_cast %63 : vector<1x128x128xbf16> to vector<128x128xbf16>
    %cst_19 = arith.constant dense<0.000000e+00> : vector<128x128xf32>
    %65 = tpu.matmul %62, %64, %cst_19 {dimension_numbers = #tpu.dot_dimension_numbers<[1], [0], [0], [1], [0, 0, 1, 1], [], []>} : vector<128x128xbf16>, vector<128x128xbf16>, vector<128x128xf32> -> vector<128x128xf32>
    %c0_20 = arith.constant 0 : index
    %c0_21 = arith.constant 0 : index
    %c0_22 = arith.constant 0 : index
    %66 = vector.load %arg7[%c0_20, %c0_21, %c0_22] : memref<1x1x128xf32, #tpu.memory_space<vmem>>, vector<1x1x128xf32>
    %67 = vector.shape_cast %66 : vector<1x1x128xf32> to vector<1x128xf32>
    %68 = vector.broadcast %67 : vector<1x128xf32> to vector<128x128xf32>
    %69 = arith.addf %65, %68 : vector<128x128xf32>
    %70 = arith.addf %4, %69 : vector<128x128xf32>
    %c0_23 = arith.constant 0 : index
    %c0_24 = arith.constant 0 : index
    %c0_25 = arith.constant 0 : index
    %71 = vector.load %arg8[%c0_23, %c0_24, %c0_25] : memref<1x1x128xf32, #tpu.memory_space<vmem>>, vector<1x1x128xf32>
    %72 = vector.shape_cast %71 : vector<1x1x128xf32> to vector<1x128xf32>
    %c0_26 = arith.constant 0 : index
    %c0_27 = arith.constant 0 : index
    %c0_28 = arith.constant 0 : index
    %73 = vector.load %arg9[%c0_26, %c0_27, %c0_28] : memref<1x1x128xf32, #tpu.memory_space<vmem>>, vector<1x1x128xf32>
    %74 = vector.shape_cast %73 : vector<1x1x128xf32> to vector<1x128xf32>
    %cst_29 = arith.constant dense<0.000000e+00> : vector<128xf32>
    %75 = vector.multi_reduction <add>, %70, %cst_29 [1] : vector<128x128xf32> to vector<128xf32>
    %76 = vector.shape_cast %75 : vector<128xf32> to vector<128x1xf32>
    %cst_30 = arith.constant 1.280000e+02 : f32
    %77 = vector.broadcast %cst_30 : f32 to vector<128x1xf32>
    %78 = arith.divf %76, %77 : vector<128x1xf32>
    %79 = vector.broadcast %78 : vector<128x1xf32> to vector<128x128xf32>
    %80 = arith.subf %70, %79 : vector<128x128xf32>
    %81 = arith.mulf %80, %80 : vector<128x128xf32>
    %cst_31 = arith.constant dense<0.000000e+00> : vector<128xf32>
    %82 = vector.multi_reduction <add>, %81, %cst_31 [1] : vector<128x128xf32> to vector<128xf32>
    %83 = vector.shape_cast %82 : vector<128xf32> to vector<128x1xf32>
    %cst_32 = arith.constant 1.280000e+02 : f32
    %84 = vector.broadcast %cst_32 : f32 to vector<128x1xf32>
    %85 = arith.divf %83, %84 : vector<128x1xf32>
    %86 = vector.broadcast %78 : vector<128x1xf32> to vector<128x128xf32>
    %87 = arith.subf %70, %86 : vector<128x128xf32>
    %cst_33 = arith.constant 9.99999974E-6 : f32
    %88 = vector.broadcast %cst_33 : f32 to vector<128x1xf32>
    %89 = arith.addf %85, %88 : vector<128x1xf32>
    %90 = math.rsqrt %89 : vector<128x1xf32>
    %91 = vector.broadcast %90 : vector<128x1xf32> to vector<128x128xf32>
    %92 = arith.mulf %87, %91 : vector<128x128xf32>
    %93 = vector.broadcast %72 : vector<1x128xf32> to vector<128x128xf32>
    %94 = arith.mulf %92, %93 : vector<128x128xf32>
    %95 = vector.broadcast %74 : vector<1x128xf32> to vector<128x128xf32>
    %96 = arith.addf %94, %95 : vector<128x128xf32>
    %97 = arith.truncf %96 : vector<128x128xf32> to vector<128x128xbf16>
    %c0_34 = arith.constant 0 : index
    %c0_35 = arith.constant 0 : index
    %c0_36 = arith.constant 0 : index
    %98 = vector.load %arg10[%c0_34, %c0_35, %c0_36] : memref<1x128x256xbf16, #tpu.memory_space<vmem>>, vector<1x128x256xbf16>
    %99 = vector.shape_cast %98 : vector<1x128x256xbf16> to vector<128x256xbf16>
    %cst_37 = arith.constant dense<0.000000e+00> : vector<128x256xf32>
    %100 = tpu.matmul %97, %99, %cst_37 {dimension_numbers = #tpu.dot_dimension_numbers<[1], [0], [0], [1], [0, 0, 1, 1], [], []>} : vector<128x128xbf16>, vector<128x256xbf16>, vector<128x256xf32> -> vector<128x256xf32>
    %c0_38 = arith.constant 0 : index
    %c0_39 = arith.constant 0 : index
    %c0_40 = arith.constant 0 : index
    %101 = vector.load %arg11[%c0_38, %c0_39, %c0_40] : memref<1x1x256xf32, #tpu.memory_space<vmem>>, vector<1x1x256xf32>
    %102 = vector.shape_cast %101 : vector<1x1x256xf32> to vector<1x256xf32>
    %103 = vector.broadcast %102 : vector<1x256xf32> to vector<128x256xf32>
    %104 = arith.addf %100, %103 : vector<128x256xf32>
    %cst_41 = arith.constant 5.000000e-01 : f32
    %105 = vector.broadcast %cst_41 : f32 to vector<128x256xf32>
    %106 = arith.mulf %105, %104 : vector<128x256xf32>
    %cst_42 = arith.constant 0.707106769 : f32
    %107 = vector.broadcast %cst_42 : f32 to vector<128x256xf32>
    %108 = arith.mulf %104, %107 : vector<128x256xf32>
    %109 = math.absf %108 : vector<128x256xf32>
    %cst_43 = arith.constant 0.327591091 : f32
    %110 = vector.broadcast %cst_43 : f32 to vector<128x256xf32>
    %111 = arith.mulf %110, %109 : vector<128x256xf32>
    %cst_44 = arith.constant 1.000000e+00 : f32
    %112 = vector.broadcast %cst_44 : f32 to vector<128x256xf32>
    %113 = arith.addf %112, %111 : vector<128x256xf32>
    %cst_45 = arith.constant 1.000000e+00 : f32
    %114 = vector.broadcast %cst_45 : f32 to vector<128x256xf32>
    %115 = arith.divf %114, %113 : vector<128x256xf32>
    %cst_46 = arith.constant 1.06140542 : f32
    %116 = vector.broadcast %cst_46 : f32 to vector<128x256xf32>
    %117 = arith.mulf %116, %115 : vector<128x256xf32>
    %cst_47 = arith.constant -1.45315206 : f32
    %118 = vector.broadcast %cst_47 : f32 to vector<128x256xf32>
    %119 = arith.addf %117, %118 : vector<128x256xf32>
    %120 = arith.mulf %119, %115 : vector<128x256xf32>
    %cst_48 = arith.constant 1.42141378 : f32
    %121 = vector.broadcast %cst_48 : f32 to vector<128x256xf32>
    %122 = arith.addf %120, %121 : vector<128x256xf32>
    %123 = arith.mulf %122, %115 : vector<128x256xf32>
    %cst_49 = arith.constant -0.284496725 : f32
    %124 = vector.broadcast %cst_49 : f32 to vector<128x256xf32>
    %125 = arith.addf %123, %124 : vector<128x256xf32>
    %126 = arith.mulf %125, %115 : vector<128x256xf32>
    %cst_50 = arith.constant 0.254829586 : f32
    %127 = vector.broadcast %cst_50 : f32 to vector<128x256xf32>
    %128 = arith.addf %126, %127 : vector<128x256xf32>
    %129 = arith.mulf %128, %115 : vector<128x256xf32>
    %cst_51 = arith.constant 0.000000e+00 : f32
    %130 = vector.broadcast %cst_51 : f32 to vector<128x256xf32>
    %131 = arith.subf %130, %109 : vector<128x256xf32>
    %132 = arith.mulf %131, %109 : vector<128x256xf32>
    %133 = math.exp %132 : vector<128x256xf32>
    %134 = arith.mulf %129, %133 : vector<128x256xf32>
    %cst_52 = arith.constant 1.000000e+00 : f32
    %135 = vector.broadcast %cst_52 : f32 to vector<128x256xf32>
    %136 = arith.subf %135, %134 : vector<128x256xf32>
    %cst_53 = arith.constant 0.000000e+00 : f32
    %137 = vector.broadcast %cst_53 : f32 to vector<128x256xf32>
    %138 = arith.cmpf oge, %108, %137 : vector<128x256xf32>
    %cst_54 = arith.constant 0.000000e+00 : f32
    %139 = vector.broadcast %cst_54 : f32 to vector<128x256xf32>
    %140 = arith.subf %139, %136 : vector<128x256xf32>
    %141 = arith.select %138, %136, %140 : vector<128x256xi1>, vector<128x256xf32>
    %cst_55 = arith.constant 1.000000e+00 : f32
    %142 = vector.broadcast %cst_55 : f32 to vector<128x256xf32>
    %143 = arith.addf %142, %141 : vector<128x256xf32>
    %144 = arith.mulf %106, %143 : vector<128x256xf32>
    %145 = arith.truncf %144 : vector<128x256xf32> to vector<128x256xbf16>
    %c0_56 = arith.constant 0 : index
    %c0_57 = arith.constant 0 : index
    %c0_58 = arith.constant 0 : index
    %146 = vector.load %arg12[%c0_56, %c0_57, %c0_58] : memref<1x256x128xbf16, #tpu.memory_space<vmem>>, vector<1x256x128xbf16>
    %147 = vector.shape_cast %146 : vector<1x256x128xbf16> to vector<256x128xbf16>
    %cst_59 = arith.constant dense<0.000000e+00> : vector<128x128xf32>
    %148 = tpu.matmul %145, %147, %cst_59 {dimension_numbers = #tpu.dot_dimension_numbers<[1], [0], [0], [1], [0, 0, 1, 1], [], []>} : vector<128x256xbf16>, vector<256x128xbf16>, vector<128x128xf32> -> vector<128x128xf32>
    %c0_60 = arith.constant 0 : index
    %c0_61 = arith.constant 0 : index
    %c0_62 = arith.constant 0 : index
    %149 = vector.load %arg13[%c0_60, %c0_61, %c0_62] : memref<1x1x128xf32, #tpu.memory_space<vmem>>, vector<1x1x128xf32>
    %150 = vector.shape_cast %149 : vector<1x1x128xf32> to vector<1x128xf32>
    %151 = vector.broadcast %150 : vector<1x128xf32> to vector<128x128xf32>
    %152 = arith.addf %148, %151 : vector<128x128xf32>
    %153 = arith.addf %96, %152 : vector<128x128xf32>
    %c0_63 = arith.constant 0 : index
    %c0_64 = arith.constant 0 : index
    %c0_65 = arith.constant 0 : index
    %154 = vector.load %arg14[%c0_63, %c0_64, %c0_65] : memref<1x1x128xf32, #tpu.memory_space<vmem>>, vector<1x1x128xf32>
    %155 = vector.shape_cast %154 : vector<1x1x128xf32> to vector<1x128xf32>
    %c0_66 = arith.constant 0 : index
    %c0_67 = arith.constant 0 : index
    %c0_68 = arith.constant 0 : index
    %156 = vector.load %arg15[%c0_66, %c0_67, %c0_68] : memref<1x1x128xf32, #tpu.memory_space<vmem>>, vector<1x1x128xf32>
    %157 = vector.shape_cast %156 : vector<1x1x128xf32> to vector<1x128xf32>
    %cst_69 = arith.constant dense<0.000000e+00> : vector<128xf32>
    %158 = vector.multi_reduction <add>, %153, %cst_69 [1] : vector<128x128xf32> to vector<128xf32>
    %159 = vector.shape_cast %158 : vector<128xf32> to vector<128x1xf32>
    %cst_70 = arith.constant 1.280000e+02 : f32
    %160 = vector.broadcast %cst_70 : f32 to vector<128x1xf32>
    %161 = arith.divf %159, %160 : vector<128x1xf32>
    %162 = vector.broadcast %161 : vector<128x1xf32> to vector<128x128xf32>
    %163 = arith.subf %153, %162 : vector<128x128xf32>
    %164 = arith.mulf %163, %163 : vector<128x128xf32>
    %cst_71 = arith.constant dense<0.000000e+00> : vector<128xf32>
    %165 = vector.multi_reduction <add>, %164, %cst_71 [1] : vector<128x128xf32> to vector<128xf32>
    %166 = vector.shape_cast %165 : vector<128xf32> to vector<128x1xf32>
    %cst_72 = arith.constant 1.280000e+02 : f32
    %167 = vector.broadcast %cst_72 : f32 to vector<128x1xf32>
    %168 = arith.divf %166, %167 : vector<128x1xf32>
    %169 = vector.broadcast %161 : vector<128x1xf32> to vector<128x128xf32>
    %170 = arith.subf %153, %169 : vector<128x128xf32>
    %cst_73 = arith.constant 9.99999974E-6 : f32
    %171 = vector.broadcast %cst_73 : f32 to vector<128x1xf32>
    %172 = arith.addf %168, %171 : vector<128x1xf32>
    %173 = math.rsqrt %172 : vector<128x1xf32>
    %174 = vector.broadcast %173 : vector<128x1xf32> to vector<128x128xf32>
    %175 = arith.mulf %170, %174 : vector<128x128xf32>
    %176 = vector.broadcast %155 : vector<1x128xf32> to vector<128x128xf32>
    %177 = arith.mulf %175, %176 : vector<128x128xf32>
    %178 = vector.broadcast %157 : vector<1x128xf32> to vector<128x128xf32>
    %179 = arith.addf %177, %178 : vector<128x128xf32>
    %180 = vector.shape_cast %179 : vector<128x128xf32> to vector<8x16x128xf32>
    %c0_74 = arith.constant 0 : index
    %c0_75 = arith.constant 0 : index
    %c0_76 = arith.constant 0 : index
    %181 = vector.load %arg17[%c0_74, %c0_75, %c0_76] : memref<8x16x128xf32, #tpu.memory_space<vmem>>, vector<8x16x128xf32>
    tpu.vector_store %arg17[%c0_74, %c0_75, %c0_76], %180 {strides = array<i32>} : memref<8x16x128xf32, #tpu.memory_space<vmem>>, vector<8x16x128xf32>,
    %c1_i32 = arith.constant 1 : i32
    %182 = arith.cmpi eq, %arg1, %c1_i32 : i32
    %183 = arith.extui %182 : i1 to i32
    %c0_i32_77 = arith.constant 0 : i32
    %184 = arith.cmpi ne, %183, %c0_i32_77 : i32
    scf.if %184 {
      %c0_78 = arith.constant 0 : index
      %c0_79 = arith.constant 0 : index
      %c0_80 = arith.constant 0 : index
      %185 = vector.load %arg17[%c0_78, %c0_79, %c0_80] : memref<8x16x128xf32, #tpu.memory_space<vmem>>, vector<8x16x128xf32>
      %186 = arith.truncf %185 : vector<8x16x128xf32> to vector<8x16x128xbf16>
      %c0_81 = arith.constant 0 : index
      %c0_82 = arith.constant 0 : index
      %c0_83 = arith.constant 0 : index
      %187 = vector.load %arg16[%c0_81, %c0_82, %c0_83] : memref<8x16x128xbf16, #tpu.memory_space<vmem>>, vector<8x16x128xbf16>
      tpu.vector_store %arg16[%c0_81, %c0_82, %c0_83], %186 {strides = array<i32>} : memref<8x16x128xbf16, #tpu.memory_space<vmem>>, vector<8x16x128xbf16>,
    } else {
    }
    return
  }
  func.func @transform_0(%arg0: i32, %arg1: i32) -> (i32, i32, i32) {
    %c0_i32 = arith.constant 0 : i32
    %c0_i32_0 = arith.constant 0 : i32
    %c0_i32_1 = arith.constant 0 : i32
    return %arg0, %c0_i32, %c0_i32_0 : i32, i32, i32
  }
  func.func @transform_1(%arg0: i32, %arg1: i32) -> (i32, i32) {
    %c0_i32 = arith.constant 0 : i32
    %c0_i32_0 = arith.constant 0 : i32
    %c0_i32_1 = arith.constant 0 : i32
    return %c0_i32, %c0_i32_0 : i32, i32
  }
  func.func @transform_2(%arg0: i32, %arg1: i32) -> (i32, i32, i32) {
    %c0_i32 = arith.constant 0 : i32
    %c0_i32_0 = arith.constant 0 : i32
    %c0_i32_1 = arith.constant 0 : i32
    return %arg1, %c0_i32, %c0_i32_0 : i32, i32, i32
  }
  func.func @transform_3(%arg0: i32, %arg1: i32) -> (i32, i32, i32) {
    %c0_i32 = arith.constant 0 : i32
    %c0_i32_0 = arith.constant 0 : i32
    %c0_i32_1 = arith.constant 0 : i32
    return %arg1, %c0_i32, %c0_i32_0 : i32, i32, i32
  }
  func.func @transform_4(%arg0: i32, %arg1: i32) -> (i32, i32, i32) {
    %c0_i32 = arith.constant 0 : i32
    %c0_i32_0 = arith.constant 0 : i32
    %c0_i32_1 = arith.constant 0 : i32
    return %arg1, %c0_i32, %c0_i32_0 : i32, i32, i32
  }
  func.func @transform_5(%arg0: i32, %arg1: i32) -> (i32, i32, i32) {
    %c0_i32 = arith.constant 0 : i32
    %c0_i32_0 = arith.constant 0 : i32
    %c0_i32_1 = arith.constant 0 : i32
    return %arg1, %c0_i32, %c0_i32_0 : i32, i32, i32
  }
  func.func @transform_6(%arg0: i32, %arg1: i32) -> (i32, i32, i32) {
    %c0_i32 = arith.constant 0 : i32
    %c0_i32_0 = arith.constant 0 : i32
    %c0_i32_1 = arith.constant 0 : i32
    return %arg1, %c0_i32, %c0_i32_0 : i32, i32, i32
  }
  func.func @transform_7(%arg0: i32, %arg1: i32) -> (i32, i32, i32) {
    %c0_i32 = arith.constant 0 : i32
    %c0_i32_0 = arith.constant 0 : i32
    %c0_i32_1 = arith.constant 0 : i32
    return %arg1, %c0_i32, %c0_i32_0 : i32, i32, i32
  }
  func.func @transform_8(%arg0: i32, %arg1: i32) -> (i32, i32, i32) {
    %c0_i32 = arith.constant 0 : i32
    %c0_i32_0 = arith.constant 0 : i32
    %c0_i32_1 = arith.constant 0 : i32
    return %arg1, %c0_i32, %c0_i32_0 : i32, i32, i32
  }
  func.func @transform_9(%arg0: i32, %arg1: i32) -> (i32, i32, i32) {
    %c0_i32 = arith.constant 0 : i32
    %c0_i32_0 = arith.constant 0 : i32
    %c0_i32_1 = arith.constant 0 : i32
    return %arg1, %c0_i32, %c0_i32_0 : i32, i32, i32
  }
  func.func @transform_10(%arg0: i32, %arg1: i32) -> (i32, i32, i32) {
    %c0_i32 = arith.constant 0 : i32
    %c0_i32_0 = arith.constant 0 : i32
    %c0_i32_1 = arith.constant 0 : i32
    return %arg1, %c0_i32, %c0_i32_0 : i32, i32, i32
  }
  func.func @transform_11(%arg0: i32, %arg1: i32) -> (i32, i32, i32) {
    %c0_i32 = arith.constant 0 : i32
    %c0_i32_0 = arith.constant 0 : i32
    %c0_i32_1 = arith.constant 0 : i32
    return %arg1, %c0_i32, %c0_i32_0 : i32, i32, i32
  }
  func.func @transform_12(%arg0: i32, %arg1: i32) -> (i32, i32, i32) {
    %c0_i32 = arith.constant 0 : i32
    %c0_i32_0 = arith.constant 0 : i32
    %c0_i32_1 = arith.constant 0 : i32
    return %arg1, %c0_i32, %c0_i32_0 : i32, i32, i32
  }
  func.func @transform_13(%arg0: i32, %arg1: i32) -> (i32, i32, i32) {
    %c0_i32 = arith.constant 0 : i32
    %c0_i32_0 = arith.constant 0 : i32
    %c0_i32_1 = arith.constant 0 : i32
    return %arg1, %c0_i32, %c0_i32_0 : i32, i32, i32
  }
  func.func @transform_14(%arg0: i32, %arg1: i32) -> (i32, i32, i32) {
    %c0_i32 = arith.constant 0 : i32
    %c0_i32_0 = arith.constant 0 : i32
    %c0_i32_1 = arith.constant 0 : i32
    return %arg0, %c0_i32, %c0_i32_0 : i32, i32, i32
  }
}

</mosaic_0001>

<llo_original>
// kernel: gpt_forward.3
$region0: #{gpt_forward.3}
  #allocation0 [shape = 'u32[]', space=smem, size = 0x4, offset = 0x4, fixed_abs, tag = 'smem constant byte address 0x4 - core index']
  #allocation1 [shape = 'u32[144,128]{1,0:T(1,128)}', space=vmem, size = 0x12000, scoped, tag = 'internal scratch']
  #allocation2 [shape = 'bf16[256,128]{1,0:T(16,128)(2,1)}', space=vmem, size = 0x10000, scoped, tag = 'scratch operand']
  %s0 = inlined_call_operand.hbm [shape: bf16[256,128], index: 0, kind: input, shape index: {}]
  %s1 = inlined_call_operand.hbm [shape: f32[1,128], index: 1, kind: input, shape index: {}]
  %s2 = inlined_call_operand.hbm [shape: f32[1,128], index: 2, kind: input, shape index: {}]
  %s3 = inlined_call_operand.hbm [shape: bf16[128,512], index: 3, kind: input, shape index: {}]
  %s4 = inlined_call_operand.hbm [shape: f32[256,512], index: 4, kind: output, shape index: {}]
  %s5 = sld [smem:[#allocation0]]
  $region46: #{gpt_forward.3} parent=0
    _
  %s7 = ssub.s32 1, %s5
  %s8 = scalar_select 0, %s7, %s5
  $region1: #{gpt_forward.3} parent=0
    #allocation3 [shape = 'u8[65536]{0}', space=vmem, size = 0x10000, scoped, tag = 'input window, operand 0, single buffered']
    #allocation4 [shape = 's32[1]{0}', space=sflag, size = 0x4, scoped, tag = 'scoped memory for gpt_forward.3']
    #allocation5 [shape = 's32[1]{0}', space=sflag, size = 0x4, scoped, tag = 'scoped memory for gpt_forward.3']
    #allocation6 [shape = 'u8[512]{0}', space=vmem, size = 0x400, scoped, tag = 'input window, operand 1, single buffered']
    #allocation7 [shape = 's32[1]{0}', space=sflag, size = 0x4, scoped, tag = 'scoped memory for gpt_forward.3']
    #allocation8 [shape = 'u8[512]{0}', space=vmem, size = 0x400, scoped, tag = 'input window, operand 2, single buffered']
    #allocation9 [shape = 'u8[131072]{0}', space=vmem, size = 0x20000, scoped, tag = 'input window, operand 3, single buffered']
    #allocation10 [shape = 's32[1]{0}', space=sflag, size = 0x4, scoped, tag = 'scoped memory for gpt_forward.3']
    #allocation11 [shape = 'u8[524288]{0}', space=vmem, size = 0x80000, scoped, tag = 'output window, operand 0, single buffered']
    %9 = vsyncpa [#allocation4], 0
    %10 = vsyncpa [#allocation7], 0
    %11 = vsyncpa [#allocation10], 0
    %12 = vsyncpa [#allocation5], 0
    // Predicated region
    $region2: #{gpt_forward.3} parent=1 // pred_check
      _
    $region3: #{gpt_forward.3} parent=1 // pred_check_branch
      %14 = sbr.rel (0) target = $region5
    $region4: #{gpt_forward.3} parent=1 // pred_region
      %s16 = ssub.s32 2048, 2048
      %17 = vsyncadd [#allocation4], %s16
      %s18 = sshll.u32 [#allocation3], 4
      %s19 = int_to_ptr.vmem [resolvable:$true] %s18
      %24 = dma.hbm_to_vmem [thread:$0]  %s0, 2048, %s19, [#allocation4], 64, 64, 4
    $region5: #{gpt_forward.3} parent=1 // pred_fallthru
      _
    // Predicated region
    $region6: #{gpt_forward.3} parent=1 // pred_check
      _
    $region7: #{gpt_forward.3} parent=1 // pred_check_branch
      %26 = sbr.rel (0) target = $region9
    $region8: #{gpt_forward.3} parent=1 // pred_region
      %s28 = ssub.s32 16, 16
      %29 = vsyncadd [#allocation7], %s28
      %s31 = sshll.u32 [#allocation6], 4
      %s32 = int_to_ptr.vmem [resolvable:$true] %s31
      %34 = dma.hbm_to_vmem [thread:$0]  %s1, 16, %s32, [#allocation7]
    $region9: #{gpt_forward.3} parent=1 // pred_fallthru
      _
    // Predicated region
    $region10: #{gpt_forward.3} parent=1 // pred_check
      _
    $region11: #{gpt_forward.3} parent=1 // pred_check_branch
      %36 = sbr.rel (0) target = $region13
    $region12: #{gpt_forward.3} parent=1 // pred_region
      %s38 = ssub.s32 16, 16
      %39 = vsyncadd [#allocation7], %s38
      %s41 = sshll.u32 [#allocation8], 4
      %s42 = int_to_ptr.vmem [resolvable:$true] %s41
      %44 = dma.hbm_to_vmem [thread:$0]  %s2, 16, %s42, [#allocation7]
    $region13: #{gpt_forward.3} parent=1 // pred_fallthru
      _
    // Predicated region
    $region14: #{gpt_forward.3} parent=1 // pred_check
      _
    $region15: #{gpt_forward.3} parent=1 // pred_check_branch
      %46 = sbr.rel (0) target = $region17
    $region16: #{gpt_forward.3} parent=1 // pred_region
      %s48 = ssub.s32 4096, 4096
      %49 = vsyncadd [#allocation10], %s48
      %s50 = sshll.u32 [#allocation9], 4
      %s51 = int_to_ptr.vmem [resolvable:$true] %s50
      %56 = dma.hbm_to_vmem [thread:$0]  %s3, 4096, %s51, [#allocation10], 256, 256, 16
    $region17: #{gpt_forward.3} parent=1 // pred_fallthru
      _
    // Predicated region
    $region18: #{gpt_forward.3} parent=1 // pred_check
      _
    $region19: #{gpt_forward.3} parent=1 // pred_check_branch
      %58 = sbr.rel (0) target = $region21
    $region20: #{gpt_forward.3} parent=1 // pred_region
      %59 = dma.done [#allocation4], 2048
    $region21: #{gpt_forward.3} parent=1 // pred_fallthru
      _
    // Predicated region
    $region22: #{gpt_forward.3} parent=1 // pred_check
      _
    $region23: #{gpt_forward.3} parent=1 // pred_check_branch
      %61 = sbr.rel (0) target = $region25
    $region24: #{gpt_forward.3} parent=1 // pred_region
      %62 = dma.done [#allocation7], 16
    $region25: #{gpt_forward.3} parent=1 // pred_fallthru
      _
    // Predicated region
    $region26: #{gpt_forward.3} parent=1 // pred_check
      _
    $region27: #{gpt_forward.3} parent=1 // pred_check_branch
      %64 = sbr.rel (0) target = $region29
    $region28: #{gpt_forward.3} parent=1 // pred_region
      %65 = dma.done [#allocation7], 16
    $region29: #{gpt_forward.3} parent=1 // pred_fallthru
      _
    // Predicated region
    $region30: #{gpt_forward.3} parent=1 // pred_check
      _
    $region31: #{gpt_forward.3} parent=1 // pred_check_branch
      %67 = sbr.rel (0) target = $region33
    $region32: #{gpt_forward.3} parent=1 // pred_region
      %68 = dma.done [#allocation10], 4096
    $region33: #{gpt_forward.3} parent=1 // pred_fallthru
      _
    %p70 = scmp.eq.s32.totalorder 0, 0
    // Predicated region
    $region34: #{gpt_forward.3} parent=1 // pred_check
      %p71 = pneg %p70
    $region35: #{gpt_forward.3} parent=1 // pred_check_branch
      %73 = sbr.rel (%p71) target = $region37
    $region36: #{gpt_forward.3} parent=1 // pred_region
      %v74 = vld [vmem:[#allocation3] sm:$0xf]
      %v75 = vld [vmem:[#allocation3 + $0x4] sm:$0xf]
      %v76 = vld [vmem:[#allocation3 + $0x8] sm:$0xf]
      %v77 = vld [vmem:[#allocation3 + $0xc] sm:$0xf]
      %v78 = vld [vmem:[#allocation3 + $0x10] sm:$0xf]
      %v79 = vld [vmem:[#allocation3 + $0x14] sm:$0xf]
      %v80 = vld [vmem:[#allocation3 + $0x18] sm:$0xf]
      %v81 = vld [vmem:[#allocation3 + $0x1c] sm:$0xf]
      %v82 = vld [vmem:[#allocation3 + $0x20] sm:$0xf]
      %v83 = vld [vmem:[#allocation3 + $0x24] sm:$0xf]
      %v84 = vld [vmem:[#allocation3 + $0x28] sm:$0xf]
      %v85 = vld [vmem:[#allocation3 + $0x2c] sm:$0xf]
      %v86 = vld [vmem:[#allocation3 + $0x30] sm:$0xf]
      %v87 = vld [vmem:[#allocation3 + $0x34] sm:$0xf]
      %v88 = vld [vmem:[#allocation3 + $0x38] sm:$0xf]
      %v89 = vld [vmem:[#allocation3 + $0x3c] sm:$0xf]
      %v90 = vld [vmem:[#allocation3 + $0x40] sm:$0xf]
      %v91 = vld [vmem:[#allocation3 + $0x44] sm:$0xf]
      %v92 = vld [vmem:[#allocation3 + $0x48] sm:$0xf]
      %v93 = vld [vmem:[#allocation3 + $0x4c] sm:$0xf]
      %v94 = vld [vmem:[#allocation3 + $0x50] sm:$0xf]
      %v95 = vld [vmem:[#allocation3 + $0x54] sm:$0xf]
      %v96 = vld [vmem:[#allocation3 + $0x58] sm:$0xf]
      %v97 = vld [vmem:[#allocation3 + $0x5c] sm:$0xf]
      %v98 = vld [vmem:[#allocation3 + $0x60] sm:$0xf]
      %v99 = vld [vmem:[#allocation3 + $0x64] sm:$0xf]
      %v100 = vld [vmem:[#allocation3 + $0x68] sm:$0xf]
      %v101 = vld [vmem:[#allocation3 + $0x6c] sm:$0xf]
      %v102 = vld [vmem:[#allocation3 + $0x70] sm:$0xf]
      %v103 = vld [vmem:[#allocation3 + $0x74] sm:$0xf]
      %v104 = vld [vmem:[#allocation3 + $0x78] sm:$0xf]
      %v105 = vld [vmem:[#allocation3 + $0x7c] sm:$0xf]
      %v106 = vunpack.c.l.bf16 %v74
      %v107 = vunpack.c.l.bf16 %v75
      %v108 = vunpack.c.l.bf16 %v76
      %v109 = vunpack.c.l.bf16 %v77
      %v110 = vunpack.c.l.bf16 %v78
      %v111 = vunpack.c.l.bf16 %v79
      %v112 = vunpack.c.l.bf16 %v80
      %v113 = vunpack.c.l.bf16 %v81
      %v114 = vunpack.c.l.bf16 %v82
      %v115 = vunpack.c.l.bf16 %v83
      %v116 = vunpack.c.l.bf16 %v84
      %v117 = vunpack.c.l.bf16 %v85
      %v118 = vunpack.c.l.bf16 %v86
      %v119 = vunpack.c.l.bf16 %v87
      %v120 = vunpack.c.l.bf16 %v88
      %v121 = vunpack.c.l.bf16 %v89
      %v122 = vunpack.c.l.bf16 %v90
      %v123 = vunpack.c.l.bf16 %v91
      %v124 = vunpack.c.l.bf16 %v92
      %v125 = vunpack.c.l.bf16 %v93
      %v126 = vunpack.c.l.bf16 %v94
      %v127 = vunpack.c.l.bf16 %v95
      %v128 = vunpack.c.l.bf16 %v96
      %v129 = vunpack.c.l.bf16 %v97
      %v130 = vunpack.c.l.bf16 %v98
      %v131 = vunpack.c.l.bf16 %v99
      %v132 = vunpack.c.l.bf16 %v100
      %v133 = vunpack.c.l.bf16 %v101
      %v134 = vunpack.c.l.bf16 %v102
      %v135 = vunpack.c.l.bf16 %v103
      %v136 = vunpack.c.l.bf16 %v104
      %v137 = vunpack.c.l.bf16 %v105
      %v138 = vld [vmem:[#allocation6] sm:$0x1]
      %v139 = vld [vmem:[#allocation8] sm:$0x1]
      %140 = vadd.xlane.f32.xlu0 %v106
      %v141 = vpop.xlane.xlu0 %140
      %142 = vadd.xlane.f32.xlu0 %v107
      %v143 = vpop.xlane.xlu0 %142
      %144 = vadd.xlane.f32.xlu0 %v108
      %v145 = vpop.xlane.xlu0 %144
      %146 = vadd.xlane.f32.xlu0 %v109
      %v147 = vpop.xlane.xlu0 %146
      %148 = vadd.xlane.f32.xlu0 %v110
      %v149 = vpop.xlane.xlu0 %148
      %150 = vadd.xlane.f32.xlu0 %v111
      %v151 = vpop.xlane.xlu0 %150
      %152 = vadd.xlane.f32.xlu0 %v112
      %v153 = vpop.xlane.xlu0 %152
      %154 = vadd.xlane.f32.xlu0 %v113
      %v155 = vpop.xlane.xlu0 %154
      %156 = vadd.xlane.f32.xlu0 %v114
      %v157 = vpop.xlane.xlu0 %156
      %158 = vadd.xlane.f32.xlu0 %v115
      %v159 = vpop.xlane.xlu0 %158
      %160 = vadd.xlane.f32.xlu0 %v116
      %v161 = vpop.xlane.xlu0 %160
      %162 = vadd.xlane.f32.xlu0 %v117
      %v163 = vpop.xlane.xlu0 %162
      %164 = vadd.xlane.f32.xlu0 %v118
      %v165 = vpop.xlane.xlu0 %164
      %166 = vadd.xlane.f32.xlu0 %v119
      %v167 = vpop.xlane.xlu0 %166
      %168 = vadd.xlane.f32.xlu0 %v120
      %v169 = vpop.xlane.xlu0 %168
      %170 = vadd.xlane.f32.xlu0 %v121
      %v171 = vpop.xlane.xlu0 %170
      %172 = vadd.xlane.f32.xlu0 %v122
      %v173 = vpop.xlane.xlu0 %172
      %174 = vadd.xlane.f32.xlu0 %v123
      %v175 = vpop.xlane.xlu0 %174
      %176 = vadd.xlane.f32.xlu0 %v124
      %v177 = vpop.xlane.xlu0 %176
      %178 = vadd.xlane.f32.xlu0 %v125
      %v179 = vpop.xlane.xlu0 %178
      %180 = vadd.xlane.f32.xlu0 %v126
      %v181 = vpop.xlane.xlu0 %180
      %182 = vadd.xlane.f32.xlu0 %v127
      %v183 = vpop.xlane.xlu0 %182
      %184 = vadd.xlane.f32.xlu0 %v128
      %v185 = vpop.xlane.xlu0 %184
      %186 = vadd.xlane.f32.xlu0 %v129
      %v187 = vpop.xlane.xlu0 %186
      %188 = vadd.xlane.f32.xlu0 %v130
      %v189 = vpop.xlane.xlu0 %188
      %190 = vadd.xlane.f32.xlu0 %v131
      %v191 = vpop.xlane.xlu0 %190
      %192 = vadd.xlane.f32.xlu0 %v132
      %v193 = vpop.xlane.xlu0 %192
      %194 = vadd.xlane.f32.xlu0 %v133
      %v195 = vpop.xlane.xlu0 %194
      %196 = vadd.xlane.f32.xlu0 %v134
      %v197 = vpop.xlane.xlu0 %196
      %198 = vadd.xlane.f32.xlu0 %v135
      %v199 = vpop.xlane.xlu0 %198
      %200 = vadd.xlane.f32.xlu0 %v136
      %v201 = vpop.xlane.xlu0 %200
      %202 = vadd.xlane.f32.xlu0 %v137
      %v203 = vpop.xlane.xlu0 %202
      %v204 = vrcp.pop 128.0
      %v205 = vmul.f32 %v141, %v204
      %v206 = vmul.f32 %v143, %v204
      %v207 = vmul.f32 %v145, %v204
      %v208 = vmul.f32 %v147, %v204
      %v209 = vmul.f32 %v149, %v204
      %v210 = vmul.f32 %v151, %v204
      %v211 = vmul.f32 %v153, %v204
      %v212 = vmul.f32 %v155, %v204
      %v213 = vmul.f32 %v157, %v204
      %v214 = vmul.f32 %v159, %v204
      %v215 = vmul.f32 %v161, %v204
      %v216 = vmul.f32 %v163, %v204
      %v217 = vmul.f32 %v165, %v204
      %v218 = vmul.f32 %v167, %v204
      %v219 = vmul.f32 %v169, %v204
      %v220 = vmul.f32 %v171, %v204
      %v221 = vmul.f32 %v173, %v204
      %v222 = vmul.f32 %v175, %v204
      %v223 = vmul.f32 %v177, %v204
      %v224 = vmul.f32 %v179, %v204
      %v225 = vmul.f32 %v181, %v204
      %v226 = vmul.f32 %v183, %v204
      %v227 = vmul.f32 %v185, %v204
      %v228 = vmul.f32 %v187, %v204
      %v229 = vmul.f32 %v189, %v204
      %v230 = vmul.f32 %v191, %v204
      %v231 = vmul.f32 %v193, %v204
      %v232 = vmul.f32 %v195, %v204
      %v233 = vmul.f32 %v197, %v204
      %v234 = vmul.f32 %v199, %v204
      %v235 = vmul.f32 %v201, %v204
      %v236 = vmul.f32 %v203, %v204
      %v237 = vsub.f32 %v106, %v205
      %v238 = vsub.f32 %v107, %v206
      %v239 = vsub.f32 %v108, %v207
      %v240 = vsub.f32 %v109, %v208
      %v241 = vsub.f32 %v110, %v209
      %v242 = vsub.f32 %v111, %v210
      %v243 = vsub.f32 %v112, %v211
      %v244 = vsub.f32 %v113, %v212
      %v245 = vsub.f32 %v114, %v213
      %v246 = vsub.f32 %v115, %v214
      %v247 = vsub.f32 %v116, %v215
      %v248 = vsub.f32 %v117, %v216
      %v249 = vsub.f32 %v118, %v217
      %v250 = vsub.f32 %v119, %v218
      %v251 = vsub.f32 %v120, %v219
      %v252 = vsub.f32 %v121, %v220
      %v253 = vsub.f32 %v122, %v221
      %v254 = vsub.f32 %v123, %v222
      %v255 = vsub.f32 %v124, %v223
      %v256 = vsub.f32 %v125, %v224
      %v257 = vsub.f32 %v126, %v225
      %v258 = vsub.f32 %v127, %v226
      %v259 = vsub.f32 %v128, %v227
      %v260 = vsub.f32 %v129, %v228
      %v261 = vsub.f32 %v130, %v229
      %v262 = vsub.f32 %v131, %v230
      %v263 = vsub.f32 %v132, %v231
      %v264 = vsub.f32 %v133, %v232
      %v265 = vsub.f32 %v134, %v233
      %v266 = vsub.f32 %v135, %v234
      %v267 = vsub.f32 %v136, %v235
      %v268 = vsub.f32 %v137, %v236
      %v269 = vmul.f32 %v237, %v237
      %v270 = vmul.f32 %v238, %v238
      %v271 = vmul.f32 %v239, %v239
      %v272 = vmul.f32 %v240, %v240
      %v273 = vmul.f32 %v241, %v241
      %v274 = vmul.f32 %v242, %v242
      %v275 = vmul.f32 %v243, %v243
      %v276 = vmul.f32 %v244, %v244
      %v277 = vmul.f32 %v245, %v245
      %v278 = vmul.f32 %v246, %v246
      %v279 = vmul.f32 %v247, %v247
      %v280 = vmul.f32 %v248, %v248
      %v281 = vmul.f32 %v249, %v249
      %v282 = vmul.f32 %v250, %v250
      %v283 = vmul.f32 %v251, %v251
      %v284 = vmul.f32 %v252, %v252
      %v285 = vmul.f32 %v253, %v253
      %v286 = vmul.f32 %v254, %v254
      %v287 = vmul.f32 %v255, %v255
      %v288 = vmul.f32 %v256, %v256
      %v289 = vmul.f32 %v257, %v257
      %v290 = vmul.f32 %v258, %v258
      %v291 = vmul.f32 %v259, %v259
      %v292 = vmul.f32 %v260, %v260
      %v293 = vmul.f32 %v261, %v261
      %v294 = vmul.f32 %v262, %v262
      %v295 = vmul.f32 %v263, %v263
      %v296 = vmul.f32 %v264, %v264
      %v297 = vmul.f32 %v265, %v265
      %v298 = vmul.f32 %v266, %v266
      %v299 = vmul.f32 %v267, %v267
      %v300 = vmul.f32 %v268, %v268
      %301 = vadd.xlane.f32.xlu0 %v269
      %v302 = vpop.xlane.xlu0 %301
      %303 = vadd.xlane.f32.xlu0 %v270
      %v304 = vpop.xlane.xlu0 %303
      %305 = vadd.xlane.f32.xlu0 %v271
      %v306 = vpop.xlane.xlu0 %305
      %307 = vadd.xlane.f32.xlu0 %v272
      %v308 = vpop.xlane.xlu0 %307
      %309 = vadd.xlane.f32.xlu0 %v273
      %v310 = vpop.xlane.xlu0 %309
      %311 = vadd.xlane.f32.xlu0 %v274
      %v312 = vpop.xlane.xlu0 %311
      %313 = vadd.xlane.f32.xlu0 %v275
      %v314 = vpop.xlane.xlu0 %313
      %315 = vadd.xlane.f32.xlu0 %v276
      %v316 = vpop.xlane.xlu0 %315
      %317 = vadd.xlane.f32.xlu0 %v277
      %v318 = vpop.xlane.xlu0 %317
      %319 = vadd.xlane.f32.xlu0 %v278
      %v320 = vpop.xlane.xlu0 %319
      %321 = vadd.xlane.f32.xlu0 %v279
      %v322 = vpop.xlane.xlu0 %321
      %323 = vadd.xlane.f32.xlu0 %v280
      %v324 = vpop.xlane.xlu0 %323
      %325 = vadd.xlane.f32.xlu0 %v281
      %v326 = vpop.xlane.xlu0 %325
      %327 = vadd.xlane.f32.xlu0 %v282
      %v328 = vpop.xlane.xlu0 %327
      %329 = vadd.xlane.f32.xlu0 %v283
      %v330 = vpop.xlane.xlu0 %329
      %331 = vadd.xlane.f32.xlu0 %v284
      %v332 = vpop.xlane.xlu0 %331
      %333 = vadd.xlane.f32.xlu0 %v285
      %v334 = vpop.xlane.xlu0 %333
      %335 = vadd.xlane.f32.xlu0 %v286
      %v336 = vpop.xlane.xlu0 %335
      %337 = vadd.xlane.f32.xlu0 %v287
      %v338 = vpop.xlane.xlu0 %337
      %339 = vadd.xlane.f32.xlu0 %v288
      %v340 = vpop.xlane.xlu0 %339
      %341 = vadd.xlane.f32.xlu0 %v289
      %v342 = vpop.xlane.xlu0 %341
      %343 = vadd.xlane.f32.xlu0 %v290
      %v344 = vpop.xlane.xlu0 %343
      %345 = vadd.xlane.f32.xlu0 %v291
      %v346 = vpop.xlane.xlu0 %345
      %347 = vadd.xlane.f32.xlu0 %v292
      %v348 = vpop.xlane.xlu0 %347
      %349 = vadd.xlane.f32.xlu0 %v293
      %v350 = vpop.xlane.xlu0 %349
      %351 = vadd.xlane.f32.xlu0 %v294
      %v352 = vpop.xlane.xlu0 %351
      %353 = vadd.xlane.f32.xlu0 %v295
      %v354 = vpop.xlane.xlu0 %353
      %355 = vadd.xlane.f32.xlu0 %v296
      %v356 = vpop.xlane.xlu0 %355
      %357 = vadd.xlane.f32.xlu0 %v297
      %v358 = vpop.xlane.xlu0 %357
      %359 = vadd.xlane.f32.xlu0 %v298
      %v360 = vpop.xlane.xlu0 %359
      %361 = vadd.xlane.f32.xlu0 %v299
      %v362 = vpop.xlane.xlu0 %361
      %363 = vadd.xlane.f32.xlu0 %v300
      %v364 = vpop.xlane.xlu0 %363
      %v365 = vmul.f32 %v302, %v204
      %v366 = vmul.f32 %v304, %v204
      %v367 = vmul.f32 %v306, %v204
      %v368 = vmul.f32 %v308, %v204
      %v369 = vmul.f32 %v310, %v204
      %v370 = vmul.f32 %v312, %v204
      %v371 = vmul.f32 %v314, %v204
      %v372 = vmul.f32 %v316, %v204
      %v373 = vmul.f32 %v318, %v204
      %v374 = vmul.f32 %v320, %v204
      %v375 = vmul.f32 %v322, %v204
      %v376 = vmul.f32 %v324, %v204
      %v377 = vmul.f32 %v326, %v204
      %v378 = vmul.f32 %v328, %v204
      %v379 = vmul.f32 %v330, %v204
      %v380 = vmul.f32 %v332, %v204
      %v381 = vmul.f32 %v334, %v204
      %v382 = vmul.f32 %v336, %v204
      %v383 = vmul.f32 %v338, %v204
      %v384 = vmul.f32 %v340, %v204
      %v385 = vmul.f32 %v342, %v204
      %v386 = vmul.f32 %v344, %v204
      %v387 = vmul.f32 %v346, %v204
      %v388 = vmul.f32 %v348, %v204
      %v389 = vmul.f32 %v350, %v204
      %v390 = vmul.f32 %v352, %v204
      %v391 = vmul.f32 %v354, %v204
      %v392 = vmul.f32 %v356, %v204
      %v393 = vmul.f32 %v358, %v204
      %v394 = vmul.f32 %v360, %v204
      %v395 = vmul.f32 %v362, %v204
      %v396 = vmul.f32 %v364, %v204
      %v397 = vadd.f32 %v365, 1e-05
      %v398 = vadd.f32 %v366, 1e-05
      %v399 = vadd.f32 %v367, 1e-05
      %v400 = vadd.f32 %v368, 1e-05
      %v401 = vadd.f32 %v369, 1e-05
      %v402 = vadd.f32 %v370, 1e-05
      %v403 = vadd.f32 %v371, 1e-05
      %v404 = vadd.f32 %v372, 1e-05
      %v405 = vadd.f32 %v373, 1e-05
      %v406 = vadd.f32 %v374, 1e-05
      %v407 = vadd.f32 %v375, 1e-05
      %v408 = vadd.f32 %v376, 1e-05
      %v409 = vadd.f32 %v377, 1e-05
      %v410 = vadd.f32 %v378, 1e-05
      %v411 = vadd.f32 %v379, 1e-05
      %v412 = vadd.f32 %v380, 1e-05
      %v413 = vadd.f32 %v381, 1e-05
      %v414 = vadd.f32 %v382, 1e-05
      %v415 = vadd.f32 %v383, 1e-05
      %v416 = vadd.f32 %v384, 1e-05
      %v417 = vadd.f32 %v385, 1e-05
      %v418 = vadd.f32 %v386, 1e-05
      %v419 = vadd.f32 %v387, 1e-05
      %v420 = vadd.f32 %v388, 1e-05
      %v421 = vadd.f32 %v389, 1e-05
      %v422 = vadd.f32 %v390, 1e-05
      %v423 = vadd.f32 %v391, 1e-05
      %v424 = vadd.f32 %v392, 1e-05
      %v425 = vadd.f32 %v393, 1e-05
      %v426 = vadd.f32 %v394, 1e-05
      %v427 = vadd.f32 %v395, 1e-05
      %v428 = vadd.f32 %v396, 1e-05
      %v429 = vrsqrt.pop %v397
      %v430 = vrsqrt.pop %v398
      %v431 = vrsqrt.pop %v399
      %v432 = vrsqrt.pop %v400
      %v433 = vrsqrt.pop %v401
      %v434 = vrsqrt.pop %v402
      %v435 = vrsqrt.pop %v403
      %v436 = vrsqrt.pop %v404
      %v437 = vrsqrt.pop %v405
      %v438 = vrsqrt.pop %v406
      %v439 = vrsqrt.pop %v407
      %v440 = vrsqrt.pop %v408
      %v441 = vrsqrt.pop %v409
      %v442 = vrsqrt.pop %v410
      %v443 = vrsqrt.pop %v411
      %v444 = vrsqrt.pop %v412
      %v445 = vrsqrt.pop %v413
      %v446 = vrsqrt.pop %v414
      %v447 = vrsqrt.pop %v415
      %v448 = vrsqrt.pop %v416
      %v449 = vrsqrt.pop %v417
      %v450 = vrsqrt.pop %v418
      %v451 = vrsqrt.pop %v419
      %v452 = vrsqrt.pop %v420
      %v453 = vrsqrt.pop %v421
      %v454 = vrsqrt.pop %v422
      %v455 = vrsqrt.pop %v423
      %v456 = vrsqrt.pop %v424
      %v457 = vrsqrt.pop %v425
      %v458 = vrsqrt.pop %v426
      %v459 = vrsqrt.pop %v427
      %v460 = vrsqrt.pop %v428
      %v461 = vmul.f32 %v237, %v429
      %v462 = vmul.f32 %v238, %v430
      %v463 = vmul.f32 %v239, %v431
      %v464 = vmul.f32 %v240, %v432
      %v465 = vmul.f32 %v241, %v433
      %v466 = vmul.f32 %v242, %v434
      %v467 = vmul.f32 %v243, %v435
      %v468 = vmul.f32 %v244, %v436
      %v469 = vmul.f32 %v245, %v437
      %v470 = vmul.f32 %v246, %v438
      %v471 = vmul.f32 %v247, %v439
      %v472 = vmul.f32 %v248, %v440
      %v473 = vmul.f32 %v249, %v441
      %v474 = vmul.f32 %v250, %v442
      %v475 = vmul.f32 %v251, %v443
      %v476 = vmul.f32 %v252, %v444
      %v477 = vmul.f32 %v253, %v445
      %v478 = vmul.f32 %v254, %v446
      %v479 = vmul.f32 %v255, %v447
      %v480 = vmul.f32 %v256, %v448
      %v481 = vmul.f32 %v257, %v449
      %v482 = vmul.f32 %v258, %v450
      %v483 = vmul.f32 %v259, %v451
      %v484 = vmul.f32 %v260, %v452
      %v485 = vmul.f32 %v261, %v453
      %v486 = vmul.f32 %v262, %v454
      %v487 = vmul.f32 %v263, %v455
      %v488 = vmul.f32 %v264, %v456
      %v489 = vmul.f32 %v265, %v457
      %v490 = vmul.f32 %v266, %v458
      %v491 = vmul.f32 %v267, %v459
      %v492 = vmul.f32 %v268, %v460
      %v494 = vlaneseq
      %v495 = vshrl.u32 %v494, 7
      %v496 = vsub.s32 0, %v495
      %v497 = vrot.slane %v138, %v496
      %v499 = vmul.f32 %v461, %v497
      %v500 = vmul.f32 %v462, %v497
      %v501 = vmul.f32 %v463, %v497
      %v502 = vmul.f32 %v464, %v497
      %v503 = vmul.f32 %v465, %v497
      %v504 = vmul.f32 %v466, %v497
      %v505 = vmul.f32 %v467, %v497
      %v506 = vmul.f32 %v468, %v497
      %v507 = vmul.f32 %v469, %v497
      %v508 = vmul.f32 %v470, %v497
      %v509 = vmul.f32 %v471, %v497
      %v510 = vmul.f32 %v472, %v497
      %v511 = vmul.f32 %v473, %v497
      %v512 = vmul.f32 %v474, %v497
      %v513 = vmul.f32 %v475, %v497
      %v514 = vmul.f32 %v476, %v497
      %v515 = vmul.f32 %v477, %v497
      %v516 = vmul.f32 %v478, %v497
      %v517 = vmul.f32 %v479, %v497
      %v518 = vmul.f32 %v480, %v497
      %v519 = vmul.f32 %v481, %v497
      %v520 = vmul.f32 %v482, %v497
      %v521 = vmul.f32 %v483, %v497
      %v522 = vmul.f32 %v484, %v497
      %v523 = vmul.f32 %v485, %v497
      %v524 = vmul.f32 %v486, %v497
      %v525 = vmul.f32 %v487, %v497
      %v526 = vmul.f32 %v488, %v497
      %v527 = vmul.f32 %v489, %v497
      %v528 = vmul.f32 %v490, %v497
      %v529 = vmul.f32 %v491, %v497
      %v530 = vmul.f32 %v492, %v497
      %v532 = vlaneseq
      %v533 = vshrl.u32 %v532, 7
      %v534 = vsub.s32 0, %v533
      %v535 = vrot.slane %v139, %v534
      %v537 = vadd.f32 %v499, %v535
      %v538 = vadd.f32 %v500, %v535
      %v539 = vadd.f32 %v501, %v535
      %v540 = vadd.f32 %v502, %v535
      %v541 = vadd.f32 %v503, %v535
      %v542 = vadd.f32 %v504, %v535
      %v543 = vadd.f32 %v505, %v535
      %v544 = vadd.f32 %v506, %v535
      %v545 = vadd.f32 %v507, %v535
      %v546 = vadd.f32 %v508, %v535
      %v547 = vadd.f32 %v509, %v535
      %v548 = vadd.f32 %v510, %v535
      %v549 = vadd.f32 %v511, %v535
      %v550 = vadd.f32 %v512, %v535
      %v551 = vadd.f32 %v513, %v535
      %v552 = vadd.f32 %v514, %v535
      %v553 = vadd.f32 %v515, %v535
      %v554 = vadd.f32 %v516, %v535
      %v555 = vadd.f32 %v517, %v535
      %v556 = vadd.f32 %v518, %v535
      %v557 = vadd.f32 %v519, %v535
      %v558 = vadd.f32 %v520, %v535
      %v559 = vadd.f32 %v521, %v535
      %v560 = vadd.f32 %v522, %v535
      %v561 = vadd.f32 %v523, %v535
      %v562 = vadd.f32 %v524, %v535
      %v563 = vadd.f32 %v525, %v535
      %v564 = vadd.f32 %v526, %v535
      %v565 = vadd.f32 %v527, %v535
      %v566 = vadd.f32 %v528, %v535
      %v567 = vadd.f32 %v529, %v535
      %v568 = vadd.f32 %v530, %v535
      %v569 = vpack.c.bf16 %v538, %v537
      %v570 = vpack.c.bf16 %v540, %v539
      %v571 = vpack.c.bf16 %v542, %v541
      %v572 = vpack.c.bf16 %v544, %v543
      %v573 = vpack.c.bf16 %v546, %v545
      %v574 = vpack.c.bf16 %v548, %v547
      %v575 = vpack.c.bf16 %v550, %v549
      %v576 = vpack.c.bf16 %v552, %v551
      %v577 = vpack.c.bf16 %v554, %v553
      %v578 = vpack.c.bf16 %v556, %v555
      %v579 = vpack.c.bf16 %v558, %v557
      %v580 = vpack.c.bf16 %v560, %v559
      %v581 = vpack.c.bf16 %v562, %v561
      %v582 = vpack.c.bf16 %v564, %v563
      %v583 = vpack.c.bf16 %v566, %v565
      %v584 = vpack.c.bf16 %v568, %v567
      %585 = vst [vmem:[#allocation2] sm:$0xff] %v569
      %586 = vst [vmem:[#allocation2 + $0x8] sm:$0xff] %v570
      %587 = vst [vmem:[#allocation2 + $0x10] sm:$0xff] %v571
      %588 = vst [vmem:[#allocation2 + $0x18] sm:$0xff] %v572
      %589 = vst [vmem:[#allocation2 + $0x20] sm:$0xff] %v573
      %590 = vst [vmem:[#allocation2 + $0x28] sm:$0xff] %v574
      %591 = vst [vmem:[#allocation2 + $0x30] sm:$0xff] %v575
      %592 = vst [vmem:[#allocation2 + $0x38] sm:$0xff] %v576
      %593 = vst [vmem:[#allocation2 + $0x40] sm:$0xff] %v577
      %594 = vst [vmem:[#allocation2 + $0x48] sm:$0xff] %v578
      %595 = vst [vmem:[#allocation2 + $0x50] sm:$0xff] %v579
      %596 = vst [vmem:[#allocation2 + $0x58] sm:$0xff] %v580
      %597 = vst [vmem:[#allocation2 + $0x60] sm:$0xff] %v581
      %598 = vst [vmem:[#allocation2 + $0x68] sm:$0xff] %v582
      %599 = vst [vmem:[#allocation2 + $0x70] sm:$0xff] %v583
      %600 = vst [vmem:[#allocation2 + $0x78] sm:$0xff] %v584
    $region37: #{gpt_forward.3} parent=1 // pred_fallthru
      _
    %v601 = vld [vmem:[#allocation2] sm:$0xff]
    %v602 = vld [vmem:[#allocation2 + $0x8] sm:$0xff]
    %v603 = vld [vmem:[#allocation2 + $0x10] sm:$0xff]
    %v604 = vld [vmem:[#allocation2 + $0x18] sm:$0xff]
    %v605 = vld [vmem:[#allocation2 + $0x20] sm:$0xff]
    %v606 = vld [vmem:[#allocation2 + $0x28] sm:$0xff]
    %v607 = vld [vmem:[#allocation2 + $0x30] sm:$0xff]
    %v608 = vld [vmem:[#allocation2 + $0x38] sm:$0xff]
    %v609 = vld [vmem:[#allocation2 + $0x40] sm:$0xff]
    %v610 = vld [vmem:[#allocation2 + $0x48] sm:$0xff]
    %v611 = vld [vmem:[#allocation2 + $0x50] sm:$0xff]
    %v612 = vld [vmem:[#allocation2 + $0x58] sm:$0xff]
    %v613 = vld [vmem:[#allocation2 + $0x60] sm:$0xff]
    %v614 = vld [vmem:[#allocation2 + $0x68] sm:$0xff]
    %v615 = vld [vmem:[#allocation2 + $0x70] sm:$0xff]
    %v616 = vld [vmem:[#allocation2 + $0x78] sm:$0xff]
    %v617 = vld [vmem:[#allocation9] sm:$0xff]
    %v618 = vld [vmem:[#allocation9 + $0x8] sm:$0xff]
    %v619 = vld [vmem:[#allocation9 + $0x10] sm:$0xff]
    %v620 = vld [vmem:[#allocation9 + $0x18] sm:$0xff]
    %v621 = vld [vmem:[#allocation9 + $0x20] sm:$0xff]
    %v622 = vld [vmem:[#allocation9 + $0x28] sm:$0xff]
    %v623 = vld [vmem:[#allocation9 + $0x30] sm:$0xff]
    %v624 = vld [vmem:[#allocation9 + $0x38] sm:$0xff]
    %v625 = vld [vmem:[#allocation9 + $0x40] sm:$0xff]
    %v626 = vld [vmem:[#allocation9 + $0x48] sm:$0xff]
    %v627 = vld [vmem:[#allocation9 + $0x50] sm:$0xff]
    %v628 = vld [vmem:[#allocation9 + $0x58] sm:$0xff]
    %v629 = vld [vmem:[#allocation9 + $0x60] sm:$0xff]
    %v630 = vld [vmem:[#allocation9 + $0x68] sm:$0xff]
    %v631 = vld [vmem:[#allocation9 + $0x70] sm:$0xff]
    %v632 = vld [vmem:[#allocation9 + $0x78] sm:$0xff]
    %v633 = vld [vmem:[#allocation9 + $0x80] sm:$0xff]
    %v634 = vld [vmem:[#allocation9 + $0x88] sm:$0xff]
    %v635 = vld [vmem:[#allocation9 + $0x90] sm:$0xff]
    %v636 = vld [vmem:[#allocation9 + $0x98] sm:$0xff]
    %v637 = vld [vmem:[#allocation9 + $0xa0] sm:$0xff]
    %v638 = vld [vmem:[#allocation9 + $0xa8] sm:$0xff]
    %v639 = vld [vmem:[#allocation9 + $0xb0] sm:$0xff]
    %v640 = vld [vmem:[#allocation9 + $0xb8] sm:$0xff]
    %v641 = vld [vmem:[#allocation9 + $0xc0] sm:$0xff]
    %v642 = vld [vmem:[#allocation9 + $0xc8] sm:$0xff]
    %v643 = vld [vmem:[#allocation9 + $0xd0] sm:$0xff]
    %v644 = vld [vmem:[#allocation9 + $0xd8] sm:$0xff]
    %v645 = vld [vmem:[#allocation9 + $0xe0] sm:$0xff]
    %v646 = vld [vmem:[#allocation9 + $0xe8] sm:$0xff]
    %v647 = vld [vmem:[#allocation9 + $0xf0] sm:$0xff]
    %v648 = vld [vmem:[#allocation9 + $0xf8] sm:$0xff]
    %v681 = vunpack.c.l.b16 %v617
    %v682 = vunpack.c.h.b16 %v617
    %v683 = vunpack.c.l.b16 %v618
    %v684 = vunpack.c.h.b16 %v618
    %v685 = vunpack.c.l.b16 %v619
    %v686 = vunpack.c.h.b16 %v619
    %v687 = vunpack.c.l.b16 %v620
    %v688 = vunpack.c.h.b16 %v620
    %v689 = vunpack.c.l.b16 %v621
    %v690 = vunpack.c.h.b16 %v621
    %v691 = vunpack.c.l.b16 %v622
    %v692 = vunpack.c.h.b16 %v622
    %v693 = vunpack.c.l.b16 %v623
    %v694 = vunpack.c.h.b16 %v623
    %v695 = vunpack.c.l.b16 %v624
    %v696 = vunpack.c.h.b16 %v624
    %v697 = vunpack.c.l.b16 %v625
    %v698 = vunpack.c.h.b16 %v625
    %v699 = vunpack.c.l.b16 %v626
    %v700 = vunpack.c.h.b16 %v626
    %v701 = vunpack.c.l.b16 %v627
    %v702 = vunpack.c.h.b16 %v627
    %v703 = vunpack.c.l.b16 %v628
    %v704 = vunpack.c.h.b16 %v628
    %v705 = vunpack.c.l.b16 %v629
    %v706 = vunpack.c.h.b16 %v629
    %v707 = vunpack.c.l.b16 %v630
    %v708 = vunpack.c.h.b16 %v630
    %v709 = vunpack.c.l.b16 %v631
    %v710 = vunpack.c.h.b16 %v631
    %v711 = vunpack.c.l.b16 %v632
    %v712 = vunpack.c.h.b16 %v632
    %v713 = vunpack.c.l.b16 %v633
    %v714 = vunpack.c.h.b16 %v633
    %v715 = vunpack.c.l.b16 %v634
    %v716 = vunpack.c.h.b16 %v634
    %v717 = vunpack.c.l.b16 %v635
    %v718 = vunpack.c.h.b16 %v635
    %v719 = vunpack.c.l.b16 %v636
    %v720 = vunpack.c.h.b16 %v636
    %v721 = vunpack.c.l.b16 %v637
    %v722 = vunpack.c.h.b16 %v637
    %v723 = vunpack.c.l.b16 %v638
    %v724 = vunpack.c.h.b16 %v638
    %v725 = vunpack.c.l.b16 %v639
    %v726 = vunpack.c.h.b16 %v639
    %v727 = vunpack.c.l.b16 %v640
    %v728 = vunpack.c.h.b16 %v640
    %v729 = vunpack.c.l.b16 %v641
    %v730 = vunpack.c.h.b16 %v641
    %v731 = vunpack.c.l.b16 %v642
    %v732 = vunpack.c.h.b16 %v642
    %v733 = vunpack.c.l.b16 %v643
    %v734 = vunpack.c.h.b16 %v643
    %v735 = vunpack.c.l.b16 %v644
    %v736 = vunpack.c.h.b16 %v644
    %v737 = vunpack.c.l.b16 %v645
    %v738 = vunpack.c.h.b16 %v645
    %v739 = vunpack.c.l.b16 %v646
    %v740 = vunpack.c.h.b16 %v646
    %v741 = vunpack.c.l.b16 %v647
    %v742 = vunpack.c.h.b16 %v647
    %v743 = vunpack.c.l.b16 %v648
    %v744 = vunpack.c.h.b16 %v648
    %v745 = vpack.c.b16 %v685, %v681
    %v746 = vpack.c.b16 %v686, %v682
    %v747 = vpack.c.b16 %v687, %v683
    %v748 = vpack.c.b16 %v688, %v684
    %v749 = vpack.c.b16 %v693, %v689
    %v750 = vpack.c.b16 %v694, %v690
    %v751 = vpack.c.b16 %v695, %v691
    %v752 = vpack.c.b16 %v696, %v692
    %v753 = vpack.c.b16 %v701, %v697
    %v754 = vpack.c.b16 %v702, %v698
    %v755 = vpack.c.b16 %v703, %v699
    %v756 = vpack.c.b16 %v704, %v700
    %v757 = vpack.c.b16 %v709, %v705
    %v758 = vpack.c.b16 %v710, %v706
    %v759 = vpack.c.b16 %v711, %v707
    %v760 = vpack.c.b16 %v712, %v708
    %v761 = vpack.c.b16 %v717, %v713
    %v762 = vpack.c.b16 %v718, %v714
    %v763 = vpack.c.b16 %v719, %v715
    %v764 = vpack.c.b16 %v720, %v716
    %v765 = vpack.c.b16 %v725, %v721
    %v766 = vpack.c.b16 %v726, %v722
    %v767 = vpack.c.b16 %v727, %v723
    %v768 = vpack.c.b16 %v728, %v724
    %v769 = vpack.c.b16 %v733, %v729
    %v770 = vpack.c.b16 %v734, %v730
    %v771 = vpack.c.b16 %v735, %v731
    %v772 = vpack.c.b16 %v736, %v732
    %v773 = vpack.c.b16 %v741, %v737
    %v774 = vpack.c.b16 %v742, %v738
    %v775 = vpack.c.b16 %v743, %v739
    %v776 = vpack.c.b16 %v744, %v740
    %809 = vmatprep.subr.bf16.mxu0 %v746
    %810 = vmatpush1.bf16.msra.mxu0 %v745
    %811 = vmatprep.subr.bf16.mxu0 %v750
    %812 = vmatpush1.bf16.msra.mxu0 %v749
    %813 = vmatprep.subr.bf16.mxu0 %v754
    %814 = vmatpush1.bf16.msra.mxu0 %v753
    %815 = vmatprep.subr.bf16.mxu0 %v758
    %816 = vmatpush1.bf16.msra.mxu0 %v757
    %817 = vmatprep.subr.bf16.mxu0 %v762
    %818 = vmatpush1.bf16.msra.mxu0 %v761
    %819 = vmatprep.subr.bf16.mxu0 %v766
    %820 = vmatpush1.bf16.msra.mxu0 %v765
    %821 = vmatprep.subr.bf16.mxu0 %v770
    %822 = vmatpush1.bf16.msra.mxu0 %v769
    %823 = vmatprep.subr.bf16.mxu0 %v774
    %824 = vmatpush1.bf16.msra.mxu0 %v773
    %825 = vmatprep.subr.bf16.mxu0 0
    %826 = vmatpush1.bf16.msra.mxu0 0
    %827 = vmatprep.subr.bf16.mxu0 0
    %828 = vmatpush1.bf16.msra.mxu0 0
    %829 = vmatprep.subr.bf16.mxu0 0
    %830 = vmatpush1.bf16.msra.mxu0 0
    %831 = vmatprep.subr.bf16.mxu0 0
    %832 = vmatpush1.bf16.msra.mxu0 0
    %833 = vmatprep.subr.bf16.mxu0 0
    %834 = vmatpush1.bf16.msra.mxu0 0
    %835 = vmatprep.subr.bf16.mxu0 0
    %836 = vmatpush1.bf16.msra.mxu0 0
    %837 = vmatprep.subr.bf16.mxu0 0
    %838 = vmatpush1.bf16.msra.mxu0 0
    %839 = vmatprep.subr.bf16.mxu0 0
    %840 = vmatpush1.bf16.msra.mxu0 0
    %841 = vmatprep.mubr.bf16.mxu0 0
    %842 = vmatmul.mubr.bf16.gmra.mrb[0].mxu0 %v601
    %v843 = vpop.f32.mrb[0].mxu0
    %v844 = vadd.f32 0.0, %v843
    %v845 = vpop.f32.mrb[0].mxu0
    %v846 = vadd.f32 0.0, %v845
    %v847 = vpop.f32.mrb[0].mxu0
    %v848 = vadd.f32 0.0, %v847
    %v849 = vpop.f32.mrb[0].mxu0
    %v850 = vadd.f32 0.0, %v849
    %851 = vmatprep.mubr.bf16.mxu0 0
    %852 = vmatmul.mubr.bf16.gmra.mrb[0].mxu0 %v602
    %v853 = vpop.f32.mrb[0].mxu0
    %v854 = vadd.f32 0.0, %v853
    %v855 = vpop.f32.mrb[0].mxu0
    %v856 = vadd.f32 0.0, %v855
    %v857 = vpop.f32.mrb[0].mxu0
    %v858 = vadd.f32 0.0, %v857
    %v859 = vpop.f32.mrb[0].mxu0
    %v860 = vadd.f32 0.0, %v859
    %861 = vmatprep.mubr.bf16.mxu0 0
    %862 = vmatmul.mubr.bf16.gmra.mrb[0].mxu0 %v603
    %v863 = vpop.f32.mrb[0].mxu0
    %v864 = vadd.f32 0.0, %v863
    %v865 = vpop.f32.mrb[0].mxu0
    %v866 = vadd.f32 0.0, %v865
    %v867 = vpop.f32.mrb[0].mxu0
    %v868 = vadd.f32 0.0, %v867
    %v869 = vpop.f32.mrb[0].mxu0
    %v870 = vadd.f32 0.0, %v869
    %871 = vmatprep.mubr.bf16.mxu0 0
    %872 = vmatmul.mubr.bf16.gmra.mrb[0].mxu0 %v604
    %v873 = vpop.f32.mrb[0].mxu0
    %v874 = vadd.f32 0.0, %v873
    %v875 = vpop.f32.mrb[0].mxu0
    %v876 = vadd.f32 0.0, %v875
    %v877 = vpop.f32.mrb[0].mxu0
    %v878 = vadd.f32 0.0, %v877
    %v879 = vpop.f32.mrb[0].mxu0
    %v880 = vadd.f32 0.0, %v879
    %881 = vmatprep.mubr.bf16.mxu0 0
    %882 = vmatmul.mubr.bf16.gmra.mrb[0].mxu0 %v605
    %v883 = vpop.f32.mrb[0].mxu0
    %v884 = vadd.f32 0.0, %v883
    %v885 = vpop.f32.mrb[0].mxu0
    %v886 = vadd.f32 0.0, %v885
    %v887 = vpop.f32.mrb[0].mxu0
    %v888 = vadd.f32 0.0, %v887
    %v889 = vpop.f32.mrb[0].mxu0
    %v890 = vadd.f32 0.0, %v889
    %891 = vmatprep.mubr.bf16.mxu0 0
    %892 = vmatmul.mubr.bf16.gmra.mrb[0].mxu0 %v606
    %v893 = vpop.f32.mrb[0].mxu0
    %v894 = vadd.f32 0.0, %v893
    %v895 = vpop.f32.mrb[0].mxu0
    %v896 = vadd.f32 0.0, %v895
    %v897 = vpop.f32.mrb[0].mxu0
    %v898 = vadd.f32 0.0, %v897
    %v899 = vpop.f32.mrb[0].mxu0
    %v900 = vadd.f32 0.0, %v899
    %901 = vmatprep.mubr.bf16.mxu0 0
    %902 = vmatmul.mubr.bf16.gmra.mrb[0].mxu0 %v607
    %v903 = vpop.f32.mrb[0].mxu0
    %v904 = vadd.f32 0.0, %v903
    %v905 = vpop.f32.mrb[0].mxu0
    %v906 = vadd.f32 0.0, %v905
    %v907 = vpop.f32.mrb[0].mxu0
    %v908 = vadd.f32 0.0, %v907
    %v909 = vpop.f32.mrb[0].mxu0
    %v910 = vadd.f32 0.0, %v909
    %911 = vmatprep.mubr.bf16.mxu0 0
    %912 = vmatmul.mubr.bf16.gmra.mrb[0].mxu0 %v608
    %v913 = vpop.f32.mrb[0].mxu0
    %v914 = vadd.f32 0.0, %v913
    %v915 = vpop.f32.mrb[0].mxu0
    %v916 = vadd.f32 0.0, %v915
    %v917 = vpop.f32.mrb[0].mxu0
    %v918 = vadd.f32 0.0, %v917
    %v919 = vpop.f32.mrb[0].mxu0
    %v920 = vadd.f32 0.0, %v919
    %921 = vmatprep.mubr.bf16.mxu0 0
    %922 = vmatmul.mubr.bf16.gmra.mrb[0].mxu0 %v609
    %v923 = vpop.f32.mrb[0].mxu0
    %v924 = vadd.f32 0.0, %v923
    %v925 = vpop.f32.mrb[0].mxu0
    %v926 = vadd.f32 0.0, %v925
    %v927 = vpop.f32.mrb[0].mxu0
    %v928 = vadd.f32 0.0, %v927
    %v929 = vpop.f32.mrb[0].mxu0
    %v930 = vadd.f32 0.0, %v929
    %931 = vmatprep.mubr.bf16.mxu0 0
    %932 = vmatmul.mubr.bf16.gmra.mrb[0].mxu0 %v610
    %v933 = vpop.f32.mrb[0].mxu0
    %v934 = vadd.f32 0.0, %v933
    %v935 = vpop.f32.mrb[0].mxu0
    %v936 = vadd.f32 0.0, %v935
    %v937 = vpop.f32.mrb[0].mxu0
    %v938 = vadd.f32 0.0, %v937
    %v939 = vpop.f32.mrb[0].mxu0
    %v940 = vadd.f32 0.0, %v939
    %941 = vmatprep.mubr.bf16.mxu0 0
    %942 = vmatmul.mubr.bf16.gmra.mrb[0].mxu0 %v611
    %v943 = vpop.f32.mrb[0].mxu0
    %v944 = vadd.f32 0.0, %v943
    %v945 = vpop.f32.mrb[0].mxu0
    %v946 = vadd.f32 0.0, %v945
    %v947 = vpop.f32.mrb[0].mxu0
    %v948 = vadd.f32 0.0, %v947
    %v949 = vpop.f32.mrb[0].mxu0
    %v950 = vadd.f32 0.0, %v949
    %951 = vmatprep.mubr.bf16.mxu0 0
    %952 = vmatmul.mubr.bf16.gmra.mrb[0].mxu0 %v612
    %v953 = vpop.f32.mrb[0].mxu0
    %v954 = vadd.f32 0.0, %v953
    %v955 = vpop.f32.mrb[0].mxu0
    %v956 = vadd.f32 0.0, %v955
    %v957 = vpop.f32.mrb[0].mxu0
    %v958 = vadd.f32 0.0, %v957
    %v959 = vpop.f32.mrb[0].mxu0
    %v960 = vadd.f32 0.0, %v959
    %961 = vmatprep.mubr.bf16.mxu0 0
    %962 = vmatmul.mubr.bf16.gmra.mrb[0].mxu0 %v613
    %v963 = vpop.f32.mrb[0].mxu0
    %v964 = vadd.f32 0.0, %v963
    %v965 = vpop.f32.mrb[0].mxu0
    %v966 = vadd.f32 0.0, %v965
    %v967 = vpop.f32.mrb[0].mxu0
    %v968 = vadd.f32 0.0, %v967
    %v969 = vpop.f32.mrb[0].mxu0
    %v970 = vadd.f32 0.0, %v969
    %971 = vmatprep.mubr.bf16.mxu0 0
    %972 = vmatmul.mubr.bf16.gmra.mrb[0].mxu0 %v614
    %v973 = vpop.f32.mrb[0].mxu0
    %v974 = vadd.f32 0.0, %v973
    %v975 = vpop.f32.mrb[0].mxu0
    %v976 = vadd.f32 0.0, %v975
    %v977 = vpop.f32.mrb[0].mxu0
    %v978 = vadd.f32 0.0, %v977
    %v979 = vpop.f32.mrb[0].mxu0
    %v980 = vadd.f32 0.0, %v979
    %981 = vmatprep.mubr.bf16.mxu0 0
    %982 = vmatmul.mubr.bf16.gmra.mrb[0].mxu0 %v615
    %v983 = vpop.f32.mrb[0].mxu0
    %v984 = vadd.f32 0.0, %v983
    %v985 = vpop.f32.mrb[0].mxu0
    %v986 = vadd.f32 0.0, %v985
    %v987 = vpop.f32.mrb[0].mxu0
    %v988 = vadd.f32 0.0, %v987
    %v989 = vpop.f32.mrb[0].mxu0
    %v990 = vadd.f32 0.0, %v989
    %991 = vmatprep.mubr.bf16.mxu0 0
    %992 = vmatmul.mubr.bf16.gmra.mrb[0].mxu0 %v616
    %v993 = vpop.f32.mrb[0].mxu0
    %v994 = vadd.f32 0.0, %v993
    %v995 = vpop.f32.mrb[0].mxu0
    %v996 = vadd.f32 0.0, %v995
    %v997 = vpop.f32.mrb[0].mxu0
    %v998 = vadd.f32 0.0, %v997
    %v999 = vpop.f32.mrb[0].mxu0
    %v1000 = vadd.f32 0.0, %v999
    %1001 = vdwg.mxu0
    %1002 = vmatprep.subr.bf16.mxu0 %v748
    %1003 = vmatpush1.bf16.msra.mxu0 %v747
    %1004 = vmatprep.subr.bf16.mxu0 %v752
    %1005 = vmatpush1.bf16.msra.mxu0 %v751
    %1006 = vmatprep.subr.bf16.mxu0 %v756
    %1007 = vmatpush1.bf16.msra.mxu0 %v755
    %1008 = vmatprep.subr.bf16.mxu0 %v760
    %1009 = vmatpush1.bf16.msra.mxu0 %v759
    %1010 = vmatprep.subr.bf16.mxu0 %v764
    %1011 = vmatpush1.bf16.msra.mxu0 %v763
    %1012 = vmatprep.subr.bf16.mxu0 %v768
    %1013 = vmatpush1.bf16.msra.mxu0 %v767
    %1014 = vmatprep.subr.bf16.mxu0 %v772
    %1015 = vmatpush1.bf16.msra.mxu0 %v771
    %1016 = vmatprep.subr.bf16.mxu0 %v776
    %1017 = vmatpush1.bf16.msra.mxu0 %v775
    %1018 = vmatprep.subr.bf16.mxu0 0
    %1019 = vmatpush1.bf16.msra.mxu0 0
    %1020 = vmatprep.subr.bf16.mxu0 0
    %1021 = vmatpush1.bf16.msra.mxu0 0
    %1022 = vmatprep.subr.bf16.mxu0 0
    %1023 = vmatpush1.bf16.msra.mxu0 0
    %1024 = vmatprep.subr.bf16.mxu0 0
    %1025 = vmatpush1.bf16.msra.mxu0 0
    %1026 = vmatprep.subr.bf16.mxu0 0
    %1027 = vmatpush1.bf16.msra.mxu0 0
    %1028 = vmatprep.subr.bf16.mxu0 0
    %1029 = vmatpush1.bf16.msra.mxu0 0
    %1030 = vmatprep.subr.bf16.mxu0 0
    %1031 = vmatpush1.bf16.msra.mxu0 0
    %1032 = vmatprep.subr.bf16.mxu0 0
    %1033 = vmatpush1.bf16.msra.mxu0 0
    %1034 = vmatprep.mubr.bf16.mxu0 0
    %1035 = vmatmul.mubr.bf16.gmra.mrb[0].mxu0 %v601
    %v1036 = vpop.f32.mrb[0].mxu0
    %v1037 = vadd.f32 0.0, %v1036
    %v1038 = vpop.f32.mrb[0].mxu0
    %v1039 = vadd.f32 0.0, %v1038
    %v1040 = vpop.f32.mrb[0].mxu0
    %v1041 = vadd.f32 0.0, %v1040
    %v1042 = vpop.f32.mrb[0].mxu0
    %v1043 = vadd.f32 0.0, %v1042
    %1044 = vmatprep.mubr.bf16.mxu0 0
    %1045 = vmatmul.mubr.bf16.gmra.mrb[0].mxu0 %v602
    %v1046 = vpop.f32.mrb[0].mxu0
    %v1047 = vadd.f32 0.0, %v1046
    %v1048 = vpop.f32.mrb[0].mxu0
    %v1049 = vadd.f32 0.0, %v1048
    %v1050 = vpop.f32.mrb[0].mxu0
    %v1051 = vadd.f32 0.0, %v1050
    %v1052 = vpop.f32.mrb[0].mxu0
    %v1053 = vadd.f32 0.0, %v1052
    %1054 = vmatprep.mubr.bf16.mxu0 0
    %1055 = vmatmul.mubr.bf16.gmra.mrb[0].mxu0 %v603
    %v1056 = vpop.f32.mrb[0].mxu0
    %v1057 = vadd.f32 0.0, %v1056
    %v1058 = vpop.f32.mrb[0].mxu0
    %v1059 = vadd.f32 0.0, %v1058
    %v1060 = vpop.f32.mrb[0].mxu0
    %v1061 = vadd.f32 0.0, %v1060
    %v1062 = vpop.f32.mrb[0].mxu0
    %v1063 = vadd.f32 0.0, %v1062
    %1064 = vmatprep.mubr.bf16.mxu0 0
    %1065 = vmatmul.mubr.bf16.gmra.mrb[0].mxu0 %v604
    %v1066 = vpop.f32.mrb[0].mxu0
    %v1067 = vadd.f32 0.0, %v1066
    %v1068 = vpop.f32.mrb[0].mxu0
    %v1069 = vadd.f32 0.0, %v1068
    %v1070 = vpop.f32.mrb[0].mxu0
    %v1071 = vadd.f32 0.0, %v1070
    %v1072 = vpop.f32.mrb[0].mxu0
    %v1073 = vadd.f32 0.0, %v1072
    %1074 = vmatprep.mubr.bf16.mxu0 0
    %1075 = vmatmul.mubr.bf16.gmra.mrb[0].mxu0 %v605
    %v1076 = vpop.f32.mrb[0].mxu0
    %v1077 = vadd.f32 0.0, %v1076
    %v1078 = vpop.f32.mrb[0].mxu0
    %v1079 = vadd.f32 0.0, %v1078
    %v1080 = vpop.f32.mrb[0].mxu0
    %v1081 = vadd.f32 0.0, %v1080
    %v1082 = vpop.f32.mrb[0].mxu0
    %v1083 = vadd.f32 0.0, %v1082
    %1084 = vmatprep.mubr.bf16.mxu0 0
    %1085 = vmatmul.mubr.bf16.gmra.mrb[0].mxu0 %v606
    %v1086 = vpop.f32.mrb[0].mxu0
    %v1087 = vadd.f32 0.0, %v1086
    %v1088 = vpop.f32.mrb[0].mxu0
    %v1089 = vadd.f32 0.0, %v1088
    %v1090 = vpop.f32.mrb[0].mxu0
    %v1091 = vadd.f32 0.0, %v1090
    %v1092 = vpop.f32.mrb[0].mxu0
    %v1093 = vadd.f32 0.0, %v1092
    %1094 = vmatprep.mubr.bf16.mxu0 0
    %1095 = vmatmul.mubr.bf16.gmra.mrb[0].mxu0 %v607
    %v1096 = vpop.f32.mrb[0].mxu0
    %v1097 = vadd.f32 0.0, %v1096
    %v1098 = vpop.f32.mrb[0].mxu0
    %v1099 = vadd.f32 0.0, %v1098
    %v1100 = vpop.f32.mrb[0].mxu0
    %v1101 = vadd.f32 0.0, %v1100
    %v1102 = vpop.f32.mrb[0].mxu0
    %v1103 = vadd.f32 0.0, %v1102
    %1104 = vmatprep.mubr.bf16.mxu0 0
    %1105 = vmatmul.mubr.bf16.gmra.mrb[0].mxu0 %v608
    %v1106 = vpop.f32.mrb[0].mxu0
    %v1107 = vadd.f32 0.0, %v1106
    %v1108 = vpop.f32.mrb[0].mxu0
    %v1109 = vadd.f32 0.0, %v1108
    %v1110 = vpop.f32.mrb[0].mxu0
    %v1111 = vadd.f32 0.0, %v1110
    %v1112 = vpop.f32.mrb[0].mxu0
    %v1113 = vadd.f32 0.0, %v1112
    %1114 = vmatprep.mubr.bf16.mxu0 0
    %1115 = vmatmul.mubr.bf16.gmra.mrb[0].mxu0 %v609
    %v1116 = vpop.f32.mrb[0].mxu0
    %v1117 = vadd.f32 0.0, %v1116
    %v1118 = vpop.f32.mrb[0].mxu0
    %v1119 = vadd.f32 0.0, %v1118
    %v1120 = vpop.f32.mrb[0].mxu0
    %v1121 = vadd.f32 0.0, %v1120
    %v1122 = vpop.f32.mrb[0].mxu0
    %v1123 = vadd.f32 0.0, %v1122
    %1124 = vmatprep.mubr.bf16.mxu0 0
    %1125 = vmatmul.mubr.bf16.gmra.mrb[0].mxu0 %v610
    %v1126 = vpop.f32.mrb[0].mxu0
    %v1127 = vadd.f32 0.0, %v1126
    %v1128 = vpop.f32.mrb[0].mxu0
    %v1129 = vadd.f32 0.0, %v1128
    %v1130 = vpop.f32.mrb[0].mxu0
    %v1131 = vadd.f32 0.0, %v1130
    %v1132 = vpop.f32.mrb[0].mxu0
    %v1133 = vadd.f32 0.0, %v1132
    %1134 = vmatprep.mubr.bf16.mxu0 0
    %1135 = vmatmul.mubr.bf16.gmra.mrb[0].mxu0 %v611
    %v1136 = vpop.f32.mrb[0].mxu0
    %v1137 = vadd.f32 0.0, %v1136
    %v1138 = vpop.f32.mrb[0].mxu0
    %v1139 = vadd.f32 0.0, %v1138
    %v1140 = vpop.f32.mrb[0].mxu0
    %v1141 = vadd.f32 0.0, %v1140
    %v1142 = vpop.f32.mrb[0].mxu0
    %v1143 = vadd.f32 0.0, %v1142
    %1144 = vmatprep.mubr.bf16.mxu0 0
    %1145 = vmatmul.mubr.bf16.gmra.mrb[0].mxu0 %v612
    %v1146 = vpop.f32.mrb[0].mxu0
    %v1147 = vadd.f32 0.0, %v1146
    %v1148 = vpop.f32.mrb[0].mxu0
    %v1149 = vadd.f32 0.0, %v1148
    %v1150 = vpop.f32.mrb[0].mxu0
    %v1151 = vadd.f32 0.0, %v1150
    %v1152 = vpop.f32.mrb[0].mxu0
    %v1153 = vadd.f32 0.0, %v1152
    %1154 = vmatprep.mubr.bf16.mxu0 0
    %1155 = vmatmul.mubr.bf16.gmra.mrb[0].mxu0 %v613
    %v1156 = vpop.f32.mrb[0].mxu0
    %v1157 = vadd.f32 0.0, %v1156
    %v1158 = vpop.f32.mrb[0].mxu0
    %v1159 = vadd.f32 0.0, %v1158
    %v1160 = vpop.f32.mrb[0].mxu0
    %v1161 = vadd.f32 0.0, %v1160
    %v1162 = vpop.f32.mrb[0].mxu0
    %v1163 = vadd.f32 0.0, %v1162
    %1164 = vmatprep.mubr.bf16.mxu0 0
    %1165 = vmatmul.mubr.bf16.gmra.mrb[0].mxu0 %v614
    %v1166 = vpop.f32.mrb[0].mxu0
    %v1167 = vadd.f32 0.0, %v1166
    %v1168 = vpop.f32.mrb[0].mxu0
    %v1169 = vadd.f32 0.0, %v1168
    %v1170 = vpop.f32.mrb[0].mxu0
    %v1171 = vadd.f32 0.0, %v1170
    %v1172 = vpop.f32.mrb[0].mxu0
    %v1173 = vadd.f32 0.0, %v1172
    %1174 = vmatprep.mubr.bf16.mxu0 0
    %1175 = vmatmul.mubr.bf16.gmra.mrb[0].mxu0 %v615
    %v1176 = vpop.f32.mrb[0].mxu0
    %v1177 = vadd.f32 0.0, %v1176
    %v1178 = vpop.f32.mrb[0].mxu0
    %v1179 = vadd.f32 0.0, %v1178
    %v1180 = vpop.f32.mrb[0].mxu0
    %v1181 = vadd.f32 0.0, %v1180
    %v1182 = vpop.f32.mrb[0].mxu0
    %v1183 = vadd.f32 0.0, %v1182
    %1184 = vmatprep.mubr.bf16.mxu0 0
    %1185 = vmatmul.mubr.bf16.gmra.mrb[0].mxu0 %v616
    %v1186 = vpop.f32.mrb[0].mxu0
    %v1187 = vadd.f32 0.0, %v1186
    %v1188 = vpop.f32.mrb[0].mxu0
    %v1189 = vadd.f32 0.0, %v1188
    %v1190 = vpop.f32.mrb[0].mxu0
    %v1191 = vadd.f32 0.0, %v1190
    %v1192 = vpop.f32.mrb[0].mxu0
    %v1193 = vadd.f32 0.0, %v1192
    %1194 = vdwg.mxu0
    %1195 = vst [vmem:[#allocation11] sm:$0xff] %v844
    %1196 = vst [vmem:[#allocation11 + $0x8] sm:$0xff] %v846
    %1197 = vst [vmem:[#allocation11 + $0x10] sm:$0xff] %v1037
    %1198 = vst [vmem:[#allocation11 + $0x18] sm:$0xff] %v1039
    %1199 = vst [vmem:[#allocation11 + $0x20] sm:$0xff] %v848
    %1200 = vst [vmem:[#allocation11 + $0x28] sm:$0xff] %v850
    %1201 = vst [vmem:[#allocation11 + $0x30] sm:$0xff] %v1041
    %1202 = vst [vmem:[#allocation11 + $0x38] sm:$0xff] %v1043
    %1203 = vst [vmem:[#allocation11 + $0x40] sm:$0xff] %v854
    %1204 = vst [vmem:[#allocation11 + $0x48] sm:$0xff] %v856
    %1205 = vst [vmem:[#allocation11 + $0x50] sm:$0xff] %v1047
    %1206 = vst [vmem:[#allocation11 + $0x58] sm:$0xff] %v1049
    %1207 = vst [vmem:[#allocation11 + $0x60] sm:$0xff] %v858
    %1208 = vst [vmem:[#allocation11 + $0x68] sm:$0xff] %v860
    %1209 = vst [vmem:[#allocation11 + $0x70] sm:$0xff] %v1051
    %1210 = vst [vmem:[#allocation11 + $0x78] sm:$0xff] %v1053
    %1211 = vst [vmem:[#allocation11 + $0x80] sm:$0xff] %v864
    %1212 = vst [vmem:[#allocation11 + $0x88] sm:$0xff] %v866
    %1213 = vst [vmem:[#allocation11 + $0x90] sm:$0xff] %v1057
    %1214 = vst [vmem:[#allocation11 + $0x98] sm:$0xff] %v1059
    %1215 = vst [vmem:[#allocation11 + $0xa0] sm:$0xff] %v868
    %1216 = vst [vmem:[#allocation11 + $0xa8] sm:$0xff] %v870
    %1217 = vst [vmem:[#allocation11 + $0xb0] sm:$0xff] %v1061
    %1218 = vst [vmem:[#allocation11 + $0xb8] sm:$0xff] %v1063
    %1219 = vst [vmem:[#allocation11 + $0xc0] sm:$0xff] %v874
    %1220 = vst [vmem:[#allocation11 + $0xc8] sm:$0xff] %v876
    %1221 = vst [vmem:[#allocation11 + $0xd0] sm:$0xff] %v1067
    %1222 = vst [vmem:[#allocation11 + $0xd8] sm:$0xff] %v1069
    %1223 = vst [vmem:[#allocation11 + $0xe0] sm:$0xff] %v878
    %1224 = vst [vmem:[#allocation11 + $0xe8] sm:$0xff] %v880
    %1225 = vst [vmem:[#allocation11 + $0xf0] sm:$0xff] %v1071
    %1226 = vst [vmem:[#allocation11 + $0xf8] sm:$0xff] %v1073
    %1227 = vst [vmem:[#allocation11 + $0x100] sm:$0xff] %v884
    %1228 = vst [vmem:[#allocation11 + $0x108] sm:$0xff] %v886
    %1229 = vst [vmem:[#allocation11 + $0x110] sm:$0xff] %v1077
    %1230 = vst [vmem:[#allocation11 + $0x118] sm:$0xff] %v1079
    %1231 = vst [vmem:[#allocation11 + $0x120] sm:$0xff] %v888
    %1232 = vst [vmem:[#allocation11 + $0x128] sm:$0xff] %v890
    %1233 = vst [vmem:[#allocation11 + $0x130] sm:$0xff] %v1081
    %1234 = vst [vmem:[#allocation11 + $0x138] sm:$0xff] %v1083
    %1235 = vst [vmem:[#allocation11 + $0x140] sm:$0xff] %v894
    %1236 = vst [vmem:[#allocation11 + $0x148] sm:$0xff] %v896
    %1237 = vst [vmem:[#allocation11 + $0x150] sm:$0xff] %v1087
    %1238 = vst [vmem:[#allocation11 + $0x158] sm:$0xff] %v1089
    %1239 = vst [vmem:[#allocation11 + $0x160] sm:$0xff] %v898
    %1240 = vst [vmem:[#allocation11 + $0x168] sm:$0xff] %v900
    %1241 = vst [vmem:[#allocation11 + $0x170] sm:$0xff] %v1091
    %1242 = vst [vmem:[#allocation11 + $0x178] sm:$0xff] %v1093
    %1243 = vst [vmem:[#allocation11 + $0x180] sm:$0xff] %v904
    %1244 = vst [vmem:[#allocation11 + $0x188] sm:$0xff] %v906
    %1245 = vst [vmem:[#allocation11 + $0x190] sm:$0xff] %v1097
    %1246 = vst [vmem:[#allocation11 + $0x198] sm:$0xff] %v1099
    %1247 = vst [vmem:[#allocation11 + $0x1a0] sm:$0xff] %v908
    %1248 = vst [vmem:[#allocation11 + $0x1a8] sm:$0xff] %v910
    %1249 = vst [vmem:[#allocation11 + $0x1b0] sm:$0xff] %v1101
    %1250 = vst [vmem:[#allocation11 + $0x1b8] sm:$0xff] %v1103
    %1251 = vst [vmem:[#allocation11 + $0x1c0] sm:$0xff] %v914
    %1252 = vst [vmem:[#allocation11 + $0x1c8] sm:$0xff] %v916
    %1253 = vst [vmem:[#allocation11 + $0x1d0] sm:$0xff] %v1107
    %1254 = vst [vmem:[#allocation11 + $0x1d8] sm:$0xff] %v1109
    %1255 = vst [vmem:[#allocation11 + $0x1e0] sm:$0xff] %v918
    %1256 = vst [vmem:[#allocation11 + $0x1e8] sm:$0xff] %v920
    %1257 = vst [vmem:[#allocation11 + $0x1f0] sm:$0xff] %v1111
    %1258 = vst [vmem:[#allocation11 + $0x1f8] sm:$0xff] %v1113
    %1259 = vst [vmem:[#allocation11 + $0x200] sm:$0xff] %v924
    %1260 = vst [vmem:[#allocation11 + $0x208] sm:$0xff] %v926
    %1261 = vst [vmem:[#allocation11 + $0x210] sm:$0xff] %v1117
    %1262 = vst [vmem:[#allocation11 + $0x218] sm:$0xff] %v1119
    %1263 = vst [vmem:[#allocation11 + $0x220] sm:$0xff] %v928
    %1264 = vst [vmem:[#allocation11 + $0x228] sm:$0xff] %v930
    %1265 = vst [vmem:[#allocation11 + $0x230] sm:$0xff] %v1121
    %1266 = vst [vmem:[#allocation11 + $0x238] sm:$0xff] %v1123
    %1267 = vst [vmem:[#allocation11 + $0x240] sm:$0xff] %v934
    %1268 = vst [vmem:[#allocation11 + $0x248] sm:$0xff] %v936
    %1269 = vst [vmem:[#allocation11 + $0x250] sm:$0xff] %v1127
    %1270 = vst [vmem:[#allocation11 + $0x258] sm:$0xff] %v1129
    %1271 = vst [vmem:[#allocation11 + $0x260] sm:$0xff] %v938
    %1272 = vst [vmem:[#allocation11 + $0x268] sm:$0xff] %v940
    %1273 = vst [vmem:[#allocation11 + $0x270] sm:$0xff] %v1131
    %1274 = vst [vmem:[#allocation11 + $0x278] sm:$0xff] %v1133
    %1275 = vst [vmem:[#allocation11 + $0x280] sm:$0xff] %v944
    %1276 = vst [vmem:[#allocation11 + $0x288] sm:$0xff] %v946
    %1277 = vst [vmem:[#allocation11 + $0x290] sm:$0xff] %v1137
    %1278 = vst [vmem:[#allocation11 + $0x298] sm:$0xff] %v1139
    %1279 = vst [vmem:[#allocation11 + $0x2a0] sm:$0xff] %v948
    %1280 = vst [vmem:[#allocation11 + $0x2a8] sm:$0xff] %v950
    %1281 = vst [vmem:[#allocation11 + $0x2b0] sm:$0xff] %v1141
    %1282 = vst [vmem:[#allocation11 + $0x2b8] sm:$0xff] %v1143
    %1283 = vst [vmem:[#allocation11 + $0x2c0] sm:$0xff] %v954
    %1284 = vst [vmem:[#allocation11 + $0x2c8] sm:$0xff] %v956
    %1285 = vst [vmem:[#allocation11 + $0x2d0] sm:$0xff] %v1147
    %1286 = vst [vmem:[#allocation11 + $0x2d8] sm:$0xff] %v1149
    %1287 = vst [vmem:[#allocation11 + $0x2e0] sm:$0xff] %v958
    %1288 = vst [vmem:[#allocation11 + $0x2e8] sm:$0xff] %v960
    %1289 = vst [vmem:[#allocation11 + $0x2f0] sm:$0xff] %v1151
    %1290 = vst [vmem:[#allocation11 + $0x2f8] sm:$0xff] %v1153
    %1291 = vst [vmem:[#allocation11 + $0x300] sm:$0xff] %v964
    %1292 = vst [vmem:[#allocation11 + $0x308] sm:$0xff] %v966
    %1293 = vst [vmem:[#allocation11 + $0x310] sm:$0xff] %v1157
    %1294 = vst [vmem:[#allocation11 + $0x318] sm:$0xff] %v1159
    %1295 = vst [vmem:[#allocation11 + $0x320] sm:$0xff] %v968
    %1296 = vst [vmem:[#allocation11 + $0x328] sm:$0xff] %v970
    %1297 = vst [vmem:[#allocation11 + $0x330] sm:$0xff] %v1161
    %1298 = vst [vmem:[#allocation11 + $0x338] sm:$0xff] %v1163
    %1299 = vst [vmem:[#allocation11 + $0x340] sm:$0xff] %v974
    %1300 = vst [vmem:[#allocation11 + $0x348] sm:$0xff] %v976
    %1301 = vst [vmem:[#allocation11 + $0x350] sm:$0xff] %v1167
    %1302 = vst [vmem:[#allocation11 + $0x358] sm:$0xff] %v1169
    %1303 = vst [vmem:[#allocation11 + $0x360] sm:$0xff] %v978
    %1304 = vst [vmem:[#allocation11 + $0x368] sm:$0xff] %v980
    %1305 = vst [vmem:[#allocation11 + $0x370] sm:$0xff] %v1171
    %1306 = vst [vmem:[#allocation11 + $0x378] sm:$0xff] %v1173
    %1307 = vst [vmem:[#allocation11 + $0x380] sm:$0xff] %v984
    %1308 = vst [vmem:[#allocation11 + $0x388] sm:$0xff] %v986
    %1309 = vst [vmem:[#allocation11 + $0x390] sm:$0xff] %v1177
    %1310 = vst [vmem:[#allocation11 + $0x398] sm:$0xff] %v1179
    %1311 = vst [vmem:[#allocation11 + $0x3a0] sm:$0xff] %v988
    %1312 = vst [vmem:[#allocation11 + $0x3a8] sm:$0xff] %v990
    %1313 = vst [vmem:[#allocation11 + $0x3b0] sm:$0xff] %v1181
    %1314 = vst [vmem:[#allocation11 + $0x3b8] sm:$0xff] %v1183
    %1315 = vst [vmem:[#allocation11 + $0x3c0] sm:$0xff] %v994
    %1316 = vst [vmem:[#allocation11 + $0x3c8] sm:$0xff] %v996
    %1317 = vst [vmem:[#allocation11 + $0x3d0] sm:$0xff] %v1187
    %1318 = vst [vmem:[#allocation11 + $0x3d8] sm:$0xff] %v1189
    %1319 = vst [vmem:[#allocation11 + $0x3e0] sm:$0xff] %v998
    %1320 = vst [vmem:[#allocation11 + $0x3e8] sm:$0xff] %v1000
    %1321 = vst [vmem:[#allocation11 + $0x3f0] sm:$0xff] %v1191
    %1322 = vst [vmem:[#allocation11 + $0x3f8] sm:$0xff] %v1193
    // Predicated region
    $region38: #{gpt_forward.3} parent=1 // pred_check
      _
    $region39: #{gpt_forward.3} parent=1 // pred_check_branch
      %1324 = sbr.rel (0) target = $region41
    $region40: #{gpt_forward.3} parent=1 // pred_region
      %s1326 = ssub.s32 16384, 16384
      %1327 = vsyncadd [#allocation5], %s1326
      %s1328 = sshll.u32 [#allocation11], 4
      %s1329 = int_to_ptr.vmem [resolvable:$true] %s1328
      %1334 = dma.vmem_to_hbm [thread:$0]  %s1329, 16384, %s4, [#allocation5], 512, 512, 32
    $region41: #{gpt_forward.3} parent=1 // pred_fallthru
      _
    // Predicated region
    $region42: #{gpt_forward.3} parent=1 // pred_check
      _
    $region43: #{gpt_forward.3} parent=1 // pred_check_branch
      %1336 = sbr.rel (0) target = $region45
    $region44: #{gpt_forward.3} parent=1 // pred_region
      %1337 = dma.done [#allocation5], 16384
    $region45: #{gpt_forward.3} parent=1 // pred_fallthru
      _
    %1338 = vsyncpa [#allocation4], 1
    %1339 = vsyncpa [#allocation7], 1
    %1340 = vsyncpa [#allocation10], 1
    %1341 = vsyncpa [#allocation5], 1

// kernel: gpt_forward.2
$region0: #{gpt_forward.2}
  #allocation0 [shape = 'u32[]', space=smem, size = 0x4, offset = 0x4, fixed_abs, tag = 'smem constant byte address 0x4 - core index']
  #allocation1 [shape = 'u32[144,128]{1,0:T(1,128)}', space=vmem, size = 0x12000, scoped, tag = 'internal scratch']
  #allocation2 [shape = 'f32[8,16,128]{2,1,0:T(8,128)}', space=vmem, size = 0x10000, scoped, tag = 'scratch operand']
  %s0 = inlined_call_operand.hbm [shape: f32[16,16,128], index: 0, kind: input, shape index: {}]
  %s1 = inlined_call_operand.hbm [shape: f32[16,16], index: 1, kind: input, shape index: {}]
  %s2 = inlined_call_operand.hbm [shape: bf16[2,128,384], index: 2, kind: input, shape index: {}]
  %s3 = inlined_call_operand.hbm [shape: f32[2,1,384], index: 3, kind: input, shape index: {}]
  %s4 = inlined_call_operand.hbm [shape: bf16[2,128,128], index: 4, kind: input, shape index: {}]
  %s5 = inlined_call_operand.hbm [shape: f32[2,1,128], index: 5, kind: input, shape index: {}]
  %s6 = inlined_call_operand.hbm [shape: f32[2,1,128], index: 6, kind: input, shape index: {}]
  %s7 = inlined_call_operand.hbm [shape: f32[2,1,128], index: 7, kind: input, shape index: {}]
  %s8 = inlined_call_operand.hbm [shape: bf16[2,128,256], index: 8, kind: input, shape index: {}]
  %s9 = inlined_call_operand.hbm [shape: f32[2,1,256], index: 9, kind: input, shape index: {}]
  %s10 = inlined_call_operand.hbm [shape: bf16[2,256,128], index: 10, kind: input, shape index: {}]
  %s11 = inlined_call_operand.hbm [shape: f32[2,1,128], index: 11, kind: input, shape index: {}]
  %s12 = inlined_call_operand.hbm [shape: f32[2,1,128], index: 12, kind: input, shape index: {}]
  %s13 = inlined_call_operand.hbm [shape: f32[2,1,128], index: 13, kind: input, shape index: {}]
  %s14 = inlined_call_operand.hbm [shape: bf16[16,16,128], index: 14, kind: output, shape index: {}]
  %s15 = sld [smem:[#allocation0]]
  $region153: #{gpt_forward.2} parent=0
    _
  %s17 = ssub.s32 1, %s15
  %s18 = scalar_select 0, %s17, %s15
  $region1: #{gpt_forward.2} parent=0
    #allocation3 [shape = 'u8[131072]{0}', space=vmem, size = 0x20000, scoped, tag = 'input window, operand 0']
    #allocation4 [shape = 's32[2]{0}', space=sflag, size = 0x8, scoped, tag = 'scoped memory for gpt_forward.2']
    #allocation5 [shape = 's32[2]{0}', space=sflag, size = 0x8, scoped, tag = 'scoped memory for gpt_forward.2']
    #allocation6 [shape = 'u8[8192]{0}', space=vmem, size = 0x2000, scoped, tag = 'input window, operand 1, single buffered']
    #allocation7 [shape = 's32[1]{0}', space=sflag, size = 0x4, scoped, tag = 'scoped memory for gpt_forward.2']
    #allocation8 [shape = 'u8[196608]{0}', space=vmem, size = 0x30000, scoped, tag = 'input window, operand 2']
    #allocation9 [shape = 'u8[3072]{0}', space=vmem, size = 0xc00, scoped, tag = 'input window, operand 3']
    #allocation10 [shape = 'u8[65536]{0}', space=vmem, size = 0x10000, scoped, tag = 'input window, operand 4']
    #allocation11 [shape = 'u8[1024]{0}', space=vmem, size = 0x400, scoped, tag = 'input window, operand 5']
    #allocation12 [shape = 'u8[1024]{0}', space=vmem, size = 0x400, scoped, tag = 'input window, operand 6']
    #allocation13 [shape = 'u8[1024]{0}', space=vmem, size = 0x400, scoped, tag = 'input window, operand 7']
    #allocation14 [shape = 'u8[131072]{0}', space=vmem, size = 0x20000, scoped, tag = 'input window, operand 8']
    #allocation15 [shape = 'u8[2048]{0}', space=vmem, size = 0x800, scoped, tag = 'input window, operand 9']
    #allocation16 [shape = 'u8[131072]{0}', space=vmem, size = 0x20000, scoped, tag = 'input window, operand 10']
    #allocation17 [shape = 'u8[1024]{0}', space=vmem, size = 0x400, scoped, tag = 'input window, operand 11']
    #allocation18 [shape = 'u8[1024]{0}', space=vmem, size = 0x400, scoped, tag = 'input window, operand 12']
    #allocation19 [shape = 'u8[1024]{0}', space=vmem, size = 0x400, scoped, tag = 'input window, operand 13']
    #allocation20 [shape = 'u8[65536]{0}', space=vmem, size = 0x10000, scoped, tag = 'output window, operand 0']
    %19 = vsyncpa [#allocation4], 0
    %s20 = scalar_lea.sflag [#allocation4], 1
    %21 = vsyncpa %s20, 0
    %22 = vsyncpa [#allocation7], 0
    %23 = vsyncpa [#allocation5], 0
    %s24 = scalar_lea.sflag [#allocation5], 1
    %25 = vsyncpa %s24, 0
    loop: start=0, step=1, limit=6
    $region2: #{gpt_forward.2} parent=1 // loop_pre_header
      _
    $region3: #{gpt_forward.2} parent=1 // loop_header
      %s27 = sphi 0, %s31
      %p28 = scmp.ge.s32.totalorder %s27, 6
      %s34 = sphi 0, %s46
      %s35 = sphi 0, %s42
      %s36 = sphi 0, %s34
      %s37 = sphi 0, %s35
      %s38 = sphi 0, %s36
      %s39 = sphi 0, %s37
      %s49 = sphi 0, %s51
      %s52 = sphi 0, %s49
      %s53 = sphi 0, %s52
      %s69 = sphi 0, %s53
      %s73 = sphi 0, %s73
      %s75 = sphi 0, %s73
      %s76 = sphi 0, %s75
      %s90 = sphi 0, %s76
      %s96 = sphi 0, %s98
      %s99 = sphi 0, %s96
      %s100 = sphi 0, %s99
      %s116 = sphi 0, %s100
      %s122 = sphi 0, %s124
      %s125 = sphi 0, %s122
      %s126 = sphi 0, %s125
      %s142 = sphi 0, %s126
      %s148 = sphi 0, %s150
      %s151 = sphi 0, %s148
      %s152 = sphi 0, %s151
      %s168 = sphi 0, %s152
      %s174 = sphi 0, %s176
      %s177 = sphi 0, %s174
      %s178 = sphi 0, %s177
      %s194 = sphi 0, %s178
      %s200 = sphi 0, %s202
      %s203 = sphi 0, %s200
      %s204 = sphi 0, %s203
      %s220 = sphi 0, %s204
      %s226 = sphi 0, %s228
      %s229 = sphi 0, %s226
      %s230 = sphi 0, %s229
      %s246 = sphi 0, %s230
      %s252 = sphi 0, %s254
      %s255 = sphi 0, %s252
      %s256 = sphi 0, %s255
      %s272 = sphi 0, %s256
      %s278 = sphi 0, %s280
      %s281 = sphi 0, %s278
      %s282 = sphi 0, %s281
      %s298 = sphi 0, %s282
      %s304 = sphi 0, %s306
      %s307 = sphi 0, %s304
      %s308 = sphi 0, %s307
      %s324 = sphi 0, %s308
      %s330 = sphi 0, %s332
      %s333 = sphi 0, %s330
      %s334 = sphi 0, %s333
      %s350 = sphi 0, %s334
      %s356 = sphi 0, %s358
      %s359 = sphi 0, %s356
      %s360 = sphi 0, %s359
      %s376 = sphi 0, %s360
      %s382 = sphi 0, %s384
      %s385 = sphi 0, %s382
      %s386 = sphi 0, %s385
      %s402 = sphi 0, %s386
      %s408 = sphi 0, %s410
      %s411 = sphi 0, %s408
      %s412 = sphi 0, %s411
      %s428 = sphi 0, %s412
    $region4: #{gpt_forward.2} parent=1 // loop_header_branch
      %30 = sbr.rel (%p28) target = $region8
    $region5: #{gpt_forward.2} parent=1 // loop_body
      %s32 = ssub.s32 %s27, 1
      %s33 = ssub.s32 %s27, 2
      %s40 = sadd.s32 1, %s35
      %p41 = scmp.ge.s32.totalorder %s40, 2
      %s42 = scalar_select %p41, 0, %s40
      %s43 = sadd.s32 1, %s34
      %s44 = scalar_select %p41, %s43, %s34
      %p45 = scmp.ge.s32.totalorder %s44, 2
      %s46 = scalar_select %p45, 0, %s44
      %s47 = ssub.s32 %s34, %s46
      %p48 = scmp.eq.s32.totalorder %s47, 0
      %s50 = sadd.s32 %s49, 1
      %s51 = scalar_select %p48, %s49, %s50
      %p54 = pneg %p48
      %p55 = scmp.eq.s32.totalorder %s27, 3
      %p56 = por %p54, %p55
      %p57 = scmp.ne.s32.totalorder %s49, %s52
      %p58 = scmp.eq.s32.totalorder %s27, 0
      %p59 = por %p57, %p58
      %p60 = scmp.ne.s32.totalorder %s49, %s52
      %p61 = scmp.eq.s32.totalorder %s32, 3
      %p62 = por %p60, %p61
      %p63 = scmp.ne.s32.totalorder %s52, %s53
      %p64 = scmp.eq.s32.totalorder %s32, 0
      %p65 = por %p63, %p64
      %p66 = scmp.ne.s32.totalorder %s52, %s53
      %p67 = scmp.eq.s32.totalorder %s33, 3
      %p68 = por %p66, %p67
      %p70 = scmp.ne.s32.totalorder %s53, %s69
      %p71 = scmp.eq.s32.totalorder %s33, 0
      %p72 = por %p70, %p71
      %s74 = sadd.s32 %s73, 1
      %p77 = scmp.eq.s32.totalorder %s27, 3
      %p78 = scmp.ne.s32.totalorder %s73, %s75
      %p79 = scmp.eq.s32.totalorder %s27, 0
      %p80 = por %p78, %p79
      %p81 = scmp.ne.s32.totalorder %s73, %s75
      %p82 = scmp.eq.s32.totalorder %s32, 3
      %p83 = por %p81, %p82
      %p84 = scmp.ne.s32.totalorder %s75, %s76
      %p85 = scmp.eq.s32.totalorder %s32, 0
      %p86 = por %p84, %p85
      %p87 = scmp.ne.s32.totalorder %s75, %s76
      %p88 = scmp.eq.s32.totalorder %s33, 3
      %p89 = por %p87, %p88
      %p91 = scmp.ne.s32.totalorder %s76, %s90
      %p92 = scmp.eq.s32.totalorder %s33, 0
      %p93 = por %p91, %p92
      %s94 = ssub.s32 %s35, %s42
      %p95 = scmp.eq.s32.totalorder %s94, 0
      %s97 = sadd.s32 %s96, 1
      %s98 = scalar_select %p95, %s96, %s97
      %p101 = pneg %p95
      %p102 = scmp.eq.s32.totalorder %s27, 3
      %p103 = por %p101, %p102
      %p104 = scmp.ne.s32.totalorder %s96, %s99
      %p105 = scmp.eq.s32.totalorder %s27, 0
      %p106 = por %p104, %p105
      %p107 = scmp.ne.s32.totalorder %s96, %s99
      %p108 = scmp.eq.s32.totalorder %s32, 3
      %p109 = por %p107, %p108
      %p110 = scmp.ne.s32.totalorder %s99, %s100
      %p111 = scmp.eq.s32.totalorder %s32, 0
      %p112 = por %p110, %p111
      %p113 = scmp.ne.s32.totalorder %s99, %s100
      %p114 = scmp.eq.s32.totalorder %s33, 3
      %p115 = por %p113, %p114
      %p117 = scmp.ne.s32.totalorder %s100, %s116
      %p118 = scmp.eq.s32.totalorder %s33, 0
      %p119 = por %p117, %p118
      %s120 = ssub.s32 %s35, %s42
      %p121 = scmp.eq.s32.totalorder %s120, 0
      %s123 = sadd.s32 %s122, 1
      %s124 = scalar_select %p121, %s122, %s123
      %p127 = pneg %p121
      %p128 = scmp.eq.s32.totalorder %s27, 3
      %p129 = por %p127, %p128
      %p130 = scmp.ne.s32.totalorder %s122, %s125
      %p131 = scmp.eq.s32.totalorder %s27, 0
      %p132 = por %p130, %p131
      %p133 = scmp.ne.s32.totalorder %s122, %s125
      %p134 = scmp.eq.s32.totalorder %s32, 3
      %p135 = por %p133, %p134
      %p136 = scmp.ne.s32.totalorder %s125, %s126
      %p137 = scmp.eq.s32.totalorder %s32, 0
      %p138 = por %p136, %p137
      %p139 = scmp.ne.s32.totalorder %s125, %s126
      %p140 = scmp.eq.s32.totalorder %s33, 3
      %p141 = por %p139, %p140
      %p143 = scmp.ne.s32.totalorder %s126, %s142
      %p144 = scmp.eq.s32.totalorder %s33, 0
      %p145 = por %p143, %p144
      %s146 = ssub.s32 %s35, %s42
      %p147 = scmp.eq.s32.totalorder %s146, 0
      %s149 = sadd.s32 %s148, 1
      %s150 = scalar_select %p147, %s148, %s149
      %p153 = pneg %p147
      %p154 = scmp.eq.s32.totalorder %s27, 3
      %p155 = por %p153, %p154
      %p156 = scmp.ne.s32.totalorder %s148, %s151
      %p157 = scmp.eq.s32.totalorder %s27, 0
      %p158 = por %p156, %p157
      %p159 = scmp.ne.s32.totalorder %s148, %s151
      %p160 = scmp.eq.s32.totalorder %s32, 3
      %p161 = por %p159, %p160
      %p162 = scmp.ne.s32.totalorder %s151, %s152
      %p163 = scmp.eq.s32.totalorder %s32, 0
      %p164 = por %p162, %p163
      %p165 = scmp.ne.s32.totalorder %s151, %s152
      %p166 = scmp.eq.s32.totalorder %s33, 3
      %p167 = por %p165, %p166
      %p169 = scmp.ne.s32.totalorder %s152, %s168
      %p170 = scmp.eq.s32.totalorder %s33, 0
      %p171 = por %p169, %p170
      %s172 = ssub.s32 %s35, %s42
      %p173 = scmp.eq.s32.totalorder %s172, 0
      %s175 = sadd.s32 %s174, 1
      %s176 = scalar_select %p173, %s174, %s175
      %p179 = pneg %p173
      %p180 = scmp.eq.s32.totalorder %s27, 3
      %p181 = por %p179, %p180
      %p182 = scmp.ne.s32.totalorder %s174, %s177
      %p183 = scmp.eq.s32.totalorder %s27, 0
      %p184 = por %p182, %p183
      %p185 = scmp.ne.s32.totalorder %s174, %s177
      %p186 = scmp.eq.s32.totalorder %s32, 3
      %p187 = por %p185, %p186
      %p188 = scmp.ne.s32.totalorder %s177, %s178
      %p189 = scmp.eq.s32.totalorder %s32, 0
      %p190 = por %p188, %p189
      %p191 = scmp.ne.s32.totalorder %s177, %s178
      %p192 = scmp.eq.s32.totalorder %s33, 3
      %p193 = por %p191, %p192
      %p195 = scmp.ne.s32.totalorder %s178, %s194
      %p196 = scmp.eq.s32.totalorder %s33, 0
      %p197 = por %p195, %p196
      %s198 = ssub.s32 %s35, %s42
      %p199 = scmp.eq.s32.totalorder %s198, 0
      %s201 = sadd.s32 %s200, 1
      %s202 = scalar_select %p199, %s200, %s201
      %p205 = pneg %p199
      %p206 = scmp.eq.s32.totalorder %s27, 3
      %p207 = por %p205, %p206
      %p208 = scmp.ne.s32.totalorder %s200, %s203
      %p209 = scmp.eq.s32.totalorder %s27, 0
      %p210 = por %p208, %p209
      %p211 = scmp.ne.s32.totalorder %s200, %s203
      %p212 = scmp.eq.s32.totalorder %s32, 3
      %p213 = por %p211, %p212
      %p214 = scmp.ne.s32.totalorder %s203, %s204
      %p215 = scmp.eq.s32.totalorder %s32, 0
      %p216 = por %p214, %p215
      %p217 = scmp.ne.s32.totalorder %s203, %s204
      %p218 = scmp.eq.s32.totalorder %s33, 3
      %p219 = por %p217, %p218
      %p221 = scmp.ne.s32.totalorder %s204, %s220
      %p222 = scmp.eq.s32.totalorder %s33, 0
      %p223 = por %p221, %p222
      %s224 = ssub.s32 %s35, %s42
      %p225 = scmp.eq.s32.totalorder %s224, 0
      %s227 = sadd.s32 %s226, 1
      %s228 = scalar_select %p225, %s226, %s227
      %p231 = pneg %p225
      %p232 = scmp.eq.s32.totalorder %s27, 3
      %p233 = por %p231, %p232
      %p234 = scmp.ne.s32.totalorder %s226, %s229
      %p235 = scmp.eq.s32.totalorder %s27, 0
      %p236 = por %p234, %p235
      %p237 = scmp.ne.s32.totalorder %s226, %s229
      %p238 = scmp.eq.s32.totalorder %s32, 3
      %p239 = por %p237, %p238
      %p240 = scmp.ne.s32.totalorder %s229, %s230
      %p241 = scmp.eq.s32.totalorder %s32, 0
      %p242 = por %p240, %p241
      %p243 = scmp.ne.s32.totalorder %s229, %s230
      %p244 = scmp.eq.s32.totalorder %s33, 3
      %p245 = por %p243, %p244
      %p247 = scmp.ne.s32.totalorder %s230, %s246
      %p248 = scmp.eq.s32.totalorder %s33, 0
      %p249 = por %p247, %p248
      %s250 = ssub.s32 %s35, %s42
      %p251 = scmp.eq.s32.totalorder %s250, 0
      %s253 = sadd.s32 %s252, 1
      %s254 = scalar_select %p251, %s252, %s253
      %p257 = pneg %p251
      %p258 = scmp.eq.s32.totalorder %s27, 3
      %p259 = por %p257, %p258
      %p260 = scmp.ne.s32.totalorder %s252, %s255
      %p261 = scmp.eq.s32.totalorder %s27, 0
      %p262 = por %p260, %p261
      %p263 = scmp.ne.s32.totalorder %s252, %s255
      %p264 = scmp.eq.s32.totalorder %s32, 3
      %p265 = por %p263, %p264
      %p266 = scmp.ne.s32.totalorder %s255, %s256
      %p267 = scmp.eq.s32.totalorder %s32, 0
      %p268 = por %p266, %p267
      %p269 = scmp.ne.s32.totalorder %s255, %s256
      %p270 = scmp.eq.s32.totalorder %s33, 3
      %p271 = por %p269, %p270
      %p273 = scmp.ne.s32.totalorder %s256, %s272
      %p274 = scmp.eq.s32.totalorder %s33, 0
      %p275 = por %p273, %p274
      %s276 = ssub.s32 %s35, %s42
      %p277 = scmp.eq.s32.totalorder %s276, 0
      %s279 = sadd.s32 %s278, 1
      %s280 = scalar_select %p277, %s278, %s279
      %p283 = pneg %p277
      %p284 = scmp.eq.s32.totalorder %s27, 3
      %p285 = por %p283, %p284
      %p286 = scmp.ne.s32.totalorder %s278, %s281
      %p287 = scmp.eq.s32.totalorder %s27, 0
      %p288 = por %p286, %p287
      %p289 = scmp.ne.s32.totalorder %s278, %s281
      %p290 = scmp.eq.s32.totalorder %s32, 3
      %p291 = por %p289, %p290
      %p292 = scmp.ne.s32.totalorder %s281, %s282
      %p293 = scmp.eq.s32.totalorder %s32, 0
      %p294 = por %p292, %p293
      %p295 = scmp.ne.s32.totalorder %s281, %s282
      %p296 = scmp.eq.s32.totalorder %s33, 3
      %p297 = por %p295, %p296
      %p299 = scmp.ne.s32.totalorder %s282, %s298
      %p300 = scmp.eq.s32.totalorder %s33, 0
      %p301 = por %p299, %p300
      %s302 = ssub.s32 %s35, %s42
      %p303 = scmp.eq.s32.totalorder %s302, 0
      %s305 = sadd.s32 %s304, 1
      %s306 = scalar_select %p303, %s304, %s305
      %p309 = pneg %p303
      %p310 = scmp.eq.s32.totalorder %s27, 3
      %p311 = por %p309, %p310
      %p312 = scmp.ne.s32.totalorder %s304, %s307
      %p313 = scmp.eq.s32.totalorder %s27, 0
      %p314 = por %p312, %p313
      %p315 = scmp.ne.s32.totalorder %s304, %s307
      %p316 = scmp.eq.s32.totalorder %s32, 3
      %p317 = por %p315, %p316
      %p318 = scmp.ne.s32.totalorder %s307, %s308
      %p319 = scmp.eq.s32.totalorder %s32, 0
      %p320 = por %p318, %p319
      %p321 = scmp.ne.s32.totalorder %s307, %s308
      %p322 = scmp.eq.s32.totalorder %s33, 3
      %p323 = por %p321, %p322
      %p325 = scmp.ne.s32.totalorder %s308, %s324
      %p326 = scmp.eq.s32.totalorder %s33, 0
      %p327 = por %p325, %p326
      %s328 = ssub.s32 %s35, %s42
      %p329 = scmp.eq.s32.totalorder %s328, 0
      %s331 = sadd.s32 %s330, 1
      %s332 = scalar_select %p329, %s330, %s331
      %p335 = pneg %p329
      %p336 = scmp.eq.s32.totalorder %s27, 3
      %p337 = por %p335, %p336
      %p338 = scmp.ne.s32.totalorder %s330, %s333
      %p339 = scmp.eq.s32.totalorder %s27, 0
      %p340 = por %p338, %p339
      %p341 = scmp.ne.s32.totalorder %s330, %s333
      %p342 = scmp.eq.s32.totalorder %s32, 3
      %p343 = por %p341, %p342
      %p344 = scmp.ne.s32.totalorder %s333, %s334
      %p345 = scmp.eq.s32.totalorder %s32, 0
      %p346 = por %p344, %p345
      %p347 = scmp.ne.s32.totalorder %s333, %s334
      %p348 = scmp.eq.s32.totalorder %s33, 3
      %p349 = por %p347, %p348
      %p351 = scmp.ne.s32.totalorder %s334, %s350
      %p352 = scmp.eq.s32.totalorder %s33, 0
      %p353 = por %p351, %p352
      %s354 = ssub.s32 %s35, %s42
      %p355 = scmp.eq.s32.totalorder %s354, 0
      %s357 = sadd.s32 %s356, 1
      %s358 = scalar_select %p355, %s356, %s357
      %p361 = pneg %p355
      %p362 = scmp.eq.s32.totalorder %s27, 3
      %p363 = por %p361, %p362
      %p364 = scmp.ne.s32.totalorder %s356, %s359
      %p365 = scmp.eq.s32.totalorder %s27, 0
      %p366 = por %p364, %p365
      %p367 = scmp.ne.s32.totalorder %s356, %s359
      %p368 = scmp.eq.s32.totalorder %s32, 3
      %p369 = por %p367, %p368
      %p370 = scmp.ne.s32.totalorder %s359, %s360
      %p371 = scmp.eq.s32.totalorder %s32, 0
      %p372 = por %p370, %p371
      %p373 = scmp.ne.s32.totalorder %s359, %s360
      %p374 = scmp.eq.s32.totalorder %s33, 3
      %p375 = por %p373, %p374
      %p377 = scmp.ne.s32.totalorder %s360, %s376
      %p378 = scmp.eq.s32.totalorder %s33, 0
      %p379 = por %p377, %p378
      %s380 = ssub.s32 %s35, %s42
      %p381 = scmp.eq.s32.totalorder %s380, 0
      %s383 = sadd.s32 %s382, 1
      %s384 = scalar_select %p381, %s382, %s383
      %p387 = pneg %p381
      %p388 = scmp.eq.s32.totalorder %s27, 3
      %p389 = por %p387, %p388
      %p390 = scmp.ne.s32.totalorder %s382, %s385
      %p391 = scmp.eq.s32.totalorder %s27, 0
      %p392 = por %p390, %p391
      %p393 = scmp.ne.s32.totalorder %s382, %s385
      %p394 = scmp.eq.s32.totalorder %s32, 3
      %p395 = por %p393, %p394
      %p396 = scmp.ne.s32.totalorder %s385, %s386
      %p397 = scmp.eq.s32.totalorder %s32, 0
      %p398 = por %p396, %p397
      %p399 = scmp.ne.s32.totalorder %s385, %s386
      %p400 = scmp.eq.s32.totalorder %s33, 3
      %p401 = por %p399, %p400
      %p403 = scmp.ne.s32.totalorder %s386, %s402
      %p404 = scmp.eq.s32.totalorder %s33, 0
      %p405 = por %p403, %p404
      %s406 = ssub.s32 %s34, %s46
      %p407 = scmp.eq.s32.totalorder %s406, 0
      %s409 = sadd.s32 %s408, 1
      %s410 = scalar_select %p407, %s408, %s409
      %p413 = pneg %p407
      %p414 = scmp.eq.s32.totalorder %s27, 3
      %p415 = por %p413, %p414
      %p416 = scmp.ne.s32.totalorder %s408, %s411
      %p417 = scmp.eq.s32.totalorder %s27, 0
      %p418 = por %p416, %p417
      %p419 = scmp.ne.s32.totalorder %s408, %s411
      %p420 = scmp.eq.s32.totalorder %s32, 3
      %p421 = por %p419, %p420
      %p422 = scmp.ne.s32.totalorder %s411, %s412
      %p423 = scmp.eq.s32.totalorder %s32, 0
      %p424 = por %p422, %p423
      %p425 = scmp.ne.s32.totalorder %s411, %s412
      %p426 = scmp.eq.s32.totalorder %s33, 3
      %p427 = por %p425, %p426
      %p429 = scmp.ne.s32.totalorder %s412, %s428
      %p430 = scmp.eq.s32.totalorder %s33, 0
      %p431 = por %p429, %p430
      %p432 = scmp.le.s32.totalorder 1, %s27
      %p433 = scmp.lt.s32.totalorder %s27, 5
      %p434 = pnand %p432, %p433
      %p435 = pneg %p434
      // Predicated region
      $region9: #{gpt_forward.2} parent=5 // pred_check
        _
      $region10: #{gpt_forward.2} parent=5 // pred_check_branch
        %437 = sbr.rel (%p434) target = $region12
      $region11: #{gpt_forward.2} parent=5 // pred_region
        %s438 = ssub.s32 %s27, 1
        // Predicated region
        $region13: #{gpt_forward.2} parent=11 // pred_check
          %p439 = pneg %p86
        $region14: #{gpt_forward.2} parent=11 // pred_check_branch
          %441 = sbr.rel (%p439) target = $region16
        $region15: #{gpt_forward.2} parent=11 // pred_region
          %s443 = ssub.s32 256, 256
          %444 = vsyncadd [#allocation7], %s443
          %s445 = sshll.u32 [#allocation6], 4
          %s446 = int_to_ptr.vmem [resolvable:$true] %s445
          %451 = dma.hbm_to_vmem [thread:$0]  %s1, 256, %s446, [#allocation7], 128, 128, 8
        $region16: #{gpt_forward.2} parent=11 // pred_fallthru
          _
      $region12: #{gpt_forward.2} parent=5 // pred_fallthru
        _
      %p452 = scmp.lt.s32.totalorder %s27, 4
      // Predicated region
      $region17: #{gpt_forward.2} parent=5 // pred_check
        %p453 = pneg %p452
      $region18: #{gpt_forward.2} parent=5 // pred_check_branch
        %455 = sbr.rel (%p453) target = $region20
      $region19: #{gpt_forward.2} parent=5 // pred_region
        // Predicated region
        $region21: #{gpt_forward.2} parent=19 // pred_check
          %p456 = pneg %p59
        $region22: #{gpt_forward.2} parent=19 // pred_check_branch
          %458 = sbr.rel (%p456) target = $region24
        $region23: #{gpt_forward.2} parent=19 // pred_region
          %s459 = sand.u32 %s27, 1
          %s460 = scalar_lea.sflag [#allocation4], %s459
          %s461 = sand.u32 %s49, 1
          %s462 = smul.addr %s461, 128
          %s463 = scalar_lea.vmem [#allocation3], %s462
          %s464 = smul.u32 8, %s34
          %s466 = ssub.s32 2048, 2048
          %467 = vsyncadd %s460, %s466
          %s468 = smul.addr %s464, 2
          %s469 = smul.addr %s468, 128
          %s470 = scalar_lea.hbm %s0, %s469
          %s471 = sshll.u32 %s463, 4
          %s472 = int_to_ptr.vmem [resolvable:$true] %s471
          %477 = dma.hbm_to_vmem [thread:$0]  %s470, 2048, %s472, %s460, 128, 128, 8
        $region24: #{gpt_forward.2} parent=19 // pred_fallthru
          _
        // Predicated region
        $region25: #{gpt_forward.2} parent=19 // pred_check
          %p478 = pneg %p106
        $region26: #{gpt_forward.2} parent=19 // pred_check_branch
          %480 = sbr.rel (%p478) target = $region28
        $region27: #{gpt_forward.2} parent=19 // pred_region
          %s481 = sand.u32 %s27, 1
          %s482 = scalar_lea.sflag [#allocation4], %s481
          %s483 = sand.u32 %s96, 1
          %s484 = smul.addr %s483, 192
          %s485 = scalar_lea.vmem [#allocation8], %s484
          %s487 = ssub.s32 3072, 3072
          %488 = vsyncadd %s482, %s487
          %s489 = smul.addr %s35, 48
          %s490 = smul.addr %s489, 64
          %s491 = scalar_lea.hbm %s2, %s490
          %s492 = sshll.u32 %s485, 4
          %s493 = int_to_ptr.vmem [resolvable:$true] %s492
          %498 = dma.hbm_to_vmem [thread:$0]  %s491, 3072, %s493, %s482, 192, 192, 12
        $region28: #{gpt_forward.2} parent=19 // pred_fallthru
          _
        // Predicated region
        $region29: #{gpt_forward.2} parent=19 // pred_check
          %p499 = pneg %p132
        $region30: #{gpt_forward.2} parent=19 // pred_check_branch
          %501 = sbr.rel (%p499) target = $region32
        $region31: #{gpt_forward.2} parent=19 // pred_region
          %s502 = sand.u32 %s27, 1
          %s503 = scalar_lea.sflag [#allocation4], %s502
          %s504 = sand.u32 %s122, 1
          %s505 = smul.addr %s504, 3
          %s506 = scalar_lea.vmem [#allocation9], %s505
          %s508 = ssub.s32 48, 48
          %509 = vsyncadd %s503, %s508
          %s510 = smul.addr %s35, 3
          %s511 = smul.addr %s510, 16
          %s512 = scalar_lea.hbm %s3, %s511
          %s514 = sshll.u32 %s506, 4
          %s515 = int_to_ptr.vmem [resolvable:$true] %s514
          %517 = dma.hbm_to_vmem [thread:$0]  %s512, 48, %s515, %s503
        $region32: #{gpt_forward.2} parent=19 // pred_fallthru
          _
        // Predicated region
        $region33: #{gpt_forward.2} parent=19 // pred_check
          %p518 = pneg %p158
        $region34: #{gpt_forward.2} parent=19 // pred_check_branch
          %520 = sbr.rel (%p518) target = $region36
        $region35: #{gpt_forward.2} parent=19 // pred_region
          %s521 = sand.u32 %s27, 1
          %s522 = scalar_lea.sflag [#allocation4], %s521
          %s523 = sand.u32 %s148, 1
          %s524 = smul.addr %s523, 64
          %s525 = scalar_lea.vmem [#allocation10], %s524
          %s527 = ssub.s32 1024, 1024
          %528 = vsyncadd %s522, %s527
          %s529 = smul.addr %s35, 16
          %s530 = smul.addr %s529, 64
          %s531 = scalar_lea.hbm %s4, %s530
          %s532 = sshll.u32 %s525, 4
          %s533 = int_to_ptr.vmem [resolvable:$true] %s532
          %538 = dma.hbm_to_vmem [thread:$0]  %s531, 1024, %s533, %s522, 64, 64, 4
        $region36: #{gpt_forward.2} parent=19 // pred_fallthru
          _
        // Predicated region
        $region37: #{gpt_forward.2} parent=19 // pred_check
          %p539 = pneg %p184
        $region38: #{gpt_forward.2} parent=19 // pred_check_branch
          %541 = sbr.rel (%p539) target = $region40
        $region39: #{gpt_forward.2} parent=19 // pred_region
          %s542 = sand.u32 %s27, 1
          %s543 = scalar_lea.sflag [#allocation4], %s542
          %s544 = sand.u32 %s174, 1
          %s545 = scalar_lea.vmem [#allocation11], %s544
          %s547 = ssub.s32 16, 16
          %548 = vsyncadd %s543, %s547
          %s549 = smul.addr %s35, 16
          %s550 = scalar_lea.hbm %s5, %s549
          %s552 = sshll.u32 %s545, 4
          %s553 = int_to_ptr.vmem [resolvable:$true] %s552
          %555 = dma.hbm_to_vmem [thread:$0]  %s550, 16, %s553, %s543
        $region40: #{gpt_forward.2} parent=19 // pred_fallthru
          _
        // Predicated region
        $region41: #{gpt_forward.2} parent=19 // pred_check
          %p556 = pneg %p210
        $region42: #{gpt_forward.2} parent=19 // pred_check_branch
          %558 = sbr.rel (%p556) target = $region44
        $region43: #{gpt_forward.2} parent=19 // pred_region
          %s559 = sand.u32 %s27, 1
          %s560 = scalar_lea.sflag [#allocation4], %s559
          %s561 = sand.u32 %s200, 1
          %s562 = scalar_lea.vmem [#allocation12], %s561
          %s564 = ssub.s32 16, 16
          %565 = vsyncadd %s560, %s564
          %s566 = smul.addr %s35, 16
          %s567 = scalar_lea.hbm %s6, %s566
          %s569 = sshll.u32 %s562, 4
          %s570 = int_to_ptr.vmem [resolvable:$true] %s569
          %572 = dma.hbm_to_vmem [thread:$0]  %s567, 16, %s570, %s560
        $region44: #{gpt_forward.2} parent=19 // pred_fallthru
          _
        // Predicated region
        $region45: #{gpt_forward.2} parent=19 // pred_check
          %p573 = pneg %p236
        $region46: #{gpt_forward.2} parent=19 // pred_check_branch
          %575 = sbr.rel (%p573) target = $region48
        $region47: #{gpt_forward.2} parent=19 // pred_region
          %s576 = sand.u32 %s27, 1
          %s577 = scalar_lea.sflag [#allocation4], %s576
          %s578 = sand.u32 %s226, 1
          %s579 = scalar_lea.vmem [#allocation13], %s578
          %s581 = ssub.s32 16, 16
          %582 = vsyncadd %s577, %s581
          %s583 = smul.addr %s35, 16
          %s584 = scalar_lea.hbm %s7, %s583
          %s586 = sshll.u32 %s579, 4
          %s587 = int_to_ptr.vmem [resolvable:$true] %s586
          %589 = dma.hbm_to_vmem [thread:$0]  %s584, 16, %s587, %s577
        $region48: #{gpt_forward.2} parent=19 // pred_fallthru
          _
        // Predicated region
        $region49: #{gpt_forward.2} parent=19 // pred_check
          %p590 = pneg %p262
        $region50: #{gpt_forward.2} parent=19 // pred_check_branch
          %592 = sbr.rel (%p590) target = $region52
        $region51: #{gpt_forward.2} parent=19 // pred_region
          %s593 = sand.u32 %s27, 1
          %s594 = scalar_lea.sflag [#allocation4], %s593
          %s595 = sand.u32 %s252, 1
          %s596 = smul.addr %s595, 128
          %s597 = scalar_lea.vmem [#allocation14], %s596
          %s599 = ssub.s32 2048, 2048
          %600 = vsyncadd %s594, %s599
          %s601 = smul.addr %s35, 32
          %s602 = smul.addr %s601, 64
          %s603 = scalar_lea.hbm %s8, %s602
          %s604 = sshll.u32 %s597, 4
          %s605 = int_to_ptr.vmem [resolvable:$true] %s604
          %610 = dma.hbm_to_vmem [thread:$0]  %s603, 2048, %s605, %s594, 128, 128, 8
        $region52: #{gpt_forward.2} parent=19 // pred_fallthru
          _
        // Predicated region
        $region53: #{gpt_forward.2} parent=19 // pred_check
          %p611 = pneg %p288
        $region54: #{gpt_forward.2} parent=19 // pred_check_branch
          %613 = sbr.rel (%p611) target = $region56
        $region55: #{gpt_forward.2} parent=19 // pred_region
          %s614 = sand.u32 %s27, 1
          %s615 = scalar_lea.sflag [#allocation4], %s614
          %s616 = sand.u32 %s278, 1
          %s617 = smul.addr %s616, 2
          %s618 = scalar_lea.vmem [#allocation15], %s617
          %s620 = ssub.s32 32, 32
          %621 = vsyncadd %s615, %s620
          %s622 = smul.addr %s35, 2
          %s623 = smul.addr %s622, 16
          %s624 = scalar_lea.hbm %s9, %s623
          %s626 = sshll.u32 %s618, 4
          %s627 = int_to_ptr.vmem [resolvable:$true] %s626
          %629 = dma.hbm_to_vmem [thread:$0]  %s624, 32, %s627, %s615
        $region56: #{gpt_forward.2} parent=19 // pred_fallthru
          _
        // Predicated region
        $region57: #{gpt_forward.2} parent=19 // pred_check
          %p630 = pneg %p314
        $region58: #{gpt_forward.2} parent=19 // pred_check_branch
          %632 = sbr.rel (%p630) target = $region60
        $region59: #{gpt_forward.2} parent=19 // pred_region
          %s633 = sand.u32 %s27, 1
          %s634 = scalar_lea.sflag [#allocation4], %s633
          %s635 = sand.u32 %s304, 1
          %s636 = smul.addr %s635, 128
          %s637 = scalar_lea.vmem [#allocation16], %s636
          %s639 = ssub.s32 2048, 2048
          %640 = vsyncadd %s634, %s639
          %s641 = smul.addr %s35, 32
          %s642 = smul.addr %s641, 64
          %s643 = scalar_lea.hbm %s10, %s642
          %s644 = sshll.u32 %s637, 4
          %s645 = int_to_ptr.vmem [resolvable:$true] %s644
          %650 = dma.hbm_to_vmem [thread:$0]  %s643, 2048, %s645, %s634, 64, 64, 4
        $region60: #{gpt_forward.2} parent=19 // pred_fallthru
          _
        // Predicated region
        $region61: #{gpt_forward.2} parent=19 // pred_check
          %p651 = pneg %p340
        $region62: #{gpt_forward.2} parent=19 // pred_check_branch
          %653 = sbr.rel (%p651) target = $region64
        $region63: #{gpt_forward.2} parent=19 // pred_region
          %s654 = sand.u32 %s27, 1
          %s655 = scalar_lea.sflag [#allocation4], %s654
          %s656 = sand.u32 %s330, 1
          %s657 = scalar_lea.vmem [#allocation17], %s656
          %s659 = ssub.s32 16, 16
          %660 = vsyncadd %s655, %s659
          %s661 = smul.addr %s35, 16
          %s662 = scalar_lea.hbm %s11, %s661
          %s664 = sshll.u32 %s657, 4
          %s665 = int_to_ptr.vmem [resolvable:$true] %s664
          %667 = dma.hbm_to_vmem [thread:$0]  %s662, 16, %s665, %s655
        $region64: #{gpt_forward.2} parent=19 // pred_fallthru
          _
        // Predicated region
        $region65: #{gpt_forward.2} parent=19 // pred_check
          %p668 = pneg %p366
        $region66: #{gpt_forward.2} parent=19 // pred_check_branch
          %670 = sbr.rel (%p668) target = $region68
        $region67: #{gpt_forward.2} parent=19 // pred_region
          %s671 = sand.u32 %s27, 1
          %s672 = scalar_lea.sflag [#allocation4], %s671
          %s673 = sand.u32 %s356, 1
          %s674 = scalar_lea.vmem [#allocation18], %s673
          %s676 = ssub.s32 16, 16
          %677 = vsyncadd %s672, %s676
          %s678 = smul.addr %s35, 16
          %s679 = scalar_lea.hbm %s12, %s678
          %s681 = sshll.u32 %s674, 4
          %s682 = int_to_ptr.vmem [resolvable:$true] %s681
          %684 = dma.hbm_to_vmem [thread:$0]  %s679, 16, %s682, %s672
        $region68: #{gpt_forward.2} parent=19 // pred_fallthru
          _
        // Predicated region
        $region69: #{gpt_forward.2} parent=19 // pred_check
          %p685 = pneg %p392
        $region70: #{gpt_forward.2} parent=19 // pred_check_branch
          %687 = sbr.rel (%p685) target = $region72
        $region71: #{gpt_forward.2} parent=19 // pred_region
          %s688 = sand.u32 %s27, 1
          %s689 = scalar_lea.sflag [#allocation4], %s688
          %s690 = sand.u32 %s382, 1
          %s691 = scalar_lea.vmem [#allocation19], %s690
          %s693 = ssub.s32 16, 16
          %694 = vsyncadd %s689, %s693
          %s695 = smul.addr %s35, 16
          %s696 = scalar_lea.hbm %s13, %s695
          %s698 = sshll.u32 %s691, 4
          %s699 = int_to_ptr.vmem [resolvable:$true] %s698
          %701 = dma.hbm_to_vmem [thread:$0]  %s696, 16, %s699, %s689
        $region72: #{gpt_forward.2} parent=19 // pred_fallthru
          _
      $region20: #{gpt_forward.2} parent=5 // pred_fallthru
        _
      %p702 = scmp.le.s32.totalorder 1, %s27
      %p703 = scmp.lt.s32.totalorder %s27, 5
      %p704 = pnand %p702, %p703
      %p705 = pneg %p704
      // Predicated region
      $region73: #{gpt_forward.2} parent=5 // pred_check
        _
      $region74: #{gpt_forward.2} parent=5 // pred_check_branch
        %707 = sbr.rel (%p704) target = $region76
      $region75: #{gpt_forward.2} parent=5 // pred_region
        %s708 = ssub.s32 %s27, 1
        %s709 = sand.u32 %s32, 1
        %s710 = scalar_lea.sflag [#allocation4], %s709
        %s711 = sand.u32 %s52, 1
        %s712 = smul.addr %s711, 128
        %s713 = scalar_lea.vmem [#allocation3], %s712
        // Predicated region
        $region77: #{gpt_forward.2} parent=75 // pred_check
          %p714 = pneg %p65
        $region78: #{gpt_forward.2} parent=75 // pred_check_branch
          %716 = sbr.rel (%p714) target = $region80
        $region79: #{gpt_forward.2} parent=75 // pred_region
          %717 = dma.done %s710, 2048
        $region80: #{gpt_forward.2} parent=75 // pred_fallthru
          _
        // Predicated region
        $region81: #{gpt_forward.2} parent=75 // pred_check
          %p718 = pneg %p86
        $region82: #{gpt_forward.2} parent=75 // pred_check_branch
          %720 = sbr.rel (%p718) target = $region84
        $region83: #{gpt_forward.2} parent=75 // pred_region
          %721 = dma.done [#allocation7], 256
        $region84: #{gpt_forward.2} parent=75 // pred_fallthru
          _
        %s722 = sand.u32 %s32, 1
        %s723 = scalar_lea.sflag [#allocation4], %s722
        %s724 = sand.u32 %s99, 1
        %s725 = smul.addr %s724, 192
        %s726 = scalar_lea.vmem [#allocation8], %s725
        // Predicated region
        $region85: #{gpt_forward.2} parent=75 // pred_check
          %p727 = pneg %p112
        $region86: #{gpt_forward.2} parent=75 // pred_check_branch
          %729 = sbr.rel (%p727) target = $region88
        $region87: #{gpt_forward.2} parent=75 // pred_region
          %730 = dma.done %s723, 3072
        $region88: #{gpt_forward.2} parent=75 // pred_fallthru
          _
        %s731 = sand.u32 %s32, 1
        %s732 = scalar_lea.sflag [#allocation4], %s731
        %s733 = sand.u32 %s125, 1
        %s734 = smul.addr %s733, 3
        %s735 = scalar_lea.vmem [#allocation9], %s734
        // Predicated region
        $region89: #{gpt_forward.2} parent=75 // pred_check
          %p736 = pneg %p138
        $region90: #{gpt_forward.2} parent=75 // pred_check_branch
          %738 = sbr.rel (%p736) target = $region92
        $region91: #{gpt_forward.2} parent=75 // pred_region
          %739 = dma.done %s732, 48
        $region92: #{gpt_forward.2} parent=75 // pred_fallthru
          _
        %s740 = sand.u32 %s32, 1
        %s741 = scalar_lea.sflag [#allocation4], %s740
        %s742 = sand.u32 %s151, 1
        %s743 = smul.addr %s742, 64
        %s744 = scalar_lea.vmem [#allocation10], %s743
        // Predicated region
        $region93: #{gpt_forward.2} parent=75 // pred_check
          %p745 = pneg %p164
        $region94: #{gpt_forward.2} parent=75 // pred_check_branch
          %747 = sbr.rel (%p745) target = $region96
        $region95: #{gpt_forward.2} parent=75 // pred_region
          %748 = dma.done %s741, 1024
        $region96: #{gpt_forward.2} parent=75 // pred_fallthru
          _
        %s749 = sand.u32 %s32, 1
        %s750 = scalar_lea.sflag [#allocation4], %s749
        %s751 = sand.u32 %s177, 1
        %s752 = scalar_lea.vmem [#allocation11], %s751
        // Predicated region
        $region97: #{gpt_forward.2} parent=75 // pred_check
          %p753 = pneg %p190
        $region98: #{gpt_forward.2} parent=75 // pred_check_branch
          %755 = sbr.rel (%p753) target = $region100
        $region99: #{gpt_forward.2} parent=75 // pred_region
          %756 = dma.done %s750, 16
        $region100: #{gpt_forward.2} parent=75 // pred_fallthru
          _
        %s757 = sand.u32 %s32, 1
        %s758 = scalar_lea.sflag [#allocation4], %s757
        %s759 = sand.u32 %s203, 1
        %s760 = scalar_lea.vmem [#allocation12], %s759
        // Predicated region
        $region101: #{gpt_forward.2} parent=75 // pred_check
          %p761 = pneg %p216
        $region102: #{gpt_forward.2} parent=75 // pred_check_branch
          %763 = sbr.rel (%p761) target = $region104
        $region103: #{gpt_forward.2} parent=75 // pred_region
          %764 = dma.done %s758, 16
        $region104: #{gpt_forward.2} parent=75 // pred_fallthru
          _
        %s765 = sand.u32 %s32, 1
        %s766 = scalar_lea.sflag [#allocation4], %s765
        %s767 = sand.u32 %s229, 1
        %s768 = scalar_lea.vmem [#allocation13], %s767
        // Predicated region
        $region105: #{gpt_forward.2} parent=75 // pred_check
          %p769 = pneg %p242
        $region106: #{gpt_forward.2} parent=75 // pred_check_branch
          %771 = sbr.rel (%p769) target = $region108
        $region107: #{gpt_forward.2} parent=75 // pred_region
          %772 = dma.done %s766, 16
        $region108: #{gpt_forward.2} parent=75 // pred_fallthru
          _
        %s773 = sand.u32 %s32, 1
        %s774 = scalar_lea.sflag [#allocation4], %s773
        %s775 = sand.u32 %s255, 1
        %s776 = smul.addr %s775, 128
        %s777 = scalar_lea.vmem [#allocation14], %s776
        // Predicated region
        $region109: #{gpt_forward.2} parent=75 // pred_check
          %p778 = pneg %p268
        $region110: #{gpt_forward.2} parent=75 // pred_check_branch
          %780 = sbr.rel (%p778) target = $region112
        $region111: #{gpt_forward.2} parent=75 // pred_region
          %781 = dma.done %s774, 2048
        $region112: #{gpt_forward.2} parent=75 // pred_fallthru
          _
        %s782 = sand.u32 %s32, 1
        %s783 = scalar_lea.sflag [#allocation4], %s782
        %s784 = sand.u32 %s281, 1
        %s785 = smul.addr %s784, 2
        %s786 = scalar_lea.vmem [#allocation15], %s785
        // Predicated region
        $region113: #{gpt_forward.2} parent=75 // pred_check
          %p787 = pneg %p294
        $region114: #{gpt_forward.2} parent=75 // pred_check_branch
          %789 = sbr.rel (%p787) target = $region116
        $region115: #{gpt_forward.2} parent=75 // pred_region
          %790 = dma.done %s783, 32
        $region116: #{gpt_forward.2} parent=75 // pred_fallthru
          _
        %s791 = sand.u32 %s32, 1
        %s792 = scalar_lea.sflag [#allocation4], %s791
        %s793 = sand.u32 %s307, 1
        %s794 = smul.addr %s793, 128
        %s795 = scalar_lea.vmem [#allocation16], %s794
        // Predicated region
        $region117: #{gpt_forward.2} parent=75 // pred_check
          %p796 = pneg %p320
        $region118: #{gpt_forward.2} parent=75 // pred_check_branch
          %798 = sbr.rel (%p796) target = $region120
        $region119: #{gpt_forward.2} parent=75 // pred_region
          %799 = dma.done %s792, 2048
        $region120: #{gpt_forward.2} parent=75 // pred_fallthru
          _
        %s800 = sand.u32 %s32, 1
        %s801 = scalar_lea.sflag [#allocation4], %s800
        %s802 = sand.u32 %s333, 1
        %s803 = scalar_lea.vmem [#allocation17], %s802
        // Predicated region
        $region121: #{gpt_forward.2} parent=75 // pred_check
          %p804 = pneg %p346
        $region122: #{gpt_forward.2} parent=75 // pred_check_branch
          %806 = sbr.rel (%p804) target = $region124
        $region123: #{gpt_forward.2} parent=75 // pred_region
          %807 = dma.done %s801, 16
        $region124: #{gpt_forward.2} parent=75 // pred_fallthru
          _
        %s808 = sand.u32 %s32, 1
        %s809 = scalar_lea.sflag [#allocation4], %s808
        %s810 = sand.u32 %s359, 1
        %s811 = scalar_lea.vmem [#allocation18], %s810
        // Predicated region
        $region125: #{gpt_forward.2} parent=75 // pred_check
          %p812 = pneg %p372
        $region126: #{gpt_forward.2} parent=75 // pred_check_branch
          %814 = sbr.rel (%p812) target = $region128
        $region127: #{gpt_forward.2} parent=75 // pred_region
          %815 = dma.done %s809, 16
        $region128: #{gpt_forward.2} parent=75 // pred_fallthru
          _
        %s816 = sand.u32 %s32, 1
        %s817 = scalar_lea.sflag [#allocation4], %s816
        %s818 = sand.u32 %s385, 1
        %s819 = scalar_lea.vmem [#allocation19], %s818
        // Predicated region
        $region129: #{gpt_forward.2} parent=75 // pred_check
          %p820 = pneg %p398
        $region130: #{gpt_forward.2} parent=75 // pred_check_branch
          %822 = sbr.rel (%p820) target = $region132
        $region131: #{gpt_forward.2} parent=75 // pred_region
          %823 = dma.done %s817, 16
        $region132: #{gpt_forward.2} parent=75 // pred_fallthru
          _
        %s824 = sand.u32 %s32, 1
        %s825 = scalar_lea.sflag [#allocation4], %s824
        %s826 = sand.u32 %s52, 1
        %s827 = smul.addr %s826, 128
        %s828 = scalar_lea.vmem [#allocation3], %s827
        %p829 = pneg %p65
        %p830 = pneg %p62
        %p831 = pneg %p86
        %p832 = pneg %p83
        %s833 = sand.u32 %s32, 1
        %s834 = scalar_lea.sflag [#allocation4], %s833
        %s835 = sand.u32 %s99, 1
        %s836 = smul.addr %s835, 192
        %s837 = scalar_lea.vmem [#allocation8], %s836
        %p838 = pneg %p112
        %p839 = pneg %p109
        %s840 = sand.u32 %s32, 1
        %s841 = scalar_lea.sflag [#allocation4], %s840
        %s842 = sand.u32 %s125, 1
        %s843 = smul.addr %s842, 3
        %s844 = scalar_lea.vmem [#allocation9], %s843
        %p845 = pneg %p138
        %p846 = pneg %p135
        %s847 = sand.u32 %s32, 1
        %s848 = scalar_lea.sflag [#allocation4], %s847
        %s849 = sand.u32 %s151, 1
        %s850 = smul.addr %s849, 64
        %s851 = scalar_lea.vmem [#allocation10], %s850
        %p852 = pneg %p164
        %p853 = pneg %p161
        %s854 = sand.u32 %s32, 1
        %s855 = scalar_lea.sflag [#allocation4], %s854
        %s856 = sand.u32 %s177, 1
        %s857 = scalar_lea.vmem [#allocation11], %s856
        %p858 = pneg %p190
        %p859 = pneg %p187
        %s860 = sand.u32 %s32, 1
        %s861 = scalar_lea.sflag [#allocation4], %s860
        %s862 = sand.u32 %s203, 1
        %s863 = scalar_lea.vmem [#allocation12], %s862
        %p864 = pneg %p216
        %p865 = pneg %p213
        %s866 = sand.u32 %s32, 1
        %s867 = scalar_lea.sflag [#allocation4], %s866
        %s868 = sand.u32 %s229, 1
        %s869 = scalar_lea.vmem [#allocation13], %s868
        %p870 = pneg %p242
        %p871 = pneg %p239
        %s872 = sand.u32 %s32, 1
        %s873 = scalar_lea.sflag [#allocation4], %s872
        %s874 = sand.u32 %s255, 1
        %s875 = smul.addr %s874, 128
        %s876 = scalar_lea.vmem [#allocation14], %s875
        %p877 = pneg %p268
        %p878 = pneg %p265
        %s879 = sand.u32 %s32, 1
        %s880 = scalar_lea.sflag [#allocation4], %s879
        %s881 = sand.u32 %s281, 1
        %s882 = smul.addr %s881, 2
        %s883 = scalar_lea.vmem [#allocation15], %s882
        %p884 = pneg %p294
        %p885 = pneg %p291
        %s886 = sand.u32 %s32, 1
        %s887 = scalar_lea.sflag [#allocation4], %s886
        %s888 = sand.u32 %s307, 1
        %s889 = smul.addr %s888, 128
        %s890 = scalar_lea.vmem [#allocation16], %s889
        %p891 = pneg %p320
        %p892 = pneg %p317
        %s893 = sand.u32 %s32, 1
        %s894 = scalar_lea.sflag [#allocation4], %s893
        %s895 = sand.u32 %s333, 1
        %s896 = scalar_lea.vmem [#allocation17], %s895
        %p897 = pneg %p346
        %p898 = pneg %p343
        %s899 = sand.u32 %s32, 1
        %s900 = scalar_lea.sflag [#allocation4], %s899
        %s901 = sand.u32 %s359, 1
        %s902 = scalar_lea.vmem [#allocation18], %s901
        %p903 = pneg %p372
        %p904 = pneg %p369
        %s905 = sand.u32 %s32, 1
        %s906 = scalar_lea.sflag [#allocation4], %s905
        %s907 = sand.u32 %s385, 1
        %s908 = scalar_lea.vmem [#allocation19], %s907
        %p909 = pneg %p398
        %p910 = pneg %p395
        %p911 = pneg %p424
        %p912 = pneg %p421
        %s913 = sand.u32 %s411, 1
        %s914 = scalar_lea.sflag [#allocation5], %s913
        %s915 = sand.u32 %s411, 1
        %s916 = smul.addr %s915, 64
        %s917 = scalar_lea.vmem [#allocation20], %s916
        %s918 = smul.u32 8, %s36
        %s919 = smul.u32 8, %s36
        %p921 = scmp.eq.s32.totalorder %s37, 0
        // Predicated region
        $region133: #{gpt_forward.2} parent=75 // pred_check
          %p922 = pneg %p921
        $region134: #{gpt_forward.2} parent=75 // pred_check_branch
          %924 = sbr.rel (%p922) target = $region136
        $region135: #{gpt_forward.2} parent=75 // pred_region
          %v925 = vld [vmem:[%s713] sm:$0xff]
          %v926 = vld [vmem:[%s713 + $0x8] sm:$0xff]
          %v927 = vld [vmem:[%s713 + $0x10] sm:$0xff]
          %v928 = vld [vmem:[%s713 + $0x18] sm:$0xff]
          %v929 = vld [vmem:[%s713 + $0x20] sm:$0xff]
          %v930 = vld [vmem:[%s713 + $0x28] sm:$0xff]
          %v931 = vld [vmem:[%s713 + $0x30] sm:$0xff]
          %v932 = vld [vmem:[%s713 + $0x38] sm:$0xff]
          %v933 = vld [vmem:[%s713 + $0x40] sm:$0xff]
          %v934 = vld [vmem:[%s713 + $0x48] sm:$0xff]
          %v935 = vld [vmem:[%s713 + $0x50] sm:$0xff]
          %v936 = vld [vmem:[%s713 + $0x58] sm:$0xff]
          %v937 = vld [vmem:[%s713 + $0x60] sm:$0xff]
          %v938 = vld [vmem:[%s713 + $0x68] sm:$0xff]
          %v939 = vld [vmem:[%s713 + $0x70] sm:$0xff]
          %v940 = vld [vmem:[%s713 + $0x78] sm:$0xff]
          %941 = vst [vmem:[#allocation2] sm:$0xff] %v925
          %942 = vst [vmem:[#allocation2 + $0x8] sm:$0xff] %v926
          %943 = vst [vmem:[#allocation2 + $0x10] sm:$0xff] %v927
          %944 = vst [vmem:[#allocation2 + $0x18] sm:$0xff] %v928
          %945 = vst [vmem:[#allocation2 + $0x20] sm:$0xff] %v929
          %946 = vst [vmem:[#allocation2 + $0x28] sm:$0xff] %v930
          %947 = vst [vmem:[#allocation2 + $0x30] sm:$0xff] %v931
          %948 = vst [vmem:[#allocation2 + $0x38] sm:$0xff] %v932
          %949 = vst [vmem:[#allocation2 + $0x40] sm:$0xff] %v933
          %950 = vst [vmem:[#allocation2 + $0x48] sm:$0xff] %v934
          %951 = vst [vmem:[#allocation2 + $0x50] sm:$0xff] %v935
          %952 = vst [vmem:[#allocation2 + $0x58] sm:$0xff] %v936
          %953 = vst [vmem:[#allocation2 + $0x60] sm:$0xff] %v937
          %954 = vst [vmem:[#allocation2 + $0x68] sm:$0xff] %v938
          %955 = vst [vmem:[#allocation2 + $0x70] sm:$0xff] %v939
          %956 = vst [vmem:[#allocation2 + $0x78] sm:$0xff] %v940
        $region136: #{gpt_forward.2} parent=75 // pred_fallthru
          _
        %v957 = vld [vmem:[#allocation2] sm:$0xff]
        %v958 = vld [vmem:[#allocation2 + $0x8] sm:$0xff]
        %v959 = vld [vmem:[#allocation2 + $0x10] sm:$0xff]
        %v960 = vld [vmem:[#allocation2 + $0x18] sm:$0xff]
        %v961 = vld [vmem:[#allocation2 + $0x20] sm:$0xff]
        %v962 = vld [vmem:[#allocation2 + $0x28] sm:$0xff]
        %v963 = vld [vmem:[#allocation2 + $0x30] sm:$0xff]
        %v964 = vld [vmem:[#allocation2 + $0x38] sm:$0xff]
        %v965 = vld [vmem:[#allocation2 + $0x40] sm:$0xff]
        %v966 = vld [vmem:[#allocation2 + $0x48] sm:$0xff]
        %v967 = vld [vmem:[#allocation2 + $0x50] sm:$0xff]
        %v968 = vld [vmem:[#allocation2 + $0x58] sm:$0xff]
        %v969 = vld [vmem:[#allocation2 + $0x60] sm:$0xff]
        %v970 = vld [vmem:[#allocation2 + $0x68] sm:$0xff]
        %v971 = vld [vmem:[#allocation2 + $0x70] sm:$0xff]
        %v972 = vld [vmem:[#allocation2 + $0x78] sm:$0xff]
        %v973 = vpack.c.bf16 %v958, %v957
        %v974 = vpack.c.bf16 %v960, %v959
        %v975 = vpack.c.bf16 %v962, %v961
        %v976 = vpack.c.bf16 %v964, %v963
        %v977 = vpack.c.bf16 %v966, %v965
        %v978 = vpack.c.bf16 %v968, %v967
        %v979 = vpack.c.bf16 %v970, %v969
        %v980 = vpack.c.bf16 %v972, %v971
        %v981 = vld [vmem:[%s726] sm:$0xff]
        %v982 = vld [vmem:[%s726 + $0x8] sm:$0xf]
        %v983 = vld [vmem:[%s726 + $0xc] sm:$0xff]
        %v984 = vld [vmem:[%s726 + $0x14] sm:$0xf]
        %v985 = vld [vmem:[%s726 + $0x18] sm:$0xff]
        %v986 = vld [vmem:[%s726 + $0x20] sm:$0xf]
        %v987 = vld [vmem:[%s726 + $0x24] sm:$0xff]
        %v988 = vld [vmem:[%s726 + $0x2c] sm:$0xf]
        %v989 = vld [vmem:[%s726 + $0x30] sm:$0xff]
        %v990 = vld [vmem:[%s726 + $0x38] sm:$0xf]
        %v991 = vld [vmem:[%s726 + $0x3c] sm:$0xff]
        %v992 = vld [vmem:[%s726 + $0x44] sm:$0xf]
        %v993 = vld [vmem:[%s726 + $0x48] sm:$0xff]
        %v994 = vld [vmem:[%s726 + $0x50] sm:$0xf]
        %v995 = vld [vmem:[%s726 + $0x54] sm:$0xff]
        %v996 = vld [vmem:[%s726 + $0x5c] sm:$0xf]
        %v997 = vld [vmem:[%s726 + $0x60] sm:$0xff]
        %v998 = vld [vmem:[%s726 + $0x68] sm:$0xf]
        %v999 = vld [vmem:[%s726 + $0x6c] sm:$0xff]
        %v1000 = vld [vmem:[%s726 + $0x74] sm:$0xf]
        %v1001 = vld [vmem:[%s726 + $0x78] sm:$0xff]
        %v1002 = vld [vmem:[%s726 + $0x80] sm:$0xf]
        %v1003 = vld [vmem:[%s726 + $0x84] sm:$0xff]
        %v1004 = vld [vmem:[%s726 + $0x8c] sm:$0xf]
        %v1005 = vld [vmem:[%s726 + $0x90] sm:$0xff]
        %v1006 = vld [vmem:[%s726 + $0x98] sm:$0xf]
        %v1007 = vld [vmem:[%s726 + $0x9c] sm:$0xff]
        %v1008 = vld [vmem:[%s726 + $0xa4] sm:$0xf]
        %v1009 = vld [vmem:[%s726 + $0xa8] sm:$0xff]
        %v1010 = vld [vmem:[%s726 + $0xb0] sm:$0xf]
        %v1011 = vld [vmem:[%s726 + $0xb4] sm:$0xff]
        %v1012 = vld [vmem:[%s726 + $0xbc] sm:$0xf]
        %v1013 = vld [vmem:[%s735] sm:$0x7]
        %v1015 = vlaneseq
        %v1016 = vshrl.u32 %v1015, 7
        %v1017 = vsub.s32 0, %v1016
        %v1018 = vrot.slane %v1013, %v1017
        %v1019 = vlaneseq
        %v1020 = vshrl.u32 %v1019, 7
        %v1021 = vsub.s32 1, %v1020
        %v1022 = vrot.slane %v1013, %v1021
        %v1023 = vlaneseq
        %v1024 = vshrl.u32 %v1023, 7
        %v1025 = vsub.s32 2, %v1024
        %v1026 = vrot.slane %v1013, %v1025
        %v1062 = vunpack.c.l.b16 %v981
        %v1063 = vunpack.c.h.b16 %v981
        %v1064 = vunpack.c.l.b16 %v982
        %v1065 = vunpack.c.l.b16 %v983
        %v1066 = vunpack.c.h.b16 %v983
        %v1067 = vunpack.c.l.b16 %v984
        %v1068 = vunpack.c.l.b16 %v985
        %v1069 = vunpack.c.h.b16 %v985
        %v1070 = vunpack.c.l.b16 %v986
        %v1071 = vunpack.c.l.b16 %v987
        %v1072 = vunpack.c.h.b16 %v987
        %v1073 = vunpack.c.l.b16 %v988
        %v1074 = vunpack.c.l.b16 %v989
        %v1075 = vunpack.c.h.b16 %v989
        %v1076 = vunpack.c.l.b16 %v990
        %v1077 = vunpack.c.l.b16 %v991
        %v1078 = vunpack.c.h.b16 %v991
        %v1079 = vunpack.c.l.b16 %v992
        %v1080 = vunpack.c.l.b16 %v993
        %v1081 = vunpack.c.h.b16 %v993
        %v1082 = vunpack.c.l.b16 %v994
        %v1083 = vunpack.c.l.b16 %v995
        %v1084 = vunpack.c.h.b16 %v995
        %v1085 = vunpack.c.l.b16 %v996
        %v1086 = vunpack.c.l.b16 %v997
        %v1087 = vunpack.c.h.b16 %v997
        %v1088 = vunpack.c.l.b16 %v998
        %v1089 = vunpack.c.l.b16 %v999
        %v1090 = vunpack.c.h.b16 %v999
        %v1091 = vunpack.c.l.b16 %v1000
        %v1092 = vunpack.c.l.b16 %v1001
        %v1093 = vunpack.c.h.b16 %v1001
        %v1094 = vunpack.c.l.b16 %v1002
        %v1095 = vunpack.c.l.b16 %v1003
        %v1096 = vunpack.c.h.b16 %v1003
        %v1097 = vunpack.c.l.b16 %v1004
        %v1098 = vunpack.c.l.b16 %v1005
        %v1099 = vunpack.c.h.b16 %v1005
        %v1100 = vunpack.c.l.b16 %v1006
        %v1101 = vunpack.c.l.b16 %v1007
        %v1102 = vunpack.c.h.b16 %v1007
        %v1103 = vunpack.c.l.b16 %v1008
        %v1104 = vunpack.c.l.b16 %v1009
        %v1105 = vunpack.c.h.b16 %v1009
        %v1106 = vunpack.c.l.b16 %v1010
        %v1107 = vunpack.c.l.b16 %v1011
        %v1108 = vunpack.c.h.b16 %v1011
        %v1109 = vunpack.c.l.b16 %v1012
        %v1110 = vpack.c.b16 %v1065, %v1062
        %v1111 = vpack.c.b16 %v1066, %v1063
        %v1112 = vpack.c.b16 %v1067, %v1064
        %v1113 = vpack.c.b16 %v1071, %v1068
        %v1114 = vpack.c.b16 %v1072, %v1069
        %v1115 = vpack.c.b16 %v1073, %v1070
        %v1116 = vpack.c.b16 %v1077, %v1074
        %v1117 = vpack.c.b16 %v1078, %v1075
        %v1118 = vpack.c.b16 %v1079, %v1076
        %v1119 = vpack.c.b16 %v1083, %v1080
        %v1120 = vpack.c.b16 %v1084, %v1081
        %v1121 = vpack.c.b16 %v1085, %v1082
        %v1122 = vpack.c.b16 %v1089, %v1086
        %v1123 = vpack.c.b16 %v1090, %v1087
        %v1124 = vpack.c.b16 %v1091, %v1088
        %v1125 = vpack.c.b16 %v1095, %v1092
        %v1126 = vpack.c.b16 %v1096, %v1093
        %v1127 = vpack.c.b16 %v1097, %v1094
        %v1128 = vpack.c.b16 %v1101, %v1098
        %v1129 = vpack.c.b16 %v1102, %v1099
        %v1130 = vpack.c.b16 %v1103, %v1100
        %v1131 = vpack.c.b16 %v1107, %v1104
        %v1132 = vpack.c.b16 %v1108, %v1105
        %v1133 = vpack.c.b16 %v1109, %v1106
        %1158 = vmatprep.subr.bf16.mxu0 %v1111
        %1159 = vmatpush1.bf16.msra.mxu0 %v1110
        %1160 = vmatprep.subr.bf16.mxu0 %v1114
        %1161 = vmatpush1.bf16.msra.mxu0 %v1113
        %1162 = vmatprep.subr.bf16.mxu0 %v1117
        %1163 = vmatpush1.bf16.msra.mxu0 %v1116
        %1164 = vmatprep.subr.bf16.mxu0 %v1120
        %1165 = vmatpush1.bf16.msra.mxu0 %v1119
        %1166 = vmatprep.subr.bf16.mxu0 %v1123
        %1167 = vmatpush1.bf16.msra.mxu0 %v1122
        %1168 = vmatprep.subr.bf16.mxu0 %v1126
        %1169 = vmatpush1.bf16.msra.mxu0 %v1125
        %1170 = vmatprep.subr.bf16.mxu0 %v1129
        %1171 = vmatpush1.bf16.msra.mxu0 %v1128
        %1172 = vmatprep.subr.bf16.mxu0 %v1132
        %1173 = vmatpush1.bf16.msra.mxu0 %v1131
        %1174 = vmatprep.subr.bf16.mxu0 0
        %1175 = vmatpush1.bf16.msra.mxu0 0
        %1176 = vmatprep.subr.bf16.mxu0 0
        %1177 = vmatpush1.bf16.msra.mxu0 0
        %1178 = vmatprep.subr.bf16.mxu0 0
        %1179 = vmatpush1.bf16.msra.mxu0 0
        %1180 = vmatprep.subr.bf16.mxu0 0
        %1181 = vmatpush1.bf16.msra.mxu0 0
        %1182 = vmatprep.subr.bf16.mxu0 0
        %1183 = vmatpush1.bf16.msra.mxu0 0
        %1184 = vmatprep.subr.bf16.mxu0 0
        %1185 = vmatpush1.bf16.msra.mxu0 0
        %1186 = vmatprep.subr.bf16.mxu0 0
        %1187 = vmatpush1.bf16.msra.mxu0 0
        %1188 = vmatprep.subr.bf16.mxu0 0
        %1189 = vmatpush1.bf16.msra.mxu0 0
        %1190 = vmatprep.mubr.bf16.mxu0 0
        %1191 = vmatmul.mubr.bf16.gmra.mrb[0].mxu0 %v973
        %v1192 = vpop.f32.mrb[0].mxu0
        %v1193 = vadd.f32 %v1018, %v1192
        %v1194 = vpop.f32.mrb[0].mxu0
        %v1195 = vadd.f32 %v1022, %v1194
        %v1196 = vpop.f32.mrb[0].mxu0
        %v1197 = vadd.f32 %v1018, %v1196
        %v1198 = vpop.f32.mrb[0].mxu0
        %v1199 = vadd.f32 %v1022, %v1198
        %1200 = vmatprep.mubr.bf16.mxu0 0
        %1201 = vmatmul.mubr.bf16.gmra.mrb[0].mxu0 %v974
        %v1202 = vpop.f32.mrb[0].mxu0
        %v1203 = vadd.f32 %v1018, %v1202
        %v1204 = vpop.f32.mrb[0].mxu0
        %v1205 = vadd.f32 %v1022, %v1204
        %v1206 = vpop.f32.mrb[0].mxu0
        %v1207 = vadd.f32 %v1018, %v1206
        %v1208 = vpop.f32.mrb[0].mxu0
        %v1209 = vadd.f32 %v1022, %v1208
        %1210 = vmatprep.mubr.bf16.mxu0 0
        %1211 = vmatmul.mubr.bf16.gmra.mrb[0].mxu0 %v975
        %v1212 = vpop.f32.mrb[0].mxu0
        %v1213 = vadd.f32 %v1018, %v1212
        %v1214 = vpop.f32.mrb[0].mxu0
        %v1215 = vadd.f32 %v1022, %v1214
        %v1216 = vpop.f32.mrb[0].mxu0
        %v1217 = vadd.f32 %v1018, %v1216
        %v1218 = vpop.f32.mrb[0].mxu0
        %v1219 = vadd.f32 %v1022, %v1218
        %1220 = vmatprep.mubr.bf16.mxu0 0
        %1221 = vmatmul.mubr.bf16.gmra.mrb[0].mxu0 %v976
        %v1222 = vpop.f32.mrb[0].mxu0
        %v1223 = vadd.f32 %v1018, %v1222
        %v1224 = vpop.f32.mrb[0].mxu0
        %v1225 = vadd.f32 %v1022, %v1224
        %v1226 = vpop.f32.mrb[0].mxu0
        %v1227 = vadd.f32 %v1018, %v1226
        %v1228 = vpop.f32.mrb[0].mxu0
        %v1229 = vadd.f32 %v1022, %v1228
        %1230 = vmatprep.mubr.bf16.mxu0 0
        %1231 = vmatmul.mubr.bf16.gmra.mrb[0].mxu0 %v977
        %v1232 = vpop.f32.mrb[0].mxu0
        %v1233 = vadd.f32 %v1018, %v1232
        %v1234 = vpop.f32.mrb[0].mxu0
        %v1235 = vadd.f32 %v1022, %v1234
        %v1236 = vpop.f32.mrb[0].mxu0
        %v1237 = vadd.f32 %v1018, %v1236
        %v1238 = vpop.f32.mrb[0].mxu0
        %v1239 = vadd.f32 %v1022, %v1238
        %1240 = vmatprep.mubr.bf16.mxu0 0
        %1241 = vmatmul.mubr.bf16.gmra.mrb[0].mxu0 %v978
        %v1242 = vpop.f32.mrb[0].mxu0
        %v1243 = vadd.f32 %v1018, %v1242
        %v1244 = vpop.f32.mrb[0].mxu0
        %v1245 = vadd.f32 %v1022, %v1244
        %v1246 = vpop.f32.mrb[0].mxu0
        %v1247 = vadd.f32 %v1018, %v1246
        %v1248 = vpop.f32.mrb[0].mxu0
        %v1249 = vadd.f32 %v1022, %v1248
        %1250 = vmatprep.mubr.bf16.mxu0 0
        %1251 = vmatmul.mubr.bf16.gmra.mrb[0].mxu0 %v979
        %v1252 = vpop.f32.mrb[0].mxu0
        %v1253 = vadd.f32 %v1018, %v1252
        %v1254 = vpop.f32.mrb[0].mxu0
        %v1255 = vadd.f32 %v1022, %v1254
        %v1256 = vpop.f32.mrb[0].mxu0
        %v1257 = vadd.f32 %v1018, %v1256
        %v1258 = vpop.f32.mrb[0].mxu0
        %v1259 = vadd.f32 %v1022, %v1258
        %1260 = vmatprep.mubr.bf16.mxu0 0
        %1261 = vmatmul.mubr.bf16.gmra.mrb[0].mxu0 %v980
        %v1262 = vpop.f32.mrb[0].mxu0
        %v1263 = vadd.f32 %v1018, %v1262
        %v1264 = vpop.f32.mrb[0].mxu0
        %v1265 = vadd.f32 %v1022, %v1264
        %v1266 = vpop.f32.mrb[0].mxu0
        %v1267 = vadd.f32 %v1018, %v1266
        %v1268 = vpop.f32.mrb[0].mxu0
        %v1269 = vadd.f32 %v1022, %v1268
        %1270 = vdwg.mxu0
        %1271 = vmatprep.subr.bf16.mxu0 0
        %1272 = vmatpush1.bf16.msra.mxu0 %v1112
        %1273 = vmatprep.subr.bf16.mxu0 0
        %1274 = vmatpush1.bf16.msra.mxu0 %v1115
        %1275 = vmatprep.subr.bf16.mxu0 0
        %1276 = vmatpush1.bf16.msra.mxu0 %v1118
        %1277 = vmatprep.subr.bf16.mxu0 0
        %1278 = vmatpush1.bf16.msra.mxu0 %v1121
        %1279 = vmatprep.subr.bf16.mxu0 0
        %1280 = vmatpush1.bf16.msra.mxu0 %v1124
        %1281 = vmatprep.subr.bf16.mxu0 0
        %1282 = vmatpush1.bf16.msra.mxu0 %v1127
        %1283 = vmatprep.subr.bf16.mxu0 0
        %1284 = vmatpush1.bf16.msra.mxu0 %v1130
        %1285 = vmatprep.subr.bf16.mxu0 0
        %1286 = vmatpush1.bf16.msra.mxu0 %v1133
        %1287 = vmatprep.subr.bf16.mxu0 0
        %1288 = vmatpush1.bf16.msra.mxu0 0
        %1289 = vmatprep.subr.bf16.mxu0 0
        %1290 = vmatpush1.bf16.msra.mxu0 0
        %1291 = vmatprep.subr.bf16.mxu0 0
        %1292 = vmatpush1.bf16.msra.mxu0 0
        %1293 = vmatprep.subr.bf16.mxu0 0
        %1294 = vmatpush1.bf16.msra.mxu0 0
        %1295 = vmatprep.subr.bf16.mxu0 0
        %1296 = vmatpush1.bf16.msra.mxu0 0
        %1297 = vmatprep.subr.bf16.mxu0 0
        %1298 = vmatpush1.bf16.msra.mxu0 0
        %1299 = vmatprep.subr.bf16.mxu0 0
        %1300 = vmatpush1.bf16.msra.mxu0 0
        %1301 = vmatprep.subr.bf16.mxu0 0
        %1302 = vmatpush1.bf16.msra.mxu0 0
        %1303 = vmatprep.mubr.bf16.mxu0 0
        %1304 = vmatmul.mubr.bf16.gmra.mrb[0].mxu0 %v973
        %v1305 = vpop.f32.mrb[0].mxu0
        %v1306 = vadd.f32 %v1026, %v1305
        %v1307 = vpop.f32.mrb[0].mxu0
        %v1308 = vpop.f32.mrb[0].mxu0
        %v1309 = vadd.f32 %v1026, %v1308
        %v1310 = vpop.f32.mrb[0].mxu0
        %1311 = vmatprep.mubr.bf16.mxu0 0
        %1312 = vmatmul.mubr.bf16.gmra.mrb[0].mxu0 %v974
        %v1313 = vpop.f32.mrb[0].mxu0
        %v1314 = vadd.f32 %v1026, %v1313
        %v1315 = vpop.f32.mrb[0].mxu0
        %v1316 = vpop.f32.mrb[0].mxu0
        %v1317 = vadd.f32 %v1026, %v1316
        %v1318 = vpop.f32.mrb[0].mxu0
        %1319 = vmatprep.mubr.bf16.mxu0 0
        %1320 = vmatmul.mubr.bf16.gmra.mrb[0].mxu0 %v975
        %v1321 = vpop.f32.mrb[0].mxu0
        %v1322 = vadd.f32 %v1026, %v1321
        %v1323 = vpop.f32.mrb[0].mxu0
        %v1324 = vpop.f32.mrb[0].mxu0
        %v1325 = vadd.f32 %v1026, %v1324
        %v1326 = vpop.f32.mrb[0].mxu0
        %1327 = vmatprep.mubr.bf16.mxu0 0
        %1328 = vmatmul.mubr.bf16.gmra.mrb[0].mxu0 %v976
        %v1329 = vpop.f32.mrb[0].mxu0
        %v1330 = vadd.f32 %v1026, %v1329
        %v1331 = vpop.f32.mrb[0].mxu0
        %v1332 = vpop.f32.mrb[0].mxu0
        %v1333 = vadd.f32 %v1026, %v1332
        %v1334 = vpop.f32.mrb[0].mxu0
        %1335 = vmatprep.mubr.bf16.mxu0 0
        %1336 = vmatmul.mubr.bf16.gmra.mrb[0].mxu0 %v977
        %v1337 = vpop.f32.mrb[0].mxu0
        %v1338 = vadd.f32 %v1026, %v1337
        %v1339 = vpop.f32.mrb[0].mxu0
        %v1340 = vpop.f32.mrb[0].mxu0
        %v1341 = vadd.f32 %v1026, %v1340
        %v1342 = vpop.f32.mrb[0].mxu0
        %1343 = vmatprep.mubr.bf16.mxu0 0
        %1344 = vmatmul.mubr.bf16.gmra.mrb[0].mxu0 %v978
        %v1345 = vpop.f32.mrb[0].mxu0
        %v1346 = vadd.f32 %v1026, %v1345
        %v1347 = vpop.f32.mrb[0].mxu0
        %v1348 = vpop.f32.mrb[0].mxu0
        %v1349 = vadd.f32 %v1026, %v1348
        %v1350 = vpop.f32.mrb[0].mxu0
        %1351 = vmatprep.mubr.bf16.mxu0 0
        %1352 = vmatmul.mubr.bf16.gmra.mrb[0].mxu0 %v979
        %v1353 = vpop.f32.mrb[0].mxu0
        %v1354 = vadd.f32 %v1026, %v1353
        %v1355 = vpop.f32.mrb[0].mxu0
        %v1356 = vpop.f32.mrb[0].mxu0
        %v1357 = vadd.f32 %v1026, %v1356
        %v1358 = vpop.f32.mrb[0].mxu0
        %1359 = vmatprep.mubr.bf16.mxu0 0
        %1360 = vmatmul.mubr.bf16.gmra.mrb[0].mxu0 %v980
        %v1361 = vpop.f32.mrb[0].mxu0
        %v1362 = vadd.f32 %v1026, %v1361
        %v1363 = vpop.f32.mrb[0].mxu0
        %v1364 = vpop.f32.mrb[0].mxu0
        %v1365 = vadd.f32 %v1026, %v1364
        %v1366 = vpop.f32.mrb[0].mxu0
        %1367 = vdwg.mxu0
        %v1368 = vmul.f32 %v1193, 0.17677669
        %v1369 = vmul.f32 %v1197, 0.17677669
        %v1370 = vmul.f32 %v1203, 0.17677669
        %v1371 = vmul.f32 %v1207, 0.17677669
        %v1372 = vmul.f32 %v1213, 0.17677669
        %v1373 = vmul.f32 %v1217, 0.17677669
        %v1374 = vmul.f32 %v1223, 0.17677669
        %v1375 = vmul.f32 %v1227, 0.17677669
        %v1376 = vmul.f32 %v1233, 0.17677669
        %v1377 = vmul.f32 %v1237, 0.17677669
        %v1378 = vmul.f32 %v1243, 0.17677669
        %v1379 = vmul.f32 %v1247, 0.17677669
        %v1380 = vmul.f32 %v1253, 0.17677669
        %v1381 = vmul.f32 %v1257, 0.17677669
        %v1382 = vmul.f32 %v1263, 0.17677669
        %v1383 = vmul.f32 %v1267, 0.17677669
        %1400 = vrot.lane.b32.xlu0 %v1368, 96
        %v1401 = vpop.permute.xlu0 %1400
        %1402 = vrot.lane.b32.xlu0 %v1369, 96
        %v1403 = vpop.permute.xlu0 %1402
        %1404 = vrot.lane.b32.xlu0 %v1370, 96
        %v1405 = vpop.permute.xlu0 %1404
        %1406 = vrot.lane.b32.xlu0 %v1371, 96
        %v1407 = vpop.permute.xlu0 %1406
        %1408 = vrot.lane.b32.xlu0 %v1372, 96
        %v1409 = vpop.permute.xlu0 %1408
        %1410 = vrot.lane.b32.xlu0 %v1373, 96
        %v1411 = vpop.permute.xlu0 %1410
        %1412 = vrot.lane.b32.xlu0 %v1374, 96
        %v1413 = vpop.permute.xlu0 %1412
        %1414 = vrot.lane.b32.xlu0 %v1375, 96
        %v1415 = vpop.permute.xlu0 %1414
        %1416 = vrot.lane.b32.xlu0 %v1376, 96
        %v1417 = vpop.permute.xlu0 %1416
        %1418 = vrot.lane.b32.xlu0 %v1377, 96
        %v1419 = vpop.permute.xlu0 %1418
        %1420 = vrot.lane.b32.xlu0 %v1378, 96
        %v1421 = vpop.permute.xlu0 %1420
        %1422 = vrot.lane.b32.xlu0 %v1379, 96
        %v1423 = vpop.permute.xlu0 %1422
        %1424 = vrot.lane.b32.xlu0 %v1380, 96
        %v1425 = vpop.permute.xlu0 %1424
        %1426 = vrot.lane.b32.xlu0 %v1381, 96
        %v1427 = vpop.permute.xlu0 %1426
        %1428 = vrot.lane.b32.xlu0 %v1382, 96
        %v1429 = vpop.permute.xlu0 %1428
        %1430 = vrot.lane.b32.xlu0 %v1383, 96
        %v1431 = vpop.permute.xlu0 %1430
        %1448 = vrot.lane.b32.xlu0 %v1368, 64
        %v1449 = vpop.permute.xlu0 %1448
        %1450 = vrot.lane.b32.xlu0 %v1369, 64
        %v1451 = vpop.permute.xlu0 %1450
        %1452 = vrot.lane.b32.xlu0 %v1370, 64
        %v1453 = vpop.permute.xlu0 %1452
        %1454 = vrot.lane.b32.xlu0 %v1371, 64
        %v1455 = vpop.permute.xlu0 %1454
        %1456 = vrot.lane.b32.xlu0 %v1372, 64
        %v1457 = vpop.permute.xlu0 %1456
        %1458 = vrot.lane.b32.xlu0 %v1373, 64
        %v1459 = vpop.permute.xlu0 %1458
        %1460 = vrot.lane.b32.xlu0 %v1374, 64
        %v1461 = vpop.permute.xlu0 %1460
        %1462 = vrot.lane.b32.xlu0 %v1375, 64
        %v1463 = vpop.permute.xlu0 %1462
        %1464 = vrot.lane.b32.xlu0 %v1376, 64
        %v1465 = vpop.permute.xlu0 %1464
        %1466 = vrot.lane.b32.xlu0 %v1377, 64
        %v1467 = vpop.permute.xlu0 %1466
        %1468 = vrot.lane.b32.xlu0 %v1378, 64
        %v1469 = vpop.permute.xlu0 %1468
        %1470 = vrot.lane.b32.xlu0 %v1379, 64
        %v1471 = vpop.permute.xlu0 %1470
        %1472 = vrot.lane.b32.xlu0 %v1380, 64
        %v1473 = vpop.permute.xlu0 %1472
        %1474 = vrot.lane.b32.xlu0 %v1381, 64
        %v1475 = vpop.permute.xlu0 %1474
        %1476 = vrot.lane.b32.xlu0 %v1382, 64
        %v1477 = vpop.permute.xlu0 %1476
        %1478 = vrot.lane.b32.xlu0 %v1383, 64
        %v1479 = vpop.permute.xlu0 %1478
        %1496 = vrot.lane.b32.xlu0 %v1368, 32
        %v1497 = vpop.permute.xlu0 %1496
        %1498 = vrot.lane.b32.xlu0 %v1369, 32
        %v1499 = vpop.permute.xlu0 %1498
        %1500 = vrot.lane.b32.xlu0 %v1370, 32
        %v1501 = vpop.permute.xlu0 %1500
        %1502 = vrot.lane.b32.xlu0 %v1371, 32
        %v1503 = vpop.permute.xlu0 %1502
        %1504 = vrot.lane.b32.xlu0 %v1372, 32
        %v1505 = vpop.permute.xlu0 %1504
        %1506 = vrot.lane.b32.xlu0 %v1373, 32
        %v1507 = vpop.permute.xlu0 %1506
        %1508 = vrot.lane.b32.xlu0 %v1374, 32
        %v1509 = vpop.permute.xlu0 %1508
        %1510 = vrot.lane.b32.xlu0 %v1375, 32
        %v1511 = vpop.permute.xlu0 %1510
        %1512 = vrot.lane.b32.xlu0 %v1376, 32
        %v1513 = vpop.permute.xlu0 %1512
        %1514 = vrot.lane.b32.xlu0 %v1377, 32
        %v1515 = vpop.permute.xlu0 %1514
        %1516 = vrot.lane.b32.xlu0 %v1378, 32
        %v1517 = vpop.permute.xlu0 %1516
        %1518 = vrot.lane.b32.xlu0 %v1379, 32
        %v1519 = vpop.permute.xlu0 %1518
        %1520 = vrot.lane.b32.xlu0 %v1380, 32
        %v1521 = vpop.permute.xlu0 %1520
        %1522 = vrot.lane.b32.xlu0 %v1381, 32
        %v1523 = vpop.permute.xlu0 %1522
        %1524 = vrot.lane.b32.xlu0 %v1382, 32
        %v1525 = vpop.permute.xlu0 %1524
        %1526 = vrot.lane.b32.xlu0 %v1383, 32
        %v1527 = vpop.permute.xlu0 %1526
        %v1544 = vpack.c.bf16 %v1369, %v1368
        %v1545 = vpack.c.bf16 %v1371, %v1370
        %v1546 = vpack.c.bf16 %v1373, %v1372
        %v1547 = vpack.c.bf16 %v1375, %v1374
        %v1548 = vpack.c.bf16 %v1377, %v1376
        %v1549 = vpack.c.bf16 %v1379, %v1378
        %v1550 = vpack.c.bf16 %v1381, %v1380
        %v1551 = vpack.c.bf16 %v1383, %v1382
        %v1552 = vpack.c.bf16 %v1403, %v1401
        %v1553 = vpack.c.bf16 %v1407, %v1405
        %v1554 = vpack.c.bf16 %v1411, %v1409
        %v1555 = vpack.c.bf16 %v1415, %v1413
        %v1556 = vpack.c.bf16 %v1419, %v1417
        %v1557 = vpack.c.bf16 %v1423, %v1421
        %v1558 = vpack.c.bf16 %v1427, %v1425
        %v1559 = vpack.c.bf16 %v1431, %v1429
        %v1560 = vpack.c.bf16 %v1451, %v1449
        %v1561 = vpack.c.bf16 %v1455, %v1453
        %v1562 = vpack.c.bf16 %v1459, %v1457
        %v1563 = vpack.c.bf16 %v1463, %v1461
        %v1564 = vpack.c.bf16 %v1467, %v1465
        %v1565 = vpack.c.bf16 %v1471, %v1469
        %v1566 = vpack.c.bf16 %v1475, %v1473
        %v1567 = vpack.c.bf16 %v1479, %v1477
        %v1568 = vpack.c.bf16 %v1499, %v1497
        %v1569 = vpack.c.bf16 %v1503, %v1501
        %v1570 = vpack.c.bf16 %v1507, %v1505
        %v1571 = vpack.c.bf16 %v1511, %v1509
        %v1572 = vpack.c.bf16 %v1515, %v1513
        %v1573 = vpack.c.bf16 %v1519, %v1517
        %v1574 = vpack.c.bf16 %v1523, %v1521
        %v1575 = vpack.c.bf16 %v1527, %v1525
        %1592 = vrot.lane.b32.xlu0 %v1195, 96
        %v1593 = vpop.permute.xlu0 %1592
        %1594 = vrot.lane.b32.xlu0 %v1199, 96
        %v1595 = vpop.permute.xlu0 %1594
        %1596 = vrot.lane.b32.xlu0 %v1205, 96
        %v1597 = vpop.permute.xlu0 %1596
        %1598 = vrot.lane.b32.xlu0 %v1209, 96
        %v1599 = vpop.permute.xlu0 %1598
        %1600 = vrot.lane.b32.xlu0 %v1215, 96
        %v1601 = vpop.permute.xlu0 %1600
        %1602 = vrot.lane.b32.xlu0 %v1219, 96
        %v1603 = vpop.permute.xlu0 %1602
        %1604 = vrot.lane.b32.xlu0 %v1225, 96
        %v1605 = vpop.permute.xlu0 %1604
        %1606 = vrot.lane.b32.xlu0 %v1229, 96
        %v1607 = vpop.permute.xlu0 %1606
        %1608 = vrot.lane.b32.xlu0 %v1235, 96
        %v1609 = vpop.permute.xlu0 %1608
        %1610 = vrot.lane.b32.xlu0 %v1239, 96
        %v1611 = vpop.permute.xlu0 %1610
        %1612 = vrot.lane.b32.xlu0 %v1245, 96
        %v1613 = vpop.permute.xlu0 %1612
        %1614 = vrot.lane.b32.xlu0 %v1249, 96
        %v1615 = vpop.permute.xlu0 %1614
        %1616 = vrot.lane.b32.xlu0 %v1255, 96
        %v1617 = vpop.permute.xlu0 %1616
        %1618 = vrot.lane.b32.xlu0 %v1259, 96
        %v1619 = vpop.permute.xlu0 %1618
        %1620 = vrot.lane.b32.xlu0 %v1265, 96
        %v1621 = vpop.permute.xlu0 %1620
        %1622 = vrot.lane.b32.xlu0 %v1269, 96
        %v1623 = vpop.permute.xlu0 %1622
        %1640 = vrot.lane.b32.xlu0 %v1195, 64
        %v1641 = vpop.permute.xlu0 %1640
        %1642 = vrot.lane.b32.xlu0 %v1199, 64
        %v1643 = vpop.permute.xlu0 %1642
        %1644 = vrot.lane.b32.xlu0 %v1205, 64
        %v1645 = vpop.permute.xlu0 %1644
        %1646 = vrot.lane.b32.xlu0 %v1209, 64
        %v1647 = vpop.permute.xlu0 %1646
        %1648 = vrot.lane.b32.xlu0 %v1215, 64
        %v1649 = vpop.permute.xlu0 %1648
        %1650 = vrot.lane.b32.xlu0 %v1219, 64
        %v1651 = vpop.permute.xlu0 %1650
        %1652 = vrot.lane.b32.xlu0 %v1225, 64
        %v1653 = vpop.permute.xlu0 %1652
        %1654 = vrot.lane.b32.xlu0 %v1229, 64
        %v1655 = vpop.permute.xlu0 %1654
        %1656 = vrot.lane.b32.xlu0 %v1235, 64
        %v1657 = vpop.permute.xlu0 %1656
        %1658 = vrot.lane.b32.xlu0 %v1239, 64
        %v1659 = vpop.permute.xlu0 %1658
        %1660 = vrot.lane.b32.xlu0 %v1245, 64
        %v1661 = vpop.permute.xlu0 %1660
        %1662 = vrot.lane.b32.xlu0 %v1249, 64
        %v1663 = vpop.permute.xlu0 %1662
        %1664 = vrot.lane.b32.xlu0 %v1255, 64
        %v1665 = vpop.permute.xlu0 %1664
        %1666 = vrot.lane.b32.xlu0 %v1259, 64
        %v1667 = vpop.permute.xlu0 %1666
        %1668 = vrot.lane.b32.xlu0 %v1265, 64
        %v1669 = vpop.permute.xlu0 %1668
        %1670 = vrot.lane.b32.xlu0 %v1269, 64
        %v1671 = vpop.permute.xlu0 %1670
        %1688 = vrot.lane.b32.xlu0 %v1195, 32
        %v1689 = vpop.permute.xlu0 %1688
        %1690 = vrot.lane.b32.xlu0 %v1199, 32
        %v1691 = vpop.permute.xlu0 %1690
        %1692 = vrot.lane.b32.xlu0 %v1205, 32
        %v1693 = vpop.permute.xlu0 %1692
        %1694 = vrot.lane.b32.xlu0 %v1209, 32
        %v1695 = vpop.permute.xlu0 %1694
        %1696 = vrot.lane.b32.xlu0 %v1215, 32
        %v1697 = vpop.permute.xlu0 %1696
        %1698 = vrot.lane.b32.xlu0 %v1219, 32
        %v1699 = vpop.permute.xlu0 %1698
        %1700 = vrot.lane.b32.xlu0 %v1225, 32
        %v1701 = vpop.permute.xlu0 %1700
        %1702 = vrot.lane.b32.xlu0 %v1229, 32
        %v1703 = vpop.permute.xlu0 %1702
        %1704 = vrot.lane.b32.xlu0 %v1235, 32
        %v1705 = vpop.permute.xlu0 %1704
        %1706 = vrot.lane.b32.xlu0 %v1239, 32
        %v1707 = vpop.permute.xlu0 %1706
        %1708 = vrot.lane.b32.xlu0 %v1245, 32
        %v1709 = vpop.permute.xlu0 %1708
        %1710 = vrot.lane.b32.xlu0 %v1249, 32
        %v1711 = vpop.permute.xlu0 %1710
        %1712 = vrot.lane.b32.xlu0 %v1255, 32
        %v1713 = vpop.permute.xlu0 %1712
        %1714 = vrot.lane.b32.xlu0 %v1259, 32
        %v1715 = vpop.permute.xlu0 %1714
        %1716 = vrot.lane.b32.xlu0 %v1265, 32
        %v1717 = vpop.permute.xlu0 %1716
        %1718 = vrot.lane.b32.xlu0 %v1269, 32
        %v1719 = vpop.permute.xlu0 %1718
        %v1736 = vpack.c.bf16 %v1199, %v1195
        %v1737 = vpack.c.bf16 %v1209, %v1205
        %v1738 = vpack.c.bf16 %v1219, %v1215
        %v1739 = vpack.c.bf16 %v1229, %v1225
        %v1740 = vpack.c.bf16 %v1239, %v1235
        %v1741 = vpack.c.bf16 %v1249, %v1245
        %v1742 = vpack.c.bf16 %v1259, %v1255
        %v1743 = vpack.c.bf16 %v1269, %v1265
        %v1744 = vpack.c.bf16 %v1595, %v1593
        %v1745 = vpack.c.bf16 %v1599, %v1597
        %v1746 = vpack.c.bf16 %v1603, %v1601
        %v1747 = vpack.c.bf16 %v1607, %v1605
        %v1748 = vpack.c.bf16 %v1611, %v1609
        %v1749 = vpack.c.bf16 %v1615, %v1613
        %v1750 = vpack.c.bf16 %v1619, %v1617
        %v1751 = vpack.c.bf16 %v1623, %v1621
        %v1752 = vpack.c.bf16 %v1643, %v1641
        %v1753 = vpack.c.bf16 %v1647, %v1645
        %v1754 = vpack.c.bf16 %v1651, %v1649
        %v1755 = vpack.c.bf16 %v1655, %v1653
        %v1756 = vpack.c.bf16 %v1659, %v1657
        %v1757 = vpack.c.bf16 %v1663, %v1661
        %v1758 = vpack.c.bf16 %v1667, %v1665
        %v1759 = vpack.c.bf16 %v1671, %v1669
        %v1760 = vpack.c.bf16 %v1691, %v1689
        %v1761 = vpack.c.bf16 %v1695, %v1693
        %v1762 = vpack.c.bf16 %v1699, %v1697
        %v1763 = vpack.c.bf16 %v1703, %v1701
        %v1764 = vpack.c.bf16 %v1707, %v1705
        %v1765 = vpack.c.bf16 %v1711, %v1709
        %v1766 = vpack.c.bf16 %v1715, %v1713
        %v1767 = vpack.c.bf16 %v1719, %v1717
        %1784 = vrot.lane.b32.xlu0 %v1306, 96
        %v1785 = vpop.permute.xlu0 %1784
        %1786 = vrot.lane.b32.xlu0 %v1309, 96
        %v1787 = vpop.permute.xlu0 %1786
        %1788 = vrot.lane.b32.xlu0 %v1314, 96
        %v1789 = vpop.permute.xlu0 %1788
        %1790 = vrot.lane.b32.xlu0 %v1317, 96
        %v1791 = vpop.permute.xlu0 %1790
        %1792 = vrot.lane.b32.xlu0 %v1322, 96
        %v1793 = vpop.permute.xlu0 %1792
        %1794 = vrot.lane.b32.xlu0 %v1325, 96
        %v1795 = vpop.permute.xlu0 %1794
        %1796 = vrot.lane.b32.xlu0 %v1330, 96
        %v1797 = vpop.permute.xlu0 %1796
        %1798 = vrot.lane.b32.xlu0 %v1333, 96
        %v1799 = vpop.permute.xlu0 %1798
        %1800 = vrot.lane.b32.xlu0 %v1338, 96
        %v1801 = vpop.permute.xlu0 %1800
        %1802 = vrot.lane.b32.xlu0 %v1341, 96
        %v1803 = vpop.permute.xlu0 %1802
        %1804 = vrot.lane.b32.xlu0 %v1346, 96
        %v1805 = vpop.permute.xlu0 %1804
        %1806 = vrot.lane.b32.xlu0 %v1349, 96
        %v1807 = vpop.permute.xlu0 %1806
        %1808 = vrot.lane.b32.xlu0 %v1354, 96
        %v1809 = vpop.permute.xlu0 %1808
        %1810 = vrot.lane.b32.xlu0 %v1357, 96
        %v1811 = vpop.permute.xlu0 %1810
        %1812 = vrot.lane.b32.xlu0 %v1362, 96
        %v1813 = vpop.permute.xlu0 %1812
        %1814 = vrot.lane.b32.xlu0 %v1365, 96
        %v1815 = vpop.permute.xlu0 %1814
        %1832 = vrot.lane.b32.xlu0 %v1306, 64
        %v1833 = vpop.permute.xlu0 %1832
        %1834 = vrot.lane.b32.xlu0 %v1309, 64
        %v1835 = vpop.permute.xlu0 %1834
        %1836 = vrot.lane.b32.xlu0 %v1314, 64
        %v1837 = vpop.permute.xlu0 %1836
        %1838 = vrot.lane.b32.xlu0 %v1317, 64
        %v1839 = vpop.permute.xlu0 %1838
        %1840 = vrot.lane.b32.xlu0 %v1322, 64
        %v1841 = vpop.permute.xlu0 %1840
        %1842 = vrot.lane.b32.xlu0 %v1325, 64
        %v1843 = vpop.permute.xlu0 %1842
        %1844 = vrot.lane.b32.xlu0 %v1330, 64
        %v1845 = vpop.permute.xlu0 %1844
        %1846 = vrot.lane.b32.xlu0 %v1333, 64
        %v1847 = vpop.permute.xlu0 %1846
        %1848 = vrot.lane.b32.xlu0 %v1338, 64
        %v1849 = vpop.permute.xlu0 %1848
        %1850 = vrot.lane.b32.xlu0 %v1341, 64
        %v1851 = vpop.permute.xlu0 %1850
        %1852 = vrot.lane.b32.xlu0 %v1346, 64
        %v1853 = vpop.permute.xlu0 %1852
        %1854 = vrot.lane.b32.xlu0 %v1349, 64
        %v1855 = vpop.permute.xlu0 %1854
        %1856 = vrot.lane.b32.xlu0 %v1354, 64
        %v1857 = vpop.permute.xlu0 %1856
        %1858 = vrot.lane.b32.xlu0 %v1357, 64
        %v1859 = vpop.permute.xlu0 %1858
        %1860 = vrot.lane.b32.xlu0 %v1362, 64
        %v1861 = vpop.permute.xlu0 %1860
        %1862 = vrot.lane.b32.xlu0 %v1365, 64
        %v1863 = vpop.permute.xlu0 %1862
        %1880 = vrot.lane.b32.xlu0 %v1306, 32
        %v1881 = vpop.permute.xlu0 %1880
        %1882 = vrot.lane.b32.xlu0 %v1309, 32
        %v1883 = vpop.permute.xlu0 %1882
        %1884 = vrot.lane.b32.xlu0 %v1314, 32
        %v1885 = vpop.permute.xlu0 %1884
        %1886 = vrot.lane.b32.xlu0 %v1317, 32
        %v1887 = vpop.permute.xlu0 %1886
        %1888 = vrot.lane.b32.xlu0 %v1322, 32
        %v1889 = vpop.permute.xlu0 %1888
        %1890 = vrot.lane.b32.xlu0 %v1325, 32
        %v1891 = vpop.permute.xlu0 %1890
        %1892 = vrot.lane.b32.xlu0 %v1330, 32
        %v1893 = vpop.permute.xlu0 %1892
        %1894 = vrot.lane.b32.xlu0 %v1333, 32
        %v1895 = vpop.permute.xlu0 %1894
        %1896 = vrot.lane.b32.xlu0 %v1338, 32
        %v1897 = vpop.permute.xlu0 %1896
        %1898 = vrot.lane.b32.xlu0 %v1341, 32
        %v1899 = vpop.permute.xlu0 %1898
        %1900 = vrot.lane.b32.xlu0 %v1346, 32
        %v1901 = vpop.permute.xlu0 %1900
        %1902 = vrot.lane.b32.xlu0 %v1349, 32
        %v1903 = vpop.permute.xlu0 %1902
        %1904 = vrot.lane.b32.xlu0 %v1354, 32
        %v1905 = vpop.permute.xlu0 %1904
        %1906 = vrot.lane.b32.xlu0 %v1357, 32
        %v1907 = vpop.permute.xlu0 %1906
        %1908 = vrot.lane.b32.xlu0 %v1362, 32
        %v1909 = vpop.permute.xlu0 %1908
        %1910 = vrot.lane.b32.xlu0 %v1365, 32
        %v1911 = vpop.permute.xlu0 %1910
        %v1928 = vpack.c.bf16 %v1309, %v1306
        %v1929 = vpack.c.bf16 %v1317, %v1314
        %v1930 = vpack.c.bf16 %v1325, %v1322
        %v1931 = vpack.c.bf16 %v1333, %v1330
        %v1932 = vpack.c.bf16 %v1341, %v1338
        %v1933 = vpack.c.bf16 %v1349, %v1346
        %v1934 = vpack.c.bf16 %v1357, %v1354
        %v1935 = vpack.c.bf16 %v1365, %v1362
        %v1936 = vpack.c.bf16 %v1787, %v1785
        %v1937 = vpack.c.bf16 %v1791, %v1789
        %v1938 = vpack.c.bf16 %v1795, %v1793
        %v1939 = vpack.c.bf16 %v1799, %v1797
        %v1940 = vpack.c.bf16 %v1803, %v1801
        %v1941 = vpack.c.bf16 %v1807, %v1805
        %v1942 = vpack.c.bf16 %v1811, %v1809
        %v1943 = vpack.c.bf16 %v1815, %v1813
        %v1944 = vpack.c.bf16 %v1835, %v1833
        %v1945 = vpack.c.bf16 %v1839, %v1837
        %v1946 = vpack.c.bf16 %v1843, %v1841
        %v1947 = vpack.c.bf16 %v1847, %v1845
        %v1948 = vpack.c.bf16 %v1851, %v1849
        %v1949 = vpack.c.bf16 %v1855, %v1853
        %v1950 = vpack.c.bf16 %v1859, %v1857
        %v1951 = vpack.c.bf16 %v1863, %v1861
        %v1952 = vpack.c.bf16 %v1883, %v1881
        %v1953 = vpack.c.bf16 %v1887, %v1885
        %v1954 = vpack.c.bf16 %v1891, %v1889
        %v1955 = vpack.c.bf16 %v1895, %v1893
        %v1956 = vpack.c.bf16 %v1899, %v1897
        %v1957 = vpack.c.bf16 %v1903, %v1901
        %v1958 = vpack.c.bf16 %v1907, %v1905
        %v1959 = vpack.c.bf16 %v1911, %v1909
        %v1960 = vld [vmem:[#allocation6] sm:$0xff]
        %v1961 = vld [vmem:[#allocation6 + $0x8] sm:$0xff]
        %vm1962 = vcmask 261120
        %v1964 = vsel %vm1962, %v1544, 0
        %v1967 = vsel %vm1962, %v1736, 0
        %1969 = vmatprep.subr.bf16.mxu0 0
        %1970 = vmatpush1.bf16.xpose.msra.mxu0 %v1967
        %1971 = vmatprep.subr.bf16.mxu0 0
        %1972 = vmatpush1.bf16.xpose.msra.mxu0 0
        %1973 = vmatprep.subr.bf16.mxu0 0
        %1974 = vmatpush1.bf16.xpose.msra.mxu0 0
        %1975 = vmatprep.subr.bf16.mxu0 0
        %1976 = vmatpush1.bf16.xpose.msra.mxu0 0
        %1977 = vmatprep.subr.bf16.mxu0 0
        %1978 = vmatpush1.bf16.xpose.msra.mxu0 0
        %1979 = vmatprep.subr.bf16.mxu0 0
        %1980 = vmatpush1.bf16.xpose.msra.mxu0 0
        %1981 = vmatprep.subr.bf16.mxu0 0
        %1982 = vmatpush1.bf16.xpose.msra.mxu0 0
        %1983 = vmatprep.subr.bf16.mxu0 0
        %1984 = vmatpush1.bf16.xpose.msra.mxu0 0
        %1985 = vmatprep.subr.bf16.mxu0 0
        %1986 = vmatpush1.bf16.xpose.msra.mxu0 0
        %1987 = vmatprep.subr.bf16.mxu0 0
        %1988 = vmatpush1.bf16.xpose.msra.mxu0 0
        %1989 = vmatprep.subr.bf16.mxu0 0
        %1990 = vmatpush1.bf16.xpose.msra.mxu0 0
        %1991 = vmatprep.subr.bf16.mxu0 0
        %1992 = vmatpush1.bf16.xpose.msra.mxu0 0
        %1993 = vmatprep.subr.bf16.mxu0 0
        %1994 = vmatpush1.bf16.xpose.msra.mxu0 0
        %1995 = vmatprep.subr.bf16.mxu0 0
        %1996 = vmatpush1.bf16.xpose.msra.mxu0 0
        %1997 = vmatprep.subr.bf16.mxu0 0
        %1998 = vmatpush1.bf16.xpose.msra.mxu0 0
        %1999 = vmatprep.subr.bf16.mxu0 0
        %2000 = vmatpush1.bf16.xpose.msra.mxu0 0
        %2001 = vmatprep.mubr.bf16.mxu0 0
        %2002 = vmatmul.mubr.bf16.gmra.mrb[0].mxu0 %v1964
        %v2003 = vpop.f32.mrb[0].mxu0
        %v2004 = vadd.f32 %v1960, %v2003
        %v2005 = vpop.f32.mrb[0].mxu0
        %v2006 = vpop.f32.mrb[0].mxu0
        %v2007 = vadd.f32 %v1961, %v2006
        %v2008 = vpop.f32.mrb[0].mxu0
        %2009 = vdwg.mxu0
        %v2011 = vsel %vm1962, %v1545, 0
        %v2014 = vsel %vm1962, %v1737, 0
        %2016 = vmatprep.subr.bf16.mxu0 0
        %2017 = vmatpush1.bf16.xpose.msra.mxu0 %v2014
        %2018 = vmatprep.subr.bf16.mxu0 0
        %2019 = vmatpush1.bf16.xpose.msra.mxu0 0
        %2020 = vmatprep.subr.bf16.mxu0 0
        %2021 = vmatpush1.bf16.xpose.msra.mxu0 0
        %2022 = vmatprep.subr.bf16.mxu0 0
        %2023 = vmatpush1.bf16.xpose.msra.mxu0 0
        %2024 = vmatprep.subr.bf16.mxu0 0
        %2025 = vmatpush1.bf16.xpose.msra.mxu0 0
        %2026 = vmatprep.subr.bf16.mxu0 0
        %2027 = vmatpush1.bf16.xpose.msra.mxu0 0
        %2028 = vmatprep.subr.bf16.mxu0 0
        %2029 = vmatpush1.bf16.xpose.msra.mxu0 0
        %2030 = vmatprep.subr.bf16.mxu0 0
        %2031 = vmatpush1.bf16.xpose.msra.mxu0 0
        %2032 = vmatprep.subr.bf16.mxu0 0
        %2033 = vmatpush1.bf16.xpose.msra.mxu0 0
        %2034 = vmatprep.subr.bf16.mxu0 0
        %2035 = vmatpush1.bf16.xpose.msra.mxu0 0
        %2036 = vmatprep.subr.bf16.mxu0 0
        %2037 = vmatpush1.bf16.xpose.msra.mxu0 0
        %2038 = vmatprep.subr.bf16.mxu0 0
        %2039 = vmatpush1.bf16.xpose.msra.mxu0 0
        %2040 = vmatprep.subr.bf16.mxu0 0
        %2041 = vmatpush1.bf16.xpose.msra.mxu0 0
        %2042 = vmatprep.subr.bf16.mxu0 0
        %2043 = vmatpush1.bf16.xpose.msra.mxu0 0
        %2044 = vmatprep.subr.bf16.mxu0 0
        %2045 = vmatpush1.bf16.xpose.msra.mxu0 0
        %2046 = vmatprep.subr.bf16.mxu0 0
        %2047 = vmatpush1.bf16.xpose.msra.mxu0 0
        %2048 = vmatprep.mubr.bf16.mxu0 0
        %2049 = vmatmul.mubr.bf16.gmra.mrb[0].mxu0 %v2011
        %v2050 = vpop.f32.mrb[0].mxu0
        %v2051 = vadd.f32 %v1960, %v2050
        %v2052 = vpop.f32.mrb[0].mxu0
        %v2053 = vpop.f32.mrb[0].mxu0
        %v2054 = vadd.f32 %v1961, %v2053
        %v2055 = vpop.f32.mrb[0].mxu0
        %2056 = vdwg.mxu0
        %v2058 = vsel %vm1962, %v1546, 0
        %v2061 = vsel %vm1962, %v1738, 0
        %2063 = vmatprep.subr.bf16.mxu0 0
        %2064 = vmatpush1.bf16.xpose.msra.mxu0 %v2061
        %2065 = vmatprep.subr.bf16.mxu0 0
        %2066 = vmatpush1.bf16.xpose.msra.mxu0 0
        %2067 = vmatprep.subr.bf16.mxu0 0
        %2068 = vmatpush1.bf16.xpose.msra.mxu0 0
        %2069 = vmatprep.subr.bf16.mxu0 0
        %2070 = vmatpush1.bf16.xpose.msra.mxu0 0
        %2071 = vmatprep.subr.bf16.mxu0 0
        %2072 = vmatpush1.bf16.xpose.msra.mxu0 0
        %2073 = vmatprep.subr.bf16.mxu0 0
        %2074 = vmatpush1.bf16.xpose.msra.mxu0 0
        %2075 = vmatprep.subr.bf16.mxu0 0
        %2076 = vmatpush1.bf16.xpose.msra.mxu0 0
        %2077 = vmatprep.subr.bf16.mxu0 0
        %2078 = vmatpush1.bf16.xpose.msra.mxu0 0
        %2079 = vmatprep.subr.bf16.mxu0 0
        %2080 = vmatpush1.bf16.xpose.msra.mxu0 0
        %2081 = vmatprep.subr.bf16.mxu0 0
        %2082 = vmatpush1.bf16.xpose.msra.mxu0 0
        %2083 = vmatprep.subr.bf16.mxu0 0
        %2084 = vmatpush1.bf16.xpose.msra.mxu0 0
        %2085 = vmatprep.subr.bf16.mxu0 0
        %2086 = vmatpush1.bf16.xpose.msra.mxu0 0
        %2087 = vmatprep.subr.bf16.mxu0 0
        %2088 = vmatpush1.bf16.xpose.msra.mxu0 0
        %2089 = vmatprep.subr.bf16.mxu0 0
        %2090 = vmatpush1.bf16.xpose.msra.mxu0 0
        %2091 = vmatprep.subr.bf16.mxu0 0
        %2092 = vmatpush1.bf16.xpose.msra.mxu0 0
        %2093 = vmatprep.subr.bf16.mxu0 0
        %2094 = vmatpush1.bf16.xpose.msra.mxu0 0
        %2095 = vmatprep.mubr.bf16.mxu0 0
        %2096 = vmatmul.mubr.bf16.gmra.mrb[0].mxu0 %v2058
        %v2097 = vpop.f32.mrb[0].mxu0
        %v2098 = vadd.f32 %v1960, %v2097
        %v2099 = vpop.f32.mrb[0].mxu0
        %v2100 = vpop.f32.mrb[0].mxu0
        %v2101 = vadd.f32 %v1961, %v2100
        %v2102 = vpop.f32.mrb[0].mxu0
        %2103 = vdwg.mxu0
        %v2105 = vsel %vm1962, %v1547, 0
        %v2108 = vsel %vm1962, %v1739, 0
        %2110 = vmatprep.subr.bf16.mxu0 0
        %2111 = vmatpush1.bf16.xpose.msra.mxu0 %v2108
        %2112 = vmatprep.subr.bf16.mxu0 0
        %2113 = vmatpush1.bf16.xpose.msra.mxu0 0
        %2114 = vmatprep.subr.bf16.mxu0 0
        %2115 = vmatpush1.bf16.xpose.msra.mxu0 0
        %2116 = vmatprep.subr.bf16.mxu0 0
        %2117 = vmatpush1.bf16.xpose.msra.mxu0 0
        %2118 = vmatprep.subr.bf16.mxu0 0
        %2119 = vmatpush1.bf16.xpose.msra.mxu0 0
        %2120 = vmatprep.subr.bf16.mxu0 0
        %2121 = vmatpush1.bf16.xpose.msra.mxu0 0
        %2122 = vmatprep.subr.bf16.mxu0 0
        %2123 = vmatpush1.bf16.xpose.msra.mxu0 0
        %2124 = vmatprep.subr.bf16.mxu0 0
        %2125 = vmatpush1.bf16.xpose.msra.mxu0 0
        %2126 = vmatprep.subr.bf16.mxu0 0
        %2127 = vmatpush1.bf16.xpose.msra.mxu0 0
        %2128 = vmatprep.subr.bf16.mxu0 0
        %2129 = vmatpush1.bf16.xpose.msra.mxu0 0
        %2130 = vmatprep.subr.bf16.mxu0 0
        %2131 = vmatpush1.bf16.xpose.msra.mxu0 0
        %2132 = vmatprep.subr.bf16.mxu0 0
        %2133 = vmatpush1.bf16.xpose.msra.mxu0 0
        %2134 = vmatprep.subr.bf16.mxu0 0
        %2135 = vmatpush1.bf16.xpose.msra.mxu0 0
        %2136 = vmatprep.subr.bf16.mxu0 0
        %2137 = vmatpush1.bf16.xpose.msra.mxu0 0
        %2138 = vmatprep.subr.bf16.mxu0 0
        %2139 = vmatpush1.bf16.xpose.msra.mxu0 0
        %2140 = vmatprep.subr.bf16.mxu0 0
        %2141 = vmatpush1.bf16.xpose.msra.mxu0 0
        %2142 = vmatprep.mubr.bf16.mxu0 0
        %2143 = vmatmul.mubr.bf16.gmra.mrb[0].mxu0 %v2105
        %v2144 = vpop.f32.mrb[0].mxu0
        %v2145 = vadd.f32 %v1960, %v2144
        %v2146 = vpop.f32.mrb[0].mxu0
        %v2147 = vpop.f32.mrb[0].mxu0
        %v2148 = vadd.f32 %v1961, %v2147
        %v2149 = vpop.f32.mrb[0].mxu0
        %2150 = vdwg.mxu0
        %v2152 = vsel %vm1962, %v1548, 0
        %v2155 = vsel %vm1962, %v1740, 0
        %2157 = vmatprep.subr.bf16.mxu0 0
        %2158 = vmatpush1.bf16.xpose.msra.mxu0 %v2155
        %2159 = vmatprep.subr.bf16.mxu0 0
        %2160 = vmatpush1.bf16.xpose.msra.mxu0 0
        %2161 = vmatprep.subr.bf16.mxu0 0
        %2162 = vmatpush1.bf16.xpose.msra.mxu0 0
        %2163 = vmatprep.subr.bf16.mxu0 0
        %2164 = vmatpush1.bf16.xpose.msra.mxu0 0
        %2165 = vmatprep.subr.bf16.mxu0 0
        %2166 = vmatpush1.bf16.xpose.msra.mxu0 0
        %2167 = vmatprep.subr.bf16.mxu0 0
        %2168 = vmatpush1.bf16.xpose.msra.mxu0 0
        %2169 = vmatprep.subr.bf16.mxu0 0
        %2170 = vmatpush1.bf16.xpose.msra.mxu0 0
        %2171 = vmatprep.subr.bf16.mxu0 0
        %2172 = vmatpush1.bf16.xpose.msra.mxu0 0
        %2173 = vmatprep.subr.bf16.mxu0 0
        %2174 = vmatpush1.bf16.xpose.msra.mxu0 0
        %2175 = vmatprep.subr.bf16.mxu0 0
        %2176 = vmatpush1.bf16.xpose.msra.mxu0 0
        %2177 = vmatprep.subr.bf16.mxu0 0
        %2178 = vmatpush1.bf16.xpose.msra.mxu0 0
        %2179 = vmatprep.subr.bf16.mxu0 0
        %2180 = vmatpush1.bf16.xpose.msra.mxu0 0
        %2181 = vmatprep.subr.bf16.mxu0 0
        %2182 = vmatpush1.bf16.xpose.msra.mxu0 0
        %2183 = vmatprep.subr.bf16.mxu0 0
        %2184 = vmatpush1.bf16.xpose.msra.mxu0 0
        %2185 = vmatprep.subr.bf16.mxu0 0
        %2186 = vmatpush1.bf16.xpose.msra.mxu0 0
        %2187 = vmatprep.subr.bf16.mxu0 0
        %2188 = vmatpush1.bf16.xpose.msra.mxu0 0
        %2189 = vmatprep.mubr.bf16.mxu0 0
        %2190 = vmatmul.mubr.bf16.gmra.mrb[0].mxu0 %v2152
        %v2191 = vpop.f32.mrb[0].mxu0
        %v2192 = vadd.f32 %v1960, %v2191
        %v2193 = vpop.f32.mrb[0].mxu0
        %v2194 = vpop.f32.mrb[0].mxu0
        %v2195 = vadd.f32 %v1961, %v2194
        %v2196 = vpop.f32.mrb[0].mxu0
        %2197 = vdwg.mxu0
        %v2199 = vsel %vm1962, %v1549, 0
        %v2202 = vsel %vm1962, %v1741, 0
        %2204 = vmatprep.subr.bf16.mxu0 0
        %2205 = vmatpush1.bf16.xpose.msra.mxu0 %v2202
        %2206 = vmatprep.subr.bf16.mxu0 0
        %2207 = vmatpush1.bf16.xpose.msra.mxu0 0
        %2208 = vmatprep.subr.bf16.mxu0 0
        %2209 = vmatpush1.bf16.xpose.msra.mxu0 0
        %2210 = vmatprep.subr.bf16.mxu0 0
        %2211 = vmatpush1.bf16.xpose.msra.mxu0 0
        %2212 = vmatprep.subr.bf16.mxu0 0
        %2213 = vmatpush1.bf16.xpose.msra.mxu0 0
        %2214 = vmatprep.subr.bf16.mxu0 0
        %2215 = vmatpush1.bf16.xpose.msra.mxu0 0
        %2216 = vmatprep.subr.bf16.mxu0 0
        %2217 = vmatpush1.bf16.xpose.msra.mxu0 0
        %2218 = vmatprep.subr.bf16.mxu0 0
        %2219 = vmatpush1.bf16.xpose.msra.mxu0 0
        %2220 = vmatprep.subr.bf16.mxu0 0
        %2221 = vmatpush1.bf16.xpose.msra.mxu0 0
        %2222 = vmatprep.subr.bf16.mxu0 0
        %2223 = vmatpush1.bf16.xpose.msra.mxu0 0
        %2224 = vmatprep.subr.bf16.mxu0 0
        %2225 = vmatpush1.bf16.xpose.msra.mxu0 0
        %2226 = vmatprep.subr.bf16.mxu0 0
        %2227 = vmatpush1.bf16.xpose.msra.mxu0 0
        %2228 = vmatprep.subr.bf16.mxu0 0
        %2229 = vmatpush1.bf16.xpose.msra.mxu0 0
        %2230 = vmatprep.subr.bf16.mxu0 0
        %2231 = vmatpush1.bf16.xpose.msra.mxu0 0
        %2232 = vmatprep.subr.bf16.mxu0 0
        %2233 = vmatpush1.bf16.xpose.msra.mxu0 0
        %2234 = vmatprep.subr.bf16.mxu0 0
        %2235 = vmatpush1.bf16.xpose.msra.mxu0 0
        %2236 = vmatprep.mubr.bf16.mxu0 0
        %2237 = vmatmul.mubr.bf16.gmra.mrb[0].mxu0 %v2199
        %v2238 = vpop.f32.mrb[0].mxu0
        %v2239 = vadd.f32 %v1960, %v2238
        %v2240 = vpop.f32.mrb[0].mxu0
        %v2241 = vpop.f32.mrb[0].mxu0
        %v2242 = vadd.f32 %v1961, %v2241
        %v2243 = vpop.f32.mrb[0].mxu0
        %2244 = vdwg.mxu0
        %v2246 = vsel %vm1962, %v1550, 0
        %v2249 = vsel %vm1962, %v1742, 0
        %2251 = vmatprep.subr.bf16.mxu0 0
        %2252 = vmatpush1.bf16.xpose.msra.mxu0 %v2249
        %2253 = vmatprep.subr.bf16.mxu0 0
        %2254 = vmatpush1.bf16.xpose.msra.mxu0 0
        %2255 = vmatprep.subr.bf16.mxu0 0
        %2256 = vmatpush1.bf16.xpose.msra.mxu0 0
        %2257 = vmatprep.subr.bf16.mxu0 0
        %2258 = vmatpush1.bf16.xpose.msra.mxu0 0
        %2259 = vmatprep.subr.bf16.mxu0 0
        %2260 = vmatpush1.bf16.xpose.msra.mxu0 0
        %2261 = vmatprep.subr.bf16.mxu0 0
        %2262 = vmatpush1.bf16.xpose.msra.mxu0 0
        %2263 = vmatprep.subr.bf16.mxu0 0
        %2264 = vmatpush1.bf16.xpose.msra.mxu0 0
        %2265 = vmatprep.subr.bf16.mxu0 0
        %2266 = vmatpush1.bf16.xpose.msra.mxu0 0
        %2267 = vmatprep.subr.bf16.mxu0 0
        %2268 = vmatpush1.bf16.xpose.msra.mxu0 0
        %2269 = vmatprep.subr.bf16.mxu0 0
        %2270 = vmatpush1.bf16.xpose.msra.mxu0 0
        %2271 = vmatprep.subr.bf16.mxu0 0
        %2272 = vmatpush1.bf16.xpose.msra.mxu0 0
        %2273 = vmatprep.subr.bf16.mxu0 0
        %2274 = vmatpush1.bf16.xpose.msra.mxu0 0
        %2275 = vmatprep.subr.bf16.mxu0 0
        %2276 = vmatpush1.bf16.xpose.msra.mxu0 0
        %2277 = vmatprep.subr.bf16.mxu0 0
        %2278 = vmatpush1.bf16.xpose.msra.mxu0 0
        %2279 = vmatprep.subr.bf16.mxu0 0
        %2280 = vmatpush1.bf16.xpose.msra.mxu0 0
        %2281 = vmatprep.subr.bf16.mxu0 0
        %2282 = vmatpush1.bf16.xpose.msra.mxu0 0
        %2283 = vmatprep.mubr.bf16.mxu0 0
        %2284 = vmatmul.mubr.bf16.gmra.mrb[0].mxu0 %v2246
        %v2285 = vpop.f32.mrb[0].mxu0
        %v2286 = vadd.f32 %v1960, %v2285
        %v2287 = vpop.f32.mrb[0].mxu0
        %v2288 = vpop.f32.mrb[0].mxu0
        %v2289 = vadd.f32 %v1961, %v2288
        %v2290 = vpop.f32.mrb[0].mxu0
        %2291 = vdwg.mxu0
        %v2293 = vsel %vm1962, %v1551, 0
        %v2296 = vsel %vm1962, %v1743, 0
        %2298 = vmatprep.subr.bf16.mxu0 0
        %2299 = vmatpush1.bf16.xpose.msra.mxu0 %v2296
        %2300 = vmatprep.subr.bf16.mxu0 0
        %2301 = vmatpush1.bf16.xpose.msra.mxu0 0
        %2302 = vmatprep.subr.bf16.mxu0 0
        %2303 = vmatpush1.bf16.xpose.msra.mxu0 0
        %2304 = vmatprep.subr.bf16.mxu0 0
        %2305 = vmatpush1.bf16.xpose.msra.mxu0 0
        %2306 = vmatprep.subr.bf16.mxu0 0
        %2307 = vmatpush1.bf16.xpose.msra.mxu0 0
        %2308 = vmatprep.subr.bf16.mxu0 0
        %2309 = vmatpush1.bf16.xpose.msra.mxu0 0
        %2310 = vmatprep.subr.bf16.mxu0 0
        %2311 = vmatpush1.bf16.xpose.msra.mxu0 0
        %2312 = vmatprep.subr.bf16.mxu0 0
        %2313 = vmatpush1.bf16.xpose.msra.mxu0 0
        %2314 = vmatprep.subr.bf16.mxu0 0
        %2315 = vmatpush1.bf16.xpose.msra.mxu0 0
        %2316 = vmatprep.subr.bf16.mxu0 0
        %2317 = vmatpush1.bf16.xpose.msra.mxu0 0
        %2318 = vmatprep.subr.bf16.mxu0 0
        %2319 = vmatpush1.bf16.xpose.msra.mxu0 0
        %2320 = vmatprep.subr.bf16.mxu0 0
        %2321 = vmatpush1.bf16.xpose.msra.mxu0 0
        %2322 = vmatprep.subr.bf16.mxu0 0
        %2323 = vmatpush1.bf16.xpose.msra.mxu0 0
        %2324 = vmatprep.subr.bf16.mxu0 0
        %2325 = vmatpush1.bf16.xpose.msra.mxu0 0
        %2326 = vmatprep.subr.bf16.mxu0 0
        %2327 = vmatpush1.bf16.xpose.msra.mxu0 0
        %2328 = vmatprep.subr.bf16.mxu0 0
        %2329 = vmatpush1.bf16.xpose.msra.mxu0 0
        %2330 = vmatprep.mubr.bf16.mxu0 0
        %2331 = vmatmul.mubr.bf16.gmra.mrb[0].mxu0 %v2293
        %v2332 = vpop.f32.mrb[0].mxu0
        %v2333 = vadd.f32 %v1960, %v2332
        %v2334 = vpop.f32.mrb[0].mxu0
        %v2335 = vpop.f32.mrb[0].mxu0
        %v2336 = vadd.f32 %v1961, %v2335
        %v2337 = vpop.f32.mrb[0].mxu0
        %2338 = vdwg.mxu0
        %v2340 = vsel %vm1962, %v1552, 0
        %v2343 = vsel %vm1962, %v1744, 0
        %2345 = vmatprep.subr.bf16.mxu0 0
        %2346 = vmatpush1.bf16.xpose.msra.mxu0 %v2343
        %2347 = vmatprep.subr.bf16.mxu0 0
        %2348 = vmatpush1.bf16.xpose.msra.mxu0 0
        %2349 = vmatprep.subr.bf16.mxu0 0
        %2350 = vmatpush1.bf16.xpose.msra.mxu0 0
        %2351 = vmatprep.subr.bf16.mxu0 0
        %2352 = vmatpush1.bf16.xpose.msra.mxu0 0
        %2353 = vmatprep.subr.bf16.mxu0 0
        %2354 = vmatpush1.bf16.xpose.msra.mxu0 0
        %2355 = vmatprep.subr.bf16.mxu0 0
        %2356 = vmatpush1.bf16.xpose.msra.mxu0 0
        %2357 = vmatprep.subr.bf16.mxu0 0
        %2358 = vmatpush1.bf16.xpose.msra.mxu0 0
        %2359 = vmatprep.subr.bf16.mxu0 0
        %2360 = vmatpush1.bf16.xpose.msra.mxu0 0
        %2361 = vmatprep.subr.bf16.mxu0 0
        %2362 = vmatpush1.bf16.xpose.msra.mxu0 0
        %2363 = vmatprep.subr.bf16.mxu0 0
        %2364 = vmatpush1.bf16.xpose.msra.mxu0 0
        %2365 = vmatprep.subr.bf16.mxu0 0
        %2366 = vmatpush1.bf16.xpose.msra.mxu0 0
        %2367 = vmatprep.subr.bf16.mxu0 0
        %2368 = vmatpush1.bf16.xpose.msra.mxu0 0
        %2369 = vmatprep.subr.bf16.mxu0 0
        %2370 = vmatpush1.bf16.xpose.msra.mxu0 0
        %2371 = vmatprep.subr.bf16.mxu0 0
        %2372 = vmatpush1.bf16.xpose.msra.mxu0 0
        %2373 = vmatprep.subr.bf16.mxu0 0
        %2374 = vmatpush1.bf16.xpose.msra.mxu0 0
        %2375 = vmatprep.subr.bf16.mxu0 0
        %2376 = vmatpush1.bf16.xpose.msra.mxu0 0
        %2377 = vmatprep.mubr.bf16.mxu0 0
        %2378 = vmatmul.mubr.bf16.gmra.mrb[0].mxu0 %v2340
        %v2379 = vpop.f32.mrb[0].mxu0
        %v2380 = vadd.f32 %v1960, %v2379
        %v2381 = vpop.f32.mrb[0].mxu0
        %v2382 = vpop.f32.mrb[0].mxu0
        %v2383 = vadd.f32 %v1961, %v2382
        %v2384 = vpop.f32.mrb[0].mxu0
        %2385 = vdwg.mxu0
        %v2387 = vsel %vm1962, %v1553, 0
        %v2390 = vsel %vm1962, %v1745, 0
        %2392 = vmatprep.subr.bf16.mxu0 0
        %2393 = vmatpush1.bf16.xpose.msra.mxu0 %v2390
        %2394 = vmatprep.subr.bf16.mxu0 0
        %2395 = vmatpush1.bf16.xpose.msra.mxu0 0
        %2396 = vmatprep.subr.bf16.mxu0 0
        %2397 = vmatpush1.bf16.xpose.msra.mxu0 0
        %2398 = vmatprep.subr.bf16.mxu0 0
        %2399 = vmatpush1.bf16.xpose.msra.mxu0 0
        %2400 = vmatprep.subr.bf16.mxu0 0
        %2401 = vmatpush1.bf16.xpose.msra.mxu0 0
        %2402 = vmatprep.subr.bf16.mxu0 0
        %2403 = vmatpush1.bf16.xpose.msra.mxu0 0
        %2404 = vmatprep.subr.bf16.mxu0 0
        %2405 = vmatpush1.bf16.xpose.msra.mxu0 0
        %2406 = vmatprep.subr.bf16.mxu0 0
        %2407 = vmatpush1.bf16.xpose.msra.mxu0 0
        %2408 = vmatprep.subr.bf16.mxu0 0
        %2409 = vmatpush1.bf16.xpose.msra.mxu0 0
        %2410 = vmatprep.subr.bf16.mxu0 0
        %2411 = vmatpush1.bf16.xpose.msra.mxu0 0
        %2412 = vmatprep.subr.bf16.mxu0 0
        %2413 = vmatpush1.bf16.xpose.msra.mxu0 0
        %2414 = vmatprep.subr.bf16.mxu0 0
        %2415 = vmatpush1.bf16.xpose.msra.mxu0 0
        %2416 = vmatprep.subr.bf16.mxu0 0
        %2417 = vmatpush1.bf16.xpose.msra.mxu0 0
        %2418 = vmatprep.subr.bf16.mxu0 0
        %2419 = vmatpush1.bf16.xpose.msra.mxu0 0
        %2420 = vmatprep.subr.bf16.mxu0 0
        %2421 = vmatpush1.bf16.xpose.msra.mxu0 0
        %2422 = vmatprep.subr.bf16.mxu0 0
        %2423 = vmatpush1.bf16.xpose.msra.mxu0 0
        %2424 = vmatprep.mubr.bf16.mxu0 0
        %2425 = vmatmul.mubr.bf16.gmra.mrb[0].mxu0 %v2387
        %v2426 = vpop.f32.mrb[0].mxu0
        %v2427 = vadd.f32 %v1960, %v2426
        %v2428 = vpop.f32.mrb[0].mxu0
        %v2429 = vpop.f32.mrb[0].mxu0
        %v2430 = vadd.f32 %v1961, %v2429
        %v2431 = vpop.f32.mrb[0].mxu0
        %2432 = vdwg.mxu0
        %v2434 = vsel %vm1962, %v1554, 0
        %v2437 = vsel %vm1962, %v1746, 0
        %2439 = vmatprep.subr.bf16.mxu0 0
        %2440 = vmatpush1.bf16.xpose.msra.mxu0 %v2437
        %2441 = vmatprep.subr.bf16.mxu0 0
        %2442 = vmatpush1.bf16.xpose.msra.mxu0 0
        %2443 = vmatprep.subr.bf16.mxu0 0
        %2444 = vmatpush1.bf16.xpose.msra.mxu0 0
        %2445 = vmatprep.subr.bf16.mxu0 0
        %2446 = vmatpush1.bf16.xpose.msra.mxu0 0
        %2447 = vmatprep.subr.bf16.mxu0 0
        %2448 = vmatpush1.bf16.xpose.msra.mxu0 0
        %2449 = vmatprep.subr.bf16.mxu0 0
        %2450 = vmatpush1.bf16.xpose.msra.mxu0 0
        %2451 = vmatprep.subr.bf16.mxu0 0
        %2452 = vmatpush1.bf16.xpose.msra.mxu0 0
        %2453 = vmatprep.subr.bf16.mxu0 0
        %2454 = vmatpush1.bf16.xpose.msra.mxu0 0
        %2455 = vmatprep.subr.bf16.mxu0 0
        %2456 = vmatpush1.bf16.xpose.msra.mxu0 0
        %2457 = vmatprep.subr.bf16.mxu0 0
        %2458 = vmatpush1.bf16.xpose.msra.mxu0 0
        %2459 = vmatprep.subr.bf16.mxu0 0
        %2460 = vmatpush1.bf16.xpose.msra.mxu0 0
        %2461 = vmatprep.subr.bf16.mxu0 0
        %2462 = vmatpush1.bf16.xpose.msra.mxu0 0
        %2463 = vmatprep.subr.bf16.mxu0 0
        %2464 = vmatpush1.bf16.xpose.msra.mxu0 0
        %2465 = vmatprep.subr.bf16.mxu0 0
        %2466 = vmatpush1.bf16.xpose.msra.mxu0 0
        %2467 = vmatprep.subr.bf16.mxu0 0
        %2468 = vmatpush1.bf16.xpose.msra.mxu0 0
        %2469 = vmatprep.subr.bf16.mxu0 0
        %2470 = vmatpush1.bf16.xpose.msra.mxu0 0
        %2471 = vmatprep.mubr.bf16.mxu0 0
        %2472 = vmatmul.mubr.bf16.gmra.mrb[0].mxu0 %v2434
        %v2473 = vpop.f32.mrb[0].mxu0
        %v2474 = vadd.f32 %v1960, %v2473
        %v2475 = vpop.f32.mrb[0].mxu0
        %v2476 = vpop.f32.mrb[0].mxu0
        %v2477 = vadd.f32 %v1961, %v2476
        %v2478 = vpop.f32.mrb[0].mxu0
        %2479 = vdwg.mxu0
        %v2481 = vsel %vm1962, %v1555, 0
        %v2484 = vsel %vm1962, %v1747, 0
        %2486 = vmatprep.subr.bf16.mxu0 0
        %2487 = vmatpush1.bf16.xpose.msra.mxu0 %v2484
        %2488 = vmatprep.subr.bf16.mxu0 0
        %2489 = vmatpush1.bf16.xpose.msra.mxu0 0
        %2490 = vmatprep.subr.bf16.mxu0 0
        %2491 = vmatpush1.bf16.xpose.msra.mxu0 0
        %2492 = vmatprep.subr.bf16.mxu0 0
        %2493 = vmatpush1.bf16.xpose.msra.mxu0 0
        %2494 = vmatprep.subr.bf16.mxu0 0
        %2495 = vmatpush1.bf16.xpose.msra.mxu0 0
        %2496 = vmatprep.subr.bf16.mxu0 0
        %2497 = vmatpush1.bf16.xpose.msra.mxu0 0
        %2498 = vmatprep.subr.bf16.mxu0 0
        %2499 = vmatpush1.bf16.xpose.msra.mxu0 0
        %2500 = vmatprep.subr.bf16.mxu0 0
        %2501 = vmatpush1.bf16.xpose.msra.mxu0 0
        %2502 = vmatprep.subr.bf16.mxu0 0
        %2503 = vmatpush1.bf16.xpose.msra.mxu0 0
        %2504 = vmatprep.subr.bf16.mxu0 0
        %2505 = vmatpush1.bf16.xpose.msra.mxu0 0
        %2506 = vmatprep.subr.bf16.mxu0 0
        %2507 = vmatpush1.bf16.xpose.msra.mxu0 0
        %2508 = vmatprep.subr.bf16.mxu0 0
        %2509 = vmatpush1.bf16.xpose.msra.mxu0 0
        %2510 = vmatprep.subr.bf16.mxu0 0
        %2511 = vmatpush1.bf16.xpose.msra.mxu0 0
        %2512 = vmatprep.subr.bf16.mxu0 0
        %2513 = vmatpush1.bf16.xpose.msra.mxu0 0
        %2514 = vmatprep.subr.bf16.mxu0 0
        %2515 = vmatpush1.bf16.xpose.msra.mxu0 0
        %2516 = vmatprep.subr.bf16.mxu0 0
        %2517 = vmatpush1.bf16.xpose.msra.mxu0 0
        %2518 = vmatprep.mubr.bf16.mxu0 0
        %2519 = vmatmul.mubr.bf16.gmra.mrb[0].mxu0 %v2481
        %v2520 = vpop.f32.mrb[0].mxu0
        %v2521 = vadd.f32 %v1960, %v2520
        %v2522 = vpop.f32.mrb[0].mxu0
        %v2523 = vpop.f32.mrb[0].mxu0
        %v2524 = vadd.f32 %v1961, %v2523
        %v2525 = vpop.f32.mrb[0].mxu0
        %2526 = vdwg.mxu0
        %v2528 = vsel %vm1962, %v1556, 0
        %v2531 = vsel %vm1962, %v1748, 0
        %2533 = vmatprep.subr.bf16.mxu0 0
        %2534 = vmatpush1.bf16.xpose.msra.mxu0 %v2531
        %2535 = vmatprep.subr.bf16.mxu0 0
        %2536 = vmatpush1.bf16.xpose.msra.mxu0 0
        %2537 = vmatprep.subr.bf16.mxu0 0
        %2538 = vmatpush1.bf16.xpose.msra.mxu0 0
        %2539 = vmatprep.subr.bf16.mxu0 0
        %2540 = vmatpush1.bf16.xpose.msra.mxu0 0
        %2541 = vmatprep.subr.bf16.mxu0 0
        %2542 = vmatpush1.bf16.xpose.msra.mxu0 0
        %2543 = vmatprep.subr.bf16.mxu0 0
        %2544 = vmatpush1.bf16.xpose.msra.mxu0 0
        %2545 = vmatprep.subr.bf16.mxu0 0
        %2546 = vmatpush1.bf16.xpose.msra.mxu0 0
        %2547 = vmatprep.subr.bf16.mxu0 0
        %2548 = vmatpush1.bf16.xpose.msra.mxu0 0
        %2549 = vmatprep.subr.bf16.mxu0 0
        %2550 = vmatpush1.bf16.xpose.msra.mxu0 0
        %2551 = vmatprep.subr.bf16.mxu0 0
        %2552 = vmatpush1.bf16.xpose.msra.mxu0 0
        %2553 = vmatprep.subr.bf16.mxu0 0
        %2554 = vmatpush1.bf16.xpose.msra.mxu0 0
        %2555 = vmatprep.subr.bf16.mxu0 0
        %2556 = vmatpush1.bf16.xpose.msra.mxu0 0
        %2557 = vmatprep.subr.bf16.mxu0 0
        %2558 = vmatpush1.bf16.xpose.msra.mxu0 0
        %2559 = vmatprep.subr.bf16.mxu0 0
        %2560 = vmatpush1.bf16.xpose.msra.mxu0 0
        %2561 = vmatprep.subr.bf16.mxu0 0
        %2562 = vmatpush1.bf16.xpose.msra.mxu0 0
        %2563 = vmatprep.subr.bf16.mxu0 0
        %2564 = vmatpush1.bf16.xpose.msra.mxu0 0
        %2565 = vmatprep.mubr.bf16.mxu0 0
        %2566 = vmatmul.mubr.bf16.gmra.mrb[0].mxu0 %v2528
        %v2567 = vpop.f32.mrb[0].mxu0
        %v2568 = vadd.f32 %v1960, %v2567
        %v2569 = vpop.f32.mrb[0].mxu0
        %v2570 = vpop.f32.mrb[0].mxu0
        %v2571 = vadd.f32 %v1961, %v2570
        %v2572 = vpop.f32.mrb[0].mxu0
        %2573 = vdwg.mxu0
        %v2575 = vsel %vm1962, %v1557, 0
        %v2578 = vsel %vm1962, %v1749, 0
        %2580 = vmatprep.subr.bf16.mxu0 0
        %2581 = vmatpush1.bf16.xpose.msra.mxu0 %v2578
        %2582 = vmatprep.subr.bf16.mxu0 0
        %2583 = vmatpush1.bf16.xpose.msra.mxu0 0
        %2584 = vmatprep.subr.bf16.mxu0 0
        %2585 = vmatpush1.bf16.xpose.msra.mxu0 0
        %2586 = vmatprep.subr.bf16.mxu0 0
        %2587 = vmatpush1.bf16.xpose.msra.mxu0 0
        %2588 = vmatprep.subr.bf16.mxu0 0
        %2589 = vmatpush1.bf16.xpose.msra.mxu0 0
        %2590 = vmatprep.subr.bf16.mxu0 0
        %2591 = vmatpush1.bf16.xpose.msra.mxu0 0
        %2592 = vmatprep.subr.bf16.mxu0 0
        %2593 = vmatpush1.bf16.xpose.msra.mxu0 0
        %2594 = vmatprep.subr.bf16.mxu0 0
        %2595 = vmatpush1.bf16.xpose.msra.mxu0 0
        %2596 = vmatprep.subr.bf16.mxu0 0
        %2597 = vmatpush1.bf16.xpose.msra.mxu0 0
        %2598 = vmatprep.subr.bf16.mxu0 0
        %2599 = vmatpush1.bf16.xpose.msra.mxu0 0
        %2600 = vmatprep.subr.bf16.mxu0 0
        %2601 = vmatpush1.bf16.xpose.msra.mxu0 0
        %2602 = vmatprep.subr.bf16.mxu0 0
        %2603 = vmatpush1.bf16.xpose.msra.mxu0 0
        %2604 = vmatprep.subr.bf16.mxu0 0
        %2605 = vmatpush1.bf16.xpose.msra.mxu0 0
        %2606 = vmatprep.subr.bf16.mxu0 0
        %2607 = vmatpush1.bf16.xpose.msra.mxu0 0
        %2608 = vmatprep.subr.bf16.mxu0 0
        %2609 = vmatpush1.bf16.xpose.msra.mxu0 0
        %2610 = vmatprep.subr.bf16.mxu0 0
        %2611 = vmatpush1.bf16.xpose.msra.mxu0 0
        %2612 = vmatprep.mubr.bf16.mxu0 0
        %2613 = vmatmul.mubr.bf16.gmra.mrb[0].mxu0 %v2575
        %v2614 = vpop.f32.mrb[0].mxu0
        %v2615 = vadd.f32 %v1960, %v2614
        %v2616 = vpop.f32.mrb[0].mxu0
        %v2617 = vpop.f32.mrb[0].mxu0
        %v2618 = vadd.f32 %v1961, %v2617
        %v2619 = vpop.f32.mrb[0].mxu0
        %2620 = vdwg.mxu0
        %v2622 = vsel %vm1962, %v1558, 0
        %v2625 = vsel %vm1962, %v1750, 0
        %2627 = vmatprep.subr.bf16.mxu0 0
        %2628 = vmatpush1.bf16.xpose.msra.mxu0 %v2625
        %2629 = vmatprep.subr.bf16.mxu0 0
        %2630 = vmatpush1.bf16.xpose.msra.mxu0 0
        %2631 = vmatprep.subr.bf16.mxu0 0
        %2632 = vmatpush1.bf16.xpose.msra.mxu0 0
        %2633 = vmatprep.subr.bf16.mxu0 0
        %2634 = vmatpush1.bf16.xpose.msra.mxu0 0
        %2635 = vmatprep.subr.bf16.mxu0 0
        %2636 = vmatpush1.bf16.xpose.msra.mxu0 0
        %2637 = vmatprep.subr.bf16.mxu0 0
        %2638 = vmatpush1.bf16.xpose.msra.mxu0 0
        %2639 = vmatprep.subr.bf16.mxu0 0
        %2640 = vmatpush1.bf16.xpose.msra.mxu0 0
        %2641 = vmatprep.subr.bf16.mxu0 0
        %2642 = vmatpush1.bf16.xpose.msra.mxu0 0
        %2643 = vmatprep.subr.bf16.mxu0 0
        %2644 = vmatpush1.bf16.xpose.msra.mxu0 0
        %2645 = vmatprep.subr.bf16.mxu0 0
        %2646 = vmatpush1.bf16.xpose.msra.mxu0 0
        %2647 = vmatprep.subr.bf16.mxu0 0
        %2648 = vmatpush1.bf16.xpose.msra.mxu0 0
        %2649 = vmatprep.subr.bf16.mxu0 0
        %2650 = vmatpush1.bf16.xpose.msra.mxu0 0
        %2651 = vmatprep.subr.bf16.mxu0 0
        %2652 = vmatpush1.bf16.xpose.msra.mxu0 0
        %2653 = vmatprep.subr.bf16.mxu0 0
        %2654 = vmatpush1.bf16.xpose.msra.mxu0 0
        %2655 = vmatprep.subr.bf16.mxu0 0
        %2656 = vmatpush1.bf16.xpose.msra.mxu0 0
        %2657 = vmatprep.subr.bf16.mxu0 0
        %2658 = vmatpush1.bf16.xpose.msra.mxu0 0
        %2659 = vmatprep.mubr.bf16.mxu0 0
        %2660 = vmatmul.mubr.bf16.gmra.mrb[0].mxu0 %v2622
        %v2661 = vpop.f32.mrb[0].mxu0
        %v2662 = vadd.f32 %v1960, %v2661
        %v2663 = vpop.f32.mrb[0].mxu0
        %v2664 = vpop.f32.mrb[0].mxu0
        %v2665 = vadd.f32 %v1961, %v2664
        %v2666 = vpop.f32.mrb[0].mxu0
        %2667 = vdwg.mxu0
        %v2669 = vsel %vm1962, %v1559, 0
        %v2672 = vsel %vm1962, %v1751, 0
        %2674 = vmatprep.subr.bf16.mxu0 0
        %2675 = vmatpush1.bf16.xpose.msra.mxu0 %v2672
        %2676 = vmatprep.subr.bf16.mxu0 0
        %2677 = vmatpush1.bf16.xpose.msra.mxu0 0
        %2678 = vmatprep.subr.bf16.mxu0 0
        %2679 = vmatpush1.bf16.xpose.msra.mxu0 0
        %2680 = vmatprep.subr.bf16.mxu0 0
        %2681 = vmatpush1.bf16.xpose.msra.mxu0 0
        %2682 = vmatprep.subr.bf16.mxu0 0
        %2683 = vmatpush1.bf16.xpose.msra.mxu0 0
        %2684 = vmatprep.subr.bf16.mxu0 0
        %2685 = vmatpush1.bf16.xpose.msra.mxu0 0
        %2686 = vmatprep.subr.bf16.mxu0 0
        %2687 = vmatpush1.bf16.xpose.msra.mxu0 0
        %2688 = vmatprep.subr.bf16.mxu0 0
        %2689 = vmatpush1.bf16.xpose.msra.mxu0 0
        %2690 = vmatprep.subr.bf16.mxu0 0
        %2691 = vmatpush1.bf16.xpose.msra.mxu0 0
        %2692 = vmatprep.subr.bf16.mxu0 0
        %2693 = vmatpush1.bf16.xpose.msra.mxu0 0
        %2694 = vmatprep.subr.bf16.mxu0 0
        %2695 = vmatpush1.bf16.xpose.msra.mxu0 0
        %2696 = vmatprep.subr.bf16.mxu0 0
        %2697 = vmatpush1.bf16.xpose.msra.mxu0 0
        %2698 = vmatprep.subr.bf16.mxu0 0
        %2699 = vmatpush1.bf16.xpose.msra.mxu0 0
        %2700 = vmatprep.subr.bf16.mxu0 0
        %2701 = vmatpush1.bf16.xpose.msra.mxu0 0
        %2702 = vmatprep.subr.bf16.mxu0 0
        %2703 = vmatpush1.bf16.xpose.msra.mxu0 0
        %2704 = vmatprep.subr.bf16.mxu0 0
        %2705 = vmatpush1.bf16.xpose.msra.mxu0 0
        %2706 = vmatprep.mubr.bf16.mxu0 0
        %2707 = vmatmul.mubr.bf16.gmra.mrb[0].mxu0 %v2669
        %v2708 = vpop.f32.mrb[0].mxu0
        %v2709 = vadd.f32 %v1960, %v2708
        %v2710 = vpop.f32.mrb[0].mxu0
        %v2711 = vpop.f32.mrb[0].mxu0
        %v2712 = vadd.f32 %v1961, %v2711
        %v2713 = vpop.f32.mrb[0].mxu0
        %2714 = vdwg.mxu0
        %v2716 = vsel %vm1962, %v1560, 0
        %v2719 = vsel %vm1962, %v1752, 0
        %2721 = vmatprep.subr.bf16.mxu0 0
        %2722 = vmatpush1.bf16.xpose.msra.mxu0 %v2719
        %2723 = vmatprep.subr.bf16.mxu0 0
        %2724 = vmatpush1.bf16.xpose.msra.mxu0 0
        %2725 = vmatprep.subr.bf16.mxu0 0
        %2726 = vmatpush1.bf16.xpose.msra.mxu0 0
        %2727 = vmatprep.subr.bf16.mxu0 0
        %2728 = vmatpush1.bf16.xpose.msra.mxu0 0
        %2729 = vmatprep.subr.bf16.mxu0 0
        %2730 = vmatpush1.bf16.xpose.msra.mxu0 0
        %2731 = vmatprep.subr.bf16.mxu0 0
        %2732 = vmatpush1.bf16.xpose.msra.mxu0 0
        %2733 = vmatprep.subr.bf16.mxu0 0
        %2734 = vmatpush1.bf16.xpose.msra.mxu0 0
        %2735 = vmatprep.subr.bf16.mxu0 0
        %2736 = vmatpush1.bf16.xpose.msra.mxu0 0
        %2737 = vmatprep.subr.bf16.mxu0 0
        %2738 = vmatpush1.bf16.xpose.msra.mxu0 0
        %2739 = vmatprep.subr.bf16.mxu0 0
        %2740 = vmatpush1.bf16.xpose.msra.mxu0 0
        %2741 = vmatprep.subr.bf16.mxu0 0
        %2742 = vmatpush1.bf16.xpose.msra.mxu0 0
        %2743 = vmatprep.subr.bf16.mxu0 0
        %2744 = vmatpush1.bf16.xpose.msra.mxu0 0
        %2745 = vmatprep.subr.bf16.mxu0 0
        %2746 = vmatpush1.bf16.xpose.msra.mxu0 0
        %2747 = vmatprep.subr.bf16.mxu0 0
        %2748 = vmatpush1.bf16.xpose.msra.mxu0 0
        %2749 = vmatprep.subr.bf16.mxu0 0
        %2750 = vmatpush1.bf16.xpose.msra.mxu0 0
        %2751 = vmatprep.subr.bf16.mxu0 0
        %2752 = vmatpush1.bf16.xpose.msra.mxu0 0
        %2753 = vmatprep.mubr.bf16.mxu0 0
        %2754 = vmatmul.mubr.bf16.gmra.mrb[0].mxu0 %v2716
        %v2755 = vpop.f32.mrb[0].mxu0
        %v2756 = vadd.f32 %v1960, %v2755
        %v2757 = vpop.f32.mrb[0].mxu0
        %v2758 = vpop.f32.mrb[0].mxu0
        %v2759 = vadd.f32 %v1961, %v2758
        %v2760 = vpop.f32.mrb[0].mxu0
        %2761 = vdwg.mxu0
        %v2763 = vsel %vm1962, %v1561, 0
        %v2766 = vsel %vm1962, %v1753, 0
        %2768 = vmatprep.subr.bf16.mxu0 0
        %2769 = vmatpush1.bf16.xpose.msra.mxu0 %v2766
        %2770 = vmatprep.subr.bf16.mxu0 0
        %2771 = vmatpush1.bf16.xpose.msra.mxu0 0
        %2772 = vmatprep.subr.bf16.mxu0 0
        %2773 = vmatpush1.bf16.xpose.msra.mxu0 0
        %2774 = vmatprep.subr.bf16.mxu0 0
        %2775 = vmatpush1.bf16.xpose.msra.mxu0 0
        %2776 = vmatprep.subr.bf16.mxu0 0
        %2777 = vmatpush1.bf16.xpose.msra.mxu0 0
        %2778 = vmatprep.subr.bf16.mxu0 0
        %2779 = vmatpush1.bf16.xpose.msra.mxu0 0
        %2780 = vmatprep.subr.bf16.mxu0 0
        %2781 = vmatpush1.bf16.xpose.msra.mxu0 0
        %2782 = vmatprep.subr.bf16.mxu0 0
        %2783 = vmatpush1.bf16.xpose.msra.mxu0 0
        %2784 = vmatprep.subr.bf16.mxu0 0
        %2785 = vmatpush1.bf16.xpose.msra.mxu0 0
        %2786 = vmatprep.subr.bf16.mxu0 0
        %2787 = vmatpush1.bf16.xpose.msra.mxu0 0
        %2788 = vmatprep.subr.bf16.mxu0 0
        %2789 = vmatpush1.bf16.xpose.msra.mxu0 0
        %2790 = vmatprep.subr.bf16.mxu0 0
        %2791 = vmatpush1.bf16.xpose.msra.mxu0 0
        %2792 = vmatprep.subr.bf16.mxu0 0
        %2793 = vmatpush1.bf16.xpose.msra.mxu0 0
        %2794 = vmatprep.subr.bf16.mxu0 0
        %2795 = vmatpush1.bf16.xpose.msra.mxu0 0
        %2796 = vmatprep.subr.bf16.mxu0 0
        %2797 = vmatpush1.bf16.xpose.msra.mxu0 0
        %2798 = vmatprep.subr.bf16.mxu0 0
        %2799 = vmatpush1.bf16.xpose.msra.mxu0 0
        %2800 = vmatprep.mubr.bf16.mxu0 0
        %2801 = vmatmul.mubr.bf16.gmra.mrb[0].mxu0 %v2763
        %v2802 = vpop.f32.mrb[0].mxu0
        %v2803 = vadd.f32 %v1960, %v2802
        %v2804 = vpop.f32.mrb[0].mxu0
        %v2805 = vpop.f32.mrb[0].mxu0
        %v2806 = vadd.f32 %v1961, %v2805
        %v2807 = vpop.f32.mrb[0].mxu0
        %2808 = vdwg.mxu0
        %v2810 = vsel %vm1962, %v1562, 0
        %v2813 = vsel %vm1962, %v1754, 0
        %2815 = vmatprep.subr.bf16.mxu0 0
        %2816 = vmatpush1.bf16.xpose.msra.mxu0 %v2813
        %2817 = vmatprep.subr.bf16.mxu0 0
        %2818 = vmatpush1.bf16.xpose.msra.mxu0 0
        %2819 = vmatprep.subr.bf16.mxu0 0
        %2820 = vmatpush1.bf16.xpose.msra.mxu0 0
        %2821 = vmatprep.subr.bf16.mxu0 0
        %2822 = vmatpush1.bf16.xpose.msra.mxu0 0
        %2823 = vmatprep.subr.bf16.mxu0 0
        %2824 = vmatpush1.bf16.xpose.msra.mxu0 0
        %2825 = vmatprep.subr.bf16.mxu0 0
        %2826 = vmatpush1.bf16.xpose.msra.mxu0 0
        %2827 = vmatprep.subr.bf16.mxu0 0
        %2828 = vmatpush1.bf16.xpose.msra.mxu0 0
        %2829 = vmatprep.subr.bf16.mxu0 0
        %2830 = vmatpush1.bf16.xpose.msra.mxu0 0
        %2831 = vmatprep.subr.bf16.mxu0 0
        %2832 = vmatpush1.bf16.xpose.msra.mxu0 0
        %2833 = vmatprep.subr.bf16.mxu0 0
        %2834 = vmatpush1.bf16.xpose.msra.mxu0 0
        %2835 = vmatprep.subr.bf16.mxu0 0
        %2836 = vmatpush1.bf16.xpose.msra.mxu0 0
        %2837 = vmatprep.subr.bf16.mxu0 0
        %2838 = vmatpush1.bf16.xpose.msra.mxu0 0
        %2839 = vmatprep.subr.bf16.mxu0 0
        %2840 = vmatpush1.bf16.xpose.msra.mxu0 0
        %2841 = vmatprep.subr.bf16.mxu0 0
        %2842 = vmatpush1.bf16.xpose.msra.mxu0 0
        %2843 = vmatprep.subr.bf16.mxu0 0
        %2844 = vmatpush1.bf16.xpose.msra.mxu0 0
        %2845 = vmatprep.subr.bf16.mxu0 0
        %2846 = vmatpush1.bf16.xpose.msra.mxu0 0
        %2847 = vmatprep.mubr.bf16.mxu0 0
        %2848 = vmatmul.mubr.bf16.gmra.mrb[0].mxu0 %v2810
        %v2849 = vpop.f32.mrb[0].mxu0
        %v2850 = vadd.f32 %v1960, %v2849
        %v2851 = vpop.f32.mrb[0].mxu0
        %v2852 = vpop.f32.mrb[0].mxu0
        %v2853 = vadd.f32 %v1961, %v2852
        %v2854 = vpop.f32.mrb[0].mxu0
        %2855 = vdwg.mxu0
        %v2857 = vsel %vm1962, %v1563, 0
        %v2860 = vsel %vm1962, %v1755, 0
        %2862 = vmatprep.subr.bf16.mxu0 0
        %2863 = vmatpush1.bf16.xpose.msra.mxu0 %v2860
        %2864 = vmatprep.subr.bf16.mxu0 0
        %2865 = vmatpush1.bf16.xpose.msra.mxu0 0
        %2866 = vmatprep.subr.bf16.mxu0 0
        %2867 = vmatpush1.bf16.xpose.msra.mxu0 0
        %2868 = vmatprep.subr.bf16.mxu0 0
        %2869 = vmatpush1.bf16.xpose.msra.mxu0 0
        %2870 = vmatprep.subr.bf16.mxu0 0
        %2871 = vmatpush1.bf16.xpose.msra.mxu0 0
        %2872 = vmatprep.subr.bf16.mxu0 0
        %2873 = vmatpush1.bf16.xpose.msra.mxu0 0
        %2874 = vmatprep.subr.bf16.mxu0 0
        %2875 = vmatpush1.bf16.xpose.msra.mxu0 0
        %2876 = vmatprep.subr.bf16.mxu0 0
        %2877 = vmatpush1.bf16.xpose.msra.mxu0 0
        %2878 = vmatprep.subr.bf16.mxu0 0
        %2879 = vmatpush1.bf16.xpose.msra.mxu0 0
        %2880 = vmatprep.subr.bf16.mxu0 0
        %2881 = vmatpush1.bf16.xpose.msra.mxu0 0
        %2882 = vmatprep.subr.bf16.mxu0 0
        %2883 = vmatpush1.bf16.xpose.msra.mxu0 0
        %2884 = vmatprep.subr.bf16.mxu0 0
        %2885 = vmatpush1.bf16.xpose.msra.mxu0 0
        %2886 = vmatprep.subr.bf16.mxu0 0
        %2887 = vmatpush1.bf16.xpose.msra.mxu0 0
        %2888 = vmatprep.subr.bf16.mxu0 0
        %2889 = vmatpush1.bf16.xpose.msra.mxu0 0
        %2890 = vmatprep.subr.bf16.mxu0 0
        %2891 = vmatpush1.bf16.xpose.msra.mxu0 0
        %2892 = vmatprep.subr.bf16.mxu0 0
        %2893 = vmatpush1.bf16.xpose.msra.mxu0 0
        %2894 = vmatprep.mubr.bf16.mxu0 0
        %2895 = vmatmul.mubr.bf16.gmra.mrb[0].mxu0 %v2857
        %v2896 = vpop.f32.mrb[0].mxu0
        %v2897 = vadd.f32 %v1960, %v2896
        %v2898 = vpop.f32.mrb[0].mxu0
        %v2899 = vpop.f32.mrb[0].mxu0
        %v2900 = vadd.f32 %v1961, %v2899
        %v2901 = vpop.f32.mrb[0].mxu0
        %2902 = vdwg.mxu0
        %v2904 = vsel %vm1962, %v1564, 0
        %v2907 = vsel %vm1962, %v1756, 0
        %2909 = vmatprep.subr.bf16.mxu0 0
        %2910 = vmatpush1.bf16.xpose.msra.mxu0 %v2907
        %2911 = vmatprep.subr.bf16.mxu0 0
        %2912 = vmatpush1.bf16.xpose.msra.mxu0 0
        %2913 = vmatprep.subr.bf16.mxu0 0
        %2914 = vmatpush1.bf16.xpose.msra.mxu0 0
        %2915 = vmatprep.subr.bf16.mxu0 0
        %2916 = vmatpush1.bf16.xpose.msra.mxu0 0
        %2917 = vmatprep.subr.bf16.mxu0 0
        %2918 = vmatpush1.bf16.xpose.msra.mxu0 0
        %2919 = vmatprep.subr.bf16.mxu0 0
        %2920 = vmatpush1.bf16.xpose.msra.mxu0 0
        %2921 = vmatprep.subr.bf16.mxu0 0
        %2922 = vmatpush1.bf16.xpose.msra.mxu0 0
        %2923 = vmatprep.subr.bf16.mxu0 0
        %2924 = vmatpush1.bf16.xpose.msra.mxu0 0
        %2925 = vmatprep.subr.bf16.mxu0 0
        %2926 = vmatpush1.bf16.xpose.msra.mxu0 0
        %2927 = vmatprep.subr.bf16.mxu0 0
        %2928 = vmatpush1.bf16.xpose.msra.mxu0 0
        %2929 = vmatprep.subr.bf16.mxu0 0
        %2930 = vmatpush1.bf16.xpose.msra.mxu0 0
        %2931 = vmatprep.subr.bf16.mxu0 0
        %2932 = vmatpush1.bf16.xpose.msra.mxu0 0
        %2933 = vmatprep.subr.bf16.mxu0 0
        %2934 = vmatpush1.bf16.xpose.msra.mxu0 0
        %2935 = vmatprep.subr.bf16.mxu0 0
        %2936 = vmatpush1.bf16.xpose.msra.mxu0 0
        %2937 = vmatprep.subr.bf16.mxu0 0
        %2938 = vmatpush1.bf16.xpose.msra.mxu0 0
        %2939 = vmatprep.subr.bf16.mxu0 0
        %2940 = vmatpush1.bf16.xpose.msra.mxu0 0
        %2941 = vmatprep.mubr.bf16.mxu0 0
        %2942 = vmatmul.mubr.bf16.gmra.mrb[0].mxu0 %v2904
        %v2943 = vpop.f32.mrb[0].mxu0
        %v2944 = vadd.f32 %v1960, %v2943
        %v2945 = vpop.f32.mrb[0].mxu0
        %v2946 = vpop.f32.mrb[0].mxu0
        %v2947 = vadd.f32 %v1961, %v2946
        %v2948 = vpop.f32.mrb[0].mxu0
        %2949 = vdwg.mxu0
        %v2951 = vsel %vm1962, %v1565, 0
        %v2954 = vsel %vm1962, %v1757, 0
        %2956 = vmatprep.subr.bf16.mxu0 0
        %2957 = vmatpush1.bf16.xpose.msra.mxu0 %v2954
        %2958 = vmatprep.subr.bf16.mxu0 0
        %2959 = vmatpush1.bf16.xpose.msra.mxu0 0
        %2960 = vmatprep.subr.bf16.mxu0 0
        %2961 = vmatpush1.bf16.xpose.msra.mxu0 0
        %2962 = vmatprep.subr.bf16.mxu0 0
        %2963 = vmatpush1.bf16.xpose.msra.mxu0 0
        %2964 = vmatprep.subr.bf16.mxu0 0
        %2965 = vmatpush1.bf16.xpose.msra.mxu0 0
        %2966 = vmatprep.subr.bf16.mxu0 0
        %2967 = vmatpush1.bf16.xpose.msra.mxu0 0
        %2968 = vmatprep.subr.bf16.mxu0 0
        %2969 = vmatpush1.bf16.xpose.msra.mxu0 0
        %2970 = vmatprep.subr.bf16.mxu0 0
        %2971 = vmatpush1.bf16.xpose.msra.mxu0 0
        %2972 = vmatprep.subr.bf16.mxu0 0
        %2973 = vmatpush1.bf16.xpose.msra.mxu0 0
        %2974 = vmatprep.subr.bf16.mxu0 0
        %2975 = vmatpush1.bf16.xpose.msra.mxu0 0
        %2976 = vmatprep.subr.bf16.mxu0 0
        %2977 = vmatpush1.bf16.xpose.msra.mxu0 0
        %2978 = vmatprep.subr.bf16.mxu0 0
        %2979 = vmatpush1.bf16.xpose.msra.mxu0 0
        %2980 = vmatprep.subr.bf16.mxu0 0
        %2981 = vmatpush1.bf16.xpose.msra.mxu0 0
        %2982 = vmatprep.subr.bf16.mxu0 0
        %2983 = vmatpush1.bf16.xpose.msra.mxu0 0
        %2984 = vmatprep.subr.bf16.mxu0 0
        %2985 = vmatpush1.bf16.xpose.msra.mxu0 0
        %2986 = vmatprep.subr.bf16.mxu0 0
        %2987 = vmatpush1.bf16.xpose.msra.mxu0 0
        %2988 = vmatprep.mubr.bf16.mxu0 0
        %2989 = vmatmul.mubr.bf16.gmra.mrb[0].mxu0 %v2951
        %v2990 = vpop.f32.mrb[0].mxu0
        %v2991 = vadd.f32 %v1960, %v2990
        %v2992 = vpop.f32.mrb[0].mxu0
        %v2993 = vpop.f32.mrb[0].mxu0
        %v2994 = vadd.f32 %v1961, %v2993
        %v2995 = vpop.f32.mrb[0].mxu0
        %2996 = vdwg.mxu0
        %v2998 = vsel %vm1962, %v1566, 0
        %v3001 = vsel %vm1962, %v1758, 0
        %3003 = vmatprep.subr.bf16.mxu0 0
        %3004 = vmatpush1.bf16.xpose.msra.mxu0 %v3001
        %3005 = vmatprep.subr.bf16.mxu0 0
        %3006 = vmatpush1.bf16.xpose.msra.mxu0 0
        %3007 = vmatprep.subr.bf16.mxu0 0
        %3008 = vmatpush1.bf16.xpose.msra.mxu0 0
        %3009 = vmatprep.subr.bf16.mxu0 0
        %3010 = vmatpush1.bf16.xpose.msra.mxu0 0
        %3011 = vmatprep.subr.bf16.mxu0 0
        %3012 = vmatpush1.bf16.xpose.msra.mxu0 0
        %3013 = vmatprep.subr.bf16.mxu0 0
        %3014 = vmatpush1.bf16.xpose.msra.mxu0 0
        %3015 = vmatprep.subr.bf16.mxu0 0
        %3016 = vmatpush1.bf16.xpose.msra.mxu0 0
        %3017 = vmatprep.subr.bf16.mxu0 0
        %3018 = vmatpush1.bf16.xpose.msra.mxu0 0
        %3019 = vmatprep.subr.bf16.mxu0 0
        %3020 = vmatpush1.bf16.xpose.msra.mxu0 0
        %3021 = vmatprep.subr.bf16.mxu0 0
        %3022 = vmatpush1.bf16.xpose.msra.mxu0 0
        %3023 = vmatprep.subr.bf16.mxu0 0
        %3024 = vmatpush1.bf16.xpose.msra.mxu0 0
        %3025 = vmatprep.subr.bf16.mxu0 0
        %3026 = vmatpush1.bf16.xpose.msra.mxu0 0
        %3027 = vmatprep.subr.bf16.mxu0 0
        %3028 = vmatpush1.bf16.xpose.msra.mxu0 0
        %3029 = vmatprep.subr.bf16.mxu0 0
        %3030 = vmatpush1.bf16.xpose.msra.mxu0 0
        %3031 = vmatprep.subr.bf16.mxu0 0
        %3032 = vmatpush1.bf16.xpose.msra.mxu0 0
        %3033 = vmatprep.subr.bf16.mxu0 0
        %3034 = vmatpush1.bf16.xpose.msra.mxu0 0
        %3035 = vmatprep.mubr.bf16.mxu0 0
        %3036 = vmatmul.mubr.bf16.gmra.mrb[0].mxu0 %v2998
        %v3037 = vpop.f32.mrb[0].mxu0
        %v3038 = vadd.f32 %v1960, %v3037
        %v3039 = vpop.f32.mrb[0].mxu0
        %v3040 = vpop.f32.mrb[0].mxu0
        %v3041 = vadd.f32 %v1961, %v3040
        %v3042 = vpop.f32.mrb[0].mxu0
        %3043 = vdwg.mxu0
        %v3045 = vsel %vm1962, %v1567, 0
        %v3048 = vsel %vm1962, %v1759, 0
        %3050 = vmatprep.subr.bf16.mxu0 0
        %3051 = vmatpush1.bf16.xpose.msra.mxu0 %v3048
        %3052 = vmatprep.subr.bf16.mxu0 0
        %3053 = vmatpush1.bf16.xpose.msra.mxu0 0
        %3054 = vmatprep.subr.bf16.mxu0 0
        %3055 = vmatpush1.bf16.xpose.msra.mxu0 0
        %3056 = vmatprep.subr.bf16.mxu0 0
        %3057 = vmatpush1.bf16.xpose.msra.mxu0 0
        %3058 = vmatprep.subr.bf16.mxu0 0
        %3059 = vmatpush1.bf16.xpose.msra.mxu0 0
        %3060 = vmatprep.subr.bf16.mxu0 0
        %3061 = vmatpush1.bf16.xpose.msra.mxu0 0
        %3062 = vmatprep.subr.bf16.mxu0 0
        %3063 = vmatpush1.bf16.xpose.msra.mxu0 0
        %3064 = vmatprep.subr.bf16.mxu0 0
        %3065 = vmatpush1.bf16.xpose.msra.mxu0 0
        %3066 = vmatprep.subr.bf16.mxu0 0
        %3067 = vmatpush1.bf16.xpose.msra.mxu0 0
        %3068 = vmatprep.subr.bf16.mxu0 0
        %3069 = vmatpush1.bf16.xpose.msra.mxu0 0
        %3070 = vmatprep.subr.bf16.mxu0 0
        %3071 = vmatpush1.bf16.xpose.msra.mxu0 0
        %3072 = vmatprep.subr.bf16.mxu0 0
        %3073 = vmatpush1.bf16.xpose.msra.mxu0 0
        %3074 = vmatprep.subr.bf16.mxu0 0
        %3075 = vmatpush1.bf16.xpose.msra.mxu0 0
        %3076 = vmatprep.subr.bf16.mxu0 0
        %3077 = vmatpush1.bf16.xpose.msra.mxu0 0
        %3078 = vmatprep.subr.bf16.mxu0 0
        %3079 = vmatpush1.bf16.xpose.msra.mxu0 0
        %3080 = vmatprep.subr.bf16.mxu0 0
        %3081 = vmatpush1.bf16.xpose.msra.mxu0 0
        %3082 = vmatprep.mubr.bf16.mxu0 0
        %3083 = vmatmul.mubr.bf16.gmra.mrb[0].mxu0 %v3045
        %v3084 = vpop.f32.mrb[0].mxu0
        %v3085 = vadd.f32 %v1960, %v3084
        %v3086 = vpop.f32.mrb[0].mxu0
        %v3087 = vpop.f32.mrb[0].mxu0
        %v3088 = vadd.f32 %v1961, %v3087
        %v3089 = vpop.f32.mrb[0].mxu0
        %3090 = vdwg.mxu0
        %v3092 = vsel %vm1962, %v1568, 0
        %v3095 = vsel %vm1962, %v1760, 0
        %3097 = vmatprep.subr.bf16.mxu0 0
        %3098 = vmatpush1.bf16.xpose.msra.mxu0 %v3095
        %3099 = vmatprep.subr.bf16.mxu0 0
        %3100 = vmatpush1.bf16.xpose.msra.mxu0 0
        %3101 = vmatprep.subr.bf16.mxu0 0
        %3102 = vmatpush1.bf16.xpose.msra.mxu0 0
        %3103 = vmatprep.subr.bf16.mxu0 0
        %3104 = vmatpush1.bf16.xpose.msra.mxu0 0
        %3105 = vmatprep.subr.bf16.mxu0 0
        %3106 = vmatpush1.bf16.xpose.msra.mxu0 0
        %3107 = vmatprep.subr.bf16.mxu0 0
        %3108 = vmatpush1.bf16.xpose.msra.mxu0 0
        %3109 = vmatprep.subr.bf16.mxu0 0
        %3110 = vmatpush1.bf16.xpose.msra.mxu0 0
        %3111 = vmatprep.subr.bf16.mxu0 0
        %3112 = vmatpush1.bf16.xpose.msra.mxu0 0
        %3113 = vmatprep.subr.bf16.mxu0 0
        %3114 = vmatpush1.bf16.xpose.msra.mxu0 0
        %3115 = vmatprep.subr.bf16.mxu0 0
        %3116 = vmatpush1.bf16.xpose.msra.mxu0 0
        %3117 = vmatprep.subr.bf16.mxu0 0
        %3118 = vmatpush1.bf16.xpose.msra.mxu0 0
        %3119 = vmatprep.subr.bf16.mxu0 0
        %3120 = vmatpush1.bf16.xpose.msra.mxu0 0
        %3121 = vmatprep.subr.bf16.mxu0 0
        %3122 = vmatpush1.bf16.xpose.msra.mxu0 0
        %3123 = vmatprep.subr.bf16.mxu0 0
        %3124 = vmatpush1.bf16.xpose.msra.mxu0 0
        %3125 = vmatprep.subr.bf16.mxu0 0
        %3126 = vmatpush1.bf16.xpose.msra.mxu0 0
        %3127 = vmatprep.subr.bf16.mxu0 0
        %3128 = vmatpush1.bf16.xpose.msra.mxu0 0
        %3129 = vmatprep.mubr.bf16.mxu0 0
        %3130 = vmatmul.mubr.bf16.gmra.mrb[0].mxu0 %v3092
        %v3131 = vpop.f32.mrb[0].mxu0
        %v3132 = vadd.f32 %v1960, %v3131
        %v3133 = vpop.f32.mrb[0].mxu0
        %v3134 = vpop.f32.mrb[0].mxu0
        %v3135 = vadd.f32 %v1961, %v3134
        %v3136 = vpop.f32.mrb[0].mxu0
        %3137 = vdwg.mxu0
        %v3139 = vsel %vm1962, %v1569, 0
        %v3142 = vsel %vm1962, %v1761, 0
        %3144 = vmatprep.subr.bf16.mxu0 0
        %3145 = vmatpush1.bf16.xpose.msra.mxu0 %v3142
        %3146 = vmatprep.subr.bf16.mxu0 0
        %3147 = vmatpush1.bf16.xpose.msra.mxu0 0
        %3148 = vmatprep.subr.bf16.mxu0 0
        %3149 = vmatpush1.bf16.xpose.msra.mxu0 0
        %3150 = vmatprep.subr.bf16.mxu0 0
        %3151 = vmatpush1.bf16.xpose.msra.mxu0 0
        %3152 = vmatprep.subr.bf16.mxu0 0
        %3153 = vmatpush1.bf16.xpose.msra.mxu0 0
        %3154 = vmatprep.subr.bf16.mxu0 0
        %3155 = vmatpush1.bf16.xpose.msra.mxu0 0
        %3156 = vmatprep.subr.bf16.mxu0 0
        %3157 = vmatpush1.bf16.xpose.msra.mxu0 0
        %3158 = vmatprep.subr.bf16.mxu0 0
        %3159 = vmatpush1.bf16.xpose.msra.mxu0 0
        %3160 = vmatprep.subr.bf16.mxu0 0
        %3161 = vmatpush1.bf16.xpose.msra.mxu0 0
        %3162 = vmatprep.subr.bf16.mxu0 0
        %3163 = vmatpush1.bf16.xpose.msra.mxu0 0
        %3164 = vmatprep.subr.bf16.mxu0 0
        %3165 = vmatpush1.bf16.xpose.msra.mxu0 0
        %3166 = vmatprep.subr.bf16.mxu0 0
        %3167 = vmatpush1.bf16.xpose.msra.mxu0 0
        %3168 = vmatprep.subr.bf16.mxu0 0
        %3169 = vmatpush1.bf16.xpose.msra.mxu0 0
        %3170 = vmatprep.subr.bf16.mxu0 0
        %3171 = vmatpush1.bf16.xpose.msra.mxu0 0
        %3172 = vmatprep.subr.bf16.mxu0 0
        %3173 = vmatpush1.bf16.xpose.msra.mxu0 0
        %3174 = vmatprep.subr.bf16.mxu0 0
        %3175 = vmatpush1.bf16.xpose.msra.mxu0 0
        %3176 = vmatprep.mubr.bf16.mxu0 0
        %3177 = vmatmul.mubr.bf16.gmra.mrb[0].mxu0 %v3139
        %v3178 = vpop.f32.mrb[0].mxu0
        %v3179 = vadd.f32 %v1960, %v3178
        %v3180 = vpop.f32.mrb[0].mxu0
        %v3181 = vpop.f32.mrb[0].mxu0
        %v3182 = vadd.f32 %v1961, %v3181
        %v3183 = vpop.f32.mrb[0].mxu0
        %3184 = vdwg.mxu0
        %v3186 = vsel %vm1962, %v1570, 0
        %v3189 = vsel %vm1962, %v1762, 0
        %3191 = vmatprep.subr.bf16.mxu0 0
        %3192 = vmatpush1.bf16.xpose.msra.mxu0 %v3189
        %3193 = vmatprep.subr.bf16.mxu0 0
        %3194 = vmatpush1.bf16.xpose.msra.mxu0 0
        %3195 = vmatprep.subr.bf16.mxu0 0
        %3196 = vmatpush1.bf16.xpose.msra.mxu0 0
        %3197 = vmatprep.subr.bf16.mxu0 0
        %3198 = vmatpush1.bf16.xpose.msra.mxu0 0
        %3199 = vmatprep.subr.bf16.mxu0 0
        %3200 = vmatpush1.bf16.xpose.msra.mxu0 0
        %3201 = vmatprep.subr.bf16.mxu0 0
        %3202 = vmatpush1.bf16.xpose.msra.mxu0 0
        %3203 = vmatprep.subr.bf16.mxu0 0
        %3204 = vmatpush1.bf16.xpose.msra.mxu0 0
        %3205 = vmatprep.subr.bf16.mxu0 0
        %3206 = vmatpush1.bf16.xpose.msra.mxu0 0
        %3207 = vmatprep.subr.bf16.mxu0 0
        %3208 = vmatpush1.bf16.xpose.msra.mxu0 0
        %3209 = vmatprep.subr.bf16.mxu0 0
        %3210 = vmatpush1.bf16.xpose.msra.mxu0 0
        %3211 = vmatprep.subr.bf16.mxu0 0
        %3212 = vmatpush1.bf16.xpose.msra.mxu0 0
        %3213 = vmatprep.subr.bf16.mxu0 0
        %3214 = vmatpush1.bf16.xpose.msra.mxu0 0
        %3215 = vmatprep.subr.bf16.mxu0 0
        %3216 = vmatpush1.bf16.xpose.msra.mxu0 0
        %3217 = vmatprep.subr.bf16.mxu0 0
        %3218 = vmatpush1.bf16.xpose.msra.mxu0 0
        %3219 = vmatprep.subr.bf16.mxu0 0
        %3220 = vmatpush1.bf16.xpose.msra.mxu0 0
        %3221 = vmatprep.subr.bf16.mxu0 0
        %3222 = vmatpush1.bf16.xpose.msra.mxu0 0
        %3223 = vmatprep.mubr.bf16.mxu0 0
        %3224 = vmatmul.mubr.bf16.gmra.mrb[0].mxu0 %v3186
        %v3225 = vpop.f32.mrb[0].mxu0
        %v3226 = vadd.f32 %v1960, %v3225
        %v3227 = vpop.f32.mrb[0].mxu0
        %v3228 = vpop.f32.mrb[0].mxu0
        %v3229 = vadd.f32 %v1961, %v3228
        %v3230 = vpop.f32.mrb[0].mxu0
        %3231 = vdwg.mxu0
        %v3233 = vsel %vm1962, %v1571, 0
        %v3236 = vsel %vm1962, %v1763, 0
        %3238 = vmatprep.subr.bf16.mxu0 0
        %3239 = vmatpush1.bf16.xpose.msra.mxu0 %v3236
        %3240 = vmatprep.subr.bf16.mxu0 0
        %3241 = vmatpush1.bf16.xpose.msra.mxu0 0
        %3242 = vmatprep.subr.bf16.mxu0 0
        %3243 = vmatpush1.bf16.xpose.msra.mxu0 0
        %3244 = vmatprep.subr.bf16.mxu0 0
        %3245 = vmatpush1.bf16.xpose.msra.mxu0 0
        %3246 = vmatprep.subr.bf16.mxu0 0
        %3247 = vmatpush1.bf16.xpose.msra.mxu0 0
        %3248 = vmatprep.subr.bf16.mxu0 0
        %3249 = vmatpush1.bf16.xpose.msra.mxu0 0
        %3250 = vmatprep.subr.bf16.mxu0 0
        %3251 = vmatpush1.bf16.xpose.msra.mxu0 0
        %3252 = vmatprep.subr.bf16.mxu0 0
        %3253 = vmatpush1.bf16.xpose.msra.mxu0 0
        %3254 = vmatprep.subr.bf16.mxu0 0
        %3255 = vmatpush1.bf16.xpose.msra.mxu0 0
        %3256 = vmatprep.subr.bf16.mxu0 0
        %3257 = vmatpush1.bf16.xpose.msra.mxu0 0
        %3258 = vmatprep.subr.bf16.mxu0 0
        %3259 = vmatpush1.bf16.xpose.msra.mxu0 0
        %3260 = vmatprep.subr.bf16.mxu0 0
        %3261 = vmatpush1.bf16.xpose.msra.mxu0 0
        %3262 = vmatprep.subr.bf16.mxu0 0
        %3263 = vmatpush1.bf16.xpose.msra.mxu0 0
        %3264 = vmatprep.subr.bf16.mxu0 0
        %3265 = vmatpush1.bf16.xpose.msra.mxu0 0
        %3266 = vmatprep.subr.bf16.mxu0 0
        %3267 = vmatpush1.bf16.xpose.msra.mxu0 0
        %3268 = vmatprep.subr.bf16.mxu0 0
        %3269 = vmatpush1.bf16.xpose.msra.mxu0 0
        %3270 = vmatprep.mubr.bf16.mxu0 0
        %3271 = vmatmul.mubr.bf16.gmra.mrb[0].mxu0 %v3233
        %v3272 = vpop.f32.mrb[0].mxu0
        %v3273 = vadd.f32 %v1960, %v3272
        %v3274 = vpop.f32.mrb[0].mxu0
        %v3275 = vpop.f32.mrb[0].mxu0
        %v3276 = vadd.f32 %v1961, %v3275
        %v3277 = vpop.f32.mrb[0].mxu0
        %3278 = vdwg.mxu0
        %v3280 = vsel %vm1962, %v1572, 0
        %v3283 = vsel %vm1962, %v1764, 0
        %3285 = vmatprep.subr.bf16.mxu0 0
        %3286 = vmatpush1.bf16.xpose.msra.mxu0 %v3283
        %3287 = vmatprep.subr.bf16.mxu0 0
        %3288 = vmatpush1.bf16.xpose.msra.mxu0 0
        %3289 = vmatprep.subr.bf16.mxu0 0
        %3290 = vmatpush1.bf16.xpose.msra.mxu0 0
        %3291 = vmatprep.subr.bf16.mxu0 0
        %3292 = vmatpush1.bf16.xpose.msra.mxu0 0
        %3293 = vmatprep.subr.bf16.mxu0 0
        %3294 = vmatpush1.bf16.xpose.msra.mxu0 0
        %3295 = vmatprep.subr.bf16.mxu0 0
        %3296 = vmatpush1.bf16.xpose.msra.mxu0 0
        %3297 = vmatprep.subr.bf16.mxu0 0
        %3298 = vmatpush1.bf16.xpose.msra.mxu0 0
        %3299 = vmatprep.subr.bf16.mxu0 0
        %3300 = vmatpush1.bf16.xpose.msra.mxu0 0
        %3301 = vmatprep.subr.bf16.mxu0 0
        %3302 = vmatpush1.bf16.xpose.msra.mxu0 0
        %3303 = vmatprep.subr.bf16.mxu0 0
        %3304 = vmatpush1.bf16.xpose.msra.mxu0 0
        %3305 = vmatprep.subr.bf16.mxu0 0
        %3306 = vmatpush1.bf16.xpose.msra.mxu0 0
        %3307 = vmatprep.subr.bf16.mxu0 0
        %3308 = vmatpush1.bf16.xpose.msra.mxu0 0
        %3309 = vmatprep.subr.bf16.mxu0 0
        %3310 = vmatpush1.bf16.xpose.msra.mxu0 0
        %3311 = vmatprep.subr.bf16.mxu0 0
        %3312 = vmatpush1.bf16.xpose.msra.mxu0 0
        %3313 = vmatprep.subr.bf16.mxu0 0
        %3314 = vmatpush1.bf16.xpose.msra.mxu0 0
        %3315 = vmatprep.subr.bf16.mxu0 0
        %3316 = vmatpush1.bf16.xpose.msra.mxu0 0
        %3317 = vmatprep.mubr.bf16.mxu0 0
        %3318 = vmatmul.mubr.bf16.gmra.mrb[0].mxu0 %v3280
        %v3319 = vpop.f32.mrb[0].mxu0
        %v3320 = vadd.f32 %v1960, %v3319
        %v3321 = vpop.f32.mrb[0].mxu0
        %v3322 = vpop.f32.mrb[0].mxu0
        %v3323 = vadd.f32 %v1961, %v3322
        %v3324 = vpop.f32.mrb[0].mxu0
        %3325 = vdwg.mxu0
        %v3327 = vsel %vm1962, %v1573, 0
        %v3330 = vsel %vm1962, %v1765, 0
        %3332 = vmatprep.subr.bf16.mxu0 0
        %3333 = vmatpush1.bf16.xpose.msra.mxu0 %v3330
        %3334 = vmatprep.subr.bf16.mxu0 0
        %3335 = vmatpush1.bf16.xpose.msra.mxu0 0
        %3336 = vmatprep.subr.bf16.mxu0 0
        %3337 = vmatpush1.bf16.xpose.msra.mxu0 0
        %3338 = vmatprep.subr.bf16.mxu0 0
        %3339 = vmatpush1.bf16.xpose.msra.mxu0 0
        %3340 = vmatprep.subr.bf16.mxu0 0
        %3341 = vmatpush1.bf16.xpose.msra.mxu0 0
        %3342 = vmatprep.subr.bf16.mxu0 0
        %3343 = vmatpush1.bf16.xpose.msra.mxu0 0
        %3344 = vmatprep.subr.bf16.mxu0 0
        %3345 = vmatpush1.bf16.xpose.msra.mxu0 0
        %3346 = vmatprep.subr.bf16.mxu0 0
        %3347 = vmatpush1.bf16.xpose.msra.mxu0 0
        %3348 = vmatprep.subr.bf16.mxu0 0
        %3349 = vmatpush1.bf16.xpose.msra.mxu0 0
        %3350 = vmatprep.subr.bf16.mxu0 0
        %3351 = vmatpush1.bf16.xpose.msra.mxu0 0
        %3352 = vmatprep.subr.bf16.mxu0 0
        %3353 = vmatpush1.bf16.xpose.msra.mxu0 0
        %3354 = vmatprep.subr.bf16.mxu0 0
        %3355 = vmatpush1.bf16.xpose.msra.mxu0 0
        %3356 = vmatprep.subr.bf16.mxu0 0
        %3357 = vmatpush1.bf16.xpose.msra.mxu0 0
        %3358 = vmatprep.subr.bf16.mxu0 0
        %3359 = vmatpush1.bf16.xpose.msra.mxu0 0
        %3360 = vmatprep.subr.bf16.mxu0 0
        %3361 = vmatpush1.bf16.xpose.msra.mxu0 0
        %3362 = vmatprep.subr.bf16.mxu0 0
        %3363 = vmatpush1.bf16.xpose.msra.mxu0 0
        %3364 = vmatprep.mubr.bf16.mxu0 0
        %3365 = vmatmul.mubr.bf16.gmra.mrb[0].mxu0 %v3327
        %v3366 = vpop.f32.mrb[0].mxu0
        %v3367 = vadd.f32 %v1960, %v3366
        %v3368 = vpop.f32.mrb[0].mxu0
        %v3369 = vpop.f32.mrb[0].mxu0
        %v3370 = vadd.f32 %v1961, %v3369
        %v3371 = vpop.f32.mrb[0].mxu0
        %3372 = vdwg.mxu0
        %v3374 = vsel %vm1962, %v1574, 0
        %v3377 = vsel %vm1962, %v1766, 0
        %3379 = vmatprep.subr.bf16.mxu0 0
        %3380 = vmatpush1.bf16.xpose.msra.mxu0 %v3377
        %3381 = vmatprep.subr.bf16.mxu0 0
        %3382 = vmatpush1.bf16.xpose.msra.mxu0 0
        %3383 = vmatprep.subr.bf16.mxu0 0
        %3384 = vmatpush1.bf16.xpose.msra.mxu0 0
        %3385 = vmatprep.subr.bf16.mxu0 0
        %3386 = vmatpush1.bf16.xpose.msra.mxu0 0
        %3387 = vmatprep.subr.bf16.mxu0 0
        %3388 = vmatpush1.bf16.xpose.msra.mxu0 0
        %3389 = vmatprep.subr.bf16.mxu0 0
        %3390 = vmatpush1.bf16.xpose.msra.mxu0 0
        %3391 = vmatprep.subr.bf16.mxu0 0
        %3392 = vmatpush1.bf16.xpose.msra.mxu0 0
        %3393 = vmatprep.subr.bf16.mxu0 0
        %3394 = vmatpush1.bf16.xpose.msra.mxu0 0
        %3395 = vmatprep.subr.bf16.mxu0 0
        %3396 = vmatpush1.bf16.xpose.msra.mxu0 0
        %3397 = vmatprep.subr.bf16.mxu0 0
        %3398 = vmatpush1.bf16.xpose.msra.mxu0 0
        %3399 = vmatprep.subr.bf16.mxu0 0
        %3400 = vmatpush1.bf16.xpose.msra.mxu0 0
        %3401 = vmatprep.subr.bf16.mxu0 0
        %3402 = vmatpush1.bf16.xpose.msra.mxu0 0
        %3403 = vmatprep.subr.bf16.mxu0 0
        %3404 = vmatpush1.bf16.xpose.msra.mxu0 0
        %3405 = vmatprep.subr.bf16.mxu0 0
        %3406 = vmatpush1.bf16.xpose.msra.mxu0 0
        %3407 = vmatprep.subr.bf16.mxu0 0
        %3408 = vmatpush1.bf16.xpose.msra.mxu0 0
        %3409 = vmatprep.subr.bf16.mxu0 0
        %3410 = vmatpush1.bf16.xpose.msra.mxu0 0
        %3411 = vmatprep.mubr.bf16.mxu0 0
        %3412 = vmatmul.mubr.bf16.gmra.mrb[0].mxu0 %v3374
        %v3413 = vpop.f32.mrb[0].mxu0
        %v3414 = vadd.f32 %v1960, %v3413
        %v3415 = vpop.f32.mrb[0].mxu0
        %v3416 = vpop.f32.mrb[0].mxu0
        %v3417 = vadd.f32 %v1961, %v3416
        %v3418 = vpop.f32.mrb[0].mxu0
        %3419 = vdwg.mxu0
        %v3421 = vsel %vm1962, %v1575, 0
        %v3424 = vsel %vm1962, %v1767, 0
        %3426 = vmatprep.subr.bf16.mxu0 0
        %3427 = vmatpush1.bf16.xpose.msra.mxu0 %v3424
        %3428 = vmatprep.subr.bf16.mxu0 0
        %3429 = vmatpush1.bf16.xpose.msra.mxu0 0
        %3430 = vmatprep.subr.bf16.mxu0 0
        %3431 = vmatpush1.bf16.xpose.msra.mxu0 0
        %3432 = vmatprep.subr.bf16.mxu0 0
        %3433 = vmatpush1.bf16.xpose.msra.mxu0 0
        %3434 = vmatprep.subr.bf16.mxu0 0
        %3435 = vmatpush1.bf16.xpose.msra.mxu0 0
        %3436 = vmatprep.subr.bf16.mxu0 0
        %3437 = vmatpush1.bf16.xpose.msra.mxu0 0
        %3438 = vmatprep.subr.bf16.mxu0 0
        %3439 = vmatpush1.bf16.xpose.msra.mxu0 0
        %3440 = vmatprep.subr.bf16.mxu0 0
        %3441 = vmatpush1.bf16.xpose.msra.mxu0 0
        %3442 = vmatprep.subr.bf16.mxu0 0
        %3443 = vmatpush1.bf16.xpose.msra.mxu0 0
        %3444 = vmatprep.subr.bf16.mxu0 0
        %3445 = vmatpush1.bf16.xpose.msra.mxu0 0
        %3446 = vmatprep.subr.bf16.mxu0 0
        %3447 = vmatpush1.bf16.xpose.msra.mxu0 0
        %3448 = vmatprep.subr.bf16.mxu0 0
        %3449 = vmatpush1.bf16.xpose.msra.mxu0 0
        %3450 = vmatprep.subr.bf16.mxu0 0
        %3451 = vmatpush1.bf16.xpose.msra.mxu0 0
        %3452 = vmatprep.subr.bf16.mxu0 0
        %3453 = vmatpush1.bf16.xpose.msra.mxu0 0
        %3454 = vmatprep.subr.bf16.mxu0 0
        %3455 = vmatpush1.bf16.xpose.msra.mxu0 0
        %3456 = vmatprep.subr.bf16.mxu0 0
        %3457 = vmatpush1.bf16.xpose.msra.mxu0 0
        %3458 = vmatprep.mubr.bf16.mxu0 0
        %3459 = vmatmul.mubr.bf16.gmra.mrb[0].mxu0 %v3421
        %v3460 = vpop.f32.mrb[0].mxu0
        %v3461 = vadd.f32 %v1960, %v3460
        %v3462 = vpop.f32.mrb[0].mxu0
        %v3463 = vpop.f32.mrb[0].mxu0
        %v3464 = vadd.f32 %v1961, %v3463
        %v3465 = vpop.f32.mrb[0].mxu0
        %3466 = vdwg.mxu0
        %vm3467 = vcmask 130048
        %v3468 = vsel %vm3467, %v2004, -inf
        %3469 = vmax.xlane.f32.xlu0 %v3468
        %v3470 = vpop.xlane.xlu0 %3469
        %v3471 = vsel %vm3467, %v2007, -inf
        %3472 = vmax.xlane.f32.xlu0 %v3471
        %v3473 = vpop.xlane.xlu0 %3472
        %v3474 = vsel %vm3467, %v2051, -inf
        %3475 = vmax.xlane.f32.xlu0 %v3474
        %v3476 = vpop.xlane.xlu0 %3475
        %v3477 = vsel %vm3467, %v2054, -inf
        %3478 = vmax.xlane.f32.xlu0 %v3477
        %v3479 = vpop.xlane.xlu0 %3478
        %v3480 = vsel %vm3467, %v2098, -inf
        %3481 = vmax.xlane.f32.xlu0 %v3480
        %v3482 = vpop.xlane.xlu0 %3481
        %v3483 = vsel %vm3467, %v2101, -inf
        %3484 = vmax.xlane.f32.xlu0 %v3483
        %v3485 = vpop.xlane.xlu0 %3484
        %v3486 = vsel %vm3467, %v2145, -inf
        %3487 = vmax.xlane.f32.xlu0 %v3486
        %v3488 = vpop.xlane.xlu0 %3487
        %v3489 = vsel %vm3467, %v2148, -inf
        %3490 = vmax.xlane.f32.xlu0 %v3489
        %v3491 = vpop.xlane.xlu0 %3490
        %v3492 = vsel %vm3467, %v2192, -inf
        %3493 = vmax.xlane.f32.xlu0 %v3492
        %v3494 = vpop.xlane.xlu0 %3493
        %v3495 = vsel %vm3467, %v2195, -inf
        %3496 = vmax.xlane.f32.xlu0 %v3495
        %v3497 = vpop.xlane.xlu0 %3496
        %v3498 = vsel %vm3467, %v2239, -inf
        %3499 = vmax.xlane.f32.xlu0 %v3498
        %v3500 = vpop.xlane.xlu0 %3499
        %v3501 = vsel %vm3467, %v2242, -inf
        %3502 = vmax.xlane.f32.xlu0 %v3501
        %v3503 = vpop.xlane.xlu0 %3502
        %v3504 = vsel %vm3467, %v2286, -inf
        %3505 = vmax.xlane.f32.xlu0 %v3504
        %v3506 = vpop.xlane.xlu0 %3505
        %v3507 = vsel %vm3467, %v2289, -inf
        %3508 = vmax.xlane.f32.xlu0 %v3507
        %v3509 = vpop.xlane.xlu0 %3508
        %v3510 = vsel %vm3467, %v2333, -inf
        %3511 = vmax.xlane.f32.xlu0 %v3510
        %v3512 = vpop.xlane.xlu0 %3511
        %v3513 = vsel %vm3467, %v2336, -inf
        %3514 = vmax.xlane.f32.xlu0 %v3513
        %v3515 = vpop.xlane.xlu0 %3514
        %v3516 = vsel %vm3467, %v2380, -inf
        %3517 = vmax.xlane.f32.xlu0 %v3516
        %v3518 = vpop.xlane.xlu0 %3517
        %v3519 = vsel %vm3467, %v2383, -inf
        %3520 = vmax.xlane.f32.xlu0 %v3519
        %v3521 = vpop.xlane.xlu0 %3520
        %v3522 = vsel %vm3467, %v2427, -inf
        %3523 = vmax.xlane.f32.xlu0 %v3522
        %v3524 = vpop.xlane.xlu0 %3523
        %v3525 = vsel %vm3467, %v2430, -inf
        %3526 = vmax.xlane.f32.xlu0 %v3525
        %v3527 = vpop.xlane.xlu0 %3526
        %v3528 = vsel %vm3467, %v2474, -inf
        %3529 = vmax.xlane.f32.xlu0 %v3528
        %v3530 = vpop.xlane.xlu0 %3529
        %v3531 = vsel %vm3467, %v2477, -inf
        %3532 = vmax.xlane.f32.xlu0 %v3531
        %v3533 = vpop.xlane.xlu0 %3532
        %v3534 = vsel %vm3467, %v2521, -inf
        %3535 = vmax.xlane.f32.xlu0 %v3534
        %v3536 = vpop.xlane.xlu0 %3535
        %v3537 = vsel %vm3467, %v2524, -inf
        %3538 = vmax.xlane.f32.xlu0 %v3537
        %v3539 = vpop.xlane.xlu0 %3538
        %v3540 = vsel %vm3467, %v2568, -inf
        %3541 = vmax.xlane.f32.xlu0 %v3540
        %v3542 = vpop.xlane.xlu0 %3541
        %v3543 = vsel %vm3467, %v2571, -inf
        %3544 = vmax.xlane.f32.xlu0 %v3543
        %v3545 = vpop.xlane.xlu0 %3544
        %v3546 = vsel %vm3467, %v2615, -inf
        %3547 = vmax.xlane.f32.xlu0 %v3546
        %v3548 = vpop.xlane.xlu0 %3547
        %v3549 = vsel %vm3467, %v2618, -inf
        %3550 = vmax.xlane.f32.xlu0 %v3549
        %v3551 = vpop.xlane.xlu0 %3550
        %v3552 = vsel %vm3467, %v2662, -inf
        %3553 = vmax.xlane.f32.xlu0 %v3552
        %v3554 = vpop.xlane.xlu0 %3553
        %v3555 = vsel %vm3467, %v2665, -inf
        %3556 = vmax.xlane.f32.xlu0 %v3555
        %v3557 = vpop.xlane.xlu0 %3556
        %v3558 = vsel %vm3467, %v2709, -inf
        %3559 = vmax.xlane.f32.xlu0 %v3558
        %v3560 = vpop.xlane.xlu0 %3559
        %v3561 = vsel %vm3467, %v2712, -inf
        %3562 = vmax.xlane.f32.xlu0 %v3561
        %v3563 = vpop.xlane.xlu0 %3562
        %v3564 = vsel %vm3467, %v2756, -inf
        %3565 = vmax.xlane.f32.xlu0 %v3564
        %v3566 = vpop.xlane.xlu0 %3565
        %v3567 = vsel %vm3467, %v2759, -inf
        %3568 = vmax.xlane.f32.xlu0 %v3567
        %v3569 = vpop.xlane.xlu0 %3568
        %v3570 = vsel %vm3467, %v2803, -inf
        %3571 = vmax.xlane.f32.xlu0 %v3570
        %v3572 = vpop.xlane.xlu0 %3571
        %v3573 = vsel %vm3467, %v2806, -inf
        %3574 = vmax.xlane.f32.xlu0 %v3573
        %v3575 = vpop.xlane.xlu0 %3574
        %v3576 = vsel %vm3467, %v2850, -inf
        %3577 = vmax.xlane.f32.xlu0 %v3576
        %v3578 = vpop.xlane.xlu0 %3577
        %v3579 = vsel %vm3467, %v2853, -inf
        %3580 = vmax.xlane.f32.xlu0 %v3579
        %v3581 = vpop.xlane.xlu0 %3580
        %v3582 = vsel %vm3467, %v2897, -inf
        %3583 = vmax.xlane.f32.xlu0 %v3582
        %v3584 = vpop.xlane.xlu0 %3583
        %v3585 = vsel %vm3467, %v2900, -inf
        %3586 = vmax.xlane.f32.xlu0 %v3585
        %v3587 = vpop.xlane.xlu0 %3586
        %v3588 = vsel %vm3467, %v2944, -inf
        %3589 = vmax.xlane.f32.xlu0 %v3588
        %v3590 = vpop.xlane.xlu0 %3589
        %v3591 = vsel %vm3467, %v2947, -inf
        %3592 = vmax.xlane.f32.xlu0 %v3591
        %v3593 = vpop.xlane.xlu0 %3592
        %v3594 = vsel %vm3467, %v2991, -inf
        %3595 = vmax.xlane.f32.xlu0 %v3594
        %v3596 = vpop.xlane.xlu0 %3595
        %v3597 = vsel %vm3467, %v2994, -inf
        %3598 = vmax.xlane.f32.xlu0 %v3597
        %v3599 = vpop.xlane.xlu0 %3598
        %v3600 = vsel %vm3467, %v3038, -inf
        %3601 = vmax.xlane.f32.xlu0 %v3600
        %v3602 = vpop.xlane.xlu0 %3601
        %v3603 = vsel %vm3467, %v3041, -inf
        %3604 = vmax.xlane.f32.xlu0 %v3603
        %v3605 = vpop.xlane.xlu0 %3604
        %v3606 = vsel %vm3467, %v3085, -inf
        %3607 = vmax.xlane.f32.xlu0 %v3606
        %v3608 = vpop.xlane.xlu0 %3607
        %v3609 = vsel %vm3467, %v3088, -inf
        %3610 = vmax.xlane.f32.xlu0 %v3609
        %v3611 = vpop.xlane.xlu0 %3610
        %v3612 = vsel %vm3467, %v3132, -inf
        %3613 = vmax.xlane.f32.xlu0 %v3612
        %v3614 = vpop.xlane.xlu0 %3613
        %v3615 = vsel %vm3467, %v3135, -inf
        %3616 = vmax.xlane.f32.xlu0 %v3615
        %v3617 = vpop.xlane.xlu0 %3616
        %v3618 = vsel %vm3467, %v3179, -inf
        %3619 = vmax.xlane.f32.xlu0 %v3618
        %v3620 = vpop.xlane.xlu0 %3619
        %v3621 = vsel %vm3467, %v3182, -inf
        %3622 = vmax.xlane.f32.xlu0 %v3621
        %v3623 = vpop.xlane.xlu0 %3622
        %v3624 = vsel %vm3467, %v3226, -inf
        %3625 = vmax.xlane.f32.xlu0 %v3624
        %v3626 = vpop.xlane.xlu0 %3625
        %v3627 = vsel %vm3467, %v3229, -inf
        %3628 = vmax.xlane.f32.xlu0 %v3627
        %v3629 = vpop.xlane.xlu0 %3628
        %v3630 = vsel %vm3467, %v3273, -inf
        %3631 = vmax.xlane.f32.xlu0 %v3630
        %v3632 = vpop.xlane.xlu0 %3631
        %v3633 = vsel %vm3467, %v3276, -inf
        %3634 = vmax.xlane.f32.xlu0 %v3633
        %v3635 = vpop.xlane.xlu0 %3634
        %v3636 = vsel %vm3467, %v3320, -inf
        %3637 = vmax.xlane.f32.xlu0 %v3636
        %v3638 = vpop.xlane.xlu0 %3637
        %v3639 = vsel %vm3467, %v3323, -inf
        %3640 = vmax.xlane.f32.xlu0 %v3639
        %v3641 = vpop.xlane.xlu0 %3640
        %v3642 = vsel %vm3467, %v3367, -inf
        %3643 = vmax.xlane.f32.xlu0 %v3642
        %v3644 = vpop.xlane.xlu0 %3643
        %v3645 = vsel %vm3467, %v3370, -inf
        %3646 = vmax.xlane.f32.xlu0 %v3645
        %v3647 = vpop.xlane.xlu0 %3646
        %v3648 = vsel %vm3467, %v3414, -inf
        %3649 = vmax.xlane.f32.xlu0 %v3648
        %v3650 = vpop.xlane.xlu0 %3649
        %v3651 = vsel %vm3467, %v3417, -inf
        %3652 = vmax.xlane.f32.xlu0 %v3651
        %v3653 = vpop.xlane.xlu0 %3652
        %v3654 = vsel %vm3467, %v3461, -inf
        %3655 = vmax.xlane.f32.xlu0 %v3654
        %v3656 = vpop.xlane.xlu0 %3655
        %v3657 = vsel %vm3467, %v3464, -inf
        %3658 = vmax.xlane.f32.xlu0 %v3657
        %v3659 = vpop.xlane.xlu0 %3658
        %v3660 = vsub.f32 %v2004, %v3470
        %v3661 = vsub.f32 %v2007, %v3473
        %v3662 = vsub.f32 %v2051, %v3476
        %v3663 = vsub.f32 %v2054, %v3479
        %v3664 = vsub.f32 %v2098, %v3482
        %v3665 = vsub.f32 %v2101, %v3485
        %v3666 = vsub.f32 %v2145, %v3488
        %v3667 = vsub.f32 %v2148, %v3491
        %v3668 = vsub.f32 %v2192, %v3494
        %v3669 = vsub.f32 %v2195, %v3497
        %v3670 = vsub.f32 %v2239, %v3500
        %v3671 = vsub.f32 %v2242, %v3503
        %v3672 = vsub.f32 %v2286, %v3506
        %v3673 = vsub.f32 %v2289, %v3509
        %v3674 = vsub.f32 %v2333, %v3512
        %v3675 = vsub.f32 %v2336, %v3515
        %v3676 = vsub.f32 %v2380, %v3518
        %v3677 = vsub.f32 %v2383, %v3521
        %v3678 = vsub.f32 %v2427, %v3524
        %v3679 = vsub.f32 %v2430, %v3527
        %v3680 = vsub.f32 %v2474, %v3530
        %v3681 = vsub.f32 %v2477, %v3533
        %v3682 = vsub.f32 %v2521, %v3536
        %v3683 = vsub.f32 %v2524, %v3539
        %v3684 = vsub.f32 %v2568, %v3542
        %v3685 = vsub.f32 %v2571, %v3545
        %v3686 = vsub.f32 %v2615, %v3548
        %v3687 = vsub.f32 %v2618, %v3551
        %v3688 = vsub.f32 %v2662, %v3554
        %v3689 = vsub.f32 %v2665, %v3557
        %v3690 = vsub.f32 %v2709, %v3560
        %v3691 = vsub.f32 %v2712, %v3563
        %v3692 = vsub.f32 %v2756, %v3566
        %v3693 = vsub.f32 %v2759, %v3569
        %v3694 = vsub.f32 %v2803, %v3572
        %v3695 = vsub.f32 %v2806, %v3575
        %v3696 = vsub.f32 %v2850, %v3578
        %v3697 = vsub.f32 %v2853, %v3581
        %v3698 = vsub.f32 %v2897, %v3584
        %v3699 = vsub.f32 %v2900, %v3587
        %v3700 = vsub.f32 %v2944, %v3590
        %v3701 = vsub.f32 %v2947, %v3593
        %v3702 = vsub.f32 %v2991, %v3596
        %v3703 = vsub.f32 %v2994, %v3599
        %v3704 = vsub.f32 %v3038, %v3602
        %v3705 = vsub.f32 %v3041, %v3605
        %v3706 = vsub.f32 %v3085, %v3608
        %v3707 = vsub.f32 %v3088, %v3611
        %v3708 = vsub.f32 %v3132, %v3614
        %v3709 = vsub.f32 %v3135, %v3617
        %v3710 = vsub.f32 %v3179, %v3620
        %v3711 = vsub.f32 %v3182, %v3623
        %v3712 = vsub.f32 %v3226, %v3626
        %v3713 = vsub.f32 %v3229, %v3629
        %v3714 = vsub.f32 %v3273, %v3632
        %v3715 = vsub.f32 %v3276, %v3635
        %v3716 = vsub.f32 %v3320, %v3638
        %v3717 = vsub.f32 %v3323, %v3641
        %v3718 = vsub.f32 %v3367, %v3644
        %v3719 = vsub.f32 %v3370, %v3647
        %v3720 = vsub.f32 %v3414, %v3650
        %v3721 = vsub.f32 %v3417, %v3653
        %v3722 = vsub.f32 %v3461, %v3656
        %v3723 = vsub.f32 %v3464, %v3659
        %v3724 = vmul.f32 %v3660, 1.442695
        %v3725 = vpow.pop %v3724
        %v3726 = vmul.f32 %v3661, 1.442695
        %v3727 = vpow.pop %v3726
        %v3728 = vmul.f32 %v3662, 1.442695
        %v3729 = vpow.pop %v3728
        %v3730 = vmul.f32 %v3663, 1.442695
        %v3731 = vpow.pop %v3730
        %v3732 = vmul.f32 %v3664, 1.442695
        %v3733 = vpow.pop %v3732
        %v3734 = vmul.f32 %v3665, 1.442695
        %v3735 = vpow.pop %v3734
        %v3736 = vmul.f32 %v3666, 1.442695
        %v3737 = vpow.pop %v3736
        %v3738 = vmul.f32 %v3667, 1.442695
        %v3739 = vpow.pop %v3738
        %v3740 = vmul.f32 %v3668, 1.442695
        %v3741 = vpow.pop %v3740
        %v3742 = vmul.f32 %v3669, 1.442695
        %v3743 = vpow.pop %v3742
        %v3744 = vmul.f32 %v3670, 1.442695
        %v3745 = vpow.pop %v3744
        %v3746 = vmul.f32 %v3671, 1.442695
        %v3747 = vpow.pop %v3746
        %v3748 = vmul.f32 %v3672, 1.442695
        %v3749 = vpow.pop %v3748
        %v3750 = vmul.f32 %v3673, 1.442695
        %v3751 = vpow.pop %v3750
        %v3752 = vmul.f32 %v3674, 1.442695
        %v3753 = vpow.pop %v3752
        %v3754 = vmul.f32 %v3675, 1.442695
        %v3755 = vpow.pop %v3754
        %v3756 = vmul.f32 %v3676, 1.442695
        %v3757 = vpow.pop %v3756
        %v3758 = vmul.f32 %v3677, 1.442695
        %v3759 = vpow.pop %v3758
        %v3760 = vmul.f32 %v3678, 1.442695
        %v3761 = vpow.pop %v3760
        %v3762 = vmul.f32 %v3679, 1.442695
        %v3763 = vpow.pop %v3762
        %v3764 = vmul.f32 %v3680, 1.442695
        %v3765 = vpow.pop %v3764
        %v3766 = vmul.f32 %v3681, 1.442695
        %v3767 = vpow.pop %v3766
        %v3768 = vmul.f32 %v3682, 1.442695
        %v3769 = vpow.pop %v3768
        %v3770 = vmul.f32 %v3683, 1.442695
        %v3771 = vpow.pop %v3770
        %v3772 = vmul.f32 %v3684, 1.442695
        %v3773 = vpow.pop %v3772
        %v3774 = vmul.f32 %v3685, 1.442695
        %v3775 = vpow.pop %v3774
        %v3776 = vmul.f32 %v3686, 1.442695
        %v3777 = vpow.pop %v3776
        %v3778 = vmul.f32 %v3687, 1.442695
        %v3779 = vpow.pop %v3778
        %v3780 = vmul.f32 %v3688, 1.442695
        %v3781 = vpow.pop %v3780
        %v3782 = vmul.f32 %v3689, 1.442695
        %v3783 = vpow.pop %v3782
        %v3784 = vmul.f32 %v3690, 1.442695
        %v3785 = vpow.pop %v3784
        %v3786 = vmul.f32 %v3691, 1.442695
        %v3787 = vpow.pop %v3786
        %v3788 = vmul.f32 %v3692, 1.442695
        %v3789 = vpow.pop %v3788
        %v3790 = vmul.f32 %v3693, 1.442695
        %v3791 = vpow.pop %v3790
        %v3792 = vmul.f32 %v3694, 1.442695
        %v3793 = vpow.pop %v3792
        %v3794 = vmul.f32 %v3695, 1.442695
        %v3795 = vpow.pop %v3794
        %v3796 = vmul.f32 %v3696, 1.442695
        %v3797 = vpow.pop %v3796
        %v3798 = vmul.f32 %v3697, 1.442695
        %v3799 = vpow.pop %v3798
        %v3800 = vmul.f32 %v3698, 1.442695
        %v3801 = vpow.pop %v3800
        %v3802 = vmul.f32 %v3699, 1.442695
        %v3803 = vpow.pop %v3802
        %v3804 = vmul.f32 %v3700, 1.442695
        %v3805 = vpow.pop %v3804
        %v3806 = vmul.f32 %v3701, 1.442695
        %v3807 = vpow.pop %v3806
        %v3808 = vmul.f32 %v3702, 1.442695
        %v3809 = vpow.pop %v3808
        %v3810 = vmul.f32 %v3703, 1.442695
        %v3811 = vpow.pop %v3810
        %v3812 = vmul.f32 %v3704, 1.442695
        %v3813 = vpow.pop %v3812
        %v3814 = vmul.f32 %v3705, 1.442695
        %v3815 = vpow.pop %v3814
        %v3816 = vmul.f32 %v3706, 1.442695
        %v3817 = vpow.pop %v3816
        %v3818 = vmul.f32 %v3707, 1.442695
        %v3819 = vpow.pop %v3818
        %v3820 = vmul.f32 %v3708, 1.442695
        %v3821 = vpow.pop %v3820
        %v3822 = vmul.f32 %v3709, 1.442695
        %v3823 = vpow.pop %v3822
        %v3824 = vmul.f32 %v3710, 1.442695
        %v3825 = vpow.pop %v3824
        %v3826 = vmul.f32 %v3711, 1.442695
        %v3827 = vpow.pop %v3826
        %v3828 = vmul.f32 %v3712, 1.442695
        %v3829 = vpow.pop %v3828
        %v3830 = vmul.f32 %v3713, 1.442695
        %v3831 = vpow.pop %v3830
        %v3832 = vmul.f32 %v3714, 1.442695
        %v3833 = vpow.pop %v3832
        %v3834 = vmul.f32 %v3715, 1.442695
        %v3835 = vpow.pop %v3834
        %v3836 = vmul.f32 %v3716, 1.442695
        %v3837 = vpow.pop %v3836
        %v3838 = vmul.f32 %v3717, 1.442695
        %v3839 = vpow.pop %v3838
        %v3840 = vmul.f32 %v3718, 1.442695
        %v3841 = vpow.pop %v3840
        %v3842 = vmul.f32 %v3719, 1.442695
        %v3843 = vpow.pop %v3842
        %v3844 = vmul.f32 %v3720, 1.442695
        %v3845 = vpow.pop %v3844
        %v3846 = vmul.f32 %v3721, 1.442695
        %v3847 = vpow.pop %v3846
        %v3848 = vmul.f32 %v3722, 1.442695
        %v3849 = vpow.pop %v3848
        %v3850 = vmul.f32 %v3723, 1.442695
        %v3851 = vpow.pop %v3850
        %v3852 = vsel %vm3467, %v3725, 0.0
        %3853 = vadd.xlane.f32.xlu0 %v3852
        %v3854 = vpop.xlane.xlu0 %3853
        %v3855 = vsel %vm3467, %v3727, 0.0
        %3856 = vadd.xlane.f32.xlu0 %v3855
        %v3857 = vpop.xlane.xlu0 %3856
        %v3858 = vsel %vm3467, %v3729, 0.0
        %3859 = vadd.xlane.f32.xlu0 %v3858
        %v3860 = vpop.xlane.xlu0 %3859
        %v3861 = vsel %vm3467, %v3731, 0.0
        %3862 = vadd.xlane.f32.xlu0 %v3861
        %v3863 = vpop.xlane.xlu0 %3862
        %v3864 = vsel %vm3467, %v3733, 0.0
        %3865 = vadd.xlane.f32.xlu0 %v3864
        %v3866 = vpop.xlane.xlu0 %3865
        %v3867 = vsel %vm3467, %v3735, 0.0
        %3868 = vadd.xlane.f32.xlu0 %v3867
        %v3869 = vpop.xlane.xlu0 %3868
        %v3870 = vsel %vm3467, %v3737, 0.0
        %3871 = vadd.xlane.f32.xlu0 %v3870
        %v3872 = vpop.xlane.xlu0 %3871
        %v3873 = vsel %vm3467, %v3739, 0.0
        %3874 = vadd.xlane.f32.xlu0 %v3873
        %v3875 = vpop.xlane.xlu0 %3874
        %v3876 = vsel %vm3467, %v3741, 0.0
        %3877 = vadd.xlane.f32.xlu0 %v3876
        %v3878 = vpop.xlane.xlu0 %3877
        %v3879 = vsel %vm3467, %v3743, 0.0
        %3880 = vadd.xlane.f32.xlu0 %v3879
        %v3881 = vpop.xlane.xlu0 %3880
        %v3882 = vsel %vm3467, %v3745, 0.0
        %3883 = vadd.xlane.f32.xlu0 %v3882
        %v3884 = vpop.xlane.xlu0 %3883
        %v3885 = vsel %vm3467, %v3747, 0.0
        %3886 = vadd.xlane.f32.xlu0 %v3885
        %v3887 = vpop.xlane.xlu0 %3886
        %v3888 = vsel %vm3467, %v3749, 0.0
        %3889 = vadd.xlane.f32.xlu0 %v3888
        %v3890 = vpop.xlane.xlu0 %3889
        %v3891 = vsel %vm3467, %v3751, 0.0
        %3892 = vadd.xlane.f32.xlu0 %v3891
        %v3893 = vpop.xlane.xlu0 %3892
        %v3894 = vsel %vm3467, %v3753, 0.0
        %3895 = vadd.xlane.f32.xlu0 %v3894
        %v3896 = vpop.xlane.xlu0 %3895
        %v3897 = vsel %vm3467, %v3755, 0.0
        %3898 = vadd.xlane.f32.xlu0 %v3897
        %v3899 = vpop.xlane.xlu0 %3898
        %v3900 = vsel %vm3467, %v3757, 0.0
        %3901 = vadd.xlane.f32.xlu0 %v3900
        %v3902 = vpop.xlane.xlu0 %3901
        %v3903 = vsel %vm3467, %v3759, 0.0
        %3904 = vadd.xlane.f32.xlu0 %v3903
        %v3905 = vpop.xlane.xlu0 %3904
        %v3906 = vsel %vm3467, %v3761, 0.0
        %3907 = vadd.xlane.f32.xlu0 %v3906
        %v3908 = vpop.xlane.xlu0 %3907
        %v3909 = vsel %vm3467, %v3763, 0.0
        %3910 = vadd.xlane.f32.xlu0 %v3909
        %v3911 = vpop.xlane.xlu0 %3910
        %v3912 = vsel %vm3467, %v3765, 0.0
        %3913 = vadd.xlane.f32.xlu0 %v3912
        %v3914 = vpop.xlane.xlu0 %3913
        %v3915 = vsel %vm3467, %v3767, 0.0
        %3916 = vadd.xlane.f32.xlu0 %v3915
        %v3917 = vpop.xlane.xlu0 %3916
        %v3918 = vsel %vm3467, %v3769, 0.0
        %3919 = vadd.xlane.f32.xlu0 %v3918
        %v3920 = vpop.xlane.xlu0 %3919
        %v3921 = vsel %vm3467, %v3771, 0.0
        %3922 = vadd.xlane.f32.xlu0 %v3921
        %v3923 = vpop.xlane.xlu0 %3922
        %v3924 = vsel %vm3467, %v3773, 0.0
        %3925 = vadd.xlane.f32.xlu0 %v3924
        %v3926 = vpop.xlane.xlu0 %3925
        %v3927 = vsel %vm3467, %v3775, 0.0
        %3928 = vadd.xlane.f32.xlu0 %v3927
        %v3929 = vpop.xlane.xlu0 %3928
        %v3930 = vsel %vm3467, %v3777, 0.0
        %3931 = vadd.xlane.f32.xlu0 %v3930
        %v3932 = vpop.xlane.xlu0 %3931
        %v3933 = vsel %vm3467, %v3779, 0.0
        %3934 = vadd.xlane.f32.xlu0 %v3933
        %v3935 = vpop.xlane.xlu0 %3934
        %v3936 = vsel %vm3467, %v3781, 0.0
        %3937 = vadd.xlane.f32.xlu0 %v3936
        %v3938 = vpop.xlane.xlu0 %3937
        %v3939 = vsel %vm3467, %v3783, 0.0
        %3940 = vadd.xlane.f32.xlu0 %v3939
        %v3941 = vpop.xlane.xlu0 %3940
        %v3942 = vsel %vm3467, %v3785, 0.0
        %3943 = vadd.xlane.f32.xlu0 %v3942
        %v3944 = vpop.xlane.xlu0 %3943
        %v3945 = vsel %vm3467, %v3787, 0.0
        %3946 = vadd.xlane.f32.xlu0 %v3945
        %v3947 = vpop.xlane.xlu0 %3946
        %v3948 = vsel %vm3467, %v3789, 0.0
        %3949 = vadd.xlane.f32.xlu0 %v3948
        %v3950 = vpop.xlane.xlu0 %3949
        %v3951 = vsel %vm3467, %v3791, 0.0
        %3952 = vadd.xlane.f32.xlu0 %v3951
        %v3953 = vpop.xlane.xlu0 %3952
        %v3954 = vsel %vm3467, %v3793, 0.0
        %3955 = vadd.xlane.f32.xlu0 %v3954
        %v3956 = vpop.xlane.xlu0 %3955
        %v3957 = vsel %vm3467, %v3795, 0.0
        %3958 = vadd.xlane.f32.xlu0 %v3957
        %v3959 = vpop.xlane.xlu0 %3958
        %v3960 = vsel %vm3467, %v3797, 0.0
        %3961 = vadd.xlane.f32.xlu0 %v3960
        %v3962 = vpop.xlane.xlu0 %3961
        %v3963 = vsel %vm3467, %v3799, 0.0
        %3964 = vadd.xlane.f32.xlu0 %v3963
        %v3965 = vpop.xlane.xlu0 %3964
        %v3966 = vsel %vm3467, %v3801, 0.0
        %3967 = vadd.xlane.f32.xlu0 %v3966
        %v3968 = vpop.xlane.xlu0 %3967
        %v3969 = vsel %vm3467, %v3803, 0.0
        %3970 = vadd.xlane.f32.xlu0 %v3969
        %v3971 = vpop.xlane.xlu0 %3970
        %v3972 = vsel %vm3467, %v3805, 0.0
        %3973 = vadd.xlane.f32.xlu0 %v3972
        %v3974 = vpop.xlane.xlu0 %3973
        %v3975 = vsel %vm3467, %v3807, 0.0
        %3976 = vadd.xlane.f32.xlu0 %v3975
        %v3977 = vpop.xlane.xlu0 %3976
        %v3978 = vsel %vm3467, %v3809, 0.0
        %3979 = vadd.xlane.f32.xlu0 %v3978
        %v3980 = vpop.xlane.xlu0 %3979
        %v3981 = vsel %vm3467, %v3811, 0.0
        %3982 = vadd.xlane.f32.xlu0 %v3981
        %v3983 = vpop.xlane.xlu0 %3982
        %v3984 = vsel %vm3467, %v3813, 0.0
        %3985 = vadd.xlane.f32.xlu0 %v3984
        %v3986 = vpop.xlane.xlu0 %3985
        %v3987 = vsel %vm3467, %v3815, 0.0
        %3988 = vadd.xlane.f32.xlu0 %v3987
        %v3989 = vpop.xlane.xlu0 %3988
        %v3990 = vsel %vm3467, %v3817, 0.0
        %3991 = vadd.xlane.f32.xlu0 %v3990
        %v3992 = vpop.xlane.xlu0 %3991
        %v3993 = vsel %vm3467, %v3819, 0.0
        %3994 = vadd.xlane.f32.xlu0 %v3993
        %v3995 = vpop.xlane.xlu0 %3994
        %v3996 = vsel %vm3467, %v3821, 0.0
        %3997 = vadd.xlane.f32.xlu0 %v3996
        %v3998 = vpop.xlane.xlu0 %3997
        %v3999 = vsel %vm3467, %v3823, 0.0
        %4000 = vadd.xlane.f32.xlu0 %v3999
        %v4001 = vpop.xlane.xlu0 %4000
        %v4002 = vsel %vm3467, %v3825, 0.0
        %4003 = vadd.xlane.f32.xlu0 %v4002
        %v4004 = vpop.xlane.xlu0 %4003
        %v4005 = vsel %vm3467, %v3827, 0.0
        %4006 = vadd.xlane.f32.xlu0 %v4005
        %v4007 = vpop.xlane.xlu0 %4006
        %v4008 = vsel %vm3467, %v3829, 0.0
        %4009 = vadd.xlane.f32.xlu0 %v4008
        %v4010 = vpop.xlane.xlu0 %4009
        %v4011 = vsel %vm3467, %v3831, 0.0
        %4012 = vadd.xlane.f32.xlu0 %v4011
        %v4013 = vpop.xlane.xlu0 %4012
        %v4014 = vsel %vm3467, %v3833, 0.0
        %4015 = vadd.xlane.f32.xlu0 %v4014
        %v4016 = vpop.xlane.xlu0 %4015
        %v4017 = vsel %vm3467, %v3835, 0.0
        %4018 = vadd.xlane.f32.xlu0 %v4017
        %v4019 = vpop.xlane.xlu0 %4018
        %v4020 = vsel %vm3467, %v3837, 0.0
        %4021 = vadd.xlane.f32.xlu0 %v4020
        %v4022 = vpop.xlane.xlu0 %4021
        %v4023 = vsel %vm3467, %v3839, 0.0
        %4024 = vadd.xlane.f32.xlu0 %v4023
        %v4025 = vpop.xlane.xlu0 %4024
        %v4026 = vsel %vm3467, %v3841, 0.0
        %4027 = vadd.xlane.f32.xlu0 %v4026
        %v4028 = vpop.xlane.xlu0 %4027
        %v4029 = vsel %vm3467, %v3843, 0.0
        %4030 = vadd.xlane.f32.xlu0 %v4029
        %v4031 = vpop.xlane.xlu0 %4030
        %v4032 = vsel %vm3467, %v3845, 0.0
        %4033 = vadd.xlane.f32.xlu0 %v4032
        %v4034 = vpop.xlane.xlu0 %4033
        %v4035 = vsel %vm3467, %v3847, 0.0
        %4036 = vadd.xlane.f32.xlu0 %v4035
        %v4037 = vpop.xlane.xlu0 %4036
        %v4038 = vsel %vm3467, %v3849, 0.0
        %4039 = vadd.xlane.f32.xlu0 %v4038
        %v4040 = vpop.xlane.xlu0 %4039
        %v4041 = vsel %vm3467, %v3851, 0.0
        %4042 = vadd.xlane.f32.xlu0 %v4041
        %v4043 = vpop.xlane.xlu0 %4042
        %v4044 = vrcp.pop %v3854
        %v4045 = vrcp.pop %v3857
        %v4046 = vrcp.pop %v3860
        %v4047 = vrcp.pop %v3863
        %v4048 = vrcp.pop %v3866
        %v4049 = vrcp.pop %v3869
        %v4050 = vrcp.pop %v3872
        %v4051 = vrcp.pop %v3875
        %v4052 = vrcp.pop %v3878
        %v4053 = vrcp.pop %v3881
        %v4054 = vrcp.pop %v3884
        %v4055 = vrcp.pop %v3887
        %v4056 = vrcp.pop %v3890
        %v4057 = vrcp.pop %v3893
        %v4058 = vrcp.pop %v3896
        %v4059 = vrcp.pop %v3899
        %v4060 = vrcp.pop %v3902
        %v4061 = vrcp.pop %v3905
        %v4062 = vrcp.pop %v3908
        %v4063 = vrcp.pop %v3911
        %v4064 = vrcp.pop %v3914
        %v4065 = vrcp.pop %v3917
        %v4066 = vrcp.pop %v3920
        %v4067 = vrcp.pop %v3923
        %v4068 = vrcp.pop %v3926
        %v4069 = vrcp.pop %v3929
        %v4070 = vrcp.pop %v3932
        %v4071 = vrcp.pop %v3935
        %v4072 = vrcp.pop %v3938
        %v4073 = vrcp.pop %v3941
        %v4074 = vrcp.pop %v3944
        %v4075 = vrcp.pop %v3947
        %v4076 = vrcp.pop %v3950
        %v4077 = vrcp.pop %v3953
        %v4078 = vrcp.pop %v3956
        %v4079 = vrcp.pop %v3959
        %v4080 = vrcp.pop %v3962
        %v4081 = vrcp.pop %v3965
        %v4082 = vrcp.pop %v3968
        %v4083 = vrcp.pop %v3971
        %v4084 = vrcp.pop %v3974
        %v4085 = vrcp.pop %v3977
        %v4086 = vrcp.pop %v3980
        %v4087 = vrcp.pop %v3983
        %v4088 = vrcp.pop %v3986
        %v4089 = vrcp.pop %v3989
        %v4090 = vrcp.pop %v3992
        %v4091 = vrcp.pop %v3995
        %v4092 = vrcp.pop %v3998
        %v4093 = vrcp.pop %v4001
        %v4094 = vrcp.pop %v4004
        %v4095 = vrcp.pop %v4007
        %v4096 = vrcp.pop %v4010
        %v4097 = vrcp.pop %v4013
        %v4098 = vrcp.pop %v4016
        %v4099 = vrcp.pop %v4019
        %v4100 = vrcp.pop %v4022
        %v4101 = vrcp.pop %v4025
        %v4102 = vrcp.pop %v4028
        %v4103 = vrcp.pop %v4031
        %v4104 = vrcp.pop %v4034
        %v4105 = vrcp.pop %v4037
        %v4106 = vrcp.pop %v4040
        %v4107 = vrcp.pop %v4043
        %v4108 = vmul.f32 %v3725, %v4044
        %v4109 = vmul.f32 %v3727, %v4045
        %v4110 = vmul.f32 %v3729, %v4046
        %v4111 = vmul.f32 %v3731, %v4047
        %v4112 = vmul.f32 %v3733, %v4048
        %v4113 = vmul.f32 %v3735, %v4049
        %v4114 = vmul.f32 %v3737, %v4050
        %v4115 = vmul.f32 %v3739, %v4051
        %v4116 = vmul.f32 %v3741, %v4052
        %v4117 = vmul.f32 %v3743, %v4053
        %v4118 = vmul.f32 %v3745, %v4054
        %v4119 = vmul.f32 %v3747, %v4055
        %v4120 = vmul.f32 %v3749, %v4056
        %v4121 = vmul.f32 %v3751, %v4057
        %v4122 = vmul.f32 %v3753, %v4058
        %v4123 = vmul.f32 %v3755, %v4059
        %v4124 = vmul.f32 %v3757, %v4060
        %v4125 = vmul.f32 %v3759, %v4061
        %v4126 = vmul.f32 %v3761, %v4062
        %v4127 = vmul.f32 %v3763, %v4063
        %v4128 = vmul.f32 %v3765, %v4064
        %v4129 = vmul.f32 %v3767, %v4065
        %v4130 = vmul.f32 %v3769, %v4066
        %v4131 = vmul.f32 %v3771, %v4067
        %v4132 = vmul.f32 %v3773, %v4068
        %v4133 = vmul.f32 %v3775, %v4069
        %v4134 = vmul.f32 %v3777, %v4070
        %v4135 = vmul.f32 %v3779, %v4071
        %v4136 = vmul.f32 %v3781, %v4072
        %v4137 = vmul.f32 %v3783, %v4073
        %v4138 = vmul.f32 %v3785, %v4074
        %v4139 = vmul.f32 %v3787, %v4075
        %v4140 = vmul.f32 %v3789, %v4076
        %v4141 = vmul.f32 %v3791, %v4077
        %v4142 = vmul.f32 %v3793, %v4078
        %v4143 = vmul.f32 %v3795, %v4079
        %v4144 = vmul.f32 %v3797, %v4080
        %v4145 = vmul.f32 %v3799, %v4081
        %v4146 = vmul.f32 %v3801, %v4082
        %v4147 = vmul.f32 %v3803, %v4083
        %v4148 = vmul.f32 %v3805, %v4084
        %v4149 = vmul.f32 %v3807, %v4085
        %v4150 = vmul.f32 %v3809, %v4086
        %v4151 = vmul.f32 %v3811, %v4087
        %v4152 = vmul.f32 %v3813, %v4088
        %v4153 = vmul.f32 %v3815, %v4089
        %v4154 = vmul.f32 %v3817, %v4090
        %v4155 = vmul.f32 %v3819, %v4091
        %v4156 = vmul.f32 %v3821, %v4092
        %v4157 = vmul.f32 %v3823, %v4093
        %v4158 = vmul.f32 %v3825, %v4094
        %v4159 = vmul.f32 %v3827, %v4095
        %v4160 = vmul.f32 %v3829, %v4096
        %v4161 = vmul.f32 %v3831, %v4097
        %v4162 = vmul.f32 %v3833, %v4098
        %v4163 = vmul.f32 %v3835, %v4099
        %v4164 = vmul.f32 %v3837, %v4100
        %v4165 = vmul.f32 %v3839, %v4101
        %v4166 = vmul.f32 %v3841, %v4102
        %v4167 = vmul.f32 %v3843, %v4103
        %v4168 = vmul.f32 %v3845, %v4104
        %v4169 = vmul.f32 %v3847, %v4105
        %v4170 = vmul.f32 %v3849, %v4106
        %v4171 = vmul.f32 %v3851, %v4107
        %v4172 = vpack.c.bf16 %v4109, %v4108
        %v4173 = vpack.c.bf16 %v4111, %v4110
        %v4174 = vpack.c.bf16 %v4113, %v4112
        %v4175 = vpack.c.bf16 %v4115, %v4114
        %v4176 = vpack.c.bf16 %v4117, %v4116
        %v4177 = vpack.c.bf16 %v4119, %v4118
        %v4178 = vpack.c.bf16 %v4121, %v4120
        %v4179 = vpack.c.bf16 %v4123, %v4122
        %v4180 = vpack.c.bf16 %v4125, %v4124
        %v4181 = vpack.c.bf16 %v4127, %v4126
        %v4182 = vpack.c.bf16 %v4129, %v4128
        %v4183 = vpack.c.bf16 %v4131, %v4130
        %v4184 = vpack.c.bf16 %v4133, %v4132
        %v4185 = vpack.c.bf16 %v4135, %v4134
        %v4186 = vpack.c.bf16 %v4137, %v4136
        %v4187 = vpack.c.bf16 %v4139, %v4138
        %v4188 = vpack.c.bf16 %v4141, %v4140
        %v4189 = vpack.c.bf16 %v4143, %v4142
        %v4190 = vpack.c.bf16 %v4145, %v4144
        %v4191 = vpack.c.bf16 %v4147, %v4146
        %v4192 = vpack.c.bf16 %v4149, %v4148
        %v4193 = vpack.c.bf16 %v4151, %v4150
        %v4194 = vpack.c.bf16 %v4153, %v4152
        %v4195 = vpack.c.bf16 %v4155, %v4154
        %v4196 = vpack.c.bf16 %v4157, %v4156
        %v4197 = vpack.c.bf16 %v4159, %v4158
        %v4198 = vpack.c.bf16 %v4161, %v4160
        %v4199 = vpack.c.bf16 %v4163, %v4162
        %v4200 = vpack.c.bf16 %v4165, %v4164
        %v4201 = vpack.c.bf16 %v4167, %v4166
        %v4202 = vpack.c.bf16 %v4169, %v4168
        %v4203 = vpack.c.bf16 %v4171, %v4170
        %v4205 = vsel %vm3467, %v4172, 0
        %4207 = vmatprep.subr.bf16.mxu0 0
        %4208 = vmatpush1.bf16.msra.mxu0 %v1928
        %4209 = vmatprep.subr.bf16.mxu0 0
        %4210 = vmatpush1.bf16.msra.mxu0 0
        %4211 = vmatprep.subr.bf16.mxu0 0
        %4212 = vmatpush1.bf16.msra.mxu0 0
        %4213 = vmatprep.subr.bf16.mxu0 0
        %4214 = vmatpush1.bf16.msra.mxu0 0
        %4215 = vmatprep.subr.bf16.mxu0 0
        %4216 = vmatpush1.bf16.msra.mxu0 0
        %4217 = vmatprep.subr.bf16.mxu0 0
        %4218 = vmatpush1.bf16.msra.mxu0 0
        %4219 = vmatprep.subr.bf16.mxu0 0
        %4220 = vmatpush1.bf16.msra.mxu0 0
        %4221 = vmatprep.subr.bf16.mxu0 0
        %4222 = vmatpush1.bf16.msra.mxu0 0
        %4223 = vmatprep.subr.bf16.mxu0 0
        %4224 = vmatpush1.bf16.msra.mxu0 0
        %4225 = vmatprep.subr.bf16.mxu0 0
        %4226 = vmatpush1.bf16.msra.mxu0 0
        %4227 = vmatprep.subr.bf16.mxu0 0
        %4228 = vmatpush1.bf16.msra.mxu0 0
        %4229 = vmatprep.subr.bf16.mxu0 0
        %4230 = vmatpush1.bf16.msra.mxu0 0
        %4231 = vmatprep.subr.bf16.mxu0 0
        %4232 = vmatpush1.bf16.msra.mxu0 0
        %4233 = vmatprep.subr.bf16.mxu0 0
        %4234 = vmatpush1.bf16.msra.mxu0 0
        %4235 = vmatprep.subr.bf16.mxu0 0
        %4236 = vmatpush1.bf16.msra.mxu0 0
        %4237 = vmatprep.subr.bf16.mxu0 0
        %4238 = vmatpush1.bf16.msra.mxu0 0
        %4239 = vmatprep.mubr.bf16.mxu0 0
        %4240 = vmatmul.mubr.bf16.gmra.mrb[0].mxu0 %v4205
        %v4241 = vpop.f32.mrb[0].mxu0
        %v4242 = vadd.f32 0.0, %v4241
        %v4243 = vpop.f32.mrb[0].mxu0
        %v4244 = vpop.f32.mrb[0].mxu0
        %v4245 = vadd.f32 0.0, %v4244
        %v4246 = vpop.f32.mrb[0].mxu0
        %4247 = vdwg.mxu0
        %v4249 = vsel %vm3467, %v4173, 0
        %4251 = vmatprep.subr.bf16.mxu0 0
        %4252 = vmatpush1.bf16.msra.mxu0 %v1929
        %4253 = vmatprep.subr.bf16.mxu0 0
        %4254 = vmatpush1.bf16.msra.mxu0 0
        %4255 = vmatprep.subr.bf16.mxu0 0
        %4256 = vmatpush1.bf16.msra.mxu0 0
        %4257 = vmatprep.subr.bf16.mxu0 0
        %4258 = vmatpush1.bf16.msra.mxu0 0
        %4259 = vmatprep.subr.bf16.mxu0 0
        %4260 = vmatpush1.bf16.msra.mxu0 0
        %4261 = vmatprep.subr.bf16.mxu0 0
        %4262 = vmatpush1.bf16.msra.mxu0 0
        %4263 = vmatprep.subr.bf16.mxu0 0
        %4264 = vmatpush1.bf16.msra.mxu0 0
        %4265 = vmatprep.subr.bf16.mxu0 0
        %4266 = vmatpush1.bf16.msra.mxu0 0
        %4267 = vmatprep.subr.bf16.mxu0 0
        %4268 = vmatpush1.bf16.msra.mxu0 0
        %4269 = vmatprep.subr.bf16.mxu0 0
        %4270 = vmatpush1.bf16.msra.mxu0 0
        %4271 = vmatprep.subr.bf16.mxu0 0
        %4272 = vmatpush1.bf16.msra.mxu0 0
        %4273 = vmatprep.subr.bf16.mxu0 0
        %4274 = vmatpush1.bf16.msra.mxu0 0
        %4275 = vmatprep.subr.bf16.mxu0 0
        %4276 = vmatpush1.bf16.msra.mxu0 0
        %4277 = vmatprep.subr.bf16.mxu0 0
        %4278 = vmatpush1.bf16.msra.mxu0 0
        %4279 = vmatprep.subr.bf16.mxu0 0
        %4280 = vmatpush1.bf16.msra.mxu0 0
        %4281 = vmatprep.subr.bf16.mxu0 0
        %4282 = vmatpush1.bf16.msra.mxu0 0
        %4283 = vmatprep.mubr.bf16.mxu0 0
        %4284 = vmatmul.mubr.bf16.gmra.mrb[0].mxu0 %v4249
        %v4285 = vpop.f32.mrb[0].mxu0
        %v4286 = vadd.f32 0.0, %v4285
        %v4287 = vpop.f32.mrb[0].mxu0
        %v4288 = vpop.f32.mrb[0].mxu0
        %v4289 = vadd.f32 0.0, %v4288
        %v4290 = vpop.f32.mrb[0].mxu0
        %4291 = vdwg.mxu0
        %v4293 = vsel %vm3467, %v4174, 0
        %4295 = vmatprep.subr.bf16.mxu0 0
        %4296 = vmatpush1.bf16.msra.mxu0 %v1930
        %4297 = vmatprep.subr.bf16.mxu0 0
        %4298 = vmatpush1.bf16.msra.mxu0 0
        %4299 = vmatprep.subr.bf16.mxu0 0
        %4300 = vmatpush1.bf16.msra.mxu0 0
        %4301 = vmatprep.subr.bf16.mxu0 0
        %4302 = vmatpush1.bf16.msra.mxu0 0
        %4303 = vmatprep.subr.bf16.mxu0 0
        %4304 = vmatpush1.bf16.msra.mxu0 0
        %4305 = vmatprep.subr.bf16.mxu0 0
        %4306 = vmatpush1.bf16.msra.mxu0 0
        %4307 = vmatprep.subr.bf16.mxu0 0
        %4308 = vmatpush1.bf16.msra.mxu0 0
        %4309 = vmatprep.subr.bf16.mxu0 0
        %4310 = vmatpush1.bf16.msra.mxu0 0
        %4311 = vmatprep.subr.bf16.mxu0 0
        %4312 = vmatpush1.bf16.msra.mxu0 0
        %4313 = vmatprep.subr.bf16.mxu0 0
        %4314 = vmatpush1.bf16.msra.mxu0 0
        %4315 = vmatprep.subr.bf16.mxu0 0
        %4316 = vmatpush1.bf16.msra.mxu0 0
        %4317 = vmatprep.subr.bf16.mxu0 0
        %4318 = vmatpush1.bf16.msra.mxu0 0
        %4319 = vmatprep.subr.bf16.mxu0 0
        %4320 = vmatpush1.bf16.msra.mxu0 0
        %4321 = vmatprep.subr.bf16.mxu0 0
        %4322 = vmatpush1.bf16.msra.mxu0 0
        %4323 = vmatprep.subr.bf16.mxu0 0
        %4324 = vmatpush1.bf16.msra.mxu0 0
        %4325 = vmatprep.subr.bf16.mxu0 0
        %4326 = vmatpush1.bf16.msra.mxu0 0
        %4327 = vmatprep.mubr.bf16.mxu0 0
        %4328 = vmatmul.mubr.bf16.gmra.mrb[0].mxu0 %v4293
        %v4329 = vpop.f32.mrb[0].mxu0
        %v4330 = vadd.f32 0.0, %v4329
        %v4331 = vpop.f32.mrb[0].mxu0
        %v4332 = vpop.f32.mrb[0].mxu0
        %v4333 = vadd.f32 0.0, %v4332
        %v4334 = vpop.f32.mrb[0].mxu0
        %4335 = vdwg.mxu0
        %v4337 = vsel %vm3467, %v4175, 0
        %4339 = vmatprep.subr.bf16.mxu0 0
        %4340 = vmatpush1.bf16.msra.mxu0 %v1931
        %4341 = vmatprep.subr.bf16.mxu0 0
        %4342 = vmatpush1.bf16.msra.mxu0 0
        %4343 = vmatprep.subr.bf16.mxu0 0
        %4344 = vmatpush1.bf16.msra.mxu0 0
        %4345 = vmatprep.subr.bf16.mxu0 0
        %4346 = vmatpush1.bf16.msra.mxu0 0
        %4347 = vmatprep.subr.bf16.mxu0 0
        %4348 = vmatpush1.bf16.msra.mxu0 0
        %4349 = vmatprep.subr.bf16.mxu0 0
        %4350 = vmatpush1.bf16.msra.mxu0 0
        %4351 = vmatprep.subr.bf16.mxu0 0
        %4352 = vmatpush1.bf16.msra.mxu0 0
        %4353 = vmatprep.subr.bf16.mxu0 0
        %4354 = vmatpush1.bf16.msra.mxu0 0
        %4355 = vmatprep.subr.bf16.mxu0 0
        %4356 = vmatpush1.bf16.msra.mxu0 0
        %4357 = vmatprep.subr.bf16.mxu0 0
        %4358 = vmatpush1.bf16.msra.mxu0 0
        %4359 = vmatprep.subr.bf16.mxu0 0
        %4360 = vmatpush1.bf16.msra.mxu0 0
        %4361 = vmatprep.subr.bf16.mxu0 0
        %4362 = vmatpush1.bf16.msra.mxu0 0
        %4363 = vmatprep.subr.bf16.mxu0 0
        %4364 = vmatpush1.bf16.msra.mxu0 0
        %4365 = vmatprep.subr.bf16.mxu0 0
        %4366 = vmatpush1.bf16.msra.mxu0 0
        %4367 = vmatprep.subr.bf16.mxu0 0
        %4368 = vmatpush1.bf16.msra.mxu0 0
        %4369 = vmatprep.subr.bf16.mxu0 0
        %4370 = vmatpush1.bf16.msra.mxu0 0
        %4371 = vmatprep.mubr.bf16.mxu0 0
        %4372 = vmatmul.mubr.bf16.gmra.mrb[0].mxu0 %v4337
        %v4373 = vpop.f32.mrb[0].mxu0
        %v4374 = vadd.f32 0.0, %v4373
        %v4375 = vpop.f32.mrb[0].mxu0
        %v4376 = vpop.f32.mrb[0].mxu0
        %v4377 = vadd.f32 0.0, %v4376
        %v4378 = vpop.f32.mrb[0].mxu0
        %4379 = vdwg.mxu0
        %v4381 = vsel %vm3467, %v4176, 0
        %4383 = vmatprep.subr.bf16.mxu0 0
        %4384 = vmatpush1.bf16.msra.mxu0 %v1932
        %4385 = vmatprep.subr.bf16.mxu0 0
        %4386 = vmatpush1.bf16.msra.mxu0 0
        %4387 = vmatprep.subr.bf16.mxu0 0
        %4388 = vmatpush1.bf16.msra.mxu0 0
        %4389 = vmatprep.subr.bf16.mxu0 0
        %4390 = vmatpush1.bf16.msra.mxu0 0
        %4391 = vmatprep.subr.bf16.mxu0 0
        %4392 = vmatpush1.bf16.msra.mxu0 0
        %4393 = vmatprep.subr.bf16.mxu0 0
        %4394 = vmatpush1.bf16.msra.mxu0 0
        %4395 = vmatprep.subr.bf16.mxu0 0
        %4396 = vmatpush1.bf16.msra.mxu0 0
        %4397 = vmatprep.subr.bf16.mxu0 0
        %4398 = vmatpush1.bf16.msra.mxu0 0
        %4399 = vmatprep.subr.bf16.mxu0 0
        %4400 = vmatpush1.bf16.msra.mxu0 0
        %4401 = vmatprep.subr.bf16.mxu0 0
        %4402 = vmatpush1.bf16.msra.mxu0 0
        %4403 = vmatprep.subr.bf16.mxu0 0
        %4404 = vmatpush1.bf16.msra.mxu0 0
        %4405 = vmatprep.subr.bf16.mxu0 0
        %4406 = vmatpush1.bf16.msra.mxu0 0
        %4407 = vmatprep.subr.bf16.mxu0 0
        %4408 = vmatpush1.bf16.msra.mxu0 0
        %4409 = vmatprep.subr.bf16.mxu0 0
        %4410 = vmatpush1.bf16.msra.mxu0 0
        %4411 = vmatprep.subr.bf16.mxu0 0
        %4412 = vmatpush1.bf16.msra.mxu0 0
        %4413 = vmatprep.subr.bf16.mxu0 0
        %4414 = vmatpush1.bf16.msra.mxu0 0
        %4415 = vmatprep.mubr.bf16.mxu0 0
        %4416 = vmatmul.mubr.bf16.gmra.mrb[0].mxu0 %v4381
        %v4417 = vpop.f32.mrb[0].mxu0
        %v4418 = vadd.f32 0.0, %v4417
        %v4419 = vpop.f32.mrb[0].mxu0
        %v4420 = vpop.f32.mrb[0].mxu0
        %v4421 = vadd.f32 0.0, %v4420
        %v4422 = vpop.f32.mrb[0].mxu0
        %4423 = vdwg.mxu0
        %v4425 = vsel %vm3467, %v4177, 0
        %4427 = vmatprep.subr.bf16.mxu0 0
        %4428 = vmatpush1.bf16.msra.mxu0 %v1933
        %4429 = vmatprep.subr.bf16.mxu0 0
        %4430 = vmatpush1.bf16.msra.mxu0 0
        %4431 = vmatprep.subr.bf16.mxu0 0
        %4432 = vmatpush1.bf16.msra.mxu0 0
        %4433 = vmatprep.subr.bf16.mxu0 0
        %4434 = vmatpush1.bf16.msra.mxu0 0
        %4435 = vmatprep.subr.bf16.mxu0 0
        %4436 = vmatpush1.bf16.msra.mxu0 0
        %4437 = vmatprep.subr.bf16.mxu0 0
        %4438 = vmatpush1.bf16.msra.mxu0 0
        %4439 = vmatprep.subr.bf16.mxu0 0
        %4440 = vmatpush1.bf16.msra.mxu0 0
        %4441 = vmatprep.subr.bf16.mxu0 0
        %4442 = vmatpush1.bf16.msra.mxu0 0
        %4443 = vmatprep.subr.bf16.mxu0 0
        %4444 = vmatpush1.bf16.msra.mxu0 0
        %4445 = vmatprep.subr.bf16.mxu0 0
        %4446 = vmatpush1.bf16.msra.mxu0 0
        %4447 = vmatprep.subr.bf16.mxu0 0
        %4448 = vmatpush1.bf16.msra.mxu0 0
        %4449 = vmatprep.subr.bf16.mxu0 0
        %4450 = vmatpush1.bf16.msra.mxu0 0
        %4451 = vmatprep.subr.bf16.mxu0 0
        %4452 = vmatpush1.bf16.msra.mxu0 0
        %4453 = vmatprep.subr.bf16.mxu0 0
        %4454 = vmatpush1.bf16.msra.mxu0 0
        %4455 = vmatprep.subr.bf16.mxu0 0
        %4456 = vmatpush1.bf16.msra.mxu0 0
        %4457 = vmatprep.subr.bf16.mxu0 0
        %4458 = vmatpush1.bf16.msra.mxu0 0
        %4459 = vmatprep.mubr.bf16.mxu0 0
        %4460 = vmatmul.mubr.bf16.gmra.mrb[0].mxu0 %v4425
        %v4461 = vpop.f32.mrb[0].mxu0
        %v4462 = vadd.f32 0.0, %v4461
        %v4463 = vpop.f32.mrb[0].mxu0
        %v4464 = vpop.f32.mrb[0].mxu0
        %v4465 = vadd.f32 0.0, %v4464
        %v4466 = vpop.f32.mrb[0].mxu0
        %4467 = vdwg.mxu0
        %v4469 = vsel %vm3467, %v4178, 0
        %4471 = vmatprep.subr.bf16.mxu0 0
        %4472 = vmatpush1.bf16.msra.mxu0 %v1934
        %4473 = vmatprep.subr.bf16.mxu0 0
        %4474 = vmatpush1.bf16.msra.mxu0 0
        %4475 = vmatprep.subr.bf16.mxu0 0
        %4476 = vmatpush1.bf16.msra.mxu0 0
        %4477 = vmatprep.subr.bf16.mxu0 0
        %4478 = vmatpush1.bf16.msra.mxu0 0
        %4479 = vmatprep.subr.bf16.mxu0 0
        %4480 = vmatpush1.bf16.msra.mxu0 0
        %4481 = vmatprep.subr.bf16.mxu0 0
        %4482 = vmatpush1.bf16.msra.mxu0 0
        %4483 = vmatprep.subr.bf16.mxu0 0
        %4484 = vmatpush1.bf16.msra.mxu0 0
        %4485 = vmatprep.subr.bf16.mxu0 0
        %4486 = vmatpush1.bf16.msra.mxu0 0
        %4487 = vmatprep.subr.bf16.mxu0 0
        %4488 = vmatpush1.bf16.msra.mxu0 0
        %4489 = vmatprep.subr.bf16.mxu0 0
        %4490 = vmatpush1.bf16.msra.mxu0 0
        %4491 = vmatprep.subr.bf16.mxu0 0
        %4492 = vmatpush1.bf16.msra.mxu0 0
        %4493 = vmatprep.subr.bf16.mxu0 0
        %4494 = vmatpush1.bf16.msra.mxu0 0
        %4495 = vmatprep.subr.bf16.mxu0 0
        %4496 = vmatpush1.bf16.msra.mxu0 0
        %4497 = vmatprep.subr.bf16.mxu0 0
        %4498 = vmatpush1.bf16.msra.mxu0 0
        %4499 = vmatprep.subr.bf16.mxu0 0
        %4500 = vmatpush1.bf16.msra.mxu0 0
        %4501 = vmatprep.subr.bf16.mxu0 0
        %4502 = vmatpush1.bf16.msra.mxu0 0
        %4503 = vmatprep.mubr.bf16.mxu0 0
        %4504 = vmatmul.mubr.bf16.gmra.mrb[0].mxu0 %v4469
        %v4505 = vpop.f32.mrb[0].mxu0
        %v4506 = vadd.f32 0.0, %v4505
        %v4507 = vpop.f32.mrb[0].mxu0
        %v4508 = vpop.f32.mrb[0].mxu0
        %v4509 = vadd.f32 0.0, %v4508
        %v4510 = vpop.f32.mrb[0].mxu0
        %4511 = vdwg.mxu0
        %v4513 = vsel %vm3467, %v4179, 0
        %4515 = vmatprep.subr.bf16.mxu0 0
        %4516 = vmatpush1.bf16.msra.mxu0 %v1935
        %4517 = vmatprep.subr.bf16.mxu0 0
        %4518 = vmatpush1.bf16.msra.mxu0 0
        %4519 = vmatprep.subr.bf16.mxu0 0
        %4520 = vmatpush1.bf16.msra.mxu0 0
        %4521 = vmatprep.subr.bf16.mxu0 0
        %4522 = vmatpush1.bf16.msra.mxu0 0
        %4523 = vmatprep.subr.bf16.mxu0 0
        %4524 = vmatpush1.bf16.msra.mxu0 0
        %4525 = vmatprep.subr.bf16.mxu0 0
        %4526 = vmatpush1.bf16.msra.mxu0 0
        %4527 = vmatprep.subr.bf16.mxu0 0
        %4528 = vmatpush1.bf16.msra.mxu0 0
        %4529 = vmatprep.subr.bf16.mxu0 0
        %4530 = vmatpush1.bf16.msra.mxu0 0
        %4531 = vmatprep.subr.bf16.mxu0 0
        %4532 = vmatpush1.bf16.msra.mxu0 0
        %4533 = vmatprep.subr.bf16.mxu0 0
        %4534 = vmatpush1.bf16.msra.mxu0 0
        %4535 = vmatprep.subr.bf16.mxu0 0
        %4536 = vmatpush1.bf16.msra.mxu0 0
        %4537 = vmatprep.subr.bf16.mxu0 0
        %4538 = vmatpush1.bf16.msra.mxu0 0
        %4539 = vmatprep.subr.bf16.mxu0 0
        %4540 = vmatpush1.bf16.msra.mxu0 0
        %4541 = vmatprep.subr.bf16.mxu0 0
        %4542 = vmatpush1.bf16.msra.mxu0 0
        %4543 = vmatprep.subr.bf16.mxu0 0
        %4544 = vmatpush1.bf16.msra.mxu0 0
        %4545 = vmatprep.subr.bf16.mxu0 0
        %4546 = vmatpush1.bf16.msra.mxu0 0
        %4547 = vmatprep.mubr.bf16.mxu0 0
        %4548 = vmatmul.mubr.bf16.gmra.mrb[0].mxu0 %v4513
        %v4549 = vpop.f32.mrb[0].mxu0
        %v4550 = vadd.f32 0.0, %v4549
        %v4551 = vpop.f32.mrb[0].mxu0
        %v4552 = vpop.f32.mrb[0].mxu0
        %v4553 = vadd.f32 0.0, %v4552
        %v4554 = vpop.f32.mrb[0].mxu0
        %4555 = vdwg.mxu0
        %v4557 = vsel %vm3467, %v4180, 0
        %4559 = vmatprep.subr.bf16.mxu0 0
        %4560 = vmatpush1.bf16.msra.mxu0 %v1936
        %4561 = vmatprep.subr.bf16.mxu0 0
        %4562 = vmatpush1.bf16.msra.mxu0 0
        %4563 = vmatprep.subr.bf16.mxu0 0
        %4564 = vmatpush1.bf16.msra.mxu0 0
        %4565 = vmatprep.subr.bf16.mxu0 0
        %4566 = vmatpush1.bf16.msra.mxu0 0
        %4567 = vmatprep.subr.bf16.mxu0 0
        %4568 = vmatpush1.bf16.msra.mxu0 0
        %4569 = vmatprep.subr.bf16.mxu0 0
        %4570 = vmatpush1.bf16.msra.mxu0 0
        %4571 = vmatprep.subr.bf16.mxu0 0
        %4572 = vmatpush1.bf16.msra.mxu0 0
        %4573 = vmatprep.subr.bf16.mxu0 0
        %4574 = vmatpush1.bf16.msra.mxu0 0
        %4575 = vmatprep.subr.bf16.mxu0 0
        %4576 = vmatpush1.bf16.msra.mxu0 0
        %4577 = vmatprep.subr.bf16.mxu0 0
        %4578 = vmatpush1.bf16.msra.mxu0 0
        %4579 = vmatprep.subr.bf16.mxu0 0
        %4580 = vmatpush1.bf16.msra.mxu0 0
        %4581 = vmatprep.subr.bf16.mxu0 0
        %4582 = vmatpush1.bf16.msra.mxu0 0
        %4583 = vmatprep.subr.bf16.mxu0 0
        %4584 = vmatpush1.bf16.msra.mxu0 0
        %4585 = vmatprep.subr.bf16.mxu0 0
        %4586 = vmatpush1.bf16.msra.mxu0 0
        %4587 = vmatprep.subr.bf16.mxu0 0
        %4588 = vmatpush1.bf16.msra.mxu0 0
        %4589 = vmatprep.subr.bf16.mxu0 0
        %4590 = vmatpush1.bf16.msra.mxu0 0
        %4591 = vmatprep.mubr.bf16.mxu0 0
        %4592 = vmatmul.mubr.bf16.gmra.mrb[0].mxu0 %v4557
        %v4593 = vpop.f32.mrb[0].mxu0
        %v4594 = vadd.f32 0.0, %v4593
        %v4595 = vpop.f32.mrb[0].mxu0
        %v4596 = vpop.f32.mrb[0].mxu0
        %v4597 = vadd.f32 0.0, %v4596
        %v4598 = vpop.f32.mrb[0].mxu0
        %4599 = vdwg.mxu0
        %v4601 = vsel %vm3467, %v4181, 0
        %4603 = vmatprep.subr.bf16.mxu0 0
        %4604 = vmatpush1.bf16.msra.mxu0 %v1937
        %4605 = vmatprep.subr.bf16.mxu0 0
        %4606 = vmatpush1.bf16.msra.mxu0 0
        %4607 = vmatprep.subr.bf16.mxu0 0
        %4608 = vmatpush1.bf16.msra.mxu0 0
        %4609 = vmatprep.subr.bf16.mxu0 0
        %4610 = vmatpush1.bf16.msra.mxu0 0
        %4611 = vmatprep.subr.bf16.mxu0 0
        %4612 = vmatpush1.bf16.msra.mxu0 0
        %4613 = vmatprep.subr.bf16.mxu0 0
        %4614 = vmatpush1.bf16.msra.mxu0 0
        %4615 = vmatprep.subr.bf16.mxu0 0
        %4616 = vmatpush1.bf16.msra.mxu0 0
        %4617 = vmatprep.subr.bf16.mxu0 0
        %4618 = vmatpush1.bf16.msra.mxu0 0
        %4619 = vmatprep.subr.bf16.mxu0 0
        %4620 = vmatpush1.bf16.msra.mxu0 0
        %4621 = vmatprep.subr.bf16.mxu0 0
        %4622 = vmatpush1.bf16.msra.mxu0 0
        %4623 = vmatprep.subr.bf16.mxu0 0
        %4624 = vmatpush1.bf16.msra.mxu0 0
        %4625 = vmatprep.subr.bf16.mxu0 0
        %4626 = vmatpush1.bf16.msra.mxu0 0
        %4627 = vmatprep.subr.bf16.mxu0 0
        %4628 = vmatpush1.bf16.msra.mxu0 0
        %4629 = vmatprep.subr.bf16.mxu0 0
        %4630 = vmatpush1.bf16.msra.mxu0 0
        %4631 = vmatprep.subr.bf16.mxu0 0
        %4632 = vmatpush1.bf16.msra.mxu0 0
        %4633 = vmatprep.subr.bf16.mxu0 0
        %4634 = vmatpush1.bf16.msra.mxu0 0
        %4635 = vmatprep.mubr.bf16.mxu0 0
        %4636 = vmatmul.mubr.bf16.gmra.mrb[0].mxu0 %v4601
        %v4637 = vpop.f32.mrb[0].mxu0
        %v4638 = vadd.f32 0.0, %v4637
        %v4639 = vpop.f32.mrb[0].mxu0
        %v4640 = vpop.f32.mrb[0].mxu0
        %v4641 = vadd.f32 0.0, %v4640
        %v4642 = vpop.f32.mrb[0].mxu0
        %4643 = vdwg.mxu0
        %v4645 = vsel %vm3467, %v4182, 0
        %4647 = vmatprep.subr.bf16.mxu0 0
        %4648 = vmatpush1.bf16.msra.mxu0 %v1938
        %4649 = vmatprep.subr.bf16.mxu0 0
        %4650 = vmatpush1.bf16.msra.mxu0 0
        %4651 = vmatprep.subr.bf16.mxu0 0
        %4652 = vmatpush1.bf16.msra.mxu0 0
        %4653 = vmatprep.subr.bf16.mxu0 0
        %4654 = vmatpush1.bf16.msra.mxu0 0
        %4655 = vmatprep.subr.bf16.mxu0 0
        %4656 = vmatpush1.bf16.msra.mxu0 0
        %4657 = vmatprep.subr.bf16.mxu0 0
        %4658 = vmatpush1.bf16.msra.mxu0 0
        %4659 = vmatprep.subr.bf16.mxu0 0
        %4660 = vmatpush1.bf16.msra.mxu0 0
        %4661 = vmatprep.subr.bf16.mxu0 0
        %4662 = vmatpush1.bf16.msra.mxu0 0
        %4663 = vmatprep.subr.bf16.mxu0 0
        %4664 = vmatpush1.bf16.msra.mxu0 0
        %4665 = vmatprep.subr.bf16.mxu0 0
        %4666 = vmatpush1.bf16.msra.mxu0 0
        %4667 = vmatprep.subr.bf16.mxu0 0
        %4668 = vmatpush1.bf16.msra.mxu0 0
        %4669 = vmatprep.subr.bf16.mxu0 0
        %4670 = vmatpush1.bf16.msra.mxu0 0
        %4671 = vmatprep.subr.bf16.mxu0 0
        %4672 = vmatpush1.bf16.msra.mxu0 0
        %4673 = vmatprep.subr.bf16.mxu0 0
        %4674 = vmatpush1.bf16.msra.mxu0 0
        %4675 = vmatprep.subr.bf16.mxu0 0
        %4676 = vmatpush1.bf16.msra.mxu0 0
        %4677 = vmatprep.subr.bf16.mxu0 0
        %4678 = vmatpush1.bf16.msra.mxu0 0
        %4679 = vmatprep.mubr.bf16.mxu0 0
        %4680 = vmatmul.mubr.bf16.gmra.mrb[0].mxu0 %v4645
        %v4681 = vpop.f32.mrb[0].mxu0
        %v4682 = vadd.f32 0.0, %v4681
        %v4683 = vpop.f32.mrb[0].mxu0
        %v4684 = vpop.f32.mrb[0].mxu0
        %v4685 = vadd.f32 0.0, %v4684
        %v4686 = vpop.f32.mrb[0].mxu0
        %4687 = vdwg.mxu0
        %v4689 = vsel %vm3467, %v4183, 0
        %4691 = vmatprep.subr.bf16.mxu0 0
        %4692 = vmatpush1.bf16.msra.mxu0 %v1939
        %4693 = vmatprep.subr.bf16.mxu0 0
        %4694 = vmatpush1.bf16.msra.mxu0 0
        %4695 = vmatprep.subr.bf16.mxu0 0
        %4696 = vmatpush1.bf16.msra.mxu0 0
        %4697 = vmatprep.subr.bf16.mxu0 0
        %4698 = vmatpush1.bf16.msra.mxu0 0
        %4699 = vmatprep.subr.bf16.mxu0 0
        %4700 = vmatpush1.bf16.msra.mxu0 0
        %4701 = vmatprep.subr.bf16.mxu0 0
        %4702 = vmatpush1.bf16.msra.mxu0 0
        %4703 = vmatprep.subr.bf16.mxu0 0
        %4704 = vmatpush1.bf16.msra.mxu0 0
        %4705 = vmatprep.subr.bf16.mxu0 0
        %4706 = vmatpush1.bf16.msra.mxu0 0
        %4707 = vmatprep.subr.bf16.mxu0 0
        %4708 = vmatpush1.bf16.msra.mxu0 0
        %4709 = vmatprep.subr.bf16.mxu0 0
        %4710 = vmatpush1.bf16.msra.mxu0 0
        %4711 = vmatprep.subr.bf16.mxu0 0
        %4712 = vmatpush1.bf16.msra.mxu0 0
        %4713 = vmatprep.subr.bf16.mxu0 0
        %4714 = vmatpush1.bf16.msra.mxu0 0
        %4715 = vmatprep.subr.bf16.mxu0 0
        %4716 = vmatpush1.bf16.msra.mxu0 0
        %4717 = vmatprep.subr.bf16.mxu0 0
        %4718 = vmatpush1.bf16.msra.mxu0 0
        %4719 = vmatprep.subr.bf16.mxu0 0
        %4720 = vmatpush1.bf16.msra.mxu0 0
        %4721 = vmatprep.subr.bf16.mxu0 0
        %4722 = vmatpush1.bf16.msra.mxu0 0
        %4723 = vmatprep.mubr.bf16.mxu0 0
        %4724 = vmatmul.mubr.bf16.gmra.mrb[0].mxu0 %v4689
        %v4725 = vpop.f32.mrb[0].mxu0
        %v4726 = vadd.f32 0.0, %v4725
        %v4727 = vpop.f32.mrb[0].mxu0
        %v4728 = vpop.f32.mrb[0].mxu0
        %v4729 = vadd.f32 0.0, %v4728
        %v4730 = vpop.f32.mrb[0].mxu0
        %4731 = vdwg.mxu0
        %v4733 = vsel %vm3467, %v4184, 0
        %4735 = vmatprep.subr.bf16.mxu0 0
        %4736 = vmatpush1.bf16.msra.mxu0 %v1940
        %4737 = vmatprep.subr.bf16.mxu0 0
        %4738 = vmatpush1.bf16.msra.mxu0 0
        %4739 = vmatprep.subr.bf16.mxu0 0
        %4740 = vmatpush1.bf16.msra.mxu0 0
        %4741 = vmatprep.subr.bf16.mxu0 0
        %4742 = vmatpush1.bf16.msra.mxu0 0
        %4743 = vmatprep.subr.bf16.mxu0 0
        %4744 = vmatpush1.bf16.msra.mxu0 0
        %4745 = vmatprep.subr.bf16.mxu0 0
        %4746 = vmatpush1.bf16.msra.mxu0 0
        %4747 = vmatprep.subr.bf16.mxu0 0
        %4748 = vmatpush1.bf16.msra.mxu0 0
        %4749 = vmatprep.subr.bf16.mxu0 0
        %4750 = vmatpush1.bf16.msra.mxu0 0
        %4751 = vmatprep.subr.bf16.mxu0 0
        %4752 = vmatpush1.bf16.msra.mxu0 0
        %4753 = vmatprep.subr.bf16.mxu0 0
        %4754 = vmatpush1.bf16.msra.mxu0 0
        %4755 = vmatprep.subr.bf16.mxu0 0
        %4756 = vmatpush1.bf16.msra.mxu0 0
        %4757 = vmatprep.subr.bf16.mxu0 0
        %4758 = vmatpush1.bf16.msra.mxu0 0
        %4759 = vmatprep.subr.bf16.mxu0 0
        %4760 = vmatpush1.bf16.msra.mxu0 0
        %4761 = vmatprep.subr.bf16.mxu0 0
        %4762 = vmatpush1.bf16.msra.mxu0 0
        %4763 = vmatprep.subr.bf16.mxu0 0
        %4764 = vmatpush1.bf16.msra.mxu0 0
        %4765 = vmatprep.subr.bf16.mxu0 0
        %4766 = vmatpush1.bf16.msra.mxu0 0
        %4767 = vmatprep.mubr.bf16.mxu0 0
        %4768 = vmatmul.mubr.bf16.gmra.mrb[0].mxu0 %v4733
        %v4769 = vpop.f32.mrb[0].mxu0
        %v4770 = vadd.f32 0.0, %v4769
        %v4771 = vpop.f32.mrb[0].mxu0
        %v4772 = vpop.f32.mrb[0].mxu0
        %v4773 = vadd.f32 0.0, %v4772
        %v4774 = vpop.f32.mrb[0].mxu0
        %4775 = vdwg.mxu0
        %v4777 = vsel %vm3467, %v4185, 0
        %4779 = vmatprep.subr.bf16.mxu0 0
        %4780 = vmatpush1.bf16.msra.mxu0 %v1941
        %4781 = vmatprep.subr.bf16.mxu0 0
        %4782 = vmatpush1.bf16.msra.mxu0 0
        %4783 = vmatprep.subr.bf16.mxu0 0
        %4784 = vmatpush1.bf16.msra.mxu0 0
        %4785 = vmatprep.subr.bf16.mxu0 0
        %4786 = vmatpush1.bf16.msra.mxu0 0
        %4787 = vmatprep.subr.bf16.mxu0 0
        %4788 = vmatpush1.bf16.msra.mxu0 0
        %4789 = vmatprep.subr.bf16.mxu0 0
        %4790 = vmatpush1.bf16.msra.mxu0 0
        %4791 = vmatprep.subr.bf16.mxu0 0
        %4792 = vmatpush1.bf16.msra.mxu0 0
        %4793 = vmatprep.subr.bf16.mxu0 0
        %4794 = vmatpush1.bf16.msra.mxu0 0
        %4795 = vmatprep.subr.bf16.mxu0 0
        %4796 = vmatpush1.bf16.msra.mxu0 0
        %4797 = vmatprep.subr.bf16.mxu0 0
        %4798 = vmatpush1.bf16.msra.mxu0 0
        %4799 = vmatprep.subr.bf16.mxu0 0
        %4800 = vmatpush1.bf16.msra.mxu0 0
        %4801 = vmatprep.subr.bf16.mxu0 0
        %4802 = vmatpush1.bf16.msra.mxu0 0
        %4803 = vmatprep.subr.bf16.mxu0 0
        %4804 = vmatpush1.bf16.msra.mxu0 0
        %4805 = vmatprep.subr.bf16.mxu0 0
        %4806 = vmatpush1.bf16.msra.mxu0 0
        %4807 = vmatprep.subr.bf16.mxu0 0
        %4808 = vmatpush1.bf16.msra.mxu0 0
        %4809 = vmatprep.subr.bf16.mxu0 0
        %4810 = vmatpush1.bf16.msra.mxu0 0
        %4811 = vmatprep.mubr.bf16.mxu0 0
        %4812 = vmatmul.mubr.bf16.gmra.mrb[0].mxu0 %v4777
        %v4813 = vpop.f32.mrb[0].mxu0
        %v4814 = vadd.f32 0.0, %v4813
        %v4815 = vpop.f32.mrb[0].mxu0
        %v4816 = vpop.f32.mrb[0].mxu0
        %v4817 = vadd.f32 0.0, %v4816
        %v4818 = vpop.f32.mrb[0].mxu0
        %4819 = vdwg.mxu0
        %v4821 = vsel %vm3467, %v4186, 0
        %4823 = vmatprep.subr.bf16.mxu0 0
        %4824 = vmatpush1.bf16.msra.mxu0 %v1942
        %4825 = vmatprep.subr.bf16.mxu0 0
        %4826 = vmatpush1.bf16.msra.mxu0 0
        %4827 = vmatprep.subr.bf16.mxu0 0
        %4828 = vmatpush1.bf16.msra.mxu0 0
        %4829 = vmatprep.subr.bf16.mxu0 0
        %4830 = vmatpush1.bf16.msra.mxu0 0
        %4831 = vmatprep.subr.bf16.mxu0 0
        %4832 = vmatpush1.bf16.msra.mxu0 0
        %4833 = vmatprep.subr.bf16.mxu0 0
        %4834 = vmatpush1.bf16.msra.mxu0 0
        %4835 = vmatprep.subr.bf16.mxu0 0
        %4836 = vmatpush1.bf16.msra.mxu0 0
        %4837 = vmatprep.subr.bf16.mxu0 0
        %4838 = vmatpush1.bf16.msra.mxu0 0
        %4839 = vmatprep.subr.bf16.mxu0 0
        %4840 = vmatpush1.bf16.msra.mxu0 0
        %4841 = vmatprep.subr.bf16.mxu0 0
        %4842 = vmatpush1.bf16.msra.mxu0 0
        %4843 = vmatprep.subr.bf16.mxu0 0
        %4844 = vmatpush1.bf16.msra.mxu0 0
        %4845 = vmatprep.subr.bf16.mxu0 0
        %4846 = vmatpush1.bf16.msra.mxu0 0
        %4847 = vmatprep.subr.bf16.mxu0 0
        %4848 = vmatpush1.bf16.msra.mxu0 0
        %4849 = vmatprep.subr.bf16.mxu0 0
        %4850 = vmatpush1.bf16.msra.mxu0 0
        %4851 = vmatprep.subr.bf16.mxu0 0
        %4852 = vmatpush1.bf16.msra.mxu0 0
        %4853 = vmatprep.subr.bf16.mxu0 0
        %4854 = vmatpush1.bf16.msra.mxu0 0
        %4855 = vmatprep.mubr.bf16.mxu0 0
        %4856 = vmatmul.mubr.bf16.gmra.mrb[0].mxu0 %v4821
        %v4857 = vpop.f32.mrb[0].mxu0
        %v4858 = vadd.f32 0.0, %v4857
        %v4859 = vpop.f32.mrb[0].mxu0
        %v4860 = vpop.f32.mrb[0].mxu0
        %v4861 = vadd.f32 0.0, %v4860
        %v4862 = vpop.f32.mrb[0].mxu0
        %4863 = vdwg.mxu0
        %v4865 = vsel %vm3467, %v4187, 0
        %4867 = vmatprep.subr.bf16.mxu0 0
        %4868 = vmatpush1.bf16.msra.mxu0 %v1943
        %4869 = vmatprep.subr.bf16.mxu0 0
        %4870 = vmatpush1.bf16.msra.mxu0 0
        %4871 = vmatprep.subr.bf16.mxu0 0
        %4872 = vmatpush1.bf16.msra.mxu0 0
        %4873 = vmatprep.subr.bf16.mxu0 0
        %4874 = vmatpush1.bf16.msra.mxu0 0
        %4875 = vmatprep.subr.bf16.mxu0 0
        %4876 = vmatpush1.bf16.msra.mxu0 0
        %4877 = vmatprep.subr.bf16.mxu0 0
        %4878 = vmatpush1.bf16.msra.mxu0 0
        %4879 = vmatprep.subr.bf16.mxu0 0
        %4880 = vmatpush1.bf16.msra.mxu0 0
        %4881 = vmatprep.subr.bf16.mxu0 0
        %4882 = vmatpush1.bf16.msra.mxu0 0
        %4883 = vmatprep.subr.bf16.mxu0 0
        %4884 = vmatpush1.bf16.msra.mxu0 0
        %4885 = vmatprep.subr.bf16.mxu0 0
        %4886 = vmatpush1.bf16.msra.mxu0 0
        %4887 = vmatprep.subr.bf16.mxu0 0
        %4888 = vmatpush1.bf16.msra.mxu0 0
        %4889 = vmatprep.subr.bf16.mxu0 0
        %4890 = vmatpush1.bf16.msra.mxu0 0
        %4891 = vmatprep.subr.bf16.mxu0 0
        %4892 = vmatpush1.bf16.msra.mxu0 0
        %4893 = vmatprep.subr.bf16.mxu0 0
        %4894 = vmatpush1.bf16.msra.mxu0 0
        %4895 = vmatprep.subr.bf16.mxu0 0
        %4896 = vmatpush1.bf16.msra.mxu0 0
        %4897 = vmatprep.subr.bf16.mxu0 0
        %4898 = vmatpush1.bf16.msra.mxu0 0
        %4899 = vmatprep.mubr.bf16.mxu0 0
        %4900 = vmatmul.mubr.bf16.gmra.mrb[0].mxu0 %v4865
        %v4901 = vpop.f32.mrb[0].mxu0
        %v4902 = vadd.f32 0.0, %v4901
        %v4903 = vpop.f32.mrb[0].mxu0
        %v4904 = vpop.f32.mrb[0].mxu0
        %v4905 = vadd.f32 0.0, %v4904
        %v4906 = vpop.f32.mrb[0].mxu0
        %4907 = vdwg.mxu0
        %v4909 = vsel %vm3467, %v4188, 0
        %4911 = vmatprep.subr.bf16.mxu0 0
        %4912 = vmatpush1.bf16.msra.mxu0 %v1944
        %4913 = vmatprep.subr.bf16.mxu0 0
        %4914 = vmatpush1.bf16.msra.mxu0 0
        %4915 = vmatprep.subr.bf16.mxu0 0
        %4916 = vmatpush1.bf16.msra.mxu0 0
        %4917 = vmatprep.subr.bf16.mxu0 0
        %4918 = vmatpush1.bf16.msra.mxu0 0
        %4919 = vmatprep.subr.bf16.mxu0 0
        %4920 = vmatpush1.bf16.msra.mxu0 0
        %4921 = vmatprep.subr.bf16.mxu0 0
        %4922 = vmatpush1.bf16.msra.mxu0 0
        %4923 = vmatprep.subr.bf16.mxu0 0
        %4924 = vmatpush1.bf16.msra.mxu0 0
        %4925 = vmatprep.subr.bf16.mxu0 0
        %4926 = vmatpush1.bf16.msra.mxu0 0
        %4927 = vmatprep.subr.bf16.mxu0 0
        %4928 = vmatpush1.bf16.msra.mxu0 0
        %4929 = vmatprep.subr.bf16.mxu0 0
        %4930 = vmatpush1.bf16.msra.mxu0 0
        %4931 = vmatprep.subr.bf16.mxu0 0
        %4932 = vmatpush1.bf16.msra.mxu0 0
        %4933 = vmatprep.subr.bf16.mxu0 0
        %4934 = vmatpush1.bf16.msra.mxu0 0
        %4935 = vmatprep.subr.bf16.mxu0 0
        %4936 = vmatpush1.bf16.msra.mxu0 0
        %4937 = vmatprep.subr.bf16.mxu0 0
        %4938 = vmatpush1.bf16.msra.mxu0 0
        %4939 = vmatprep.subr.bf16.mxu0 0
        %4940 = vmatpush1.bf16.msra.mxu0 0
        %4941 = vmatprep.subr.bf16.mxu0 0
        %4942 = vmatpush1.bf16.msra.mxu0 0
        %4943 = vmatprep.mubr.bf16.mxu0 0
        %4944 = vmatmul.mubr.bf16.gmra.mrb[0].mxu0 %v4909
        %v4945 = vpop.f32.mrb[0].mxu0
        %v4946 = vadd.f32 0.0, %v4945
        %v4947 = vpop.f32.mrb[0].mxu0
        %v4948 = vpop.f32.mrb[0].mxu0
        %v4949 = vadd.f32 0.0, %v4948
        %v4950 = vpop.f32.mrb[0].mxu0
        %4951 = vdwg.mxu0
        %v4953 = vsel %vm3467, %v4189, 0
        %4955 = vmatprep.subr.bf16.mxu0 0
        %4956 = vmatpush1.bf16.msra.mxu0 %v1945
        %4957 = vmatprep.subr.bf16.mxu0 0
        %4958 = vmatpush1.bf16.msra.mxu0 0
        %4959 = vmatprep.subr.bf16.mxu0 0
        %4960 = vmatpush1.bf16.msra.mxu0 0
        %4961 = vmatprep.subr.bf16.mxu0 0
        %4962 = vmatpush1.bf16.msra.mxu0 0
        %4963 = vmatprep.subr.bf16.mxu0 0
        %4964 = vmatpush1.bf16.msra.mxu0 0
        %4965 = vmatprep.subr.bf16.mxu0 0
        %4966 = vmatpush1.bf16.msra.mxu0 0
        %4967 = vmatprep.subr.bf16.mxu0 0
        %4968 = vmatpush1.bf16.msra.mxu0 0
        %4969 = vmatprep.subr.bf16.mxu0 0
        %4970 = vmatpush1.bf16.msra.mxu0 0
        %4971 = vmatprep.subr.bf16.mxu0 0
        %4972 = vmatpush1.bf16.msra.mxu0 0
        %4973 = vmatprep.subr.bf16.mxu0 0
        %4974 = vmatpush1.bf16.msra.mxu0 0
        %4975 = vmatprep.subr.bf16.mxu0 0
        %4976 = vmatpush1.bf16.msra.mxu0 0
        %4977 = vmatprep.subr.bf16.mxu0 0
        %4978 = vmatpush1.bf16.msra.mxu0 0
        %4979 = vmatprep.subr.bf16.mxu0 0
        %4980 = vmatpush1.bf16.msra.mxu0 0
        %4981 = vmatprep.subr.bf16.mxu0 0
        %4982 = vmatpush1.bf16.msra.mxu0 0
        %4983 = vmatprep.subr.bf16.mxu0 0
        %4984 = vmatpush1.bf16.msra.mxu0 0
        %4985 = vmatprep.subr.bf16.mxu0 0
        %4986 = vmatpush1.bf16.msra.mxu0 0
        %4987 = vmatprep.mubr.bf16.mxu0 0
        %4988 = vmatmul.mubr.bf16.gmra.mrb[0].mxu0 %v4953
        %v4989 = vpop.f32.mrb[0].mxu0
        %v4990 = vadd.f32 0.0, %v4989
        %v4991 = vpop.f32.mrb[0].mxu0
        %v4992 = vpop.f32.mrb[0].mxu0
        %v4993 = vadd.f32 0.0, %v4992
        %v4994 = vpop.f32.mrb[0].mxu0
        %4995 = vdwg.mxu0
        %v4997 = vsel %vm3467, %v4190, 0
        %4999 = vmatprep.subr.bf16.mxu0 0
        %5000 = vmatpush1.bf16.msra.mxu0 %v1946
        %5001 = vmatprep.subr.bf16.mxu0 0
        %5002 = vmatpush1.bf16.msra.mxu0 0
        %5003 = vmatprep.subr.bf16.mxu0 0
        %5004 = vmatpush1.bf16.msra.mxu0 0
        %5005 = vmatprep.subr.bf16.mxu0 0
        %5006 = vmatpush1.bf16.msra.mxu0 0
        %5007 = vmatprep.subr.bf16.mxu0 0
        %5008 = vmatpush1.bf16.msra.mxu0 0
        %5009 = vmatprep.subr.bf16.mxu0 0
        %5010 = vmatpush1.bf16.msra.mxu0 0
        %5011 = vmatprep.subr.bf16.mxu0 0
        %5012 = vmatpush1.bf16.msra.mxu0 0
        %5013 = vmatprep.subr.bf16.mxu0 0
        %5014 = vmatpush1.bf16.msra.mxu0 0
        %5015 = vmatprep.subr.bf16.mxu0 0
        %5016 = vmatpush1.bf16.msra.mxu0 0
        %5017 = vmatprep.subr.bf16.mxu0 0
        %5018 = vmatpush1.bf16.msra.mxu0 0
        %5019 = vmatprep.subr.bf16.mxu0 0
        %5020 = vmatpush1.bf16.msra.mxu0 0
        %5021 = vmatprep.subr.bf16.mxu0 0
        %5022 = vmatpush1.bf16.msra.mxu0 0
        %5023 = vmatprep.subr.bf16.mxu0 0
        %5024 = vmatpush1.bf16.msra.mxu0 0
        %5025 = vmatprep.subr.bf16.mxu0 0
        %5026 = vmatpush1.bf16.msra.mxu0 0
        %5027 = vmatprep.subr.bf16.mxu0 0
        %5028 = vmatpush1.bf16.msra.mxu0 0
        %5029 = vmatprep.subr.bf16.mxu0 0
        %5030 = vmatpush1.bf16.msra.mxu0 0
        %5031 = vmatprep.mubr.bf16.mxu0 0
        %5032 = vmatmul.mubr.bf16.gmra.mrb[0].mxu0 %v4997
        %v5033 = vpop.f32.mrb[0].mxu0
        %v5034 = vadd.f32 0.0, %v5033
        %v5035 = vpop.f32.mrb[0].mxu0
        %v5036 = vpop.f32.mrb[0].mxu0
        %v5037 = vadd.f32 0.0, %v5036
        %v5038 = vpop.f32.mrb[0].mxu0
        %5039 = vdwg.mxu0
        %v5041 = vsel %vm3467, %v4191, 0
        %5043 = vmatprep.subr.bf16.mxu0 0
        %5044 = vmatpush1.bf16.msra.mxu0 %v1947
        %5045 = vmatprep.subr.bf16.mxu0 0
        %5046 = vmatpush1.bf16.msra.mxu0 0
        %5047 = vmatprep.subr.bf16.mxu0 0
        %5048 = vmatpush1.bf16.msra.mxu0 0
        %5049 = vmatprep.subr.bf16.mxu0 0
        %5050 = vmatpush1.bf16.msra.mxu0 0
        %5051 = vmatprep.subr.bf16.mxu0 0
        %5052 = vmatpush1.bf16.msra.mxu0 0
        %5053 = vmatprep.subr.bf16.mxu0 0
        %5054 = vmatpush1.bf16.msra.mxu0 0
        %5055 = vmatprep.subr.bf16.mxu0 0
        %5056 = vmatpush1.bf16.msra.mxu0 0
        %5057 = vmatprep.subr.bf16.mxu0 0
        %5058 = vmatpush1.bf16.msra.mxu0 0
        %5059 = vmatprep.subr.bf16.mxu0 0
        %5060 = vmatpush1.bf16.msra.mxu0 0
        %5061 = vmatprep.subr.bf16.mxu0 0
        %5062 = vmatpush1.bf16.msra.mxu0 0
        %5063 = vmatprep.subr.bf16.mxu0 0
        %5064 = vmatpush1.bf16.msra.mxu0 0
        %5065 = vmatprep.subr.bf16.mxu0 0
        %5066 = vmatpush1.bf16.msra.mxu0 0
        %5067 = vmatprep.subr.bf16.mxu0 0
        %5068 = vmatpush1.bf16.msra.mxu0 0
        %5069 = vmatprep.subr.bf16.mxu0 0
        %5070 = vmatpush1.bf16.msra.mxu0 0
        %5071 = vmatprep.subr.bf16.mxu0 0
        %5072 = vmatpush1.bf16.msra.mxu0 0
        %5073 = vmatprep.subr.bf16.mxu0 0
        %5074 = vmatpush1.bf16.msra.mxu0 0
        %5075 = vmatprep.mubr.bf16.mxu0 0
        %5076 = vmatmul.mubr.bf16.gmra.mrb[0].mxu0 %v5041
        %v5077 = vpop.f32.mrb[0].mxu0
        %v5078 = vadd.f32 0.0, %v5077
        %v5079 = vpop.f32.mrb[0].mxu0
        %v5080 = vpop.f32.mrb[0].mxu0
        %v5081 = vadd.f32 0.0, %v5080
        %v5082 = vpop.f32.mrb[0].mxu0
        %5083 = vdwg.mxu0
        %v5085 = vsel %vm3467, %v4192, 0
        %5087 = vmatprep.subr.bf16.mxu0 0
        %5088 = vmatpush1.bf16.msra.mxu0 %v1948
        %5089 = vmatprep.subr.bf16.mxu0 0
        %5090 = vmatpush1.bf16.msra.mxu0 0
        %5091 = vmatprep.subr.bf16.mxu0 0
        %5092 = vmatpush1.bf16.msra.mxu0 0
        %5093 = vmatprep.subr.bf16.mxu0 0
        %5094 = vmatpush1.bf16.msra.mxu0 0
        %5095 = vmatprep.subr.bf16.mxu0 0
        %5096 = vmatpush1.bf16.msra.mxu0 0
        %5097 = vmatprep.subr.bf16.mxu0 0
        %5098 = vmatpush1.bf16.msra.mxu0 0
        %5099 = vmatprep.subr.bf16.mxu0 0
        %5100 = vmatpush1.bf16.msra.mxu0 0
        %5101 = vmatprep.subr.bf16.mxu0 0
        %5102 = vmatpush1.bf16.msra.mxu0 0
        %5103 = vmatprep.subr.bf16.mxu0 0
        %5104 = vmatpush1.bf16.msra.mxu0 0
        %5105 = vmatprep.subr.bf16.mxu0 0
        %5106 = vmatpush1.bf16.msra.mxu0 0
        %5107 = vmatprep.subr.bf16.mxu0 0
        %5108 = vmatpush1.bf16.msra.mxu0 0
        %5109 = vmatprep.subr.bf16.mxu0 0
        %5110 = vmatpush1.bf16.msra.mxu0 0
        %5111 = vmatprep.subr.bf16.mxu0 0
        %5112 = vmatpush1.bf16.msra.mxu0 0
        %5113 = vmatprep.subr.bf16.mxu0 0
        %5114 = vmatpush1.bf16.msra.mxu0 0
        %5115 = vmatprep.subr.bf16.mxu0 0
        %5116 = vmatpush1.bf16.msra.mxu0 0
        %5117 = vmatprep.subr.bf16.mxu0 0
        %5118 = vmatpush1.bf16.msra.mxu0 0
        %5119 = vmatprep.mubr.bf16.mxu0 0
        %5120 = vmatmul.mubr.bf16.gmra.mrb[0].mxu0 %v5085
        %v5121 = vpop.f32.mrb[0].mxu0
        %v5122 = vadd.f32 0.0, %v5121
        %v5123 = vpop.f32.mrb[0].mxu0
        %v5124 = vpop.f32.mrb[0].mxu0
        %v5125 = vadd.f32 0.0, %v5124
        %v5126 = vpop.f32.mrb[0].mxu0
        %5127 = vdwg.mxu0
        %v5129 = vsel %vm3467, %v4193, 0
        %5131 = vmatprep.subr.bf16.mxu0 0
        %5132 = vmatpush1.bf16.msra.mxu0 %v1949
        %5133 = vmatprep.subr.bf16.mxu0 0
        %5134 = vmatpush1.bf16.msra.mxu0 0
        %5135 = vmatprep.subr.bf16.mxu0 0
        %5136 = vmatpush1.bf16.msra.mxu0 0
        %5137 = vmatprep.subr.bf16.mxu0 0
        %5138 = vmatpush1.bf16.msra.mxu0 0
        %5139 = vmatprep.subr.bf16.mxu0 0
        %5140 = vmatpush1.bf16.msra.mxu0 0
        %5141 = vmatprep.subr.bf16.mxu0 0
        %5142 = vmatpush1.bf16.msra.mxu0 0
        %5143 = vmatprep.subr.bf16.mxu0 0
        %5144 = vmatpush1.bf16.msra.mxu0 0
        %5145 = vmatprep.subr.bf16.mxu0 0
        %5146 = vmatpush1.bf16.msra.mxu0 0
        %5147 = vmatprep.subr.bf16.mxu0 0
        %5148 = vmatpush1.bf16.msra.mxu0 0
        %5149 = vmatprep.subr.bf16.mxu0 0
        %5150 = vmatpush1.bf16.msra.mxu0 0
        %5151 = vmatprep.subr.bf16.mxu0 0
        %5152 = vmatpush1.bf16.msra.mxu0 0
        %5153 = vmatprep.subr.bf16.mxu0 0
        %5154 = vmatpush1.bf16.msra.mxu0 0
        %5155 = vmatprep.subr.bf16.mxu0 0
        %5156 = vmatpush1.bf16.msra.mxu0 0
        %5157 = vmatprep.subr.bf16.mxu0 0
        %5158 = vmatpush1.bf16.msra.mxu0 0
        %5159 = vmatprep.subr.bf16.mxu0 0
        %5160 = vmatpush1.bf16.msra.mxu0 0
        %5161 = vmatprep.subr.bf16.mxu0 0
        %5162 = vmatpush1.bf16.msra.mxu0 0
        %5163 = vmatprep.mubr.bf16.mxu0 0
        %5164 = vmatmul.mubr.bf16.gmra.mrb[0].mxu0 %v5129
        %v5165 = vpop.f32.mrb[0].mxu0
        %v5166 = vadd.f32 0.0, %v5165
        %v5167 = vpop.f32.mrb[0].mxu0
        %v5168 = vpop.f32.mrb[0].mxu0
        %v5169 = vadd.f32 0.0, %v5168
        %v5170 = vpop.f32.mrb[0].mxu0
        %5171 = vdwg.mxu0
        %v5173 = vsel %vm3467, %v4194, 0
        %5175 = vmatprep.subr.bf16.mxu0 0
        %5176 = vmatpush1.bf16.msra.mxu0 %v1950
        %5177 = vmatprep.subr.bf16.mxu0 0
        %5178 = vmatpush1.bf16.msra.mxu0 0
        %5179 = vmatprep.subr.bf16.mxu0 0
        %5180 = vmatpush1.bf16.msra.mxu0 0
        %5181 = vmatprep.subr.bf16.mxu0 0
        %5182 = vmatpush1.bf16.msra.mxu0 0
        %5183 = vmatprep.subr.bf16.mxu0 0
        %5184 = vmatpush1.bf16.msra.mxu0 0
        %5185 = vmatprep.subr.bf16.mxu0 0
        %5186 = vmatpush1.bf16.msra.mxu0 0
        %5187 = vmatprep.subr.bf16.mxu0 0
        %5188 = vmatpush1.bf16.msra.mxu0 0
        %5189 = vmatprep.subr.bf16.mxu0 0
        %5190 = vmatpush1.bf16.msra.mxu0 0
        %5191 = vmatprep.subr.bf16.mxu0 0
        %5192 = vmatpush1.bf16.msra.mxu0 0
        %5193 = vmatprep.subr.bf16.mxu0 0
        %5194 = vmatpush1.bf16.msra.mxu0 0
        %5195 = vmatprep.subr.bf16.mxu0 0
        %5196 = vmatpush1.bf16.msra.mxu0 0
        %5197 = vmatprep.subr.bf16.mxu0 0
        %5198 = vmatpush1.bf16.msra.mxu0 0
        %5199 = vmatprep.subr.bf16.mxu0 0
        %5200 = vmatpush1.bf16.msra.mxu0 0
        %5201 = vmatprep.subr.bf16.mxu0 0
        %5202 = vmatpush1.bf16.msra.mxu0 0
        %5203 = vmatprep.subr.bf16.mxu0 0
        %5204 = vmatpush1.bf16.msra.mxu0 0
        %5205 = vmatprep.subr.bf16.mxu0 0
        %5206 = vmatpush1.bf16.msra.mxu0 0
        %5207 = vmatprep.mubr.bf16.mxu0 0
        %5208 = vmatmul.mubr.bf16.gmra.mrb[0].mxu0 %v5173
        %v5209 = vpop.f32.mrb[0].mxu0
        %v5210 = vadd.f32 0.0, %v5209
        %v5211 = vpop.f32.mrb[0].mxu0
        %v5212 = vpop.f32.mrb[0].mxu0
        %v5213 = vadd.f32 0.0, %v5212
        %v5214 = vpop.f32.mrb[0].mxu0
        %5215 = vdwg.mxu0
        %v5217 = vsel %vm3467, %v4195, 0
        %5219 = vmatprep.subr.bf16.mxu0 0
        %5220 = vmatpush1.bf16.msra.mxu0 %v1951
        %5221 = vmatprep.subr.bf16.mxu0 0
        %5222 = vmatpush1.bf16.msra.mxu0 0
        %5223 = vmatprep.subr.bf16.mxu0 0
        %5224 = vmatpush1.bf16.msra.mxu0 0
        %5225 = vmatprep.subr.bf16.mxu0 0
        %5226 = vmatpush1.bf16.msra.mxu0 0
        %5227 = vmatprep.subr.bf16.mxu0 0
        %5228 = vmatpush1.bf16.msra.mxu0 0
        %5229 = vmatprep.subr.bf16.mxu0 0
        %5230 = vmatpush1.bf16.msra.mxu0 0
        %5231 = vmatprep.subr.bf16.mxu0 0
        %5232 = vmatpush1.bf16.msra.mxu0 0
        %5233 = vmatprep.subr.bf16.mxu0 0
        %5234 = vmatpush1.bf16.msra.mxu0 0
        %5235 = vmatprep.subr.bf16.mxu0 0
        %5236 = vmatpush1.bf16.msra.mxu0 0
        %5237 = vmatprep.subr.bf16.mxu0 0
        %5238 = vmatpush1.bf16.msra.mxu0 0
        %5239 = vmatprep.subr.bf16.mxu0 0
        %5240 = vmatpush1.bf16.msra.mxu0 0
        %5241 = vmatprep.subr.bf16.mxu0 0
        %5242 = vmatpush1.bf16.msra.mxu0 0
        %5243 = vmatprep.subr.bf16.mxu0 0
        %5244 = vmatpush1.bf16.msra.mxu0 0
        %5245 = vmatprep.subr.bf16.mxu0 0
        %5246 = vmatpush1.bf16.msra.mxu0 0
        %5247 = vmatprep.subr.bf16.mxu0 0
        %5248 = vmatpush1.bf16.msra.mxu0 0
        %5249 = vmatprep.subr.bf16.mxu0 0
        %5250 = vmatpush1.bf16.msra.mxu0 0
        %5251 = vmatprep.mubr.bf16.mxu0 0
        %5252 = vmatmul.mubr.bf16.gmra.mrb[0].mxu0 %v5217
        %v5253 = vpop.f32.mrb[0].mxu0
        %v5254 = vadd.f32 0.0, %v5253
        %v5255 = vpop.f32.mrb[0].mxu0
        %v5256 = vpop.f32.mrb[0].mxu0
        %v5257 = vadd.f32 0.0, %v5256
        %v5258 = vpop.f32.mrb[0].mxu0
        %5259 = vdwg.mxu0
        %v5261 = vsel %vm3467, %v4196, 0
        %5263 = vmatprep.subr.bf16.mxu0 0
        %5264 = vmatpush1.bf16.msra.mxu0 %v1952
        %5265 = vmatprep.subr.bf16.mxu0 0
        %5266 = vmatpush1.bf16.msra.mxu0 0
        %5267 = vmatprep.subr.bf16.mxu0 0
        %5268 = vmatpush1.bf16.msra.mxu0 0
        %5269 = vmatprep.subr.bf16.mxu0 0
        %5270 = vmatpush1.bf16.msra.mxu0 0
        %5271 = vmatprep.subr.bf16.mxu0 0
        %5272 = vmatpush1.bf16.msra.mxu0 0
        %5273 = vmatprep.subr.bf16.mxu0 0
        %5274 = vmatpush1.bf16.msra.mxu0 0
        %5275 = vmatprep.subr.bf16.mxu0 0
        %5276 = vmatpush1.bf16.msra.mxu0 0
        %5277 = vmatprep.subr.bf16.mxu0 0
        %5278 = vmatpush1.bf16.msra.mxu0 0
        %5279 = vmatprep.subr.bf16.mxu0 0
        %5280 = vmatpush1.bf16.msra.mxu0 0
        %5281 = vmatprep.subr.bf16.mxu0 0
        %5282 = vmatpush1.bf16.msra.mxu0 0
        %5283 = vmatprep.subr.bf16.mxu0 0
        %5284 = vmatpush1.bf16.msra.mxu0 0
        %5285 = vmatprep.subr.bf16.mxu0 0
        %5286 = vmatpush1.bf16.msra.mxu0 0
        %5287 = vmatprep.subr.bf16.mxu0 0
        %5288 = vmatpush1.bf16.msra.mxu0 0
        %5289 = vmatprep.subr.bf16.mxu0 0
        %5290 = vmatpush1.bf16.msra.mxu0 0
        %5291 = vmatprep.subr.bf16.mxu0 0
        %5292 = vmatpush1.bf16.msra.mxu0 0
        %5293 = vmatprep.subr.bf16.mxu0 0
        %5294 = vmatpush1.bf16.msra.mxu0 0
        %5295 = vmatprep.mubr.bf16.mxu0 0
        %5296 = vmatmul.mubr.bf16.gmra.mrb[0].mxu0 %v5261
        %v5297 = vpop.f32.mrb[0].mxu0
        %v5298 = vadd.f32 0.0, %v5297
        %v5299 = vpop.f32.mrb[0].mxu0
        %v5300 = vpop.f32.mrb[0].mxu0
        %v5301 = vadd.f32 0.0, %v5300
        %v5302 = vpop.f32.mrb[0].mxu0
        %5303 = vdwg.mxu0
        %v5305 = vsel %vm3467, %v4197, 0
        %5307 = vmatprep.subr.bf16.mxu0 0
        %5308 = vmatpush1.bf16.msra.mxu0 %v1953
        %5309 = vmatprep.subr.bf16.mxu0 0
        %5310 = vmatpush1.bf16.msra.mxu0 0
        %5311 = vmatprep.subr.bf16.mxu0 0
        %5312 = vmatpush1.bf16.msra.mxu0 0
        %5313 = vmatprep.subr.bf16.mxu0 0
        %5314 = vmatpush1.bf16.msra.mxu0 0
        %5315 = vmatprep.subr.bf16.mxu0 0
        %5316 = vmatpush1.bf16.msra.mxu0 0
        %5317 = vmatprep.subr.bf16.mxu0 0
        %5318 = vmatpush1.bf16.msra.mxu0 0
        %5319 = vmatprep.subr.bf16.mxu0 0
        %5320 = vmatpush1.bf16.msra.mxu0 0
        %5321 = vmatprep.subr.bf16.mxu0 0
        %5322 = vmatpush1.bf16.msra.mxu0 0
        %5323 = vmatprep.subr.bf16.mxu0 0
        %5324 = vmatpush1.bf16.msra.mxu0 0
        %5325 = vmatprep.subr.bf16.mxu0 0
        %5326 = vmatpush1.bf16.msra.mxu0 0
        %5327 = vmatprep.subr.bf16.mxu0 0
        %5328 = vmatpush1.bf16.msra.mxu0 0
        %5329 = vmatprep.subr.bf16.mxu0 0
        %5330 = vmatpush1.bf16.msra.mxu0 0
        %5331 = vmatprep.subr.bf16.mxu0 0
        %5332 = vmatpush1.bf16.msra.mxu0 0
        %5333 = vmatprep.subr.bf16.mxu0 0
        %5334 = vmatpush1.bf16.msra.mxu0 0
        %5335 = vmatprep.subr.bf16.mxu0 0
        %5336 = vmatpush1.bf16.msra.mxu0 0
        %5337 = vmatprep.subr.bf16.mxu0 0
        %5338 = vmatpush1.bf16.msra.mxu0 0
        %5339 = vmatprep.mubr.bf16.mxu0 0
        %5340 = vmatmul.mubr.bf16.gmra.mrb[0].mxu0 %v5305
        %v5341 = vpop.f32.mrb[0].mxu0
        %v5342 = vadd.f32 0.0, %v5341
        %v5343 = vpop.f32.mrb[0].mxu0
        %v5344 = vpop.f32.mrb[0].mxu0
        %v5345 = vadd.f32 0.0, %v5344
        %v5346 = vpop.f32.mrb[0].mxu0
        %5347 = vdwg.mxu0
        %v5349 = vsel %vm3467, %v4198, 0
        %5351 = vmatprep.subr.bf16.mxu0 0
        %5352 = vmatpush1.bf16.msra.mxu0 %v1954
        %5353 = vmatprep.subr.bf16.mxu0 0
        %5354 = vmatpush1.bf16.msra.mxu0 0
        %5355 = vmatprep.subr.bf16.mxu0 0
        %5356 = vmatpush1.bf16.msra.mxu0 0
        %5357 = vmatprep.subr.bf16.mxu0 0
        %5358 = vmatpush1.bf16.msra.mxu0 0
        %5359 = vmatprep.subr.bf16.mxu0 0
        %5360 = vmatpush1.bf16.msra.mxu0 0
        %5361 = vmatprep.subr.bf16.mxu0 0
        %5362 = vmatpush1.bf16.msra.mxu0 0
        %5363 = vmatprep.subr.bf16.mxu0 0
        %5364 = vmatpush1.bf16.msra.mxu0 0
        %5365 = vmatprep.subr.bf16.mxu0 0
        %5366 = vmatpush1.bf16.msra.mxu0 0
        %5367 = vmatprep.subr.bf16.mxu0 0
        %5368 = vmatpush1.bf16.msra.mxu0 0
        %5369 = vmatprep.subr.bf16.mxu0 0
        %5370 = vmatpush1.bf16.msra.mxu0 0
        %5371 = vmatprep.subr.bf16.mxu0 0
        %5372 = vmatpush1.bf16.msra.mxu0 0
        %5373 = vmatprep.subr.bf16.mxu0 0
        %5374 = vmatpush1.bf16.msra.mxu0 0
        %5375 = vmatprep.subr.bf16.mxu0 0
        %5376 = vmatpush1.bf16.msra.mxu0 0
        %5377 = vmatprep.subr.bf16.mxu0 0
        %5378 = vmatpush1.bf16.msra.mxu0 0
        %5379 = vmatprep.subr.bf16.mxu0 0
        %5380 = vmatpush1.bf16.msra.mxu0 0
        %5381 = vmatprep.subr.bf16.mxu0 0
        %5382 = vmatpush1.bf16.msra.mxu0 0
        %5383 = vmatprep.mubr.bf16.mxu0 0
        %5384 = vmatmul.mubr.bf16.gmra.mrb[0].mxu0 %v5349
        %v5385 = vpop.f32.mrb[0].mxu0
        %v5386 = vadd.f32 0.0, %v5385
        %v5387 = vpop.f32.mrb[0].mxu0
        %v5388 = vpop.f32.mrb[0].mxu0
        %v5389 = vadd.f32 0.0, %v5388
        %v5390 = vpop.f32.mrb[0].mxu0
        %5391 = vdwg.mxu0
        %v5393 = vsel %vm3467, %v4199, 0
        %5395 = vmatprep.subr.bf16.mxu0 0
        %5396 = vmatpush1.bf16.msra.mxu0 %v1955
        %5397 = vmatprep.subr.bf16.mxu0 0
        %5398 = vmatpush1.bf16.msra.mxu0 0
        %5399 = vmatprep.subr.bf16.mxu0 0
        %5400 = vmatpush1.bf16.msra.mxu0 0
        %5401 = vmatprep.subr.bf16.mxu0 0
        %5402 = vmatpush1.bf16.msra.mxu0 0
        %5403 = vmatprep.subr.bf16.mxu0 0
        %5404 = vmatpush1.bf16.msra.mxu0 0
        %5405 = vmatprep.subr.bf16.mxu0 0
        %5406 = vmatpush1.bf16.msra.mxu0 0
        %5407 = vmatprep.subr.bf16.mxu0 0
        %5408 = vmatpush1.bf16.msra.mxu0 0
        %5409 = vmatprep.subr.bf16.mxu0 0
        %5410 = vmatpush1.bf16.msra.mxu0 0
        %5411 = vmatprep.subr.bf16.mxu0 0
        %5412 = vmatpush1.bf16.msra.mxu0 0
        %5413 = vmatprep.subr.bf16.mxu0 0
        %5414 = vmatpush1.bf16.msra.mxu0 0
        %5415 = vmatprep.subr.bf16.mxu0 0
        %5416 = vmatpush1.bf16.msra.mxu0 0
        %5417 = vmatprep.subr.bf16.mxu0 0
        %5418 = vmatpush1.bf16.msra.mxu0 0
        %5419 = vmatprep.subr.bf16.mxu0 0
        %5420 = vmatpush1.bf16.msra.mxu0 0
        %5421 = vmatprep.subr.bf16.mxu0 0
        %5422 = vmatpush1.bf16.msra.mxu0 0
        %5423 = vmatprep.subr.bf16.mxu0 0
        %5424 = vmatpush1.bf16.msra.mxu0 0
        %5425 = vmatprep.subr.bf16.mxu0 0
        %5426 = vmatpush1.bf16.msra.mxu0 0
        %5427 = vmatprep.mubr.bf16.mxu0 0
        %5428 = vmatmul.mubr.bf16.gmra.mrb[0].mxu0 %v5393
        %v5429 = vpop.f32.mrb[0].mxu0
        %v5430 = vadd.f32 0.0, %v5429
        %v5431 = vpop.f32.mrb[0].mxu0
        %v5432 = vpop.f32.mrb[0].mxu0
        %v5433 = vadd.f32 0.0, %v5432
        %v5434 = vpop.f32.mrb[0].mxu0
        %5435 = vdwg.mxu0
        %v5437 = vsel %vm3467, %v4200, 0
        %5439 = vmatprep.subr.bf16.mxu0 0
        %5440 = vmatpush1.bf16.msra.mxu0 %v1956
        %5441 = vmatprep.subr.bf16.mxu0 0
        %5442 = vmatpush1.bf16.msra.mxu0 0
        %5443 = vmatprep.subr.bf16.mxu0 0
        %5444 = vmatpush1.bf16.msra.mxu0 0
        %5445 = vmatprep.subr.bf16.mxu0 0
        %5446 = vmatpush1.bf16.msra.mxu0 0
        %5447 = vmatprep.subr.bf16.mxu0 0
        %5448 = vmatpush1.bf16.msra.mxu0 0
        %5449 = vmatprep.subr.bf16.mxu0 0
        %5450 = vmatpush1.bf16.msra.mxu0 0
        %5451 = vmatprep.subr.bf16.mxu0 0
        %5452 = vmatpush1.bf16.msra.mxu0 0
        %5453 = vmatprep.subr.bf16.mxu0 0
        %5454 = vmatpush1.bf16.msra.mxu0 0
        %5455 = vmatprep.subr.bf16.mxu0 0
        %5456 = vmatpush1.bf16.msra.mxu0 0
        %5457 = vmatprep.subr.bf16.mxu0 0
        %5458 = vmatpush1.bf16.msra.mxu0 0
        %5459 = vmatprep.subr.bf16.mxu0 0
        %5460 = vmatpush1.bf16.msra.mxu0 0
        %5461 = vmatprep.subr.bf16.mxu0 0
        %5462 = vmatpush1.bf16.msra.mxu0 0
        %5463 = vmatprep.subr.bf16.mxu0 0
        %5464 = vmatpush1.bf16.msra.mxu0 0
        %5465 = vmatprep.subr.bf16.mxu0 0
        %5466 = vmatpush1.bf16.msra.mxu0 0
        %5467 = vmatprep.subr.bf16.mxu0 0
        %5468 = vmatpush1.bf16.msra.mxu0 0
        %5469 = vmatprep.subr.bf16.mxu0 0
        %5470 = vmatpush1.bf16.msra.mxu0 0
        %5471 = vmatprep.mubr.bf16.mxu0 0
        %5472 = vmatmul.mubr.bf16.gmra.mrb[0].mxu0 %v5437
        %v5473 = vpop.f32.mrb[0].mxu0
        %v5474 = vadd.f32 0.0, %v5473
        %v5475 = vpop.f32.mrb[0].mxu0
        %v5476 = vpop.f32.mrb[0].mxu0
        %v5477 = vadd.f32 0.0, %v5476
        %v5478 = vpop.f32.mrb[0].mxu0
        %5479 = vdwg.mxu0
        %v5481 = vsel %vm3467, %v4201, 0
        %5483 = vmatprep.subr.bf16.mxu0 0
        %5484 = vmatpush1.bf16.msra.mxu0 %v1957
        %5485 = vmatprep.subr.bf16.mxu0 0
        %5486 = vmatpush1.bf16.msra.mxu0 0
        %5487 = vmatprep.subr.bf16.mxu0 0
        %5488 = vmatpush1.bf16.msra.mxu0 0
        %5489 = vmatprep.subr.bf16.mxu0 0
        %5490 = vmatpush1.bf16.msra.mxu0 0
        %5491 = vmatprep.subr.bf16.mxu0 0
        %5492 = vmatpush1.bf16.msra.mxu0 0
        %5493 = vmatprep.subr.bf16.mxu0 0
        %5494 = vmatpush1.bf16.msra.mxu0 0
        %5495 = vmatprep.subr.bf16.mxu0 0
        %5496 = vmatpush1.bf16.msra.mxu0 0
        %5497 = vmatprep.subr.bf16.mxu0 0
        %5498 = vmatpush1.bf16.msra.mxu0 0
        %5499 = vmatprep.subr.bf16.mxu0 0
        %5500 = vmatpush1.bf16.msra.mxu0 0
        %5501 = vmatprep.subr.bf16.mxu0 0
        %5502 = vmatpush1.bf16.msra.mxu0 0
        %5503 = vmatprep.subr.bf16.mxu0 0
        %5504 = vmatpush1.bf16.msra.mxu0 0
        %5505 = vmatprep.subr.bf16.mxu0 0
        %5506 = vmatpush1.bf16.msra.mxu0 0
        %5507 = vmatprep.subr.bf16.mxu0 0
        %5508 = vmatpush1.bf16.msra.mxu0 0
        %5509 = vmatprep.subr.bf16.mxu0 0
        %5510 = vmatpush1.bf16.msra.mxu0 0
        %5511 = vmatprep.subr.bf16.mxu0 0
        %5512 = vmatpush1.bf16.msra.mxu0 0
        %5513 = vmatprep.subr.bf16.mxu0 0
        %5514 = vmatpush1.bf16.msra.mxu0 0
        %5515 = vmatprep.mubr.bf16.mxu0 0
        %5516 = vmatmul.mubr.bf16.gmra.mrb[0].mxu0 %v5481
        %v5517 = vpop.f32.mrb[0].mxu0
        %v5518 = vadd.f32 0.0, %v5517
        %v5519 = vpop.f32.mrb[0].mxu0
        %v5520 = vpop.f32.mrb[0].mxu0
        %v5521 = vadd.f32 0.0, %v5520
        %v5522 = vpop.f32.mrb[0].mxu0
        %5523 = vdwg.mxu0
        %v5525 = vsel %vm3467, %v4202, 0
        %5527 = vmatprep.subr.bf16.mxu0 0
        %5528 = vmatpush1.bf16.msra.mxu0 %v1958
        %5529 = vmatprep.subr.bf16.mxu0 0
        %5530 = vmatpush1.bf16.msra.mxu0 0
        %5531 = vmatprep.subr.bf16.mxu0 0
        %5532 = vmatpush1.bf16.msra.mxu0 0
        %5533 = vmatprep.subr.bf16.mxu0 0
        %5534 = vmatpush1.bf16.msra.mxu0 0
        %5535 = vmatprep.subr.bf16.mxu0 0
        %5536 = vmatpush1.bf16.msra.mxu0 0
        %5537 = vmatprep.subr.bf16.mxu0 0
        %5538 = vmatpush1.bf16.msra.mxu0 0
        %5539 = vmatprep.subr.bf16.mxu0 0
        %5540 = vmatpush1.bf16.msra.mxu0 0
        %5541 = vmatprep.subr.bf16.mxu0 0
        %5542 = vmatpush1.bf16.msra.mxu0 0
        %5543 = vmatprep.subr.bf16.mxu0 0
        %5544 = vmatpush1.bf16.msra.mxu0 0
        %5545 = vmatprep.subr.bf16.mxu0 0
        %5546 = vmatpush1.bf16.msra.mxu0 0
        %5547 = vmatprep.subr.bf16.mxu0 0
        %5548 = vmatpush1.bf16.msra.mxu0 0
        %5549 = vmatprep.subr.bf16.mxu0 0
        %5550 = vmatpush1.bf16.msra.mxu0 0
        %5551 = vmatprep.subr.bf16.mxu0 0
        %5552 = vmatpush1.bf16.msra.mxu0 0
        %5553 = vmatprep.subr.bf16.mxu0 0
        %5554 = vmatpush1.bf16.msra.mxu0 0
        %5555 = vmatprep.subr.bf16.mxu0 0
        %5556 = vmatpush1.bf16.msra.mxu0 0
        %5557 = vmatprep.subr.bf16.mxu0 0
        %5558 = vmatpush1.bf16.msra.mxu0 0
        %5559 = vmatprep.mubr.bf16.mxu0 0
        %5560 = vmatmul.mubr.bf16.gmra.mrb[0].mxu0 %v5525
        %v5561 = vpop.f32.mrb[0].mxu0
        %v5562 = vadd.f32 0.0, %v5561
        %v5563 = vpop.f32.mrb[0].mxu0
        %v5564 = vpop.f32.mrb[0].mxu0
        %v5565 = vadd.f32 0.0, %v5564
        %v5566 = vpop.f32.mrb[0].mxu0
        %5567 = vdwg.mxu0
        %v5569 = vsel %vm3467, %v4203, 0
        %5571 = vmatprep.subr.bf16.mxu0 0
        %5572 = vmatpush1.bf16.msra.mxu0 %v1959
        %5573 = vmatprep.subr.bf16.mxu0 0
        %5574 = vmatpush1.bf16.msra.mxu0 0
        %5575 = vmatprep.subr.bf16.mxu0 0
        %5576 = vmatpush1.bf16.msra.mxu0 0
        %5577 = vmatprep.subr.bf16.mxu0 0
        %5578 = vmatpush1.bf16.msra.mxu0 0
        %5579 = vmatprep.subr.bf16.mxu0 0
        %5580 = vmatpush1.bf16.msra.mxu0 0
        %5581 = vmatprep.subr.bf16.mxu0 0
        %5582 = vmatpush1.bf16.msra.mxu0 0
        %5583 = vmatprep.subr.bf16.mxu0 0
        %5584 = vmatpush1.bf16.msra.mxu0 0
        %5585 = vmatprep.subr.bf16.mxu0 0
        %5586 = vmatpush1.bf16.msra.mxu0 0
        %5587 = vmatprep.subr.bf16.mxu0 0
        %5588 = vmatpush1.bf16.msra.mxu0 0
        %5589 = vmatprep.subr.bf16.mxu0 0
        %5590 = vmatpush1.bf16.msra.mxu0 0
        %5591 = vmatprep.subr.bf16.mxu0 0
        %5592 = vmatpush1.bf16.msra.mxu0 0
        %5593 = vmatprep.subr.bf16.mxu0 0
        %5594 = vmatpush1.bf16.msra.mxu0 0
        %5595 = vmatprep.subr.bf16.mxu0 0
        %5596 = vmatpush1.bf16.msra.mxu0 0
        %5597 = vmatprep.subr.bf16.mxu0 0
        %5598 = vmatpush1.bf16.msra.mxu0 0
        %5599 = vmatprep.subr.bf16.mxu0 0
        %5600 = vmatpush1.bf16.msra.mxu0 0
        %5601 = vmatprep.subr.bf16.mxu0 0
        %5602 = vmatpush1.bf16.msra.mxu0 0
        %5603 = vmatprep.mubr.bf16.mxu0 0
        %5604 = vmatmul.mubr.bf16.gmra.mrb[0].mxu0 %v5569
        %v5605 = vpop.f32.mrb[0].mxu0
        %v5606 = vadd.f32 0.0, %v5605
        %v5607 = vpop.f32.mrb[0].mxu0
        %v5608 = vpop.f32.mrb[0].mxu0
        %v5609 = vadd.f32 0.0, %v5608
        %v5610 = vpop.f32.mrb[0].mxu0
        %5611 = vdwg.mxu0
        %5628 = vrot.lane.b32.xlu0 %v4594, 32
        %v5629 = vpop.permute.xlu0 %5628
        %5630 = vrot.lane.b32.xlu0 %v4597, 32
        %v5631 = vpop.permute.xlu0 %5630
        %5632 = vrot.lane.b32.xlu0 %v4638, 32
        %v5633 = vpop.permute.xlu0 %5632
        %5634 = vrot.lane.b32.xlu0 %v4641, 32
        %v5635 = vpop.permute.xlu0 %5634
        %5636 = vrot.lane.b32.xlu0 %v4682, 32
        %v5637 = vpop.permute.xlu0 %5636
        %5638 = vrot.lane.b32.xlu0 %v4685, 32
        %v5639 = vpop.permute.xlu0 %5638
        %5640 = vrot.lane.b32.xlu0 %v4726, 32
        %v5641 = vpop.permute.xlu0 %5640
        %5642 = vrot.lane.b32.xlu0 %v4729, 32
        %v5643 = vpop.permute.xlu0 %5642
        %5644 = vrot.lane.b32.xlu0 %v4770, 32
        %v5645 = vpop.permute.xlu0 %5644
        %5646 = vrot.lane.b32.xlu0 %v4773, 32
        %v5647 = vpop.permute.xlu0 %5646
        %5648 = vrot.lane.b32.xlu0 %v4814, 32
        %v5649 = vpop.permute.xlu0 %5648
        %5650 = vrot.lane.b32.xlu0 %v4817, 32
        %v5651 = vpop.permute.xlu0 %5650
        %5652 = vrot.lane.b32.xlu0 %v4858, 32
        %v5653 = vpop.permute.xlu0 %5652
        %5654 = vrot.lane.b32.xlu0 %v4861, 32
        %v5655 = vpop.permute.xlu0 %5654
        %5656 = vrot.lane.b32.xlu0 %v4902, 32
        %v5657 = vpop.permute.xlu0 %5656
        %5658 = vrot.lane.b32.xlu0 %v4905, 32
        %v5659 = vpop.permute.xlu0 %5658
        %5692 = vrot.lane.b32.xlu0 %v4946, 64
        %v5693 = vpop.permute.xlu0 %5692
        %5694 = vrot.lane.b32.xlu0 %v4949, 64
        %v5695 = vpop.permute.xlu0 %5694
        %5696 = vrot.lane.b32.xlu0 %v4990, 64
        %v5697 = vpop.permute.xlu0 %5696
        %5698 = vrot.lane.b32.xlu0 %v4993, 64
        %v5699 = vpop.permute.xlu0 %5698
        %5700 = vrot.lane.b32.xlu0 %v5034, 64
        %v5701 = vpop.permute.xlu0 %5700
        %5702 = vrot.lane.b32.xlu0 %v5037, 64
        %v5703 = vpop.permute.xlu0 %5702
        %5704 = vrot.lane.b32.xlu0 %v5078, 64
        %v5705 = vpop.permute.xlu0 %5704
        %5706 = vrot.lane.b32.xlu0 %v5081, 64
        %v5707 = vpop.permute.xlu0 %5706
        %5708 = vrot.lane.b32.xlu0 %v5122, 64
        %v5709 = vpop.permute.xlu0 %5708
        %5710 = vrot.lane.b32.xlu0 %v5125, 64
        %v5711 = vpop.permute.xlu0 %5710
        %5712 = vrot.lane.b32.xlu0 %v5166, 64
        %v5713 = vpop.permute.xlu0 %5712
        %5714 = vrot.lane.b32.xlu0 %v5169, 64
        %v5715 = vpop.permute.xlu0 %5714
        %5716 = vrot.lane.b32.xlu0 %v5210, 64
        %v5717 = vpop.permute.xlu0 %5716
        %5718 = vrot.lane.b32.xlu0 %v5213, 64
        %v5719 = vpop.permute.xlu0 %5718
        %5720 = vrot.lane.b32.xlu0 %v5254, 64
        %v5721 = vpop.permute.xlu0 %5720
        %5722 = vrot.lane.b32.xlu0 %v5257, 64
        %v5723 = vpop.permute.xlu0 %5722
        %5756 = vrot.lane.b32.xlu0 %v5298, 96
        %v5757 = vpop.permute.xlu0 %5756
        %5758 = vrot.lane.b32.xlu0 %v5301, 96
        %v5759 = vpop.permute.xlu0 %5758
        %5760 = vrot.lane.b32.xlu0 %v5342, 96
        %v5761 = vpop.permute.xlu0 %5760
        %5762 = vrot.lane.b32.xlu0 %v5345, 96
        %v5763 = vpop.permute.xlu0 %5762
        %5764 = vrot.lane.b32.xlu0 %v5386, 96
        %v5765 = vpop.permute.xlu0 %5764
        %5766 = vrot.lane.b32.xlu0 %v5389, 96
        %v5767 = vpop.permute.xlu0 %5766
        %5768 = vrot.lane.b32.xlu0 %v5430, 96
        %v5769 = vpop.permute.xlu0 %5768
        %5770 = vrot.lane.b32.xlu0 %v5433, 96
        %v5771 = vpop.permute.xlu0 %5770
        %5772 = vrot.lane.b32.xlu0 %v5474, 96
        %v5773 = vpop.permute.xlu0 %5772
        %5774 = vrot.lane.b32.xlu0 %v5477, 96
        %v5775 = vpop.permute.xlu0 %5774
        %5776 = vrot.lane.b32.xlu0 %v5518, 96
        %v5777 = vpop.permute.xlu0 %5776
        %5778 = vrot.lane.b32.xlu0 %v5521, 96
        %v5779 = vpop.permute.xlu0 %5778
        %5780 = vrot.lane.b32.xlu0 %v5562, 96
        %v5781 = vpop.permute.xlu0 %5780
        %5782 = vrot.lane.b32.xlu0 %v5565, 96
        %v5783 = vpop.permute.xlu0 %5782
        %5784 = vrot.lane.b32.xlu0 %v5606, 96
        %v5785 = vpop.permute.xlu0 %5784
        %5786 = vrot.lane.b32.xlu0 %v5609, 96
        %v5787 = vpop.permute.xlu0 %5786
        %v5804 = vsel %vm1962, %v4242, %v5629
        %v5805 = vsel %vm1962, %v4245, %v5631
        %v5806 = vsel %vm1962, %v4286, %v5633
        %v5807 = vsel %vm1962, %v4289, %v5635
        %v5808 = vsel %vm1962, %v4330, %v5637
        %v5809 = vsel %vm1962, %v4333, %v5639
        %v5810 = vsel %vm1962, %v4374, %v5641
        %v5811 = vsel %vm1962, %v4377, %v5643
        %v5812 = vsel %vm1962, %v4418, %v5645
        %v5813 = vsel %vm1962, %v4421, %v5647
        %v5814 = vsel %vm1962, %v4462, %v5649
        %v5815 = vsel %vm1962, %v4465, %v5651
        %v5816 = vsel %vm1962, %v4506, %v5653
        %v5817 = vsel %vm1962, %v4509, %v5655
        %v5818 = vsel %vm1962, %v4550, %v5657
        %v5819 = vsel %vm1962, %v4553, %v5659
        %vm5820 = vcmask 523264
        %v5821 = vsel %vm5820, %v5804, %v5693
        %v5822 = vsel %vm5820, %v5805, %v5695
        %v5823 = vsel %vm5820, %v5806, %v5697
        %v5824 = vsel %vm5820, %v5807, %v5699
        %v5825 = vsel %vm5820, %v5808, %v5701
        %v5826 = vsel %vm5820, %v5809, %v5703
        %v5827 = vsel %vm5820, %v5810, %v5705
        %v5828 = vsel %vm5820, %v5811, %v5707
        %v5829 = vsel %vm5820, %v5812, %v5709
        %v5830 = vsel %vm5820, %v5813, %v5711
        %v5831 = vsel %vm5820, %v5814, %v5713
        %v5832 = vsel %vm5820, %v5815, %v5715
        %v5833 = vsel %vm5820, %v5816, %v5717
        %v5834 = vsel %vm5820, %v5817, %v5719
        %v5835 = vsel %vm5820, %v5818, %v5721
        %v5836 = vsel %vm5820, %v5819, %v5723
        %vm5837 = vcmask 785408
        %v5838 = vsel %vm5837, %v5821, %v5757
        %v5839 = vsel %vm5837, %v5822, %v5759
        %v5840 = vsel %vm5837, %v5823, %v5761
        %v5841 = vsel %vm5837, %v5824, %v5763
        %v5842 = vsel %vm5837, %v5825, %v5765
        %v5843 = vsel %vm5837, %v5826, %v5767
        %v5844 = vsel %vm5837, %v5827, %v5769
        %v5845 = vsel %vm5837, %v5828, %v5771
        %v5846 = vsel %vm5837, %v5829, %v5773
        %v5847 = vsel %vm5837, %v5830, %v5775
        %v5848 = vsel %vm5837, %v5831, %v5777
        %v5849 = vsel %vm5837, %v5832, %v5779
        %v5850 = vsel %vm5837, %v5833, %v5781
        %v5851 = vsel %vm5837, %v5834, %v5783
        %v5852 = vsel %vm5837, %v5835, %v5785
        %v5853 = vsel %vm5837, %v5836, %v5787
        %v5854 = vpack.c.bf16 %v5839, %v5838
        %v5855 = vpack.c.bf16 %v5841, %v5840
        %v5856 = vpack.c.bf16 %v5843, %v5842
        %v5857 = vpack.c.bf16 %v5845, %v5844
        %v5858 = vpack.c.bf16 %v5847, %v5846
        %v5859 = vpack.c.bf16 %v5849, %v5848
        %v5860 = vpack.c.bf16 %v5851, %v5850
        %v5861 = vpack.c.bf16 %v5853, %v5852
        %v5862 = vld [vmem:[%s744] sm:$0xf]
        %v5863 = vld [vmem:[%s744 + $0x4] sm:$0xf]
        %v5864 = vld [vmem:[%s744 + $0x8] sm:$0xf]
        %v5865 = vld [vmem:[%s744 + $0xc] sm:$0xf]
        %v5866 = vld [vmem:[%s744 + $0x10] sm:$0xf]
        %v5867 = vld [vmem:[%s744 + $0x14] sm:$0xf]
        %v5868 = vld [vmem:[%s744 + $0x18] sm:$0xf]
        %v5869 = vld [vmem:[%s744 + $0x1c] sm:$0xf]
        %v5870 = vld [vmem:[%s744 + $0x20] sm:$0xf]
        %v5871 = vld [vmem:[%s744 + $0x24] sm:$0xf]
        %v5872 = vld [vmem:[%s744 + $0x28] sm:$0xf]
        %v5873 = vld [vmem:[%s744 + $0x2c] sm:$0xf]
        %v5874 = vld [vmem:[%s744 + $0x30] sm:$0xf]
        %v5875 = vld [vmem:[%s744 + $0x34] sm:$0xf]
        %v5876 = vld [vmem:[%s744 + $0x38] sm:$0xf]
        %v5877 = vld [vmem:[%s744 + $0x3c] sm:$0xf]
        %v5878 = vld [vmem:[%s752] sm:$0x1]
        %v5880 = vlaneseq
        %v5881 = vshrl.u32 %v5880, 7
        %v5882 = vsub.s32 0, %v5881
        %v5883 = vrot.slane %v5878, %v5882
        %v5901 = vunpack.c.l.b16 %v5862
        %v5902 = vunpack.c.l.b16 %v5863
        %v5903 = vunpack.c.l.b16 %v5864
        %v5904 = vunpack.c.l.b16 %v5865
        %v5905 = vunpack.c.l.b16 %v5866
        %v5906 = vunpack.c.l.b16 %v5867
        %v5907 = vunpack.c.l.b16 %v5868
        %v5908 = vunpack.c.l.b16 %v5869
        %v5909 = vunpack.c.l.b16 %v5870
        %v5910 = vunpack.c.l.b16 %v5871
        %v5911 = vunpack.c.l.b16 %v5872
        %v5912 = vunpack.c.l.b16 %v5873
        %v5913 = vunpack.c.l.b16 %v5874
        %v5914 = vunpack.c.l.b16 %v5875
        %v5915 = vunpack.c.l.b16 %v5876
        %v5916 = vunpack.c.l.b16 %v5877
        %v5917 = vpack.c.b16 %v5902, %v5901
        %v5918 = vpack.c.b16 %v5904, %v5903
        %v5919 = vpack.c.b16 %v5906, %v5905
        %v5920 = vpack.c.b16 %v5908, %v5907
        %v5921 = vpack.c.b16 %v5910, %v5909
        %v5922 = vpack.c.b16 %v5912, %v5911
        %v5923 = vpack.c.b16 %v5914, %v5913
        %v5924 = vpack.c.b16 %v5916, %v5915
        %5933 = vmatprep.subr.bf16.mxu0 0
        %5934 = vmatpush1.bf16.msra.mxu0 %v5917
        %5935 = vmatprep.subr.bf16.mxu0 0
        %5936 = vmatpush1.bf16.msra.mxu0 %v5918
        %5937 = vmatprep.subr.bf16.mxu0 0
        %5938 = vmatpush1.bf16.msra.mxu0 %v5919
        %5939 = vmatprep.subr.bf16.mxu0 0
        %5940 = vmatpush1.bf16.msra.mxu0 %v5920
        %5941 = vmatprep.subr.bf16.mxu0 0
        %5942 = vmatpush1.bf16.msra.mxu0 %v5921
        %5943 = vmatprep.subr.bf16.mxu0 0
        %5944 = vmatpush1.bf16.msra.mxu0 %v5922
        %5945 = vmatprep.subr.bf16.mxu0 0
        %5946 = vmatpush1.bf16.msra.mxu0 %v5923
        %5947 = vmatprep.subr.bf16.mxu0 0
        %5948 = vmatpush1.bf16.msra.mxu0 %v5924
        %5949 = vmatprep.subr.bf16.mxu0 0
        %5950 = vmatpush1.bf16.msra.mxu0 0
        %5951 = vmatprep.subr.bf16.mxu0 0
        %5952 = vmatpush1.bf16.msra.mxu0 0
        %5953 = vmatprep.subr.bf16.mxu0 0
        %5954 = vmatpush1.bf16.msra.mxu0 0
        %5955 = vmatprep.subr.bf16.mxu0 0
        %5956 = vmatpush1.bf16.msra.mxu0 0
        %5957 = vmatprep.subr.bf16.mxu0 0
        %5958 = vmatpush1.bf16.msra.mxu0 0
        %5959 = vmatprep.subr.bf16.mxu0 0
        %5960 = vmatpush1.bf16.msra.mxu0 0
        %5961 = vmatprep.subr.bf16.mxu0 0
        %5962 = vmatpush1.bf16.msra.mxu0 0
        %5963 = vmatprep.subr.bf16.mxu0 0
        %5964 = vmatpush1.bf16.msra.mxu0 0
        %5965 = vmatprep.mubr.bf16.mxu0 0
        %5966 = vmatmul.mubr.bf16.gmra.mrb[0].mxu0 %v5854
        %v5967 = vpop.f32.mrb[0].mxu0
        %v5968 = vadd.f32 %v5883, %v5967
        %v5969 = vpop.f32.mrb[0].mxu0
        %v5970 = vpop.f32.mrb[0].mxu0
        %v5971 = vadd.f32 %v5883, %v5970
        %v5972 = vpop.f32.mrb[0].mxu0
        %5973 = vmatprep.mubr.bf16.mxu0 0
        %5974 = vmatmul.mubr.bf16.gmra.mrb[0].mxu0 %v5855
        %v5975 = vpop.f32.mrb[0].mxu0
        %v5976 = vadd.f32 %v5883, %v5975
        %v5977 = vpop.f32.mrb[0].mxu0
        %v5978 = vpop.f32.mrb[0].mxu0
        %v5979 = vadd.f32 %v5883, %v5978
        %v5980 = vpop.f32.mrb[0].mxu0
        %5981 = vmatprep.mubr.bf16.mxu0 0
        %5982 = vmatmul.mubr.bf16.gmra.mrb[0].mxu0 %v5856
        %v5983 = vpop.f32.mrb[0].mxu0
        %v5984 = vadd.f32 %v5883, %v5983
        %v5985 = vpop.f32.mrb[0].mxu0
        %v5986 = vpop.f32.mrb[0].mxu0
        %v5987 = vadd.f32 %v5883, %v5986
        %v5988 = vpop.f32.mrb[0].mxu0
        %5989 = vmatprep.mubr.bf16.mxu0 0
        %5990 = vmatmul.mubr.bf16.gmra.mrb[0].mxu0 %v5857
        %v5991 = vpop.f32.mrb[0].mxu0
        %v5992 = vadd.f32 %v5883, %v5991
        %v5993 = vpop.f32.mrb[0].mxu0
        %v5994 = vpop.f32.mrb[0].mxu0
        %v5995 = vadd.f32 %v5883, %v5994
        %v5996 = vpop.f32.mrb[0].mxu0
        %5997 = vmatprep.mubr.bf16.mxu0 0
        %5998 = vmatmul.mubr.bf16.gmra.mrb[0].mxu0 %v5858
        %v5999 = vpop.f32.mrb[0].mxu0
        %v6000 = vadd.f32 %v5883, %v5999
        %v6001 = vpop.f32.mrb[0].mxu0
        %v6002 = vpop.f32.mrb[0].mxu0
        %v6003 = vadd.f32 %v5883, %v6002
        %v6004 = vpop.f32.mrb[0].mxu0
        %6005 = vmatprep.mubr.bf16.mxu0 0
        %6006 = vmatmul.mubr.bf16.gmra.mrb[0].mxu0 %v5859
        %v6007 = vpop.f32.mrb[0].mxu0
        %v6008 = vadd.f32 %v5883, %v6007
        %v6009 = vpop.f32.mrb[0].mxu0
        %v6010 = vpop.f32.mrb[0].mxu0
        %v6011 = vadd.f32 %v5883, %v6010
        %v6012 = vpop.f32.mrb[0].mxu0
        %6013 = vmatprep.mubr.bf16.mxu0 0
        %6014 = vmatmul.mubr.bf16.gmra.mrb[0].mxu0 %v5860
        %v6015 = vpop.f32.mrb[0].mxu0
        %v6016 = vadd.f32 %v5883, %v6015
        %v6017 = vpop.f32.mrb[0].mxu0
        %v6018 = vpop.f32.mrb[0].mxu0
        %v6019 = vadd.f32 %v5883, %v6018
        %v6020 = vpop.f32.mrb[0].mxu0
        %6021 = vmatprep.mubr.bf16.mxu0 0
        %6022 = vmatmul.mubr.bf16.gmra.mrb[0].mxu0 %v5861
        %v6023 = vpop.f32.mrb[0].mxu0
        %v6024 = vadd.f32 %v5883, %v6023
        %v6025 = vpop.f32.mrb[0].mxu0
        %v6026 = vpop.f32.mrb[0].mxu0
        %v6027 = vadd.f32 %v5883, %v6026
        %v6028 = vpop.f32.mrb[0].mxu0
        %6029 = vdwg.mxu0
        %v6030 = vadd.f32 %v957, %v5968
        %v6031 = vadd.f32 %v958, %v5971
        %v6032 = vadd.f32 %v959, %v5976
        %v6033 = vadd.f32 %v960, %v5979
        %v6034 = vadd.f32 %v961, %v5984
        %v6035 = vadd.f32 %v962, %v5987
        %v6036 = vadd.f32 %v963, %v5992
        %v6037 = vadd.f32 %v964, %v5995
        %v6038 = vadd.f32 %v965, %v6000
        %v6039 = vadd.f32 %v966, %v6003
        %v6040 = vadd.f32 %v967, %v6008
        %v6041 = vadd.f32 %v968, %v6011
        %v6042 = vadd.f32 %v969, %v6016
        %v6043 = vadd.f32 %v970, %v6019
        %v6044 = vadd.f32 %v971, %v6024
        %v6045 = vadd.f32 %v972, %v6027
        %v6046 = vld [vmem:[%s760] sm:$0x1]
        %v6047 = vld [vmem:[%s768] sm:$0x1]
        %6048 = vadd.xlane.f32.xlu0 %v6030
        %v6049 = vpop.xlane.xlu0 %6048
        %6050 = vadd.xlane.f32.xlu0 %v6031
        %v6051 = vpop.xlane.xlu0 %6050
        %6052 = vadd.xlane.f32.xlu0 %v6032
        %v6053 = vpop.xlane.xlu0 %6052
        %6054 = vadd.xlane.f32.xlu0 %v6033
        %v6055 = vpop.xlane.xlu0 %6054
        %6056 = vadd.xlane.f32.xlu0 %v6034
        %v6057 = vpop.xlane.xlu0 %6056
        %6058 = vadd.xlane.f32.xlu0 %v6035
        %v6059 = vpop.xlane.xlu0 %6058
        %6060 = vadd.xlane.f32.xlu0 %v6036
        %v6061 = vpop.xlane.xlu0 %6060
        %6062 = vadd.xlane.f32.xlu0 %v6037
        %v6063 = vpop.xlane.xlu0 %6062
        %6064 = vadd.xlane.f32.xlu0 %v6038
        %v6065 = vpop.xlane.xlu0 %6064
        %6066 = vadd.xlane.f32.xlu0 %v6039
        %v6067 = vpop.xlane.xlu0 %6066
        %6068 = vadd.xlane.f32.xlu0 %v6040
        %v6069 = vpop.xlane.xlu0 %6068
        %6070 = vadd.xlane.f32.xlu0 %v6041
        %v6071 = vpop.xlane.xlu0 %6070
        %6072 = vadd.xlane.f32.xlu0 %v6042
        %v6073 = vpop.xlane.xlu0 %6072
        %6074 = vadd.xlane.f32.xlu0 %v6043
        %v6075 = vpop.xlane.xlu0 %6074
        %6076 = vadd.xlane.f32.xlu0 %v6044
        %v6077 = vpop.xlane.xlu0 %6076
        %6078 = vadd.xlane.f32.xlu0 %v6045
        %v6079 = vpop.xlane.xlu0 %6078
        %v6080 = vrcp.pop 128.0
        %v6081 = vmul.f32 %v6049, %v6080
        %v6082 = vmul.f32 %v6051, %v6080
        %v6083 = vmul.f32 %v6053, %v6080
        %v6084 = vmul.f32 %v6055, %v6080
        %v6085 = vmul.f32 %v6057, %v6080
        %v6086 = vmul.f32 %v6059, %v6080
        %v6087 = vmul.f32 %v6061, %v6080
        %v6088 = vmul.f32 %v6063, %v6080
        %v6089 = vmul.f32 %v6065, %v6080
        %v6090 = vmul.f32 %v6067, %v6080
        %v6091 = vmul.f32 %v6069, %v6080
        %v6092 = vmul.f32 %v6071, %v6080
        %v6093 = vmul.f32 %v6073, %v6080
        %v6094 = vmul.f32 %v6075, %v6080
        %v6095 = vmul.f32 %v6077, %v6080
        %v6096 = vmul.f32 %v6079, %v6080
        %v6097 = vsub.f32 %v6030, %v6081
        %v6098 = vsub.f32 %v6031, %v6082
        %v6099 = vsub.f32 %v6032, %v6083
        %v6100 = vsub.f32 %v6033, %v6084
        %v6101 = vsub.f32 %v6034, %v6085
        %v6102 = vsub.f32 %v6035, %v6086
        %v6103 = vsub.f32 %v6036, %v6087
        %v6104 = vsub.f32 %v6037, %v6088
        %v6105 = vsub.f32 %v6038, %v6089
        %v6106 = vsub.f32 %v6039, %v6090
        %v6107 = vsub.f32 %v6040, %v6091
        %v6108 = vsub.f32 %v6041, %v6092
        %v6109 = vsub.f32 %v6042, %v6093
        %v6110 = vsub.f32 %v6043, %v6094
        %v6111 = vsub.f32 %v6044, %v6095
        %v6112 = vsub.f32 %v6045, %v6096
        %v6113 = vmul.f32 %v6097, %v6097
        %v6114 = vmul.f32 %v6098, %v6098
        %v6115 = vmul.f32 %v6099, %v6099
        %v6116 = vmul.f32 %v6100, %v6100
        %v6117 = vmul.f32 %v6101, %v6101
        %v6118 = vmul.f32 %v6102, %v6102
        %v6119 = vmul.f32 %v6103, %v6103
        %v6120 = vmul.f32 %v6104, %v6104
        %v6121 = vmul.f32 %v6105, %v6105
        %v6122 = vmul.f32 %v6106, %v6106
        %v6123 = vmul.f32 %v6107, %v6107
        %v6124 = vmul.f32 %v6108, %v6108
        %v6125 = vmul.f32 %v6109, %v6109
        %v6126 = vmul.f32 %v6110, %v6110
        %v6127 = vmul.f32 %v6111, %v6111
        %v6128 = vmul.f32 %v6112, %v6112
        %6129 = vadd.xlane.f32.xlu0 %v6113
        %v6130 = vpop.xlane.xlu0 %6129
        %6131 = vadd.xlane.f32.xlu0 %v6114
        %v6132 = vpop.xlane.xlu0 %6131
        %6133 = vadd.xlane.f32.xlu0 %v6115
        %v6134 = vpop.xlane.xlu0 %6133
        %6135 = vadd.xlane.f32.xlu0 %v6116
        %v6136 = vpop.xlane.xlu0 %6135
        %6137 = vadd.xlane.f32.xlu0 %v6117
        %v6138 = vpop.xlane.xlu0 %6137
        %6139 = vadd.xlane.f32.xlu0 %v6118
        %v6140 = vpop.xlane.xlu0 %6139
        %6141 = vadd.xlane.f32.xlu0 %v6119
        %v6142 = vpop.xlane.xlu0 %6141
        %6143 = vadd.xlane.f32.xlu0 %v6120
        %v6144 = vpop.xlane.xlu0 %6143
        %6145 = vadd.xlane.f32.xlu0 %v6121
        %v6146 = vpop.xlane.xlu0 %6145
        %6147 = vadd.xlane.f32.xlu0 %v6122
        %v6148 = vpop.xlane.xlu0 %6147
        %6149 = vadd.xlane.f32.xlu0 %v6123
        %v6150 = vpop.xlane.xlu0 %6149
        %6151 = vadd.xlane.f32.xlu0 %v6124
        %v6152 = vpop.xlane.xlu0 %6151
        %6153 = vadd.xlane.f32.xlu0 %v6125
        %v6154 = vpop.xlane.xlu0 %6153
        %6155 = vadd.xlane.f32.xlu0 %v6126
        %v6156 = vpop.xlane.xlu0 %6155
        %6157 = vadd.xlane.f32.xlu0 %v6127
        %v6158 = vpop.xlane.xlu0 %6157
        %6159 = vadd.xlane.f32.xlu0 %v6128
        %v6160 = vpop.xlane.xlu0 %6159
        %v6161 = vmul.f32 %v6130, %v6080
        %v6162 = vmul.f32 %v6132, %v6080
        %v6163 = vmul.f32 %v6134, %v6080
        %v6164 = vmul.f32 %v6136, %v6080
        %v6165 = vmul.f32 %v6138, %v6080
        %v6166 = vmul.f32 %v6140, %v6080
        %v6167 = vmul.f32 %v6142, %v6080
        %v6168 = vmul.f32 %v6144, %v6080
        %v6169 = vmul.f32 %v6146, %v6080
        %v6170 = vmul.f32 %v6148, %v6080
        %v6171 = vmul.f32 %v6150, %v6080
        %v6172 = vmul.f32 %v6152, %v6080
        %v6173 = vmul.f32 %v6154, %v6080
        %v6174 = vmul.f32 %v6156, %v6080
        %v6175 = vmul.f32 %v6158, %v6080
        %v6176 = vmul.f32 %v6160, %v6080
        %v6177 = vadd.f32 %v6161, 1e-05
        %v6178 = vadd.f32 %v6162, 1e-05
        %v6179 = vadd.f32 %v6163, 1e-05
        %v6180 = vadd.f32 %v6164, 1e-05
        %v6181 = vadd.f32 %v6165, 1e-05
        %v6182 = vadd.f32 %v6166, 1e-05
        %v6183 = vadd.f32 %v6167, 1e-05
        %v6184 = vadd.f32 %v6168, 1e-05
        %v6185 = vadd.f32 %v6169, 1e-05
        %v6186 = vadd.f32 %v6170, 1e-05
        %v6187 = vadd.f32 %v6171, 1e-05
        %v6188 = vadd.f32 %v6172, 1e-05
        %v6189 = vadd.f32 %v6173, 1e-05
        %v6190 = vadd.f32 %v6174, 1e-05
        %v6191 = vadd.f32 %v6175, 1e-05
        %v6192 = vadd.f32 %v6176, 1e-05
        %v6193 = vrsqrt.pop %v6177
        %v6194 = vrsqrt.pop %v6178
        %v6195 = vrsqrt.pop %v6179
        %v6196 = vrsqrt.pop %v6180
        %v6197 = vrsqrt.pop %v6181
        %v6198 = vrsqrt.pop %v6182
        %v6199 = vrsqrt.pop %v6183
        %v6200 = vrsqrt.pop %v6184
        %v6201 = vrsqrt.pop %v6185
        %v6202 = vrsqrt.pop %v6186
        %v6203 = vrsqrt.pop %v6187
        %v6204 = vrsqrt.pop %v6188
        %v6205 = vrsqrt.pop %v6189
        %v6206 = vrsqrt.pop %v6190
        %v6207 = vrsqrt.pop %v6191
        %v6208 = vrsqrt.pop %v6192
        %v6209 = vmul.f32 %v6097, %v6193
        %v6210 = vmul.f32 %v6098, %v6194
        %v6211 = vmul.f32 %v6099, %v6195
        %v6212 = vmul.f32 %v6100, %v6196
        %v6213 = vmul.f32 %v6101, %v6197
        %v6214 = vmul.f32 %v6102, %v6198
        %v6215 = vmul.f32 %v6103, %v6199
        %v6216 = vmul.f32 %v6104, %v6200
        %v6217 = vmul.f32 %v6105, %v6201
        %v6218 = vmul.f32 %v6106, %v6202
        %v6219 = vmul.f32 %v6107, %v6203
        %v6220 = vmul.f32 %v6108, %v6204
        %v6221 = vmul.f32 %v6109, %v6205
        %v6222 = vmul.f32 %v6110, %v6206
        %v6223 = vmul.f32 %v6111, %v6207
        %v6224 = vmul.f32 %v6112, %v6208
        %v6226 = vlaneseq
        %v6227 = vshrl.u32 %v6226, 7
        %v6228 = vsub.s32 0, %v6227
        %v6229 = vrot.slane %v6046, %v6228
        %v6231 = vmul.f32 %v6209, %v6229
        %v6232 = vmul.f32 %v6210, %v6229
        %v6233 = vmul.f32 %v6211, %v6229
        %v6234 = vmul.f32 %v6212, %v6229
        %v6235 = vmul.f32 %v6213, %v6229
        %v6236 = vmul.f32 %v6214, %v6229
        %v6237 = vmul.f32 %v6215, %v6229
        %v6238 = vmul.f32 %v6216, %v6229
        %v6239 = vmul.f32 %v6217, %v6229
        %v6240 = vmul.f32 %v6218, %v6229
        %v6241 = vmul.f32 %v6219, %v6229
        %v6242 = vmul.f32 %v6220, %v6229
        %v6243 = vmul.f32 %v6221, %v6229
        %v6244 = vmul.f32 %v6222, %v6229
        %v6245 = vmul.f32 %v6223, %v6229
        %v6246 = vmul.f32 %v6224, %v6229
        %v6248 = vlaneseq
        %v6249 = vshrl.u32 %v6248, 7
        %v6250 = vsub.s32 0, %v6249
        %v6251 = vrot.slane %v6047, %v6250
        %v6253 = vadd.f32 %v6231, %v6251
        %v6254 = vadd.f32 %v6232, %v6251
        %v6255 = vadd.f32 %v6233, %v6251
        %v6256 = vadd.f32 %v6234, %v6251
        %v6257 = vadd.f32 %v6235, %v6251
        %v6258 = vadd.f32 %v6236, %v6251
        %v6259 = vadd.f32 %v6237, %v6251
        %v6260 = vadd.f32 %v6238, %v6251
        %v6261 = vadd.f32 %v6239, %v6251
        %v6262 = vadd.f32 %v6240, %v6251
        %v6263 = vadd.f32 %v6241, %v6251
        %v6264 = vadd.f32 %v6242, %v6251
        %v6265 = vadd.f32 %v6243, %v6251
        %v6266 = vadd.f32 %v6244, %v6251
        %v6267 = vadd.f32 %v6245, %v6251
        %v6268 = vadd.f32 %v6246, %v6251
        %v6269 = vpack.c.bf16 %v6254, %v6253
        %v6270 = vpack.c.bf16 %v6256, %v6255
        %v6271 = vpack.c.bf16 %v6258, %v6257
        %v6272 = vpack.c.bf16 %v6260, %v6259
        %v6273 = vpack.c.bf16 %v6262, %v6261
        %v6274 = vpack.c.bf16 %v6264, %v6263
        %v6275 = vpack.c.bf16 %v6266, %v6265
        %v6276 = vpack.c.bf16 %v6268, %v6267
        %v6277 = vld [vmem:[%s777] sm:$0xff]
        %v6278 = vld [vmem:[%s777 + $0x8] sm:$0xff]
        %v6279 = vld [vmem:[%s777 + $0x10] sm:$0xff]
        %v6280 = vld [vmem:[%s777 + $0x18] sm:$0xff]
        %v6281 = vld [vmem:[%s777 + $0x20] sm:$0xff]
        %v6282 = vld [vmem:[%s777 + $0x28] sm:$0xff]
        %v6283 = vld [vmem:[%s777 + $0x30] sm:$0xff]
        %v6284 = vld [vmem:[%s777 + $0x38] sm:$0xff]
        %v6285 = vld [vmem:[%s777 + $0x40] sm:$0xff]
        %v6286 = vld [vmem:[%s777 + $0x48] sm:$0xff]
        %v6287 = vld [vmem:[%s777 + $0x50] sm:$0xff]
        %v6288 = vld [vmem:[%s777 + $0x58] sm:$0xff]
        %v6289 = vld [vmem:[%s777 + $0x60] sm:$0xff]
        %v6290 = vld [vmem:[%s777 + $0x68] sm:$0xff]
        %v6291 = vld [vmem:[%s777 + $0x70] sm:$0xff]
        %v6292 = vld [vmem:[%s777 + $0x78] sm:$0xff]
        %v6293 = vld [vmem:[%s786] sm:$0x3]
        %v6295 = vlaneseq
        %v6296 = vshrl.u32 %v6295, 7
        %v6297 = vsub.s32 0, %v6296
        %v6298 = vrot.slane %v6293, %v6297
        %v6299 = vlaneseq
        %v6300 = vshrl.u32 %v6299, 7
        %v6301 = vsub.s32 1, %v6300
        %v6302 = vrot.slane %v6293, %v6301
        %v6321 = vunpack.c.l.b16 %v6277
        %v6322 = vunpack.c.h.b16 %v6277
        %v6323 = vunpack.c.l.b16 %v6278
        %v6324 = vunpack.c.h.b16 %v6278
        %v6325 = vunpack.c.l.b16 %v6279
        %v6326 = vunpack.c.h.b16 %v6279
        %v6327 = vunpack.c.l.b16 %v6280
        %v6328 = vunpack.c.h.b16 %v6280
        %v6329 = vunpack.c.l.b16 %v6281
        %v6330 = vunpack.c.h.b16 %v6281
        %v6331 = vunpack.c.l.b16 %v6282
        %v6332 = vunpack.c.h.b16 %v6282
        %v6333 = vunpack.c.l.b16 %v6283
        %v6334 = vunpack.c.h.b16 %v6283
        %v6335 = vunpack.c.l.b16 %v6284
        %v6336 = vunpack.c.h.b16 %v6284
        %v6337 = vunpack.c.l.b16 %v6285
        %v6338 = vunpack.c.h.b16 %v6285
        %v6339 = vunpack.c.l.b16 %v6286
        %v6340 = vunpack.c.h.b16 %v6286
        %v6341 = vunpack.c.l.b16 %v6287
        %v6342 = vunpack.c.h.b16 %v6287
        %v6343 = vunpack.c.l.b16 %v6288
        %v6344 = vunpack.c.h.b16 %v6288
        %v6345 = vunpack.c.l.b16 %v6289
        %v6346 = vunpack.c.h.b16 %v6289
        %v6347 = vunpack.c.l.b16 %v6290
        %v6348 = vunpack.c.h.b16 %v6290
        %v6349 = vunpack.c.l.b16 %v6291
        %v6350 = vunpack.c.h.b16 %v6291
        %v6351 = vunpack.c.l.b16 %v6292
        %v6352 = vunpack.c.h.b16 %v6292
        %v6353 = vpack.c.b16 %v6323, %v6321
        %v6354 = vpack.c.b16 %v6324, %v6322
        %v6355 = vpack.c.b16 %v6327, %v6325
        %v6356 = vpack.c.b16 %v6328, %v6326
        %v6357 = vpack.c.b16 %v6331, %v6329
        %v6358 = vpack.c.b16 %v6332, %v6330
        %v6359 = vpack.c.b16 %v6335, %v6333
        %v6360 = vpack.c.b16 %v6336, %v6334
        %v6361 = vpack.c.b16 %v6339, %v6337
        %v6362 = vpack.c.b16 %v6340, %v6338
        %v6363 = vpack.c.b16 %v6343, %v6341
        %v6364 = vpack.c.b16 %v6344, %v6342
        %v6365 = vpack.c.b16 %v6347, %v6345
        %v6366 = vpack.c.b16 %v6348, %v6346
        %v6367 = vpack.c.b16 %v6351, %v6349
        %v6368 = vpack.c.b16 %v6352, %v6350
        %6385 = vmatprep.subr.bf16.mxu0 %v6354
        %6386 = vmatpush1.bf16.msra.mxu0 %v6353
        %6387 = vmatprep.subr.bf16.mxu0 %v6356
        %6388 = vmatpush1.bf16.msra.mxu0 %v6355
        %6389 = vmatprep.subr.bf16.mxu0 %v6358
        %6390 = vmatpush1.bf16.msra.mxu0 %v6357
        %6391 = vmatprep.subr.bf16.mxu0 %v6360
        %6392 = vmatpush1.bf16.msra.mxu0 %v6359
        %6393 = vmatprep.subr.bf16.mxu0 %v6362
        %6394 = vmatpush1.bf16.msra.mxu0 %v6361
        %6395 = vmatprep.subr.bf16.mxu0 %v6364
        %6396 = vmatpush1.bf16.msra.mxu0 %v6363
        %6397 = vmatprep.subr.bf16.mxu0 %v6366
        %6398 = vmatpush1.bf16.msra.mxu0 %v6365
        %6399 = vmatprep.subr.bf16.mxu0 %v6368
        %6400 = vmatpush1.bf16.msra.mxu0 %v6367
        %6401 = vmatprep.subr.bf16.mxu0 0
        %6402 = vmatpush1.bf16.msra.mxu0 0
        %6403 = vmatprep.subr.bf16.mxu0 0
        %6404 = vmatpush1.bf16.msra.mxu0 0
        %6405 = vmatprep.subr.bf16.mxu0 0
        %6406 = vmatpush1.bf16.msra.mxu0 0
        %6407 = vmatprep.subr.bf16.mxu0 0
        %6408 = vmatpush1.bf16.msra.mxu0 0
        %6409 = vmatprep.subr.bf16.mxu0 0
        %6410 = vmatpush1.bf16.msra.mxu0 0
        %6411 = vmatprep.subr.bf16.mxu0 0
        %6412 = vmatpush1.bf16.msra.mxu0 0
        %6413 = vmatprep.subr.bf16.mxu0 0
        %6414 = vmatpush1.bf16.msra.mxu0 0
        %6415 = vmatprep.subr.bf16.mxu0 0
        %6416 = vmatpush1.bf16.msra.mxu0 0
        %6417 = vmatprep.mubr.bf16.mxu0 0
        %6418 = vmatmul.mubr.bf16.gmra.mrb[0].mxu0 %v6269
        %v6419 = vpop.f32.mrb[0].mxu0
        %v6420 = vadd.f32 %v6298, %v6419
        %v6421 = vpop.f32.mrb[0].mxu0
        %v6422 = vadd.f32 %v6302, %v6421
        %v6423 = vpop.f32.mrb[0].mxu0
        %v6424 = vadd.f32 %v6298, %v6423
        %v6425 = vpop.f32.mrb[0].mxu0
        %v6426 = vadd.f32 %v6302, %v6425
        %6427 = vmatprep.mubr.bf16.mxu0 0
        %6428 = vmatmul.mubr.bf16.gmra.mrb[0].mxu0 %v6270
        %v6429 = vpop.f32.mrb[0].mxu0
        %v6430 = vadd.f32 %v6298, %v6429
        %v6431 = vpop.f32.mrb[0].mxu0
        %v6432 = vadd.f32 %v6302, %v6431
        %v6433 = vpop.f32.mrb[0].mxu0
        %v6434 = vadd.f32 %v6298, %v6433
        %v6435 = vpop.f32.mrb[0].mxu0
        %v6436 = vadd.f32 %v6302, %v6435
        %6437 = vmatprep.mubr.bf16.mxu0 0
        %6438 = vmatmul.mubr.bf16.gmra.mrb[0].mxu0 %v6271
        %v6439 = vpop.f32.mrb[0].mxu0
        %v6440 = vadd.f32 %v6298, %v6439
        %v6441 = vpop.f32.mrb[0].mxu0
        %v6442 = vadd.f32 %v6302, %v6441
        %v6443 = vpop.f32.mrb[0].mxu0
        %v6444 = vadd.f32 %v6298, %v6443
        %v6445 = vpop.f32.mrb[0].mxu0
        %v6446 = vadd.f32 %v6302, %v6445
        %6447 = vmatprep.mubr.bf16.mxu0 0
        %6448 = vmatmul.mubr.bf16.gmra.mrb[0].mxu0 %v6272
        %v6449 = vpop.f32.mrb[0].mxu0
        %v6450 = vadd.f32 %v6298, %v6449
        %v6451 = vpop.f32.mrb[0].mxu0
        %v6452 = vadd.f32 %v6302, %v6451
        %v6453 = vpop.f32.mrb[0].mxu0
        %v6454 = vadd.f32 %v6298, %v6453
        %v6455 = vpop.f32.mrb[0].mxu0
        %v6456 = vadd.f32 %v6302, %v6455
        %6457 = vmatprep.mubr.bf16.mxu0 0
        %6458 = vmatmul.mubr.bf16.gmra.mrb[0].mxu0 %v6273
        %v6459 = vpop.f32.mrb[0].mxu0
        %v6460 = vadd.f32 %v6298, %v6459
        %v6461 = vpop.f32.mrb[0].mxu0
        %v6462 = vadd.f32 %v6302, %v6461
        %v6463 = vpop.f32.mrb[0].mxu0
        %v6464 = vadd.f32 %v6298, %v6463
        %v6465 = vpop.f32.mrb[0].mxu0
        %v6466 = vadd.f32 %v6302, %v6465
        %6467 = vmatprep.mubr.bf16.mxu0 0
        %6468 = vmatmul.mubr.bf16.gmra.mrb[0].mxu0 %v6274
        %v6469 = vpop.f32.mrb[0].mxu0
        %v6470 = vadd.f32 %v6298, %v6469
        %v6471 = vpop.f32.mrb[0].mxu0
        %v6472 = vadd.f32 %v6302, %v6471
        %v6473 = vpop.f32.mrb[0].mxu0
        %v6474 = vadd.f32 %v6298, %v6473
        %v6475 = vpop.f32.mrb[0].mxu0
        %v6476 = vadd.f32 %v6302, %v6475
        %6477 = vmatprep.mubr.bf16.mxu0 0
        %6478 = vmatmul.mubr.bf16.gmra.mrb[0].mxu0 %v6275
        %v6479 = vpop.f32.mrb[0].mxu0
        %v6480 = vadd.f32 %v6298, %v6479
        %v6481 = vpop.f32.mrb[0].mxu0
        %v6482 = vadd.f32 %v6302, %v6481
        %v6483 = vpop.f32.mrb[0].mxu0
        %v6484 = vadd.f32 %v6298, %v6483
        %v6485 = vpop.f32.mrb[0].mxu0
        %v6486 = vadd.f32 %v6302, %v6485
        %6487 = vmatprep.mubr.bf16.mxu0 0
        %6488 = vmatmul.mubr.bf16.gmra.mrb[0].mxu0 %v6276
        %v6489 = vpop.f32.mrb[0].mxu0
        %v6490 = vadd.f32 %v6298, %v6489
        %v6491 = vpop.f32.mrb[0].mxu0
        %v6492 = vadd.f32 %v6302, %v6491
        %v6493 = vpop.f32.mrb[0].mxu0
        %v6494 = vadd.f32 %v6298, %v6493
        %v6495 = vpop.f32.mrb[0].mxu0
        %v6496 = vadd.f32 %v6302, %v6495
        %6497 = vdwg.mxu0
        %v6498 = vmul.f32 %v6420, 0.5
        %v6499 = vmul.f32 %v6422, 0.5
        %v6500 = vmul.f32 %v6424, 0.5
        %v6501 = vmul.f32 %v6426, 0.5
        %v6502 = vmul.f32 %v6430, 0.5
        %v6503 = vmul.f32 %v6432, 0.5
        %v6504 = vmul.f32 %v6434, 0.5
        %v6505 = vmul.f32 %v6436, 0.5
        %v6506 = vmul.f32 %v6440, 0.5
        %v6507 = vmul.f32 %v6442, 0.5
        %v6508 = vmul.f32 %v6444, 0.5
        %v6509 = vmul.f32 %v6446, 0.5
        %v6510 = vmul.f32 %v6450, 0.5
        %v6511 = vmul.f32 %v6452, 0.5
        %v6512 = vmul.f32 %v6454, 0.5
        %v6513 = vmul.f32 %v6456, 0.5
        %v6514 = vmul.f32 %v6460, 0.5
        %v6515 = vmul.f32 %v6462, 0.5
        %v6516 = vmul.f32 %v6464, 0.5
        %v6517 = vmul.f32 %v6466, 0.5
        %v6518 = vmul.f32 %v6470, 0.5
        %v6519 = vmul.f32 %v6472, 0.5
        %v6520 = vmul.f32 %v6474, 0.5
        %v6521 = vmul.f32 %v6476, 0.5
        %v6522 = vmul.f32 %v6480, 0.5
        %v6523 = vmul.f32 %v6482, 0.5
        %v6524 = vmul.f32 %v6484, 0.5
        %v6525 = vmul.f32 %v6486, 0.5
        %v6526 = vmul.f32 %v6490, 0.5
        %v6527 = vmul.f32 %v6492, 0.5
        %v6528 = vmul.f32 %v6494, 0.5
        %v6529 = vmul.f32 %v6496, 0.5
        %v6530 = vmul.f32 %v6420, 0.70710677
        %v6531 = vmul.f32 %v6422, 0.70710677
        %v6532 = vmul.f32 %v6424, 0.70710677
        %v6533 = vmul.f32 %v6426, 0.70710677
        %v6534 = vmul.f32 %v6430, 0.70710677
        %v6535 = vmul.f32 %v6432, 0.70710677
        %v6536 = vmul.f32 %v6434, 0.70710677
        %v6537 = vmul.f32 %v6436, 0.70710677
        %v6538 = vmul.f32 %v6440, 0.70710677
        %v6539 = vmul.f32 %v6442, 0.70710677
        %v6540 = vmul.f32 %v6444, 0.70710677
        %v6541 = vmul.f32 %v6446, 0.70710677
        %v6542 = vmul.f32 %v6450, 0.70710677
        %v6543 = vmul.f32 %v6452, 0.70710677
        %v6544 = vmul.f32 %v6454, 0.70710677
        %v6545 = vmul.f32 %v6456, 0.70710677
        %v6546 = vmul.f32 %v6460, 0.70710677
        %v6547 = vmul.f32 %v6462, 0.70710677
        %v6548 = vmul.f32 %v6464, 0.70710677
        %v6549 = vmul.f32 %v6466, 0.70710677
        %v6550 = vmul.f32 %v6470, 0.70710677
        %v6551 = vmul.f32 %v6472, 0.70710677
        %v6552 = vmul.f32 %v6474, 0.70710677
        %v6553 = vmul.f32 %v6476, 0.70710677
        %v6554 = vmul.f32 %v6480, 0.70710677
        %v6555 = vmul.f32 %v6482, 0.70710677
        %v6556 = vmul.f32 %v6484, 0.70710677
        %v6557 = vmul.f32 %v6486, 0.70710677
        %v6558 = vmul.f32 %v6490, 0.70710677
        %v6559 = vmul.f32 %v6492, 0.70710677
        %v6560 = vmul.f32 %v6494, 0.70710677
        %v6561 = vmul.f32 %v6496, 0.70710677
        %v6562 = vand.u32 2147483647, %v6530
        %v6563 = vand.u32 2147483647, %v6531
        %v6564 = vand.u32 2147483647, %v6532
        %v6565 = vand.u32 2147483647, %v6533
        %v6566 = vand.u32 2147483647, %v6534
        %v6567 = vand.u32 2147483647, %v6535
        %v6568 = vand.u32 2147483647, %v6536
        %v6569 = vand.u32 2147483647, %v6537
        %v6570 = vand.u32 2147483647, %v6538
        %v6571 = vand.u32 2147483647, %v6539
        %v6572 = vand.u32 2147483647, %v6540
        %v6573 = vand.u32 2147483647, %v6541
        %v6574 = vand.u32 2147483647, %v6542
        %v6575 = vand.u32 2147483647, %v6543
        %v6576 = vand.u32 2147483647, %v6544
        %v6577 = vand.u32 2147483647, %v6545
        %v6578 = vand.u32 2147483647, %v6546
        %v6579 = vand.u32 2147483647, %v6547
        %v6580 = vand.u32 2147483647, %v6548
        %v6581 = vand.u32 2147483647, %v6549
        %v6582 = vand.u32 2147483647, %v6550
        %v6583 = vand.u32 2147483647, %v6551
        %v6584 = vand.u32 2147483647, %v6552
        %v6585 = vand.u32 2147483647, %v6553
        %v6586 = vand.u32 2147483647, %v6554
        %v6587 = vand.u32 2147483647, %v6555
        %v6588 = vand.u32 2147483647, %v6556
        %v6589 = vand.u32 2147483647, %v6557
        %v6590 = vand.u32 2147483647, %v6558
        %v6591 = vand.u32 2147483647, %v6559
        %v6592 = vand.u32 2147483647, %v6560
        %v6593 = vand.u32 2147483647, %v6561
        %v6594 = vmul.f32 %v6562, 0.3275911
        %v6595 = vmul.f32 %v6563, 0.3275911
        %v6596 = vmul.f32 %v6564, 0.3275911
        %v6597 = vmul.f32 %v6565, 0.3275911
        %v6598 = vmul.f32 %v6566, 0.3275911
        %v6599 = vmul.f32 %v6567, 0.3275911
        %v6600 = vmul.f32 %v6568, 0.3275911
        %v6601 = vmul.f32 %v6569, 0.3275911
        %v6602 = vmul.f32 %v6570, 0.3275911
        %v6603 = vmul.f32 %v6571, 0.3275911
        %v6604 = vmul.f32 %v6572, 0.3275911
        %v6605 = vmul.f32 %v6573, 0.3275911
        %v6606 = vmul.f32 %v6574, 0.3275911
        %v6607 = vmul.f32 %v6575, 0.3275911
        %v6608 = vmul.f32 %v6576, 0.3275911
        %v6609 = vmul.f32 %v6577, 0.3275911
        %v6610 = vmul.f32 %v6578, 0.3275911
        %v6611 = vmul.f32 %v6579, 0.3275911
        %v6612 = vmul.f32 %v6580, 0.3275911
        %v6613 = vmul.f32 %v6581, 0.3275911
        %v6614 = vmul.f32 %v6582, 0.3275911
        %v6615 = vmul.f32 %v6583, 0.3275911
        %v6616 = vmul.f32 %v6584, 0.3275911
        %v6617 = vmul.f32 %v6585, 0.3275911
        %v6618 = vmul.f32 %v6586, 0.3275911
        %v6619 = vmul.f32 %v6587, 0.3275911
        %v6620 = vmul.f32 %v6588, 0.3275911
        %v6621 = vmul.f32 %v6589, 0.3275911
        %v6622 = vmul.f32 %v6590, 0.3275911
        %v6623 = vmul.f32 %v6591, 0.3275911
        %v6624 = vmul.f32 %v6592, 0.3275911
        %v6625 = vmul.f32 %v6593, 0.3275911
        %v6626 = vadd.f32 %v6594, 1.0
        %v6627 = vadd.f32 %v6595, 1.0
        %v6628 = vadd.f32 %v6596, 1.0
        %v6629 = vadd.f32 %v6597, 1.0
        %v6630 = vadd.f32 %v6598, 1.0
        %v6631 = vadd.f32 %v6599, 1.0
        %v6632 = vadd.f32 %v6600, 1.0
        %v6633 = vadd.f32 %v6601, 1.0
        %v6634 = vadd.f32 %v6602, 1.0
        %v6635 = vadd.f32 %v6603, 1.0
        %v6636 = vadd.f32 %v6604, 1.0
        %v6637 = vadd.f32 %v6605, 1.0
        %v6638 = vadd.f32 %v6606, 1.0
        %v6639 = vadd.f32 %v6607, 1.0
        %v6640 = vadd.f32 %v6608, 1.0
        %v6641 = vadd.f32 %v6609, 1.0
        %v6642 = vadd.f32 %v6610, 1.0
        %v6643 = vadd.f32 %v6611, 1.0
        %v6644 = vadd.f32 %v6612, 1.0
        %v6645 = vadd.f32 %v6613, 1.0
        %v6646 = vadd.f32 %v6614, 1.0
        %v6647 = vadd.f32 %v6615, 1.0
        %v6648 = vadd.f32 %v6616, 1.0
        %v6649 = vadd.f32 %v6617, 1.0
        %v6650 = vadd.f32 %v6618, 1.0
        %v6651 = vadd.f32 %v6619, 1.0
        %v6652 = vadd.f32 %v6620, 1.0
        %v6653 = vadd.f32 %v6621, 1.0
        %v6654 = vadd.f32 %v6622, 1.0
        %v6655 = vadd.f32 %v6623, 1.0
        %v6656 = vadd.f32 %v6624, 1.0
        %v6657 = vadd.f32 %v6625, 1.0
        %v6658 = vrcp.pop %v6626
        %v6659 = vmul.f32 1.0, %v6658
        %v6660 = vrcp.pop %v6627
        %v6661 = vmul.f32 1.0, %v6660
        %v6662 = vrcp.pop %v6628
        %v6663 = vmul.f32 1.0, %v6662
        %v6664 = vrcp.pop %v6629
        %v6665 = vmul.f32 1.0, %v6664
        %v6666 = vrcp.pop %v6630
        %v6667 = vmul.f32 1.0, %v6666
        %v6668 = vrcp.pop %v6631
        %v6669 = vmul.f32 1.0, %v6668
        %v6670 = vrcp.pop %v6632
        %v6671 = vmul.f32 1.0, %v6670
        %v6672 = vrcp.pop %v6633
        %v6673 = vmul.f32 1.0, %v6672
        %v6674 = vrcp.pop %v6634
        %v6675 = vmul.f32 1.0, %v6674
        %v6676 = vrcp.pop %v6635
        %v6677 = vmul.f32 1.0, %v6676
        %v6678 = vrcp.pop %v6636
        %v6679 = vmul.f32 1.0, %v6678
        %v6680 = vrcp.pop %v6637
        %v6681 = vmul.f32 1.0, %v6680
        %v6682 = vrcp.pop %v6638
        %v6683 = vmul.f32 1.0, %v6682
        %v6684 = vrcp.pop %v6639
        %v6685 = vmul.f32 1.0, %v6684
        %v6686 = vrcp.pop %v6640
        %v6687 = vmul.f32 1.0, %v6686
        %v6688 = vrcp.pop %v6641
        %v6689 = vmul.f32 1.0, %v6688
        %v6690 = vrcp.pop %v6642
        %v6691 = vmul.f32 1.0, %v6690
        %v6692 = vrcp.pop %v6643
        %v6693 = vmul.f32 1.0, %v6692
        %v6694 = vrcp.pop %v6644
        %v6695 = vmul.f32 1.0, %v6694
        %v6696 = vrcp.pop %v6645
        %v6697 = vmul.f32 1.0, %v6696
        %v6698 = vrcp.pop %v6646
        %v6699 = vmul.f32 1.0, %v6698
        %v6700 = vrcp.pop %v6647
        %v6701 = vmul.f32 1.0, %v6700
        %v6702 = vrcp.pop %v6648
        %v6703 = vmul.f32 1.0, %v6702
        %v6704 = vrcp.pop %v6649
        %v6705 = vmul.f32 1.0, %v6704
        %v6706 = vrcp.pop %v6650
        %v6707 = vmul.f32 1.0, %v6706
        %v6708 = vrcp.pop %v6651
        %v6709 = vmul.f32 1.0, %v6708
        %v6710 = vrcp.pop %v6652
        %v6711 = vmul.f32 1.0, %v6710
        %v6712 = vrcp.pop %v6653
        %v6713 = vmul.f32 1.0, %v6712
        %v6714 = vrcp.pop %v6654
        %v6715 = vmul.f32 1.0, %v6714
        %v6716 = vrcp.pop %v6655
        %v6717 = vmul.f32 1.0, %v6716
        %v6718 = vrcp.pop %v6656
        %v6719 = vmul.f32 1.0, %v6718
        %v6720 = vrcp.pop %v6657
        %v6721 = vmul.f32 1.0, %v6720
        %v6722 = vmul.f32 %v6659, 1.0614054
        %v6723 = vmul.f32 %v6661, 1.0614054
        %v6724 = vmul.f32 %v6663, 1.0614054
        %v6725 = vmul.f32 %v6665, 1.0614054
        %v6726 = vmul.f32 %v6667, 1.0614054
        %v6727 = vmul.f32 %v6669, 1.0614054
        %v6728 = vmul.f32 %v6671, 1.0614054
        %v6729 = vmul.f32 %v6673, 1.0614054
        %v6730 = vmul.f32 %v6675, 1.0614054
        %v6731 = vmul.f32 %v6677, 1.0614054
        %v6732 = vmul.f32 %v6679, 1.0614054
        %v6733 = vmul.f32 %v6681, 1.0614054
        %v6734 = vmul.f32 %v6683, 1.0614054
        %v6735 = vmul.f32 %v6685, 1.0614054
        %v6736 = vmul.f32 %v6687, 1.0614054
        %v6737 = vmul.f32 %v6689, 1.0614054
        %v6738 = vmul.f32 %v6691, 1.0614054
        %v6739 = vmul.f32 %v6693, 1.0614054
        %v6740 = vmul.f32 %v6695, 1.0614054
        %v6741 = vmul.f32 %v6697, 1.0614054
        %v6742 = vmul.f32 %v6699, 1.0614054
        %v6743 = vmul.f32 %v6701, 1.0614054
        %v6744 = vmul.f32 %v6703, 1.0614054
        %v6745 = vmul.f32 %v6705, 1.0614054
        %v6746 = vmul.f32 %v6707, 1.0614054
        %v6747 = vmul.f32 %v6709, 1.0614054
        %v6748 = vmul.f32 %v6711, 1.0614054
        %v6749 = vmul.f32 %v6713, 1.0614054
        %v6750 = vmul.f32 %v6715, 1.0614054
        %v6751 = vmul.f32 %v6717, 1.0614054
        %v6752 = vmul.f32 %v6719, 1.0614054
        %v6753 = vmul.f32 %v6721, 1.0614054
        %v6754 = vadd.f32 %v6722, -1.4531521
        %v6755 = vadd.f32 %v6723, -1.4531521
        %v6756 = vadd.f32 %v6724, -1.4531521
        %v6757 = vadd.f32 %v6725, -1.4531521
        %v6758 = vadd.f32 %v6726, -1.4531521
        %v6759 = vadd.f32 %v6727, -1.4531521
        %v6760 = vadd.f32 %v6728, -1.4531521
        %v6761 = vadd.f32 %v6729, -1.4531521
        %v6762 = vadd.f32 %v6730, -1.4531521
        %v6763 = vadd.f32 %v6731, -1.4531521
        %v6764 = vadd.f32 %v6732, -1.4531521
        %v6765 = vadd.f32 %v6733, -1.4531521
        %v6766 = vadd.f32 %v6734, -1.4531521
        %v6767 = vadd.f32 %v6735, -1.4531521
        %v6768 = vadd.f32 %v6736, -1.4531521
        %v6769 = vadd.f32 %v6737, -1.4531521
        %v6770 = vadd.f32 %v6738, -1.4531521
        %v6771 = vadd.f32 %v6739, -1.4531521
        %v6772 = vadd.f32 %v6740, -1.4531521
        %v6773 = vadd.f32 %v6741, -1.4531521
        %v6774 = vadd.f32 %v6742, -1.4531521
        %v6775 = vadd.f32 %v6743, -1.4531521
        %v6776 = vadd.f32 %v6744, -1.4531521
        %v6777 = vadd.f32 %v6745, -1.4531521
        %v6778 = vadd.f32 %v6746, -1.4531521
        %v6779 = vadd.f32 %v6747, -1.4531521
        %v6780 = vadd.f32 %v6748, -1.4531521
        %v6781 = vadd.f32 %v6749, -1.4531521
        %v6782 = vadd.f32 %v6750, -1.4531521
        %v6783 = vadd.f32 %v6751, -1.4531521
        %v6784 = vadd.f32 %v6752, -1.4531521
        %v6785 = vadd.f32 %v6753, -1.4531521
        %v6786 = vmul.f32 %v6754, %v6659
        %v6787 = vmul.f32 %v6755, %v6661
        %v6788 = vmul.f32 %v6756, %v6663
        %v6789 = vmul.f32 %v6757, %v6665
        %v6790 = vmul.f32 %v6758, %v6667
        %v6791 = vmul.f32 %v6759, %v6669
        %v6792 = vmul.f32 %v6760, %v6671
        %v6793 = vmul.f32 %v6761, %v6673
        %v6794 = vmul.f32 %v6762, %v6675
        %v6795 = vmul.f32 %v6763, %v6677
        %v6796 = vmul.f32 %v6764, %v6679
        %v6797 = vmul.f32 %v6765, %v6681
        %v6798 = vmul.f32 %v6766, %v6683
        %v6799 = vmul.f32 %v6767, %v6685
        %v6800 = vmul.f32 %v6768, %v6687
        %v6801 = vmul.f32 %v6769, %v6689
        %v6802 = vmul.f32 %v6770, %v6691
        %v6803 = vmul.f32 %v6771, %v6693
        %v6804 = vmul.f32 %v6772, %v6695
        %v6805 = vmul.f32 %v6773, %v6697
        %v6806 = vmul.f32 %v6774, %v6699
        %v6807 = vmul.f32 %v6775, %v6701
        %v6808 = vmul.f32 %v6776, %v6703
        %v6809 = vmul.f32 %v6777, %v6705
        %v6810 = vmul.f32 %v6778, %v6707
        %v6811 = vmul.f32 %v6779, %v6709
        %v6812 = vmul.f32 %v6780, %v6711
        %v6813 = vmul.f32 %v6781, %v6713
        %v6814 = vmul.f32 %v6782, %v6715
        %v6815 = vmul.f32 %v6783, %v6717
        %v6816 = vmul.f32 %v6784, %v6719
        %v6817 = vmul.f32 %v6785, %v6721
        %v6818 = vadd.f32 %v6786, 1.4214138
        %v6819 = vadd.f32 %v6787, 1.4214138
        %v6820 = vadd.f32 %v6788, 1.4214138
        %v6821 = vadd.f32 %v6789, 1.4214138
        %v6822 = vadd.f32 %v6790, 1.4214138
        %v6823 = vadd.f32 %v6791, 1.4214138
        %v6824 = vadd.f32 %v6792, 1.4214138
        %v6825 = vadd.f32 %v6793, 1.4214138
        %v6826 = vadd.f32 %v6794, 1.4214138
        %v6827 = vadd.f32 %v6795, 1.4214138
        %v6828 = vadd.f32 %v6796, 1.4214138
        %v6829 = vadd.f32 %v6797, 1.4214138
        %v6830 = vadd.f32 %v6798, 1.4214138
        %v6831 = vadd.f32 %v6799, 1.4214138
        %v6832 = vadd.f32 %v6800, 1.4214138
        %v6833 = vadd.f32 %v6801, 1.4214138
        %v6834 = vadd.f32 %v6802, 1.4214138
        %v6835 = vadd.f32 %v6803, 1.4214138
        %v6836 = vadd.f32 %v6804, 1.4214138
        %v6837 = vadd.f32 %v6805, 1.4214138
        %v6838 = vadd.f32 %v6806, 1.4214138
        %v6839 = vadd.f32 %v6807, 1.4214138
        %v6840 = vadd.f32 %v6808, 1.4214138
        %v6841 = vadd.f32 %v6809, 1.4214138
        %v6842 = vadd.f32 %v6810, 1.4214138
        %v6843 = vadd.f32 %v6811, 1.4214138
        %v6844 = vadd.f32 %v6812, 1.4214138
        %v6845 = vadd.f32 %v6813, 1.4214138
        %v6846 = vadd.f32 %v6814, 1.4214138
        %v6847 = vadd.f32 %v6815, 1.4214138
        %v6848 = vadd.f32 %v6816, 1.4214138
        %v6849 = vadd.f32 %v6817, 1.4214138
        %v6850 = vmul.f32 %v6818, %v6659
        %v6851 = vmul.f32 %v6819, %v6661
        %v6852 = vmul.f32 %v6820, %v6663
        %v6853 = vmul.f32 %v6821, %v6665
        %v6854 = vmul.f32 %v6822, %v6667
        %v6855 = vmul.f32 %v6823, %v6669
        %v6856 = vmul.f32 %v6824, %v6671
        %v6857 = vmul.f32 %v6825, %v6673
        %v6858 = vmul.f32 %v6826, %v6675
        %v6859 = vmul.f32 %v6827, %v6677
        %v6860 = vmul.f32 %v6828, %v6679
        %v6861 = vmul.f32 %v6829, %v6681
        %v6862 = vmul.f32 %v6830, %v6683
        %v6863 = vmul.f32 %v6831, %v6685
        %v6864 = vmul.f32 %v6832, %v6687
        %v6865 = vmul.f32 %v6833, %v6689
        %v6866 = vmul.f32 %v6834, %v6691
        %v6867 = vmul.f32 %v6835, %v6693
        %v6868 = vmul.f32 %v6836, %v6695
        %v6869 = vmul.f32 %v6837, %v6697
        %v6870 = vmul.f32 %v6838, %v6699
        %v6871 = vmul.f32 %v6839, %v6701
        %v6872 = vmul.f32 %v6840, %v6703
        %v6873 = vmul.f32 %v6841, %v6705
        %v6874 = vmul.f32 %v6842, %v6707
        %v6875 = vmul.f32 %v6843, %v6709
        %v6876 = vmul.f32 %v6844, %v6711
        %v6877 = vmul.f32 %v6845, %v6713
        %v6878 = vmul.f32 %v6846, %v6715
        %v6879 = vmul.f32 %v6847, %v6717
        %v6880 = vmul.f32 %v6848, %v6719
        %v6881 = vmul.f32 %v6849, %v6721
        %v6882 = vadd.f32 %v6850, -0.28449672
        %v6883 = vadd.f32 %v6851, -0.28449672
        %v6884 = vadd.f32 %v6852, -0.28449672
        %v6885 = vadd.f32 %v6853, -0.28449672
        %v6886 = vadd.f32 %v6854, -0.28449672
        %v6887 = vadd.f32 %v6855, -0.28449672
        %v6888 = vadd.f32 %v6856, -0.28449672
        %v6889 = vadd.f32 %v6857, -0.28449672
        %v6890 = vadd.f32 %v6858, -0.28449672
        %v6891 = vadd.f32 %v6859, -0.28449672
        %v6892 = vadd.f32 %v6860, -0.28449672
        %v6893 = vadd.f32 %v6861, -0.28449672
        %v6894 = vadd.f32 %v6862, -0.28449672
        %v6895 = vadd.f32 %v6863, -0.28449672
        %v6896 = vadd.f32 %v6864, -0.28449672
        %v6897 = vadd.f32 %v6865, -0.28449672
        %v6898 = vadd.f32 %v6866, -0.28449672
        %v6899 = vadd.f32 %v6867, -0.28449672
        %v6900 = vadd.f32 %v6868, -0.28449672
        %v6901 = vadd.f32 %v6869, -0.28449672
        %v6902 = vadd.f32 %v6870, -0.28449672
        %v6903 = vadd.f32 %v6871, -0.28449672
        %v6904 = vadd.f32 %v6872, -0.28449672
        %v6905 = vadd.f32 %v6873, -0.28449672
        %v6906 = vadd.f32 %v6874, -0.28449672
        %v6907 = vadd.f32 %v6875, -0.28449672
        %v6908 = vadd.f32 %v6876, -0.28449672
        %v6909 = vadd.f32 %v6877, -0.28449672
        %v6910 = vadd.f32 %v6878, -0.28449672
        %v6911 = vadd.f32 %v6879, -0.28449672
        %v6912 = vadd.f32 %v6880, -0.28449672
        %v6913 = vadd.f32 %v6881, -0.28449672
        %v6914 = vmul.f32 %v6882, %v6659
        %v6915 = vmul.f32 %v6883, %v6661
        %v6916 = vmul.f32 %v6884, %v6663
        %v6917 = vmul.f32 %v6885, %v6665
        %v6918 = vmul.f32 %v6886, %v6667
        %v6919 = vmul.f32 %v6887, %v6669
        %v6920 = vmul.f32 %v6888, %v6671
        %v6921 = vmul.f32 %v6889, %v6673
        %v6922 = vmul.f32 %v6890, %v6675
        %v6923 = vmul.f32 %v6891, %v6677
        %v6924 = vmul.f32 %v6892, %v6679
        %v6925 = vmul.f32 %v6893, %v6681
        %v6926 = vmul.f32 %v6894, %v6683
        %v6927 = vmul.f32 %v6895, %v6685
        %v6928 = vmul.f32 %v6896, %v6687
        %v6929 = vmul.f32 %v6897, %v6689
        %v6930 = vmul.f32 %v6898, %v6691
        %v6931 = vmul.f32 %v6899, %v6693
        %v6932 = vmul.f32 %v6900, %v6695
        %v6933 = vmul.f32 %v6901, %v6697
        %v6934 = vmul.f32 %v6902, %v6699
        %v6935 = vmul.f32 %v6903, %v6701
        %v6936 = vmul.f32 %v6904, %v6703
        %v6937 = vmul.f32 %v6905, %v6705
        %v6938 = vmul.f32 %v6906, %v6707
        %v6939 = vmul.f32 %v6907, %v6709
        %v6940 = vmul.f32 %v6908, %v6711
        %v6941 = vmul.f32 %v6909, %v6713
        %v6942 = vmul.f32 %v6910, %v6715
        %v6943 = vmul.f32 %v6911, %v6717
        %v6944 = vmul.f32 %v6912, %v6719
        %v6945 = vmul.f32 %v6913, %v6721
        %v6946 = vadd.f32 %v6914, 0.2548296
        %v6947 = vadd.f32 %v6915, 0.2548296
        %v6948 = vadd.f32 %v6916, 0.2548296
        %v6949 = vadd.f32 %v6917, 0.2548296
        %v6950 = vadd.f32 %v6918, 0.2548296
        %v6951 = vadd.f32 %v6919, 0.2548296
        %v6952 = vadd.f32 %v6920, 0.2548296
        %v6953 = vadd.f32 %v6921, 0.2548296
        %v6954 = vadd.f32 %v6922, 0.2548296
        %v6955 = vadd.f32 %v6923, 0.2548296
        %v6956 = vadd.f32 %v6924, 0.2548296
        %v6957 = vadd.f32 %v6925, 0.2548296
        %v6958 = vadd.f32 %v6926, 0.2548296
        %v6959 = vadd.f32 %v6927, 0.2548296
        %v6960 = vadd.f32 %v6928, 0.2548296
        %v6961 = vadd.f32 %v6929, 0.2548296
        %v6962 = vadd.f32 %v6930, 0.2548296
        %v6963 = vadd.f32 %v6931, 0.2548296
        %v6964 = vadd.f32 %v6932, 0.2548296
        %v6965 = vadd.f32 %v6933, 0.2548296
        %v6966 = vadd.f32 %v6934, 0.2548296
        %v6967 = vadd.f32 %v6935, 0.2548296
        %v6968 = vadd.f32 %v6936, 0.2548296
        %v6969 = vadd.f32 %v6937, 0.2548296
        %v6970 = vadd.f32 %v6938, 0.2548296
        %v6971 = vadd.f32 %v6939, 0.2548296
        %v6972 = vadd.f32 %v6940, 0.2548296
        %v6973 = vadd.f32 %v6941, 0.2548296
        %v6974 = vadd.f32 %v6942, 0.2548296
        %v6975 = vadd.f32 %v6943, 0.2548296
        %v6976 = vadd.f32 %v6944, 0.2548296
        %v6977 = vadd.f32 %v6945, 0.2548296
        %v6978 = vmul.f32 %v6946, %v6659
        %v6979 = vmul.f32 %v6947, %v6661
        %v6980 = vmul.f32 %v6948, %v6663
        %v6981 = vmul.f32 %v6949, %v6665
        %v6982 = vmul.f32 %v6950, %v6667
        %v6983 = vmul.f32 %v6951, %v6669
        %v6984 = vmul.f32 %v6952, %v6671
        %v6985 = vmul.f32 %v6953, %v6673
        %v6986 = vmul.f32 %v6954, %v6675
        %v6987 = vmul.f32 %v6955, %v6677
        %v6988 = vmul.f32 %v6956, %v6679
        %v6989 = vmul.f32 %v6957, %v6681
        %v6990 = vmul.f32 %v6958, %v6683
        %v6991 = vmul.f32 %v6959, %v6685
        %v6992 = vmul.f32 %v6960, %v6687
        %v6993 = vmul.f32 %v6961, %v6689
        %v6994 = vmul.f32 %v6962, %v6691
        %v6995 = vmul.f32 %v6963, %v6693
        %v6996 = vmul.f32 %v6964, %v6695
        %v6997 = vmul.f32 %v6965, %v6697
        %v6998 = vmul.f32 %v6966, %v6699
        %v6999 = vmul.f32 %v6967, %v6701
        %v7000 = vmul.f32 %v6968, %v6703
        %v7001 = vmul.f32 %v6969, %v6705
        %v7002 = vmul.f32 %v6970, %v6707
        %v7003 = vmul.f32 %v6971, %v6709
        %v7004 = vmul.f32 %v6972, %v6711
        %v7005 = vmul.f32 %v6973, %v6713
        %v7006 = vmul.f32 %v6974, %v6715
        %v7007 = vmul.f32 %v6975, %v6717
        %v7008 = vmul.f32 %v6976, %v6719
        %v7009 = vmul.f32 %v6977, %v6721
        %v7010 = vsub.f32 0.0, %v6562
        %v7011 = vsub.f32 0.0, %v6563
        %v7012 = vsub.f32 0.0, %v6564
        %v7013 = vsub.f32 0.0, %v6565
        %v7014 = vsub.f32 0.0, %v6566
        %v7015 = vsub.f32 0.0, %v6567
        %v7016 = vsub.f32 0.0, %v6568
        %v7017 = vsub.f32 0.0, %v6569
        %v7018 = vsub.f32 0.0, %v6570
        %v7019 = vsub.f32 0.0, %v6571
        %v7020 = vsub.f32 0.0, %v6572
        %v7021 = vsub.f32 0.0, %v6573
        %v7022 = vsub.f32 0.0, %v6574
        %v7023 = vsub.f32 0.0, %v6575
        %v7024 = vsub.f32 0.0, %v6576
        %v7025 = vsub.f32 0.0, %v6577
        %v7026 = vsub.f32 0.0, %v6578
        %v7027 = vsub.f32 0.0, %v6579
        %v7028 = vsub.f32 0.0, %v6580
        %v7029 = vsub.f32 0.0, %v6581
        %v7030 = vsub.f32 0.0, %v6582
        %v7031 = vsub.f32 0.0, %v6583
        %v7032 = vsub.f32 0.0, %v6584
        %v7033 = vsub.f32 0.0, %v6585
        %v7034 = vsub.f32 0.0, %v6586
        %v7035 = vsub.f32 0.0, %v6587
        %v7036 = vsub.f32 0.0, %v6588
        %v7037 = vsub.f32 0.0, %v6589
        %v7038 = vsub.f32 0.0, %v6590
        %v7039 = vsub.f32 0.0, %v6591
        %v7040 = vsub.f32 0.0, %v6592
        %v7041 = vsub.f32 0.0, %v6593
        %v7042 = vmul.f32 %v7010, %v6562
        %v7043 = vmul.f32 %v7011, %v6563
        %v7044 = vmul.f32 %v7012, %v6564
        %v7045 = vmul.f32 %v7013, %v6565
        %v7046 = vmul.f32 %v7014, %v6566
        %v7047 = vmul.f32 %v7015, %v6567
        %v7048 = vmul.f32 %v7016, %v6568
        %v7049 = vmul.f32 %v7017, %v6569
        %v7050 = vmul.f32 %v7018, %v6570
        %v7051 = vmul.f32 %v7019, %v6571
        %v7052 = vmul.f32 %v7020, %v6572
        %v7053 = vmul.f32 %v7021, %v6573
        %v7054 = vmul.f32 %v7022, %v6574
        %v7055 = vmul.f32 %v7023, %v6575
        %v7056 = vmul.f32 %v7024, %v6576
        %v7057 = vmul.f32 %v7025, %v6577
        %v7058 = vmul.f32 %v7026, %v6578
        %v7059 = vmul.f32 %v7027, %v6579
        %v7060 = vmul.f32 %v7028, %v6580
        %v7061 = vmul.f32 %v7029, %v6581
        %v7062 = vmul.f32 %v7030, %v6582
        %v7063 = vmul.f32 %v7031, %v6583
        %v7064 = vmul.f32 %v7032, %v6584
        %v7065 = vmul.f32 %v7033, %v6585
        %v7066 = vmul.f32 %v7034, %v6586
        %v7067 = vmul.f32 %v7035, %v6587
        %v7068 = vmul.f32 %v7036, %v6588
        %v7069 = vmul.f32 %v7037, %v6589
        %v7070 = vmul.f32 %v7038, %v6590
        %v7071 = vmul.f32 %v7039, %v6591
        %v7072 = vmul.f32 %v7040, %v6592
        %v7073 = vmul.f32 %v7041, %v6593
        %v7074 = vmul.f32 %v7042, 1.442695
        %v7075 = vpow.pop %v7074
        %v7076 = vmul.f32 %v7043, 1.442695
        %v7077 = vpow.pop %v7076
        %v7078 = vmul.f32 %v7044, 1.442695
        %v7079 = vpow.pop %v7078
        %v7080 = vmul.f32 %v7045, 1.442695
        %v7081 = vpow.pop %v7080
        %v7082 = vmul.f32 %v7046, 1.442695
        %v7083 = vpow.pop %v7082
        %v7084 = vmul.f32 %v7047, 1.442695
        %v7085 = vpow.pop %v7084
        %v7086 = vmul.f32 %v7048, 1.442695
        %v7087 = vpow.pop %v7086
        %v7088 = vmul.f32 %v7049, 1.442695
        %v7089 = vpow.pop %v7088
        %v7090 = vmul.f32 %v7050, 1.442695
        %v7091 = vpow.pop %v7090
        %v7092 = vmul.f32 %v7051, 1.442695
        %v7093 = vpow.pop %v7092
        %v7094 = vmul.f32 %v7052, 1.442695
        %v7095 = vpow.pop %v7094
        %v7096 = vmul.f32 %v7053, 1.442695
        %v7097 = vpow.pop %v7096
        %v7098 = vmul.f32 %v7054, 1.442695
        %v7099 = vpow.pop %v7098
        %v7100 = vmul.f32 %v7055, 1.442695
        %v7101 = vpow.pop %v7100
        %v7102 = vmul.f32 %v7056, 1.442695
        %v7103 = vpow.pop %v7102
        %v7104 = vmul.f32 %v7057, 1.442695
        %v7105 = vpow.pop %v7104
        %v7106 = vmul.f32 %v7058, 1.442695
        %v7107 = vpow.pop %v7106
        %v7108 = vmul.f32 %v7059, 1.442695
        %v7109 = vpow.pop %v7108
        %v7110 = vmul.f32 %v7060, 1.442695
        %v7111 = vpow.pop %v7110
        %v7112 = vmul.f32 %v7061, 1.442695
        %v7113 = vpow.pop %v7112
        %v7114 = vmul.f32 %v7062, 1.442695
        %v7115 = vpow.pop %v7114
        %v7116 = vmul.f32 %v7063, 1.442695
        %v7117 = vpow.pop %v7116
        %v7118 = vmul.f32 %v7064, 1.442695
        %v7119 = vpow.pop %v7118
        %v7120 = vmul.f32 %v7065, 1.442695
        %v7121 = vpow.pop %v7120
        %v7122 = vmul.f32 %v7066, 1.442695
        %v7123 = vpow.pop %v7122
        %v7124 = vmul.f32 %v7067, 1.442695
        %v7125 = vpow.pop %v7124
        %v7126 = vmul.f32 %v7068, 1.442695
        %v7127 = vpow.pop %v7126
        %v7128 = vmul.f32 %v7069, 1.442695
        %v7129 = vpow.pop %v7128
        %v7130 = vmul.f32 %v7070, 1.442695
        %v7131 = vpow.pop %v7130
        %v7132 = vmul.f32 %v7071, 1.442695
        %v7133 = vpow.pop %v7132
        %v7134 = vmul.f32 %v7072, 1.442695
        %v7135 = vpow.pop %v7134
        %v7136 = vmul.f32 %v7073, 1.442695
        %v7137 = vpow.pop %v7136
        %v7138 = vmul.f32 %v6978, %v7075
        %v7139 = vmul.f32 %v6979, %v7077
        %v7140 = vmul.f32 %v6980, %v7079
        %v7141 = vmul.f32 %v6981, %v7081
        %v7142 = vmul.f32 %v6982, %v7083
        %v7143 = vmul.f32 %v6983, %v7085
        %v7144 = vmul.f32 %v6984, %v7087
        %v7145 = vmul.f32 %v6985, %v7089
        %v7146 = vmul.f32 %v6986, %v7091
        %v7147 = vmul.f32 %v6987, %v7093
        %v7148 = vmul.f32 %v6988, %v7095
        %v7149 = vmul.f32 %v6989, %v7097
        %v7150 = vmul.f32 %v6990, %v7099
        %v7151 = vmul.f32 %v6991, %v7101
        %v7152 = vmul.f32 %v6992, %v7103
        %v7153 = vmul.f32 %v6993, %v7105
        %v7154 = vmul.f32 %v6994, %v7107
        %v7155 = vmul.f32 %v6995, %v7109
        %v7156 = vmul.f32 %v6996, %v7111
        %v7157 = vmul.f32 %v6997, %v7113
        %v7158 = vmul.f32 %v6998, %v7115
        %v7159 = vmul.f32 %v6999, %v7117
        %v7160 = vmul.f32 %v7000, %v7119
        %v7161 = vmul.f32 %v7001, %v7121
        %v7162 = vmul.f32 %v7002, %v7123
        %v7163 = vmul.f32 %v7003, %v7125
        %v7164 = vmul.f32 %v7004, %v7127
        %v7165 = vmul.f32 %v7005, %v7129
        %v7166 = vmul.f32 %v7006, %v7131
        %v7167 = vmul.f32 %v7007, %v7133
        %v7168 = vmul.f32 %v7008, %v7135
        %v7169 = vmul.f32 %v7009, %v7137
        %v7170 = vsub.f32 1.0, %v7138
        %v7171 = vsub.f32 1.0, %v7139
        %v7172 = vsub.f32 1.0, %v7140
        %v7173 = vsub.f32 1.0, %v7141
        %v7174 = vsub.f32 1.0, %v7142
        %v7175 = vsub.f32 1.0, %v7143
        %v7176 = vsub.f32 1.0, %v7144
        %v7177 = vsub.f32 1.0, %v7145
        %v7178 = vsub.f32 1.0, %v7146
        %v7179 = vsub.f32 1.0, %v7147
        %v7180 = vsub.f32 1.0, %v7148
        %v7181 = vsub.f32 1.0, %v7149
        %v7182 = vsub.f32 1.0, %v7150
        %v7183 = vsub.f32 1.0, %v7151
        %v7184 = vsub.f32 1.0, %v7152
        %v7185 = vsub.f32 1.0, %v7153
        %v7186 = vsub.f32 1.0, %v7154
        %v7187 = vsub.f32 1.0, %v7155
        %v7188 = vsub.f32 1.0, %v7156
        %v7189 = vsub.f32 1.0, %v7157
        %v7190 = vsub.f32 1.0, %v7158
        %v7191 = vsub.f32 1.0, %v7159
        %v7192 = vsub.f32 1.0, %v7160
        %v7193 = vsub.f32 1.0, %v7161
        %v7194 = vsub.f32 1.0, %v7162
        %v7195 = vsub.f32 1.0, %v7163
        %v7196 = vsub.f32 1.0, %v7164
        %v7197 = vsub.f32 1.0, %v7165
        %v7198 = vsub.f32 1.0, %v7166
        %v7199 = vsub.f32 1.0, %v7167
        %v7200 = vsub.f32 1.0, %v7168
        %v7201 = vsub.f32 1.0, %v7169
        %vm7202 = vcmp.ge.f32.partialorder %v6530, 0.0
        %vm7203 = vcmp.ge.f32.partialorder %v6531, 0.0
        %vm7204 = vcmp.ge.f32.partialorder %v6532, 0.0
        %vm7205 = vcmp.ge.f32.partialorder %v6533, 0.0
        %vm7206 = vcmp.ge.f32.partialorder %v6534, 0.0
        %vm7207 = vcmp.ge.f32.partialorder %v6535, 0.0
        %vm7208 = vcmp.ge.f32.partialorder %v6536, 0.0
        %vm7209 = vcmp.ge.f32.partialorder %v6537, 0.0
        %vm7210 = vcmp.ge.f32.partialorder %v6538, 0.0
        %vm7211 = vcmp.ge.f32.partialorder %v6539, 0.0
        %vm7212 = vcmp.ge.f32.partialorder %v6540, 0.0
        %vm7213 = vcmp.ge.f32.partialorder %v6541, 0.0
        %vm7214 = vcmp.ge.f32.partialorder %v6542, 0.0
        %vm7215 = vcmp.ge.f32.partialorder %v6543, 0.0
        %vm7216 = vcmp.ge.f32.partialorder %v6544, 0.0
        %vm7217 = vcmp.ge.f32.partialorder %v6545, 0.0
        %vm7218 = vcmp.ge.f32.partialorder %v6546, 0.0
        %vm7219 = vcmp.ge.f32.partialorder %v6547, 0.0
        %vm7220 = vcmp.ge.f32.partialorder %v6548, 0.0
        %vm7221 = vcmp.ge.f32.partialorder %v6549, 0.0
        %vm7222 = vcmp.ge.f32.partialorder %v6550, 0.0
        %vm7223 = vcmp.ge.f32.partialorder %v6551, 0.0
        %vm7224 = vcmp.ge.f32.partialorder %v6552, 0.0
        %vm7225 = vcmp.ge.f32.partialorder %v6553, 0.0
        %vm7226 = vcmp.ge.f32.partialorder %v6554, 0.0
        %vm7227 = vcmp.ge.f32.partialorder %v6555, 0.0
        %vm7228 = vcmp.ge.f32.partialorder %v6556, 0.0
        %vm7229 = vcmp.ge.f32.partialorder %v6557, 0.0
        %vm7230 = vcmp.ge.f32.partialorder %v6558, 0.0
        %vm7231 = vcmp.ge.f32.partialorder %v6559, 0.0
        %vm7232 = vcmp.ge.f32.partialorder %v6560, 0.0
        %vm7233 = vcmp.ge.f32.partialorder %v6561, 0.0
        %v7234 = vsub.f32 0.0, %v7170
        %v7235 = vsub.f32 0.0, %v7171
        %v7236 = vsub.f32 0.0, %v7172
        %v7237 = vsub.f32 0.0, %v7173
        %v7238 = vsub.f32 0.0, %v7174
        %v7239 = vsub.f32 0.0, %v7175
        %v7240 = vsub.f32 0.0, %v7176
        %v7241 = vsub.f32 0.0, %v7177
        %v7242 = vsub.f32 0.0, %v7178
        %v7243 = vsub.f32 0.0, %v7179
        %v7244 = vsub.f32 0.0, %v7180
        %v7245 = vsub.f32 0.0, %v7181
        %v7246 = vsub.f32 0.0, %v7182
        %v7247 = vsub.f32 0.0, %v7183
        %v7248 = vsub.f32 0.0, %v7184
        %v7249 = vsub.f32 0.0, %v7185
        %v7250 = vsub.f32 0.0, %v7186
        %v7251 = vsub.f32 0.0, %v7187
        %v7252 = vsub.f32 0.0, %v7188
        %v7253 = vsub.f32 0.0, %v7189
        %v7254 = vsub.f32 0.0, %v7190
        %v7255 = vsub.f32 0.0, %v7191
        %v7256 = vsub.f32 0.0, %v7192
        %v7257 = vsub.f32 0.0, %v7193
        %v7258 = vsub.f32 0.0, %v7194
        %v7259 = vsub.f32 0.0, %v7195
        %v7260 = vsub.f32 0.0, %v7196
        %v7261 = vsub.f32 0.0, %v7197
        %v7262 = vsub.f32 0.0, %v7198
        %v7263 = vsub.f32 0.0, %v7199
        %v7264 = vsub.f32 0.0, %v7200
        %v7265 = vsub.f32 0.0, %v7201
        %v7266 = vsel %vm7202, %v7170, %v7234
        %v7267 = vsel %vm7203, %v7171, %v7235
        %v7268 = vsel %vm7204, %v7172, %v7236
        %v7269 = vsel %vm7205, %v7173, %v7237
        %v7270 = vsel %vm7206, %v7174, %v7238
        %v7271 = vsel %vm7207, %v7175, %v7239
        %v7272 = vsel %vm7208, %v7176, %v7240
        %v7273 = vsel %vm7209, %v7177, %v7241
        %v7274 = vsel %vm7210, %v7178, %v7242
        %v7275 = vsel %vm7211, %v7179, %v7243
        %v7276 = vsel %vm7212, %v7180, %v7244
        %v7277 = vsel %vm7213, %v7181, %v7245
        %v7278 = vsel %vm7214, %v7182, %v7246
        %v7279 = vsel %vm7215, %v7183, %v7247
        %v7280 = vsel %vm7216, %v7184, %v7248
        %v7281 = vsel %vm7217, %v7185, %v7249
        %v7282 = vsel %vm7218, %v7186, %v7250
        %v7283 = vsel %vm7219, %v7187, %v7251
        %v7284 = vsel %vm7220, %v7188, %v7252
        %v7285 = vsel %vm7221, %v7189, %v7253
        %v7286 = vsel %vm7222, %v7190, %v7254
        %v7287 = vsel %vm7223, %v7191, %v7255
        %v7288 = vsel %vm7224, %v7192, %v7256
        %v7289 = vsel %vm7225, %v7193, %v7257
        %v7290 = vsel %vm7226, %v7194, %v7258
        %v7291 = vsel %vm7227, %v7195, %v7259
        %v7292 = vsel %vm7228, %v7196, %v7260
        %v7293 = vsel %vm7229, %v7197, %v7261
        %v7294 = vsel %vm7230, %v7198, %v7262
        %v7295 = vsel %vm7231, %v7199, %v7263
        %v7296 = vsel %vm7232, %v7200, %v7264
        %v7297 = vsel %vm7233, %v7201, %v7265
        %v7298 = vadd.f32 %v7266, 1.0
        %v7299 = vadd.f32 %v7267, 1.0
        %v7300 = vadd.f32 %v7268, 1.0
        %v7301 = vadd.f32 %v7269, 1.0
        %v7302 = vadd.f32 %v7270, 1.0
        %v7303 = vadd.f32 %v7271, 1.0
        %v7304 = vadd.f32 %v7272, 1.0
        %v7305 = vadd.f32 %v7273, 1.0
        %v7306 = vadd.f32 %v7274, 1.0
        %v7307 = vadd.f32 %v7275, 1.0
        %v7308 = vadd.f32 %v7276, 1.0
        %v7309 = vadd.f32 %v7277, 1.0
        %v7310 = vadd.f32 %v7278, 1.0
        %v7311 = vadd.f32 %v7279, 1.0
        %v7312 = vadd.f32 %v7280, 1.0
        %v7313 = vadd.f32 %v7281, 1.0
        %v7314 = vadd.f32 %v7282, 1.0
        %v7315 = vadd.f32 %v7283, 1.0
        %v7316 = vadd.f32 %v7284, 1.0
        %v7317 = vadd.f32 %v7285, 1.0
        %v7318 = vadd.f32 %v7286, 1.0
        %v7319 = vadd.f32 %v7287, 1.0
        %v7320 = vadd.f32 %v7288, 1.0
        %v7321 = vadd.f32 %v7289, 1.0
        %v7322 = vadd.f32 %v7290, 1.0
        %v7323 = vadd.f32 %v7291, 1.0
        %v7324 = vadd.f32 %v7292, 1.0
        %v7325 = vadd.f32 %v7293, 1.0
        %v7326 = vadd.f32 %v7294, 1.0
        %v7327 = vadd.f32 %v7295, 1.0
        %v7328 = vadd.f32 %v7296, 1.0
        %v7329 = vadd.f32 %v7297, 1.0
        %v7330 = vmul.f32 %v6498, %v7298
        %v7331 = vmul.f32 %v6499, %v7299
        %v7332 = vmul.f32 %v6500, %v7300
        %v7333 = vmul.f32 %v6501, %v7301
        %v7334 = vmul.f32 %v6502, %v7302
        %v7335 = vmul.f32 %v6503, %v7303
        %v7336 = vmul.f32 %v6504, %v7304
        %v7337 = vmul.f32 %v6505, %v7305
        %v7338 = vmul.f32 %v6506, %v7306
        %v7339 = vmul.f32 %v6507, %v7307
        %v7340 = vmul.f32 %v6508, %v7308
        %v7341 = vmul.f32 %v6509, %v7309
        %v7342 = vmul.f32 %v6510, %v7310
        %v7343 = vmul.f32 %v6511, %v7311
        %v7344 = vmul.f32 %v6512, %v7312
        %v7345 = vmul.f32 %v6513, %v7313
        %v7346 = vmul.f32 %v6514, %v7314
        %v7347 = vmul.f32 %v6515, %v7315
        %v7348 = vmul.f32 %v6516, %v7316
        %v7349 = vmul.f32 %v6517, %v7317
        %v7350 = vmul.f32 %v6518, %v7318
        %v7351 = vmul.f32 %v6519, %v7319
        %v7352 = vmul.f32 %v6520, %v7320
        %v7353 = vmul.f32 %v6521, %v7321
        %v7354 = vmul.f32 %v6522, %v7322
        %v7355 = vmul.f32 %v6523, %v7323
        %v7356 = vmul.f32 %v6524, %v7324
        %v7357 = vmul.f32 %v6525, %v7325
        %v7358 = vmul.f32 %v6526, %v7326
        %v7359 = vmul.f32 %v6527, %v7327
        %v7360 = vmul.f32 %v6528, %v7328
        %v7361 = vmul.f32 %v6529, %v7329
        %v7362 = vpack.c.bf16 %v7332, %v7330
        %v7363 = vpack.c.bf16 %v7333, %v7331
        %v7364 = vpack.c.bf16 %v7336, %v7334
        %v7365 = vpack.c.bf16 %v7337, %v7335
        %v7366 = vpack.c.bf16 %v7340, %v7338
        %v7367 = vpack.c.bf16 %v7341, %v7339
        %v7368 = vpack.c.bf16 %v7344, %v7342
        %v7369 = vpack.c.bf16 %v7345, %v7343
        %v7370 = vpack.c.bf16 %v7348, %v7346
        %v7371 = vpack.c.bf16 %v7349, %v7347
        %v7372 = vpack.c.bf16 %v7352, %v7350
        %v7373 = vpack.c.bf16 %v7353, %v7351
        %v7374 = vpack.c.bf16 %v7356, %v7354
        %v7375 = vpack.c.bf16 %v7357, %v7355
        %v7376 = vpack.c.bf16 %v7360, %v7358
        %v7377 = vpack.c.bf16 %v7361, %v7359
        %v7378 = vld [vmem:[%s795] sm:$0xf]
        %v7379 = vld [vmem:[%s795 + $0x4] sm:$0xf]
        %v7380 = vld [vmem:[%s795 + $0x8] sm:$0xf]
        %v7381 = vld [vmem:[%s795 + $0xc] sm:$0xf]
        %v7382 = vld [vmem:[%s795 + $0x10] sm:$0xf]
        %v7383 = vld [vmem:[%s795 + $0x14] sm:$0xf]
        %v7384 = vld [vmem:[%s795 + $0x18] sm:$0xf]
        %v7385 = vld [vmem:[%s795 + $0x1c] sm:$0xf]
        %v7386 = vld [vmem:[%s795 + $0x20] sm:$0xf]
        %v7387 = vld [vmem:[%s795 + $0x24] sm:$0xf]
        %v7388 = vld [vmem:[%s795 + $0x28] sm:$0xf]
        %v7389 = vld [vmem:[%s795 + $0x2c] sm:$0xf]
        %v7390 = vld [vmem:[%s795 + $0x30] sm:$0xf]
        %v7391 = vld [vmem:[%s795 + $0x34] sm:$0xf]
        %v7392 = vld [vmem:[%s795 + $0x38] sm:$0xf]
        %v7393 = vld [vmem:[%s795 + $0x3c] sm:$0xf]
        %v7394 = vld [vmem:[%s795 + $0x40] sm:$0xf]
        %v7395 = vld [vmem:[%s795 + $0x44] sm:$0xf]
        %v7396 = vld [vmem:[%s795 + $0x48] sm:$0xf]
        %v7397 = vld [vmem:[%s795 + $0x4c] sm:$0xf]
        %v7398 = vld [vmem:[%s795 + $0x50] sm:$0xf]
        %v7399 = vld [vmem:[%s795 + $0x54] sm:$0xf]
        %v7400 = vld [vmem:[%s795 + $0x58] sm:$0xf]
        %v7401 = vld [vmem:[%s795 + $0x5c] sm:$0xf]
        %v7402 = vld [vmem:[%s795 + $0x60] sm:$0xf]
        %v7403 = vld [vmem:[%s795 + $0x64] sm:$0xf]
        %v7404 = vld [vmem:[%s795 + $0x68] sm:$0xf]
        %v7405 = vld [vmem:[%s795 + $0x6c] sm:$0xf]
        %v7406 = vld [vmem:[%s795 + $0x70] sm:$0xf]
        %v7407 = vld [vmem:[%s795 + $0x74] sm:$0xf]
        %v7408 = vld [vmem:[%s795 + $0x78] sm:$0xf]
        %v7409 = vld [vmem:[%s795 + $0x7c] sm:$0xf]
        %v7410 = vld [vmem:[%s803] sm:$0x1]
        %v7412 = vlaneseq
        %v7413 = vshrl.u32 %v7412, 7
        %v7414 = vsub.s32 0, %v7413
        %v7415 = vrot.slane %v7410, %v7414
        %v7449 = vunpack.c.l.b16 %v7378
        %v7450 = vunpack.c.l.b16 %v7379
        %v7451 = vunpack.c.l.b16 %v7380
        %v7452 = vunpack.c.l.b16 %v7381
        %v7453 = vunpack.c.l.b16 %v7382
        %v7454 = vunpack.c.l.b16 %v7383
        %v7455 = vunpack.c.l.b16 %v7384
        %v7456 = vunpack.c.l.b16 %v7385
        %v7457 = vunpack.c.l.b16 %v7386
        %v7458 = vunpack.c.l.b16 %v7387
        %v7459 = vunpack.c.l.b16 %v7388
        %v7460 = vunpack.c.l.b16 %v7389
        %v7461 = vunpack.c.l.b16 %v7390
        %v7462 = vunpack.c.l.b16 %v7391
        %v7463 = vunpack.c.l.b16 %v7392
        %v7464 = vunpack.c.l.b16 %v7393
        %v7465 = vunpack.c.l.b16 %v7394
        %v7466 = vunpack.c.l.b16 %v7395
        %v7467 = vunpack.c.l.b16 %v7396
        %v7468 = vunpack.c.l.b16 %v7397
        %v7469 = vunpack.c.l.b16 %v7398
        %v7470 = vunpack.c.l.b16 %v7399
        %v7471 = vunpack.c.l.b16 %v7400
        %v7472 = vunpack.c.l.b16 %v7401
        %v7473 = vunpack.c.l.b16 %v7402
        %v7474 = vunpack.c.l.b16 %v7403
        %v7475 = vunpack.c.l.b16 %v7404
        %v7476 = vunpack.c.l.b16 %v7405
        %v7477 = vunpack.c.l.b16 %v7406
        %v7478 = vunpack.c.l.b16 %v7407
        %v7479 = vunpack.c.l.b16 %v7408
        %v7480 = vunpack.c.l.b16 %v7409
        %v7481 = vpack.c.b16 %v7450, %v7449
        %v7482 = vpack.c.b16 %v7452, %v7451
        %v7483 = vpack.c.b16 %v7454, %v7453
        %v7484 = vpack.c.b16 %v7456, %v7455
        %v7485 = vpack.c.b16 %v7458, %v7457
        %v7486 = vpack.c.b16 %v7460, %v7459
        %v7487 = vpack.c.b16 %v7462, %v7461
        %v7488 = vpack.c.b16 %v7464, %v7463
        %v7489 = vpack.c.b16 %v7466, %v7465
        %v7490 = vpack.c.b16 %v7468, %v7467
        %v7491 = vpack.c.b16 %v7470, %v7469
        %v7492 = vpack.c.b16 %v7472, %v7471
        %v7493 = vpack.c.b16 %v7474, %v7473
        %v7494 = vpack.c.b16 %v7476, %v7475
        %v7495 = vpack.c.b16 %v7478, %v7477
        %v7496 = vpack.c.b16 %v7480, %v7479
        %7513 = vmatprep.subr.bf16.mxu0 0
        %7514 = vmatpush1.bf16.msra.mxu0 %v7481
        %7515 = vmatprep.subr.bf16.mxu0 0
        %7516 = vmatpush1.bf16.msra.mxu0 %v7482
        %7517 = vmatprep.subr.bf16.mxu0 0
        %7518 = vmatpush1.bf16.msra.mxu0 %v7483
        %7519 = vmatprep.subr.bf16.mxu0 0
        %7520 = vmatpush1.bf16.msra.mxu0 %v7484
        %7521 = vmatprep.subr.bf16.mxu0 0
        %7522 = vmatpush1.bf16.msra.mxu0 %v7485
        %7523 = vmatprep.subr.bf16.mxu0 0
        %7524 = vmatpush1.bf16.msra.mxu0 %v7486
        %7525 = vmatprep.subr.bf16.mxu0 0
        %7526 = vmatpush1.bf16.msra.mxu0 %v7487
        %7527 = vmatprep.subr.bf16.mxu0 0
        %7528 = vmatpush1.bf16.msra.mxu0 %v7488
        %7529 = vmatprep.subr.bf16.mxu0 0
        %7530 = vmatpush1.bf16.msra.mxu0 %v7489
        %7531 = vmatprep.subr.bf16.mxu0 0
        %7532 = vmatpush1.bf16.msra.mxu0 %v7490
        %7533 = vmatprep.subr.bf16.mxu0 0
        %7534 = vmatpush1.bf16.msra.mxu0 %v7491
        %7535 = vmatprep.subr.bf16.mxu0 0
        %7536 = vmatpush1.bf16.msra.mxu0 %v7492
        %7537 = vmatprep.subr.bf16.mxu0 0
        %7538 = vmatpush1.bf16.msra.mxu0 %v7493
        %7539 = vmatprep.subr.bf16.mxu0 0
        %7540 = vmatpush1.bf16.msra.mxu0 %v7494
        %7541 = vmatprep.subr.bf16.mxu0 0
        %7542 = vmatpush1.bf16.msra.mxu0 %v7495
        %7543 = vmatprep.subr.bf16.mxu0 0
        %7544 = vmatpush1.bf16.msra.mxu0 %v7496
        %7545 = vmatprep.mubr.bf16.mxu0 %v7363
        %7546 = vmatmul.mubr.bf16.gmra.mrb[0].mxu0 %v7362
        %v7547 = vpop.f32.mrb[0].mxu0
        %v7548 = vadd.f32 %v7415, %v7547
        %v7549 = vpop.f32.mrb[0].mxu0
        %v7550 = vpop.f32.mrb[0].mxu0
        %v7551 = vadd.f32 %v7415, %v7550
        %v7552 = vpop.f32.mrb[0].mxu0
        %7553 = vmatprep.mubr.bf16.mxu0 %v7365
        %7554 = vmatmul.mubr.bf16.gmra.mrb[0].mxu0 %v7364
        %v7555 = vpop.f32.mrb[0].mxu0
        %v7556 = vadd.f32 %v7415, %v7555
        %v7557 = vpop.f32.mrb[0].mxu0
        %v7558 = vpop.f32.mrb[0].mxu0
        %v7559 = vadd.f32 %v7415, %v7558
        %v7560 = vpop.f32.mrb[0].mxu0
        %7561 = vmatprep.mubr.bf16.mxu0 %v7367
        %7562 = vmatmul.mubr.bf16.gmra.mrb[0].mxu0 %v7366
        %v7563 = vpop.f32.mrb[0].mxu0
        %v7564 = vadd.f32 %v7415, %v7563
        %v7565 = vpop.f32.mrb[0].mxu0
        %v7566 = vpop.f32.mrb[0].mxu0
        %v7567 = vadd.f32 %v7415, %v7566
        %v7568 = vpop.f32.mrb[0].mxu0
        %7569 = vmatprep.mubr.bf16.mxu0 %v7369
        %7570 = vmatmul.mubr.bf16.gmra.mrb[0].mxu0 %v7368
        %v7571 = vpop.f32.mrb[0].mxu0
        %v7572 = vadd.f32 %v7415, %v7571
        %v7573 = vpop.f32.mrb[0].mxu0
        %v7574 = vpop.f32.mrb[0].mxu0
        %v7575 = vadd.f32 %v7415, %v7574
        %v7576 = vpop.f32.mrb[0].mxu0
        %7577 = vmatprep.mubr.bf16.mxu0 %v7371
        %7578 = vmatmul.mubr.bf16.gmra.mrb[0].mxu0 %v7370
        %v7579 = vpop.f32.mrb[0].mxu0
        %v7580 = vadd.f32 %v7415, %v7579
        %v7581 = vpop.f32.mrb[0].mxu0
        %v7582 = vpop.f32.mrb[0].mxu0
        %v7583 = vadd.f32 %v7415, %v7582
        %v7584 = vpop.f32.mrb[0].mxu0
        %7585 = vmatprep.mubr.bf16.mxu0 %v7373
        %7586 = vmatmul.mubr.bf16.gmra.mrb[0].mxu0 %v7372
        %v7587 = vpop.f32.mrb[0].mxu0
        %v7588 = vadd.f32 %v7415, %v7587
        %v7589 = vpop.f32.mrb[0].mxu0
        %v7590 = vpop.f32.mrb[0].mxu0
        %v7591 = vadd.f32 %v7415, %v7590
        %v7592 = vpop.f32.mrb[0].mxu0
        %7593 = vmatprep.mubr.bf16.mxu0 %v7375
        %7594 = vmatmul.mubr.bf16.gmra.mrb[0].mxu0 %v7374
        %v7595 = vpop.f32.mrb[0].mxu0
        %v7596 = vadd.f32 %v7415, %v7595
        %v7597 = vpop.f32.mrb[0].mxu0
        %v7598 = vpop.f32.mrb[0].mxu0
        %v7599 = vadd.f32 %v7415, %v7598
        %v7600 = vpop.f32.mrb[0].mxu0
        %7601 = vmatprep.mubr.bf16.mxu0 %v7377
        %7602 = vmatmul.mubr.bf16.gmra.mrb[0].mxu0 %v7376
        %v7603 = vpop.f32.mrb[0].mxu0
        %v7604 = vadd.f32 %v7415, %v7603
        %v7605 = vpop.f32.mrb[0].mxu0
        %v7606 = vpop.f32.mrb[0].mxu0
        %v7607 = vadd.f32 %v7415, %v7606
        %v7608 = vpop.f32.mrb[0].mxu0
        %7609 = vdwg.mxu0
        %v7610 = vadd.f32 %v6253, %v7548
        %v7611 = vadd.f32 %v6254, %v7551
        %v7612 = vadd.f32 %v6255, %v7556
        %v7613 = vadd.f32 %v6256, %v7559
        %v7614 = vadd.f32 %v6257, %v7564
        %v7615 = vadd.f32 %v6258, %v7567
        %v7616 = vadd.f32 %v6259, %v7572
        %v7617 = vadd.f32 %v6260, %v7575
        %v7618 = vadd.f32 %v6261, %v7580
        %v7619 = vadd.f32 %v6262, %v7583
        %v7620 = vadd.f32 %v6263, %v7588
        %v7621 = vadd.f32 %v6264, %v7591
        %v7622 = vadd.f32 %v6265, %v7596
        %v7623 = vadd.f32 %v6266, %v7599
        %v7624 = vadd.f32 %v6267, %v7604
        %v7625 = vadd.f32 %v6268, %v7607
        %v7626 = vld [vmem:[%s811] sm:$0x1]
        %v7627 = vld [vmem:[%s819] sm:$0x1]
        %7628 = vadd.xlane.f32.xlu0 %v7610
        %v7629 = vpop.xlane.xlu0 %7628
        %7630 = vadd.xlane.f32.xlu0 %v7611
        %v7631 = vpop.xlane.xlu0 %7630
        %7632 = vadd.xlane.f32.xlu0 %v7612
        %v7633 = vpop.xlane.xlu0 %7632
        %7634 = vadd.xlane.f32.xlu0 %v7613
        %v7635 = vpop.xlane.xlu0 %7634
        %7636 = vadd.xlane.f32.xlu0 %v7614
        %v7637 = vpop.xlane.xlu0 %7636
        %7638 = vadd.xlane.f32.xlu0 %v7615
        %v7639 = vpop.xlane.xlu0 %7638
        %7640 = vadd.xlane.f32.xlu0 %v7616
        %v7641 = vpop.xlane.xlu0 %7640
        %7642 = vadd.xlane.f32.xlu0 %v7617
        %v7643 = vpop.xlane.xlu0 %7642
        %7644 = vadd.xlane.f32.xlu0 %v7618
        %v7645 = vpop.xlane.xlu0 %7644
        %7646 = vadd.xlane.f32.xlu0 %v7619
        %v7647 = vpop.xlane.xlu0 %7646
        %7648 = vadd.xlane.f32.xlu0 %v7620
        %v7649 = vpop.xlane.xlu0 %7648
        %7650 = vadd.xlane.f32.xlu0 %v7621
        %v7651 = vpop.xlane.xlu0 %7650
        %7652 = vadd.xlane.f32.xlu0 %v7622
        %v7653 = vpop.xlane.xlu0 %7652
        %7654 = vadd.xlane.f32.xlu0 %v7623
        %v7655 = vpop.xlane.xlu0 %7654
        %7656 = vadd.xlane.f32.xlu0 %v7624
        %v7657 = vpop.xlane.xlu0 %7656
        %7658 = vadd.xlane.f32.xlu0 %v7625
        %v7659 = vpop.xlane.xlu0 %7658
        %v7660 = vmul.f32 %v7629, %v6080
        %v7661 = vmul.f32 %v7631, %v6080
        %v7662 = vmul.f32 %v7633, %v6080
        %v7663 = vmul.f32 %v7635, %v6080
        %v7664 = vmul.f32 %v7637, %v6080
        %v7665 = vmul.f32 %v7639, %v6080
        %v7666 = vmul.f32 %v7641, %v6080
        %v7667 = vmul.f32 %v7643, %v6080
        %v7668 = vmul.f32 %v7645, %v6080
        %v7669 = vmul.f32 %v7647, %v6080
        %v7670 = vmul.f32 %v7649, %v6080
        %v7671 = vmul.f32 %v7651, %v6080
        %v7672 = vmul.f32 %v7653, %v6080
        %v7673 = vmul.f32 %v7655, %v6080
        %v7674 = vmul.f32 %v7657, %v6080
        %v7675 = vmul.f32 %v7659, %v6080
        %v7676 = vsub.f32 %v7610, %v7660
        %v7677 = vsub.f32 %v7611, %v7661
        %v7678 = vsub.f32 %v7612, %v7662
        %v7679 = vsub.f32 %v7613, %v7663
        %v7680 = vsub.f32 %v7614, %v7664
        %v7681 = vsub.f32 %v7615, %v7665
        %v7682 = vsub.f32 %v7616, %v7666
        %v7683 = vsub.f32 %v7617, %v7667
        %v7684 = vsub.f32 %v7618, %v7668
        %v7685 = vsub.f32 %v7619, %v7669
        %v7686 = vsub.f32 %v7620, %v7670
        %v7687 = vsub.f32 %v7621, %v7671
        %v7688 = vsub.f32 %v7622, %v7672
        %v7689 = vsub.f32 %v7623, %v7673
        %v7690 = vsub.f32 %v7624, %v7674
        %v7691 = vsub.f32 %v7625, %v7675
        %v7692 = vmul.f32 %v7676, %v7676
        %v7693 = vmul.f32 %v7677, %v7677
        %v7694 = vmul.f32 %v7678, %v7678
        %v7695 = vmul.f32 %v7679, %v7679
        %v7696 = vmul.f32 %v7680, %v7680
        %v7697 = vmul.f32 %v7681, %v7681
        %v7698 = vmul.f32 %v7682, %v7682
        %v7699 = vmul.f32 %v7683, %v7683
        %v7700 = vmul.f32 %v7684, %v7684
        %v7701 = vmul.f32 %v7685, %v7685
        %v7702 = vmul.f32 %v7686, %v7686
        %v7703 = vmul.f32 %v7687, %v7687
        %v7704 = vmul.f32 %v7688, %v7688
        %v7705 = vmul.f32 %v7689, %v7689
        %v7706 = vmul.f32 %v7690, %v7690
        %v7707 = vmul.f32 %v7691, %v7691
        %7708 = vadd.xlane.f32.xlu0 %v7692
        %v7709 = vpop.xlane.xlu0 %7708
        %7710 = vadd.xlane.f32.xlu0 %v7693
        %v7711 = vpop.xlane.xlu0 %7710
        %7712 = vadd.xlane.f32.xlu0 %v7694
        %v7713 = vpop.xlane.xlu0 %7712
        %7714 = vadd.xlane.f32.xlu0 %v7695
        %v7715 = vpop.xlane.xlu0 %7714
        %7716 = vadd.xlane.f32.xlu0 %v7696
        %v7717 = vpop.xlane.xlu0 %7716
        %7718 = vadd.xlane.f32.xlu0 %v7697
        %v7719 = vpop.xlane.xlu0 %7718
        %7720 = vadd.xlane.f32.xlu0 %v7698
        %v7721 = vpop.xlane.xlu0 %7720
        %7722 = vadd.xlane.f32.xlu0 %v7699
        %v7723 = vpop.xlane.xlu0 %7722
        %7724 = vadd.xlane.f32.xlu0 %v7700
        %v7725 = vpop.xlane.xlu0 %7724
        %7726 = vadd.xlane.f32.xlu0 %v7701
        %v7727 = vpop.xlane.xlu0 %7726
        %7728 = vadd.xlane.f32.xlu0 %v7702
        %v7729 = vpop.xlane.xlu0 %7728
        %7730 = vadd.xlane.f32.xlu0 %v7703
        %v7731 = vpop.xlane.xlu0 %7730
        %7732 = vadd.xlane.f32.xlu0 %v7704
        %v7733 = vpop.xlane.xlu0 %7732
        %7734 = vadd.xlane.f32.xlu0 %v7705
        %v7735 = vpop.xlane.xlu0 %7734
        %7736 = vadd.xlane.f32.xlu0 %v7706
        %v7737 = vpop.xlane.xlu0 %7736
        %7738 = vadd.xlane.f32.xlu0 %v7707
        %v7739 = vpop.xlane.xlu0 %7738
        %v7740 = vmul.f32 %v7709, %v6080
        %v7741 = vmul.f32 %v7711, %v6080
        %v7742 = vmul.f32 %v7713, %v6080
        %v7743 = vmul.f32 %v7715, %v6080
        %v7744 = vmul.f32 %v7717, %v6080
        %v7745 = vmul.f32 %v7719, %v6080
        %v7746 = vmul.f32 %v7721, %v6080
        %v7747 = vmul.f32 %v7723, %v6080
        %v7748 = vmul.f32 %v7725, %v6080
        %v7749 = vmul.f32 %v7727, %v6080
        %v7750 = vmul.f32 %v7729, %v6080
        %v7751 = vmul.f32 %v7731, %v6080
        %v7752 = vmul.f32 %v7733, %v6080
        %v7753 = vmul.f32 %v7735, %v6080
        %v7754 = vmul.f32 %v7737, %v6080
        %v7755 = vmul.f32 %v7739, %v6080
        %v7756 = vadd.f32 %v7740, 1e-05
        %v7757 = vadd.f32 %v7741, 1e-05
        %v7758 = vadd.f32 %v7742, 1e-05
        %v7759 = vadd.f32 %v7743, 1e-05
        %v7760 = vadd.f32 %v7744, 1e-05
        %v7761 = vadd.f32 %v7745, 1e-05
        %v7762 = vadd.f32 %v7746, 1e-05
        %v7763 = vadd.f32 %v7747, 1e-05
        %v7764 = vadd.f32 %v7748, 1e-05
        %v7765 = vadd.f32 %v7749, 1e-05
        %v7766 = vadd.f32 %v7750, 1e-05
        %v7767 = vadd.f32 %v7751, 1e-05
        %v7768 = vadd.f32 %v7752, 1e-05
        %v7769 = vadd.f32 %v7753, 1e-05
        %v7770 = vadd.f32 %v7754, 1e-05
        %v7771 = vadd.f32 %v7755, 1e-05
        %v7772 = vrsqrt.pop %v7756
        %v7773 = vrsqrt.pop %v7757
        %v7774 = vrsqrt.pop %v7758
        %v7775 = vrsqrt.pop %v7759
        %v7776 = vrsqrt.pop %v7760
        %v7777 = vrsqrt.pop %v7761
        %v7778 = vrsqrt.pop %v7762
        %v7779 = vrsqrt.pop %v7763
        %v7780 = vrsqrt.pop %v7764
        %v7781 = vrsqrt.pop %v7765
        %v7782 = vrsqrt.pop %v7766
        %v7783 = vrsqrt.pop %v7767
        %v7784 = vrsqrt.pop %v7768
        %v7785 = vrsqrt.pop %v7769
        %v7786 = vrsqrt.pop %v7770
        %v7787 = vrsqrt.pop %v7771
        %v7788 = vmul.f32 %v7676, %v7772
        %v7789 = vmul.f32 %v7677, %v7773
        %v7790 = vmul.f32 %v7678, %v7774
        %v7791 = vmul.f32 %v7679, %v7775
        %v7792 = vmul.f32 %v7680, %v7776
        %v7793 = vmul.f32 %v7681, %v7777
        %v7794 = vmul.f32 %v7682, %v7778
        %v7795 = vmul.f32 %v7683, %v7779
        %v7796 = vmul.f32 %v7684, %v7780
        %v7797 = vmul.f32 %v7685, %v7781
        %v7798 = vmul.f32 %v7686, %v7782
        %v7799 = vmul.f32 %v7687, %v7783
        %v7800 = vmul.f32 %v7688, %v7784
        %v7801 = vmul.f32 %v7689, %v7785
        %v7802 = vmul.f32 %v7690, %v7786
        %v7803 = vmul.f32 %v7691, %v7787
        %v7805 = vlaneseq
        %v7806 = vshrl.u32 %v7805, 7
        %v7807 = vsub.s32 0, %v7806
        %v7808 = vrot.slane %v7626, %v7807
        %v7810 = vmul.f32 %v7788, %v7808
        %v7811 = vmul.f32 %v7789, %v7808
        %v7812 = vmul.f32 %v7790, %v7808
        %v7813 = vmul.f32 %v7791, %v7808
        %v7814 = vmul.f32 %v7792, %v7808
        %v7815 = vmul.f32 %v7793, %v7808
        %v7816 = vmul.f32 %v7794, %v7808
        %v7817 = vmul.f32 %v7795, %v7808
        %v7818 = vmul.f32 %v7796, %v7808
        %v7819 = vmul.f32 %v7797, %v7808
        %v7820 = vmul.f32 %v7798, %v7808
        %v7821 = vmul.f32 %v7799, %v7808
        %v7822 = vmul.f32 %v7800, %v7808
        %v7823 = vmul.f32 %v7801, %v7808
        %v7824 = vmul.f32 %v7802, %v7808
        %v7825 = vmul.f32 %v7803, %v7808
        %v7827 = vlaneseq
        %v7828 = vshrl.u32 %v7827, 7
        %v7829 = vsub.s32 0, %v7828
        %v7830 = vrot.slane %v7627, %v7829
        %v7832 = vadd.f32 %v7810, %v7830
        %v7833 = vadd.f32 %v7811, %v7830
        %v7834 = vadd.f32 %v7812, %v7830
        %v7835 = vadd.f32 %v7813, %v7830
        %v7836 = vadd.f32 %v7814, %v7830
        %v7837 = vadd.f32 %v7815, %v7830
        %v7838 = vadd.f32 %v7816, %v7830
        %v7839 = vadd.f32 %v7817, %v7830
        %v7840 = vadd.f32 %v7818, %v7830
        %v7841 = vadd.f32 %v7819, %v7830
        %v7842 = vadd.f32 %v7820, %v7830
        %v7843 = vadd.f32 %v7821, %v7830
        %v7844 = vadd.f32 %v7822, %v7830
        %v7845 = vadd.f32 %v7823, %v7830
        %v7846 = vadd.f32 %v7824, %v7830
        %v7847 = vadd.f32 %v7825, %v7830
        %7848 = vst [vmem:[#allocation2] sm:$0xff] %v7832
        %7849 = vst [vmem:[#allocation2 + $0x8] sm:$0xff] %v7833
        %7850 = vst [vmem:[#allocation2 + $0x10] sm:$0xff] %v7834
        %7851 = vst [vmem:[#allocation2 + $0x18] sm:$0xff] %v7835
        %7852 = vst [vmem:[#allocation2 + $0x20] sm:$0xff] %v7836
        %7853 = vst [vmem:[#allocation2 + $0x28] sm:$0xff] %v7837
        %7854 = vst [vmem:[#allocation2 + $0x30] sm:$0xff] %v7838
        %7855 = vst [vmem:[#allocation2 + $0x38] sm:$0xff] %v7839
        %7856 = vst [vmem:[#allocation2 + $0x40] sm:$0xff] %v7840
        %7857 = vst [vmem:[#allocation2 + $0x48] sm:$0xff] %v7841
        %7858 = vst [vmem:[#allocation2 + $0x50] sm:$0xff] %v7842
        %7859 = vst [vmem:[#allocation2 + $0x58] sm:$0xff] %v7843
        %7860 = vst [vmem:[#allocation2 + $0x60] sm:$0xff] %v7844
        %7861 = vst [vmem:[#allocation2 + $0x68] sm:$0xff] %v7845
        %7862 = vst [vmem:[#allocation2 + $0x70] sm:$0xff] %v7846
        %7863 = vst [vmem:[#allocation2 + $0x78] sm:$0xff] %v7847
        %p7864 = scmp.eq.s32.totalorder %s37, 1
        // Predicated region
        $region137: #{gpt_forward.2} parent=75 // pred_check
          %p7865 = pneg %p7864
        $region138: #{gpt_forward.2} parent=75 // pred_check_branch
          %7867 = sbr.rel (%p7865) target = $region140
        $region139: #{gpt_forward.2} parent=75 // pred_region
          %v7868 = vld [vmem:[#allocation2] sm:$0xff]
          %v7869 = vld [vmem:[#allocation2 + $0x8] sm:$0xff]
          %v7870 = vld [vmem:[#allocation2 + $0x10] sm:$0xff]
          %v7871 = vld [vmem:[#allocation2 + $0x18] sm:$0xff]
          %v7872 = vld [vmem:[#allocation2 + $0x20] sm:$0xff]
          %v7873 = vld [vmem:[#allocation2 + $0x28] sm:$0xff]
          %v7874 = vld [vmem:[#allocation2 + $0x30] sm:$0xff]
          %v7875 = vld [vmem:[#allocation2 + $0x38] sm:$0xff]
          %v7876 = vld [vmem:[#allocation2 + $0x40] sm:$0xff]
          %v7877 = vld [vmem:[#allocation2 + $0x48] sm:$0xff]
          %v7878 = vld [vmem:[#allocation2 + $0x50] sm:$0xff]
          %v7879 = vld [vmem:[#allocation2 + $0x58] sm:$0xff]
          %v7880 = vld [vmem:[#allocation2 + $0x60] sm:$0xff]
          %v7881 = vld [vmem:[#allocation2 + $0x68] sm:$0xff]
          %v7882 = vld [vmem:[#allocation2 + $0x70] sm:$0xff]
          %v7883 = vld [vmem:[#allocation2 + $0x78] sm:$0xff]
          %v7884 = vpack.c.bf16 %v7869, %v7868
          %v7885 = vpack.c.bf16 %v7871, %v7870
          %v7886 = vpack.c.bf16 %v7873, %v7872
          %v7887 = vpack.c.bf16 %v7875, %v7874
          %v7888 = vpack.c.bf16 %v7877, %v7876
          %v7889 = vpack.c.bf16 %v7879, %v7878
          %v7890 = vpack.c.bf16 %v7881, %v7880
          %v7891 = vpack.c.bf16 %v7883, %v7882
          %v7900 = vunpack.c.l.b16 %v7884
          %v7901 = vunpack.c.h.b16 %v7884
          %v7902 = vunpack.c.l.b16 %v7885
          %v7903 = vunpack.c.h.b16 %v7885
          %v7904 = vunpack.c.l.b16 %v7886
          %v7905 = vunpack.c.h.b16 %v7886
          %v7906 = vunpack.c.l.b16 %v7887
          %v7907 = vunpack.c.h.b16 %v7887
          %v7908 = vunpack.c.l.b16 %v7888
          %v7909 = vunpack.c.h.b16 %v7888
          %v7910 = vunpack.c.l.b16 %v7889
          %v7911 = vunpack.c.h.b16 %v7889
          %v7912 = vunpack.c.l.b16 %v7890
          %v7913 = vunpack.c.h.b16 %v7890
          %v7914 = vunpack.c.l.b16 %v7891
          %v7915 = vunpack.c.h.b16 %v7891
          %v7916 = vpack.c.b16 %v7900, %v7900
          %v7917 = vpack.c.b16 %v7901, %v7901
          %v7918 = vpack.c.b16 %v7902, %v7902
          %v7919 = vpack.c.b16 %v7903, %v7903
          %v7920 = vpack.c.b16 %v7904, %v7904
          %v7921 = vpack.c.b16 %v7905, %v7905
          %v7922 = vpack.c.b16 %v7906, %v7906
          %v7923 = vpack.c.b16 %v7907, %v7907
          %v7924 = vpack.c.b16 %v7908, %v7908
          %v7925 = vpack.c.b16 %v7909, %v7909
          %v7926 = vpack.c.b16 %v7910, %v7910
          %v7927 = vpack.c.b16 %v7911, %v7911
          %v7928 = vpack.c.b16 %v7912, %v7912
          %v7929 = vpack.c.b16 %v7913, %v7913
          %v7930 = vpack.c.b16 %v7914, %v7914
          %v7931 = vpack.c.b16 %v7915, %v7915
          %7948 = vst [vmem:[%s917] sm:$0xf] %v7916
          %7949 = vst [vmem:[%s917 + $0x4] sm:$0xf] %v7917
          %7950 = vst [vmem:[%s917 + $0x8] sm:$0xf] %v7918
          %7951 = vst [vmem:[%s917 + $0xc] sm:$0xf] %v7919
          %7952 = vst [vmem:[%s917 + $0x10] sm:$0xf] %v7920
          %7953 = vst [vmem:[%s917 + $0x14] sm:$0xf] %v7921
          %7954 = vst [vmem:[%s917 + $0x18] sm:$0xf] %v7922
          %7955 = vst [vmem:[%s917 + $0x1c] sm:$0xf] %v7923
          %7956 = vst [vmem:[%s917 + $0x20] sm:$0xf] %v7924
          %7957 = vst [vmem:[%s917 + $0x24] sm:$0xf] %v7925
          %7958 = vst [vmem:[%s917 + $0x28] sm:$0xf] %v7926
          %7959 = vst [vmem:[%s917 + $0x2c] sm:$0xf] %v7927
          %7960 = vst [vmem:[%s917 + $0x30] sm:$0xf] %v7928
          %7961 = vst [vmem:[%s917 + $0x34] sm:$0xf] %v7929
          %7962 = vst [vmem:[%s917 + $0x38] sm:$0xf] %v7930
          %7963 = vst [vmem:[%s917 + $0x3c] sm:$0xf] %v7931
        $region140: #{gpt_forward.2} parent=75 // pred_fallthru
          _
        %s7964 = sand.u32 %s411, 1
        %s7965 = scalar_lea.sflag [#allocation5], %s7964
        %s7966 = sand.u32 %s411, 1
        %s7967 = smul.addr %s7966, 64
        %s7968 = scalar_lea.vmem [#allocation20], %s7967
        // Predicated region
        $region141: #{gpt_forward.2} parent=75 // pred_check
          %p7969 = pneg %p421
        $region142: #{gpt_forward.2} parent=75 // pred_check_branch
          %7971 = sbr.rel (%p7969) target = $region144
        $region143: #{gpt_forward.2} parent=75 // pred_region
          %s7972 = smul.u32 8, %s36
          %s7974 = ssub.s32 1024, 1024
          %7975 = vsyncadd %s7965, %s7974
          %s7976 = smul.addr %s7972, 2
          %s7977 = smul.addr %s7976, 64
          %s7978 = scalar_lea.hbm %s14, %s7977
          %s7979 = sshll.u32 %s7968, 4
          %s7980 = int_to_ptr.vmem [resolvable:$true] %s7979
          %7985 = dma.vmem_to_hbm [thread:$0]  %s7980, 1024, %s7978, %s7965, 64, 64, 4
        $region144: #{gpt_forward.2} parent=75 // pred_fallthru
          _
      $region76: #{gpt_forward.2} parent=5 // pred_fallthru
        _
      %p7986 = scmp.le.s32.totalorder 2, %s27
      // Predicated region
      $region145: #{gpt_forward.2} parent=5 // pred_check
        %p7987 = pneg %p7986
      $region146: #{gpt_forward.2} parent=5 // pred_check_branch
        %7989 = sbr.rel (%p7987) target = $region148
      $region147: #{gpt_forward.2} parent=5 // pred_region
        %s7990 = ssub.s32 %s27, 2
        // Predicated region
        $region149: #{gpt_forward.2} parent=147 // pred_check
          %p7991 = pneg %p427
        $region150: #{gpt_forward.2} parent=147 // pred_check_branch
          %7993 = sbr.rel (%p7991) target = $region152
        $region151: #{gpt_forward.2} parent=147 // pred_region
          %s7994 = sand.u32 %s412, 1
          %s7995 = scalar_lea.sflag [#allocation5], %s7994
          %s7996 = sand.u32 %s412, 1
          %s7997 = smul.addr %s7996, 64
          %s7998 = scalar_lea.vmem [#allocation20], %s7997
          %7999 = dma.done %s7995, 1024
        $region152: #{gpt_forward.2} parent=147 // pred_fallthru
          _
      $region148: #{gpt_forward.2} parent=5 // pred_fallthru
        _
    $region6: #{gpt_forward.2} parent=1 // loop_footer
      %s31 = sadd.s32 1, %s27
    $region7: #{gpt_forward.2} parent=1 // loop_footer_branch
      %26 = sbr.rel target = $region3
    $region8: #{gpt_forward.2} parent=1 // loop_exit
      _
    %8000 = vsyncpa [#allocation4], 1
    %s8001 = scalar_lea.sflag [#allocation4], 1
    %8002 = vsyncpa %s8001, 1
    %8003 = vsyncpa [#allocation7], 1
    %8004 = vsyncpa [#allocation5], 1
    %s8005 = scalar_lea.sflag [#allocation5], 1
    %8006 = vsyncpa %s8005, 1

</llo_original>
